<compile_context>
chip_gen: v6e
topology: v6e:2x2x1
jax: 0.10.0
libtpu: 0.0.40
codegen_flags: <defaults>
</compile_context>

<pallas_src>
import math

import numpy as np
import jax
import jax.numpy as jnp
from jax.experimental import pallas as pl
from jax.experimental.pallas import tpu as pltpu

# ---------------- model config (small, consistent with DiT.__init__) ----------
INPUT_SIZE = 16
PATCH = 2
IN_CH = 4
HIDDEN = 64
DEPTH = 2
HEADS = 4
MLP_RATIO = 4.0
NUM_CLASSES = 15
LEARN_SIGMA = True
OUT_CH = IN_CH * 2 if LEARN_SIGMA else IN_CH
FREQ_DIM = 256

NUM_PATCHES = (INPUT_SIZE // PATCH) ** 2          # T = 64
PATCH_DIM = IN_CH * PATCH * PATCH                 # 16
MLP_HIDDEN = int(HIDDEN * MLP_RATIO)              # 256
HEAD_DIM = HIDDEN // HEADS                        # 16
FINAL_DIM = PATCH * PATCH * OUT_CH                # 32
ADA_TOTAL = DEPTH * 6 * HIDDEN + 2 * HIDDEN       # stacked adaLN output width

OUT_GROUP = 128 // FINAL_DIM                      # tokens packed per 128-lane row (=4)
OUT_ROWS = NUM_PATCHES // OUT_GROUP               # packed output rows per image (=16)


# ---------------- sincos positional embedding (verbatim numpy, from models.py) -
def get_1d_sincos_pos_embed_from_grid(embed_dim, pos):
    assert embed_dim % 2 == 0
    omega = np.arange(embed_dim // 2, dtype=np.float64)
    omega /= embed_dim / 2.0
    omega = 1.0 / 10000 ** omega
    pos = pos.reshape(-1)
    out = np.einsum('m,d->md', pos, omega)
    emb_sin = np.sin(out)
    emb_cos = np.cos(out)
    return np.concatenate([emb_sin, emb_cos], axis=1)


def get_2d_sincos_pos_embed_from_grid(embed_dim, grid):
    assert embed_dim % 2 == 0
    emb_h = get_1d_sincos_pos_embed_from_grid(embed_dim // 2, grid[0])
    emb_w = get_1d_sincos_pos_embed_from_grid(embed_dim // 2, grid[1])
    return np.concatenate([emb_h, emb_w], axis=1)


def get_2d_sincos_pos_embed(embed_dim, grid_size):
    grid_h = np.arange(grid_size, dtype=np.float32)
    grid_w = np.arange(grid_size, dtype=np.float32)
    grid = np.meshgrid(grid_w, grid_h)
    grid = np.stack(grid, axis=0).reshape([2, 1, grid_size, grid_size])
    return get_2d_sincos_pos_embed_from_grid(embed_dim, grid)


# ---------------- small helpers usable inside kernels --------------------------
def _layernorm(v, eps=1e-6):
    # LayerNorm(elementwise_affine=False): normalize over last dim, biased var.
    mu = jnp.mean(v, axis=-1, keepdims=True)
    var = jnp.mean((v - mu) ** 2, axis=-1, keepdims=True)
    return (v - mu) * jax.lax.rsqrt(var + eps)


def _silu(v):
    return v * jax.nn.sigmoid(v)


def _gelu_tanh(v):
    # GELU(approximate='tanh')
    return 0.5 * v * (1.0 + jnp.tanh(0.7978845608028654 * (v + 0.044715 * v * v * v)))


# ---------------- fused Pallas kernel (one batch element per grid step) --------
def dit_fused_kernel(xp_ref, pos_ref, pw_ref, pb_ref, c_ref,
                     wada_ref, bada_ref,
                     wqkv_ref, bqkv_ref, wproj_ref, bproj_ref,
                     wfc1_ref, bfc1_ref, wfc2_ref, bfc2_ref,
                     wlin_ref, blin_ref, o_ref):
    D, H, hd, T = HIDDEN, HEADS, HEAD_DIM, NUM_PATCHES

    def mm(a, w):
        # bf16 operands, f32 accumulation on the MXU.
        return jnp.dot(a.astype(jnp.bfloat16), w, preferred_element_type=jnp.float32)

    # ---- patch embed + fixed positional embedding -----------------------------
    x = mm(xp_ref[...], pw_ref[...]) + pb_ref[...] + pos_ref[...]            # (T, D) f32

    # ---- adaLN modulation for all blocks + final layer (depends only on c) ----
    c = c_ref[...]                                                           # (1, D)
    ada = mm(_silu(c), wada_ref[...]) + bada_ref[...]                        # (1, ADA_TOTAL)

    for d in range(DEPTH):
        base = d * 6 * D
        shift_msa = ada[:, base + 0 * D: base + 1 * D]                       # (1, D)
        scale_msa = ada[:, base + 1 * D: base + 2 * D]
        gate_msa = ada[:, base + 2 * D: base + 3 * D]
        shift_mlp = ada[:, base + 3 * D: base + 4 * D]
        scale_mlp = ada[:, base + 4 * D: base + 5 * D]
        gate_mlp = ada[:, base + 5 * D: base + 6 * D]

        # ---- attention branch (streaming per head) -----------------------------
        xm = _layernorm(x) * (1.0 + scale_msa) + shift_msa                   # (T, D)
        qkv = mm(xm, wqkv_ref[d]) + bqkv_ref[d]                              # (T, 3D)
        # NOTE: 1/sqrt(hd) already folded into the Q third of wqkv/bqkv.
        qkv_b16 = qkv.astype(jnp.bfloat16)

        head_outs = []
        for h in range(H):
            qh = qkv_b16[:, h * hd:(h + 1) * hd]                             # (T, hd)
            kh = qkv_b16[:, D + h * hd: D + (h + 1) * hd]                    # (T, hd)
            vh = qkv_b16[:, 2 * D + h * hd: 2 * D + (h + 1) * hd]            # (T, hd)
            s = jax.lax.dot_general(qh, kh, (((1,), (1,)), ((), ())),
                                    preferred_element_type=jnp.float32)      # (T, T)
            s = s - jnp.max(s, axis=-1, keepdims=True)
            p = jnp.exp(s)
            p = p * pl.reciprocal(jnp.sum(p, axis=-1, keepdims=True), approx=True)
            head_outs.append(jnp.dot(p.astype(jnp.bfloat16), vh,
                                     preferred_element_type=jnp.float32))    # (T, hd)

        # Lane-concat heads -> one (T, D) tile, single output-proj matmul.
        ho = jnp.concatenate(head_outs, axis=-1).astype(jnp.bfloat16)        # (T, D)
        attn = jnp.dot(ho, wproj_ref[d],
                       preferred_element_type=jnp.float32) + bproj_ref[d]    # (T, D)
        x = x + gate_msa * attn

        # ---- MLP branch ---------------------------------------------------------
        xm2 = _layernorm(x) * (1.0 + scale_mlp) + shift_mlp                  # (T, D)
        h1 = _gelu_tanh(mm(xm2, wfc1_ref[d]) + bfc1_ref[d])                  # (T, MLP_HIDDEN)
        h2 = mm(h1, wfc2_ref[d]) + bfc2_ref[d]                               # (T, D)
        x = x + gate_mlp * h2

    # ---- final layer: adaLN + linear projection --------------------------------
    fbase = DEPTH * 6 * D
    shift_f = ada[:, fbase + 0 * D: fbase + 1 * D]
    scale_f = ada[:, fbase + 1 * D: fbase + 2 * D]
    xm = _layernorm(x) * (1.0 + scale_f) + shift_f                           # (T, D)
    out = mm(xm, wlin_ref[...]) + blin_ref[...]                              # (T, FINAL_DIM)

    # Lane-dense packing: 4 sublane chunks of (OUT_ROWS, FINAL_DIM) concatenated
    # along lanes -> (OUT_ROWS, 128) unmasked full-lane stores.
    packed = jnp.concatenate(
        [out[g * OUT_ROWS:(g + 1) * OUT_ROWS, :] for g in range(OUT_GROUP)], axis=-1)
    o_ref[...] = packed.astype(o_ref.dtype)


# ---------------- pallas_call wrapper -------------------------------------------
def _full_spec(a):
    nd = a.ndim
    return pl.BlockSpec(a.shape, lambda i, _nd=nd: (0,) * _nd)


def dit_fused_call(xp, pos, c, kw):
    """xp: (B, T, PATCH_DIM); pos: (T, D); c: (B, 1, D)."""
    B = xp.shape[0]
    args = [xp, pos, kw["patch_w"], kw["patch_b"], c,
            kw["w_ada"], kw["b_ada"],
            kw["w_qkv"], kw["b_qkv"], kw["w_proj"], kw["b_proj"],
            kw["w_fc1"], kw["b_fc1"], kw["w_fc2"], kw["b_fc2"],
            kw["w_lin"], kw["b_lin"]]
    in_specs = [
        pl.BlockSpec((None, NUM_PATCHES, PATCH_DIM), lambda i: (i, 0, 0)),   # xp (per-batch)
        _full_spec(pos),                                                      # pos (shared)
        _full_spec(kw["patch_w"]), _full_spec(kw["patch_b"]),
        pl.BlockSpec((None, 1, HIDDEN), lambda i: (i, 0, 0)),                 # c (per-batch)
        _full_spec(kw["w_ada"]), _full_spec(kw["b_ada"]),
        _full_spec(kw["w_qkv"]), _full_spec(kw["b_qkv"]),
        _full_spec(kw["w_proj"]), _full_spec(kw["b_proj"]),
        _full_spec(kw["w_fc1"]), _full_spec(kw["b_fc1"]),
        _full_spec(kw["w_fc2"]), _full_spec(kw["b_fc2"]),
        _full_spec(kw["w_lin"]), _full_spec(kw["b_lin"]),
    ]
    return pl.pallas_call(
        dit_fused_kernel,
        out_shape=jax.ShapeDtypeStruct((B, OUT_ROWS, 128), jnp.float32),
        grid=(B,),
        in_specs=in_specs,
        out_specs=pl.BlockSpec((None, OUT_ROWS, 128), lambda i: (i, 0, 0)),
        compiler_params=pltpu.CompilerParams(
            dimension_semantics=("parallel",),
            vmem_limit_bytes=32 * 1024 * 1024),
    )(*args)


# ---------------- plain-JAX glue --------------------------------------------------
def patchify(x, p):
    # x: (N, C, H, W) -> (N, T, C*p*p), ordered to match Conv2d(stride=p, kernel=p)
    N, C, H, W = x.shape
    x = x.reshape(N, C, H // p, p, W // p, p)
    x = jnp.transpose(x, (0, 2, 4, 1, 3, 5))           # N, h, w, C, p, p
    return x.reshape(N, (H // p) * (W // p), C * p * p)


def unpatchify(x, p, c):
    # x: (N, T, p*p*c) -> (N, c, H, W)
    n, T, _ = x.shape
    h = w = int(T ** 0.5)
    assert h * w == T
    x = x.reshape(n, h, w, p, p, c)
    x = jnp.einsum('nhwpqc->nchpwq', x)
    return x.reshape(n, c, h * p, w * p)


def timestep_embedding(t, dim, max_period=10000):
    half = dim // 2
    freqs = jnp.exp(-math.log(max_period) * jnp.arange(half, dtype=jnp.float32) / half)
    args = t[:, None].astype(jnp.float32) * freqs[None, :]
    return jnp.concatenate([jnp.cos(args), jnp.sin(args)], axis=-1)


# ---------------- parameters ------------------------------------------------------
def init_params(key):
    def nrm(k, shape, std=0.02):
        return std * jax.random.normal(k, shape, jnp.float32)

    keys = iter(jax.random.split(key, 64))
    p = {}
    # PatchEmbed (Conv2d p x p, stride p) as a matmul over flattened patches.
    p["patch_w"] = nrm(next(keys), (PATCH_DIM, HIDDEN))
    p["patch_b"] = jnp.zeros((1, HIDDEN), jnp.float32)
    p["pos"] = jnp.asarray(
        get_2d_sincos_pos_embed(HIDDEN, int(NUM_PATCHES ** 0.5)), jnp.float32)
    # TimestepEmbedder MLP
    p["t_w1"] = nrm(next(keys), (FREQ_DIM, HIDDEN))
    p["t_b1"] = jnp.zeros((HIDDEN,), jnp.float32)
    p["t_w2"] = nrm(next(keys), (HIDDEN, HIDDEN))
    p["t_b2"] = jnp.zeros((HIDDEN,), jnp.float32)
    # LabelEmbedder (num_classes + 1 rows because dropout_prob > 0)
    p["y_table"] = nrm(next(keys), (NUM_CLASSES + 1, HIDDEN))
    # DiT blocks (random instead of the paper's zero-init so the kernel does
    # non-trivial work; forward semantics unchanged).
    p["blocks"] = []
    for _ in range(DEPTH):
        blk = {
            "w_ada": nrm(next(keys), (HIDDEN, 6 * HIDDEN)),
            "b_ada": nrm(next(keys), (1, 6 * HIDDEN)),
            "w_qkv": nrm(next(keys), (HIDDEN, 3 * HIDDEN)),
            "b_qkv": jnp.zeros((1, 3 * HIDDEN), jnp.float32),
            "w_proj": nrm(next(keys), (HIDDEN, HIDDEN)),
            "b_proj": jnp.zeros((1, HIDDEN), jnp.float32),
            "w_fc1": nrm(next(keys), (HIDDEN, MLP_HIDDEN)),
            "b_fc1": jnp.zeros((1, MLP_HIDDEN), jnp.float32),
            "w_fc2": nrm(next(keys), (MLP_HIDDEN, HIDDEN)),
            "b_fc2": jnp.zeros((1, HIDDEN), jnp.float32),
        }
        p["blocks"].append(blk)
    # Final layer
    p["final"] = {
        "w_ada": nrm(next(keys), (HIDDEN, 2 * HIDDEN)),
        "b_ada": nrm(next(keys), (1, 2 * HIDDEN)),
        "w_lin": nrm(next(keys), (HIDDEN, FINAL_DIM)),
        "b_lin": jnp.zeros((1, FINAL_DIM), jnp.float32),
    }
    return p


def prepare_params(p):
    """One-time weight prep: stack blocks along a DEPTH axis, fuse all adaLN
    weights (blocks + final layer), fold 1/sqrt(hd) into the Q third of qkv,
    and cast matmul weights to bf16 (biases stay f32)."""
    D = HIDDEN
    blocks = p["blocks"]

    def stack(key):
        return jnp.stack([blk[key] for blk in blocks], axis=0)

    # fold attention scale into Q columns of qkv weight & bias
    scale = 1.0 / math.sqrt(HEAD_DIM)
    qscale = jnp.concatenate([jnp.full((D,), scale, jnp.float32),
                              jnp.ones((2 * D,), jnp.float32)])
    w_qkv = stack("w_qkv") * qscale[None, None, :]
    b_qkv = stack("b_qkv") * qscale[None, None, :]

    w_ada_all = jnp.concatenate([blk["w_ada"] for blk in blocks]
                                + [p["final"]["w_ada"]], axis=1)      # (D, ADA_TOTAL)
    b_ada_all = jnp.concatenate([blk["b_ada"] for blk in blocks]
                                + [p["final"]["b_ada"]], axis=1)      # (1, ADA_TOTAL)

    bf = lambda a: a.astype(jnp.bfloat16)
    kernel_weights = {
        "patch_w": bf(p["patch_w"]), "patch_b": p["patch_b"],
        "w_ada": bf(w_ada_all), "b_ada": b_ada_all,
        "w_qkv": bf(w_qkv), "b_qkv": b_qkv,
        "w_proj": bf(stack("w_proj")), "b_proj": stack("b_proj"),
        "w_fc1": bf(stack("w_fc1")), "b_fc1": stack("b_fc1"),
        "w_fc2": bf(stack("w_fc2")), "b_fc2": stack("b_fc2"),
        "w_lin": bf(p["final"]["w_lin"]), "b_lin": p["final"]["b_lin"],
    }
    return {
        "kernel": kernel_weights,
        "pos": p["pos"],
        "t_w1": p["t_w1"], "t_b1": p["t_b1"],
        "t_w2": p["t_w2"], "t_b2": p["t_b2"],
        "y_table": p["y_table"],
    }


# ---------------- forward ----------------------------------------------------------
def dit_forward(prepped, x, t, y):
    """x: (N, C, H, W) float32; t: (N,) float; y: (N,) int32. Eval mode (no label drop)."""
    B = x.shape[0]
    xp = patchify(x, PATCH)                                           # (B, T, C*p*p)

    # Conditioning: timestep MLP + label embedding (tiny -> plain JAX glue).
    # TODO(synk): training-mode label dropout (classifier-free guidance) not implemented.
    t_freq = timestep_embedding(t, FREQ_DIM)
    h = t_freq @ prepped["t_w1"] + prepped["t_b1"]
    h = h * jax.nn.sigmoid(h)                                         # SiLU
    t_emb = h @ prepped["t_w2"] + prepped["t_b2"]
    y_emb = prepped["y_table"][y]                                     # embedding gather
    c = (t_emb + y_emb)[:, None, :]                                   # (B, 1, D)

    # Entire transformer forward in one fused Pallas kernel, batch-parallel grid.
    out_packed = dit_fused_call(xp, prepped["pos"], c, prepped["kernel"])  # (B, T/4, 128)
    # Undo the lane-dense packing: 4 lane chunks of FINAL_DIM back onto the token axis.
    out = jnp.concatenate(jnp.split(out_packed, OUT_GROUP, axis=-1), axis=1)  # (B, T, FINAL_DIM)
    return unpatchify(out, PATCH, OUT_CH)                             # (N, out_ch, H, W)


if __name__ == "__main__":
    key = jax.random.PRNGKey(0)
    kx, kt, ky = jax.random.split(key, 3)
    B = 2
    x = jax.random.normal(kx, (B, IN_CH, INPUT_SIZE, INPUT_SIZE), jnp.float32)
    t = jax.random.uniform(kt, (B,), jnp.float32, 0.0, 1000.0)
    y = jax.random.randint(ky, (B,), 0, NUM_CLASSES)

    params = init_params(jax.random.PRNGKey(42))
    prepped = prepare_params(params)

    fwd = jax.jit(dit_forward)
    out = fwd(prepped, x, t, y)
    out = jax.block_until_ready(out)
    assert out.shape == (B, OUT_CH, INPUT_SIZE, INPUT_SIZE), out.shape
    assert bool(jnp.all(jnp.isfinite(out)))
    print("KERNEL_OK")
</pallas_src>

<mosaic_0001>
module attributes {stable_mosaic.version = 11 : i64} {
  func.func @dit_fused_kernel(%arg0: i32, %arg1: memref<1x64x16xf32, #tpu.memory_space<vmem>>, %arg2: memref<64x64xf32, #tpu.memory_space<vmem>>, %arg3: memref<16x64xbf16, #tpu.memory_space<vmem>>, %arg4: memref<1x64xf32, #tpu.memory_space<vmem>>, %arg5: memref<1x1x64xf32, #tpu.memory_space<vmem>>, %arg6: memref<64x896xbf16, #tpu.memory_space<vmem>>, %arg7: memref<1x896xf32, #tpu.memory_space<vmem>>, %arg8: memref<2x64x192xbf16, #tpu.memory_space<vmem>>, %arg9: memref<2x1x192xf32, #tpu.memory_space<vmem>>, %arg10: memref<2x64x64xbf16, #tpu.memory_space<vmem>>, %arg11: memref<2x1x64xf32, #tpu.memory_space<vmem>>, %arg12: memref<2x64x256xbf16, #tpu.memory_space<vmem>>, %arg13: memref<2x1x256xf32, #tpu.memory_space<vmem>>, %arg14: memref<2x256x64xbf16, #tpu.memory_space<vmem>>, %arg15: memref<2x1x64xf32, #tpu.memory_space<vmem>>, %arg16: memref<64x32xbf16, #tpu.memory_space<vmem>>, %arg17: memref<1x32xf32, #tpu.memory_space<vmem>>, %arg18: memref<1x16x128xf32, #tpu.memory_space<vmem>>) attributes {dimension_semantics = [#tpu.dimension_semantics<parallel>], iteration_bounds = array<i64: 2>, scalar_prefetch = 0 : i64, scratch_operands = 0 : i64, tpu.core_type = #tpu.core_type<tc>, window_params = [{transform_indices = @transform_0, window_bounds = array<i64: 1, 64, 16>}, {pipeline_mode = #tpu.pipeline_mode<synchronous>, transform_indices = @transform_1, window_bounds = array<i64: 64, 64>}, {pipeline_mode = #tpu.pipeline_mode<synchronous>, transform_indices = @transform_2, window_bounds = array<i64: 16, 64>}, {pipeline_mode = #tpu.pipeline_mode<synchronous>, transform_indices = @transform_3, window_bounds = array<i64: 1, 64>}, {transform_indices = @transform_4, window_bounds = array<i64: 1, 1, 64>}, {pipeline_mode = #tpu.pipeline_mode<synchronous>, transform_indices = @transform_5, window_bounds = array<i64: 64, 896>}, {pipeline_mode = #tpu.pipeline_mode<synchronous>, transform_indices = @transform_6, window_bounds = array<i64: 1, 896>}, {pipeline_mode = #tpu.pipeline_mode<synchronous>, transform_indices = @transform_7, window_bounds = array<i64: 2, 64, 192>}, {pipeline_mode = #tpu.pipeline_mode<synchronous>, transform_indices = @transform_8, window_bounds = array<i64: 2, 1, 192>}, {pipeline_mode = #tpu.pipeline_mode<synchronous>, transform_indices = @transform_9, window_bounds = array<i64: 2, 64, 64>}, {pipeline_mode = #tpu.pipeline_mode<synchronous>, transform_indices = @transform_10, window_bounds = array<i64: 2, 1, 64>}, {pipeline_mode = #tpu.pipeline_mode<synchronous>, transform_indices = @transform_11, window_bounds = array<i64: 2, 64, 256>}, {pipeline_mode = #tpu.pipeline_mode<synchronous>, transform_indices = @transform_12, window_bounds = array<i64: 2, 1, 256>}, {pipeline_mode = #tpu.pipeline_mode<synchronous>, transform_indices = @transform_13, window_bounds = array<i64: 2, 256, 64>}, {pipeline_mode = #tpu.pipeline_mode<synchronous>, transform_indices = @transform_14, window_bounds = array<i64: 2, 1, 64>}, {pipeline_mode = #tpu.pipeline_mode<synchronous>, transform_indices = @transform_15, window_bounds = array<i64: 64, 32>}, {pipeline_mode = #tpu.pipeline_mode<synchronous>, transform_indices = @transform_16, window_bounds = array<i64: 1, 32>}, {transform_indices = @transform_17, window_bounds = array<i64: 1, 16, 128>}]} {
    %c0 = arith.constant 0 : index
    %c0_0 = arith.constant 0 : index
    %c0_1 = arith.constant 0 : index
    %0 = vector.load %arg1[%c0, %c0_0, %c0_1] : memref<1x64x16xf32, #tpu.memory_space<vmem>>, vector<1x64x16xf32>
    %1 = vector.shape_cast %0 : vector<1x64x16xf32> to vector<64x16xf32>
    %c0_2 = arith.constant 0 : index
    %c0_3 = arith.constant 0 : index
    %2 = vector.load %arg3[%c0_2, %c0_3] : memref<16x64xbf16, #tpu.memory_space<vmem>>, vector<16x64xbf16>
    %3 = arith.truncf %1 : vector<64x16xf32> to vector<64x16xbf16>
    %cst = arith.constant dense<0.000000e+00> : vector<64x64xf32>
    %4 = tpu.matmul %3, %2, %cst {dimension_numbers = #tpu.dot_dimension_numbers<[1], [0], [0], [1], [0, 0, 1, 1], [], []>} : vector<64x16xbf16>, vector<16x64xbf16>, vector<64x64xf32> -> vector<64x64xf32>
    %c0_4 = arith.constant 0 : index
    %c0_5 = arith.constant 0 : index
    %5 = vector.load %arg4[%c0_4, %c0_5] : memref<1x64xf32, #tpu.memory_space<vmem>>, vector<1x64xf32>
    %6 = vector.broadcast %5 : vector<1x64xf32> to vector<64x64xf32>
    %7 = arith.addf %4, %6 : vector<64x64xf32>
    %c0_6 = arith.constant 0 : index
    %c0_7 = arith.constant 0 : index
    %8 = vector.load %arg2[%c0_6, %c0_7] : memref<64x64xf32, #tpu.memory_space<vmem>>, vector<64x64xf32>
    %9 = arith.addf %7, %8 : vector<64x64xf32>
    %c0_8 = arith.constant 0 : index
    %c0_9 = arith.constant 0 : index
    %c0_10 = arith.constant 0 : index
    %10 = vector.load %arg5[%c0_8, %c0_9, %c0_10] : memref<1x1x64xf32, #tpu.memory_space<vmem>>, vector<1x1x64xf32>
    %11 = vector.shape_cast %10 : vector<1x1x64xf32> to vector<1x64xf32>
    %12 = arith.negf %11 : vector<1x64xf32>
    %13 = math.exp %12 : vector<1x64xf32>
    %cst_11 = arith.constant 1.000000e+00 : f32
    %14 = vector.broadcast %cst_11 : f32 to vector<1x64xf32>
    %15 = arith.addf %14, %13 : vector<1x64xf32>
    %16 = arith.divf %14, %15 : vector<1x64xf32>
    %17 = arith.mulf %11, %16 : vector<1x64xf32>
    %c0_12 = arith.constant 0 : index
    %c0_13 = arith.constant 0 : index
    %18 = vector.load %arg6[%c0_12, %c0_13] : memref<64x896xbf16, #tpu.memory_space<vmem>>, vector<64x896xbf16>
    %19 = arith.truncf %17 : vector<1x64xf32> to vector<1x64xbf16>
    %cst_14 = arith.constant dense<0.000000e+00> : vector<1x896xf32>
    %20 = tpu.matmul %19, %18, %cst_14 {dimension_numbers = #tpu.dot_dimension_numbers<[1], [0], [0], [1], [0, 0, 1, 1], [], []>} : vector<1x64xbf16>, vector<64x896xbf16>, vector<1x896xf32> -> vector<1x896xf32>
    %c0_15 = arith.constant 0 : index
    %c0_16 = arith.constant 0 : index
    %21 = vector.load %arg7[%c0_15, %c0_16] : memref<1x896xf32, #tpu.memory_space<vmem>>, vector<1x896xf32>
    %22 = arith.addf %20, %21 : vector<1x896xf32>
    %23 = vector.extract_strided_slice %22 {offsets = [0, 0], sizes = [1, 64], strides = [1, 1]} : vector<1x896xf32> to vector<1x64xf32>
    %24 = vector.extract_strided_slice %22 {offsets = [0, 64], sizes = [1, 64], strides = [1, 1]} : vector<1x896xf32> to vector<1x64xf32>
    %25 = vector.extract_strided_slice %22 {offsets = [0, 128], sizes = [1, 64], strides = [1, 1]} : vector<1x896xf32> to vector<1x64xf32>
    %26 = vector.extract_strided_slice %22 {offsets = [0, 192], sizes = [1, 64], strides = [1, 1]} : vector<1x896xf32> to vector<1x64xf32>
    %27 = vector.extract_strided_slice %22 {offsets = [0, 256], sizes = [1, 64], strides = [1, 1]} : vector<1x896xf32> to vector<1x64xf32>
    %28 = vector.extract_strided_slice %22 {offsets = [0, 320], sizes = [1, 64], strides = [1, 1]} : vector<1x896xf32> to vector<1x64xf32>
    %cst_17 = arith.constant dense<0.000000e+00> : vector<64xf32>
    %29 = vector.multi_reduction <add>, %9, %cst_17 [1] : vector<64x64xf32> to vector<64xf32>
    %30 = vector.shape_cast %29 : vector<64xf32> to vector<64x1xf32>
    %cst_18 = arith.constant 6.400000e+01 : f32
    %31 = vector.broadcast %cst_18 : f32 to vector<64x1xf32>
    %32 = arith.divf %30, %31 : vector<64x1xf32>
    %33 = vector.broadcast %32 : vector<64x1xf32> to vector<64x64xf32>
    %34 = arith.subf %9, %33 : vector<64x64xf32>
    %35 = arith.mulf %34, %34 : vector<64x64xf32>
    %cst_19 = arith.constant dense<0.000000e+00> : vector<64xf32>
    %36 = vector.multi_reduction <add>, %35, %cst_19 [1] : vector<64x64xf32> to vector<64xf32>
    %37 = vector.shape_cast %36 : vector<64xf32> to vector<64x1xf32>
    %cst_20 = arith.constant 6.400000e+01 : f32
    %38 = vector.broadcast %cst_20 : f32 to vector<64x1xf32>
    %39 = arith.divf %37, %38 : vector<64x1xf32>
    %40 = vector.broadcast %32 : vector<64x1xf32> to vector<64x64xf32>
    %41 = arith.subf %9, %40 : vector<64x64xf32>
    %cst_21 = arith.constant 9.99999997E-7 : f32
    %42 = vector.broadcast %cst_21 : f32 to vector<64x1xf32>
    %43 = arith.addf %39, %42 : vector<64x1xf32>
    %44 = math.rsqrt %43 : vector<64x1xf32>
    %45 = vector.broadcast %44 : vector<64x1xf32> to vector<64x64xf32>
    %46 = arith.mulf %41, %45 : vector<64x64xf32>
    %cst_22 = arith.constant 1.000000e+00 : f32
    %47 = vector.broadcast %cst_22 : f32 to vector<1x64xf32>
    %48 = arith.addf %47, %24 : vector<1x64xf32>
    %49 = vector.broadcast %48 : vector<1x64xf32> to vector<64x64xf32>
    %50 = arith.mulf %46, %49 : vector<64x64xf32>
    %51 = vector.broadcast %23 : vector<1x64xf32> to vector<64x64xf32>
    %52 = arith.addf %50, %51 : vector<64x64xf32>
    %c0_23 = arith.constant 0 : index
    %c0_24 = arith.constant 0 : index
    %c0_25 = arith.constant 0 : index
    %53 = vector.load %arg8[%c0_23, %c0_24, %c0_25] : memref<2x64x192xbf16, #tpu.memory_space<vmem>>, vector<1x64x192xbf16>
    %54 = vector.shape_cast %53 : vector<1x64x192xbf16> to vector<64x192xbf16>
    %55 = arith.truncf %52 : vector<64x64xf32> to vector<64x64xbf16>
    %cst_26 = arith.constant dense<0.000000e+00> : vector<64x192xf32>
    %56 = tpu.matmul %55, %54, %cst_26 {dimension_numbers = #tpu.dot_dimension_numbers<[1], [0], [0], [1], [0, 0, 1, 1], [], []>} : vector<64x64xbf16>, vector<64x192xbf16>, vector<64x192xf32> -> vector<64x192xf32>
    %c0_27 = arith.constant 0 : index
    %c0_28 = arith.constant 0 : index
    %c0_29 = arith.constant 0 : index
    %57 = vector.load %arg9[%c0_27, %c0_28, %c0_29] : memref<2x1x192xf32, #tpu.memory_space<vmem>>, vector<1x1x192xf32>
    %58 = vector.shape_cast %57 : vector<1x1x192xf32> to vector<1x192xf32>
    %59 = vector.broadcast %58 : vector<1x192xf32> to vector<64x192xf32>
    %60 = arith.addf %56, %59 : vector<64x192xf32>
    %61 = arith.truncf %60 : vector<64x192xf32> to vector<64x192xbf16>
    %62 = vector.extract_strided_slice %61 {offsets = [0, 0], sizes = [64, 16], strides = [1, 1]} : vector<64x192xbf16> to vector<64x16xbf16>
    %63 = vector.extract_strided_slice %61 {offsets = [0, 64], sizes = [64, 16], strides = [1, 1]} : vector<64x192xbf16> to vector<64x16xbf16>
    %64 = vector.extract_strided_slice %61 {offsets = [0, 128], sizes = [64, 16], strides = [1, 1]} : vector<64x192xbf16> to vector<64x16xbf16>
    %cst_30 = arith.constant dense<0.000000e+00> : vector<64x64xf32>
    %65 = tpu.matmul %62, %63, %cst_30 {dimension_numbers = #tpu.dot_dimension_numbers<[1], [1], [0], [0], [0, 0, 1, 0], [], []>} : vector<64x16xbf16>, vector<64x16xbf16>, vector<64x64xf32> -> vector<64x64xf32>
    %cst_31 = arith.constant dense<0xFF800000> : vector<64xf32>
    %66 = vector.multi_reduction <maximumf>, %65, %cst_31 [1] : vector<64x64xf32> to vector<64xf32>
    %67 = vector.shape_cast %66 : vector<64xf32> to vector<64x1xf32>
    %68 = vector.broadcast %67 : vector<64x1xf32> to vector<64x64xf32>
    %69 = arith.subf %65, %68 : vector<64x64xf32>
    %70 = math.exp %69 : vector<64x64xf32>
    %cst_32 = arith.constant dense<0.000000e+00> : vector<64xf32>
    %71 = vector.multi_reduction <add>, %70, %cst_32 [1] : vector<64x64xf32> to vector<64xf32>
    %72 = vector.shape_cast %71 : vector<64xf32> to vector<64x1xf32>
    %73 = tpu.reciprocal %72 {approx = true} : vector<64x1xf32> -> vector<64x1xf32>
    %74 = vector.broadcast %73 : vector<64x1xf32> to vector<64x64xf32>
    %75 = arith.mulf %70, %74 : vector<64x64xf32>
    %76 = arith.truncf %75 : vector<64x64xf32> to vector<64x64xbf16>
    %cst_33 = arith.constant dense<0.000000e+00> : vector<64x16xf32>
    %77 = tpu.matmul %76, %64, %cst_33 {dimension_numbers = #tpu.dot_dimension_numbers<[1], [0], [0], [1], [0, 0, 1, 1], [], []>} : vector<64x64xbf16>, vector<64x16xbf16>, vector<64x16xf32> -> vector<64x16xf32>
    %78 = vector.extract_strided_slice %61 {offsets = [0, 16], sizes = [64, 16], strides = [1, 1]} : vector<64x192xbf16> to vector<64x16xbf16>
    %79 = vector.extract_strided_slice %61 {offsets = [0, 80], sizes = [64, 16], strides = [1, 1]} : vector<64x192xbf16> to vector<64x16xbf16>
    %80 = vector.extract_strided_slice %61 {offsets = [0, 144], sizes = [64, 16], strides = [1, 1]} : vector<64x192xbf16> to vector<64x16xbf16>
    %cst_34 = arith.constant dense<0.000000e+00> : vector<64x64xf32>
    %81 = tpu.matmul %78, %79, %cst_34 {dimension_numbers = #tpu.dot_dimension_numbers<[1], [1], [0], [0], [0, 0, 1, 0], [], []>} : vector<64x16xbf16>, vector<64x16xbf16>, vector<64x64xf32> -> vector<64x64xf32>
    %cst_35 = arith.constant dense<0xFF800000> : vector<64xf32>
    %82 = vector.multi_reduction <maximumf>, %81, %cst_35 [1] : vector<64x64xf32> to vector<64xf32>
    %83 = vector.shape_cast %82 : vector<64xf32> to vector<64x1xf32>
    %84 = vector.broadcast %83 : vector<64x1xf32> to vector<64x64xf32>
    %85 = arith.subf %81, %84 : vector<64x64xf32>
    %86 = math.exp %85 : vector<64x64xf32>
    %cst_36 = arith.constant dense<0.000000e+00> : vector<64xf32>
    %87 = vector.multi_reduction <add>, %86, %cst_36 [1] : vector<64x64xf32> to vector<64xf32>
    %88 = vector.shape_cast %87 : vector<64xf32> to vector<64x1xf32>
    %89 = tpu.reciprocal %88 {approx = true} : vector<64x1xf32> -> vector<64x1xf32>
    %90 = vector.broadcast %89 : vector<64x1xf32> to vector<64x64xf32>
    %91 = arith.mulf %86, %90 : vector<64x64xf32>
    %92 = arith.truncf %91 : vector<64x64xf32> to vector<64x64xbf16>
    %cst_37 = arith.constant dense<0.000000e+00> : vector<64x16xf32>
    %93 = tpu.matmul %92, %80, %cst_37 {dimension_numbers = #tpu.dot_dimension_numbers<[1], [0], [0], [1], [0, 0, 1, 1], [], []>} : vector<64x64xbf16>, vector<64x16xbf16>, vector<64x16xf32> -> vector<64x16xf32>
    %94 = vector.extract_strided_slice %61 {offsets = [0, 32], sizes = [64, 16], strides = [1, 1]} : vector<64x192xbf16> to vector<64x16xbf16>
    %95 = vector.extract_strided_slice %61 {offsets = [0, 96], sizes = [64, 16], strides = [1, 1]} : vector<64x192xbf16> to vector<64x16xbf16>
    %96 = vector.extract_strided_slice %61 {offsets = [0, 160], sizes = [64, 16], strides = [1, 1]} : vector<64x192xbf16> to vector<64x16xbf16>
    %cst_38 = arith.constant dense<0.000000e+00> : vector<64x64xf32>
    %97 = tpu.matmul %94, %95, %cst_38 {dimension_numbers = #tpu.dot_dimension_numbers<[1], [1], [0], [0], [0, 0, 1, 0], [], []>} : vector<64x16xbf16>, vector<64x16xbf16>, vector<64x64xf32> -> vector<64x64xf32>
    %cst_39 = arith.constant dense<0xFF800000> : vector<64xf32>
    %98 = vector.multi_reduction <maximumf>, %97, %cst_39 [1] : vector<64x64xf32> to vector<64xf32>
    %99 = vector.shape_cast %98 : vector<64xf32> to vector<64x1xf32>
    %100 = vector.broadcast %99 : vector<64x1xf32> to vector<64x64xf32>
    %101 = arith.subf %97, %100 : vector<64x64xf32>
    %102 = math.exp %101 : vector<64x64xf32>
    %cst_40 = arith.constant dense<0.000000e+00> : vector<64xf32>
    %103 = vector.multi_reduction <add>, %102, %cst_40 [1] : vector<64x64xf32> to vector<64xf32>
    %104 = vector.shape_cast %103 : vector<64xf32> to vector<64x1xf32>
    %105 = tpu.reciprocal %104 {approx = true} : vector<64x1xf32> -> vector<64x1xf32>
    %106 = vector.broadcast %105 : vector<64x1xf32> to vector<64x64xf32>
    %107 = arith.mulf %102, %106 : vector<64x64xf32>
    %108 = arith.truncf %107 : vector<64x64xf32> to vector<64x64xbf16>
    %cst_41 = arith.constant dense<0.000000e+00> : vector<64x16xf32>
    %109 = tpu.matmul %108, %96, %cst_41 {dimension_numbers = #tpu.dot_dimension_numbers<[1], [0], [0], [1], [0, 0, 1, 1], [], []>} : vector<64x64xbf16>, vector<64x16xbf16>, vector<64x16xf32> -> vector<64x16xf32>
    %110 = vector.extract_strided_slice %61 {offsets = [0, 48], sizes = [64, 16], strides = [1, 1]} : vector<64x192xbf16> to vector<64x16xbf16>
    %111 = vector.extract_strided_slice %61 {offsets = [0, 112], sizes = [64, 16], strides = [1, 1]} : vector<64x192xbf16> to vector<64x16xbf16>
    %112 = vector.extract_strided_slice %61 {offsets = [0, 176], sizes = [64, 16], strides = [1, 1]} : vector<64x192xbf16> to vector<64x16xbf16>
    %cst_42 = arith.constant dense<0.000000e+00> : vector<64x64xf32>
    %113 = tpu.matmul %110, %111, %cst_42 {dimension_numbers = #tpu.dot_dimension_numbers<[1], [1], [0], [0], [0, 0, 1, 0], [], []>} : vector<64x16xbf16>, vector<64x16xbf16>, vector<64x64xf32> -> vector<64x64xf32>
    %cst_43 = arith.constant dense<0xFF800000> : vector<64xf32>
    %114 = vector.multi_reduction <maximumf>, %113, %cst_43 [1] : vector<64x64xf32> to vector<64xf32>
    %115 = vector.shape_cast %114 : vector<64xf32> to vector<64x1xf32>
    %116 = vector.broadcast %115 : vector<64x1xf32> to vector<64x64xf32>
    %117 = arith.subf %113, %116 : vector<64x64xf32>
    %118 = math.exp %117 : vector<64x64xf32>
    %cst_44 = arith.constant dense<0.000000e+00> : vector<64xf32>
    %119 = vector.multi_reduction <add>, %118, %cst_44 [1] : vector<64x64xf32> to vector<64xf32>
    %120 = vector.shape_cast %119 : vector<64xf32> to vector<64x1xf32>
    %121 = tpu.reciprocal %120 {approx = true} : vector<64x1xf32> -> vector<64x1xf32>
    %122 = vector.broadcast %121 : vector<64x1xf32> to vector<64x64xf32>
    %123 = arith.mulf %118, %122 : vector<64x64xf32>
    %124 = arith.truncf %123 : vector<64x64xf32> to vector<64x64xbf16>
    %cst_45 = arith.constant dense<0.000000e+00> : vector<64x16xf32>
    %125 = tpu.matmul %124, %112, %cst_45 {dimension_numbers = #tpu.dot_dimension_numbers<[1], [0], [0], [1], [0, 0, 1, 1], [], []>} : vector<64x64xbf16>, vector<64x16xbf16>, vector<64x16xf32> -> vector<64x16xf32>
    %126 = tpu.concatenate %77, %93, %109, %125 in 1 : vector<64x16xf32>, vector<64x16xf32>, vector<64x16xf32>, vector<64x16xf32> -> vector<64x64xf32>
    %127 = arith.truncf %126 : vector<64x64xf32> to vector<64x64xbf16>
    %c0_46 = arith.constant 0 : index
    %c0_47 = arith.constant 0 : index
    %c0_48 = arith.constant 0 : index
    %128 = vector.load %arg10[%c0_46, %c0_47, %c0_48] : memref<2x64x64xbf16, #tpu.memory_space<vmem>>, vector<1x64x64xbf16>
    %129 = vector.shape_cast %128 : vector<1x64x64xbf16> to vector<64x64xbf16>
    %cst_49 = arith.constant dense<0.000000e+00> : vector<64x64xf32>
    %130 = tpu.matmul %127, %129, %cst_49 {dimension_numbers = #tpu.dot_dimension_numbers<[1], [0], [0], [1], [0, 0, 1, 1], [], []>} : vector<64x64xbf16>, vector<64x64xbf16>, vector<64x64xf32> -> vector<64x64xf32>
    %c0_50 = arith.constant 0 : index
    %c0_51 = arith.constant 0 : index
    %c0_52 = arith.constant 0 : index
    %131 = vector.load %arg11[%c0_50, %c0_51, %c0_52] : memref<2x1x64xf32, #tpu.memory_space<vmem>>, vector<1x1x64xf32>
    %132 = vector.shape_cast %131 : vector<1x1x64xf32> to vector<1x64xf32>
    %133 = vector.broadcast %132 : vector<1x64xf32> to vector<64x64xf32>
    %134 = arith.addf %130, %133 : vector<64x64xf32>
    %135 = vector.broadcast %25 : vector<1x64xf32> to vector<64x64xf32>
    %136 = arith.mulf %135, %134 : vector<64x64xf32>
    %137 = arith.addf %9, %136 : vector<64x64xf32>
    %cst_53 = arith.constant dense<0.000000e+00> : vector<64xf32>
    %138 = vector.multi_reduction <add>, %137, %cst_53 [1] : vector<64x64xf32> to vector<64xf32>
    %139 = vector.shape_cast %138 : vector<64xf32> to vector<64x1xf32>
    %cst_54 = arith.constant 6.400000e+01 : f32
    %140 = vector.broadcast %cst_54 : f32 to vector<64x1xf32>
    %141 = arith.divf %139, %140 : vector<64x1xf32>
    %142 = vector.broadcast %141 : vector<64x1xf32> to vector<64x64xf32>
    %143 = arith.subf %137, %142 : vector<64x64xf32>
    %144 = arith.mulf %143, %143 : vector<64x64xf32>
    %cst_55 = arith.constant dense<0.000000e+00> : vector<64xf32>
    %145 = vector.multi_reduction <add>, %144, %cst_55 [1] : vector<64x64xf32> to vector<64xf32>
    %146 = vector.shape_cast %145 : vector<64xf32> to vector<64x1xf32>
    %cst_56 = arith.constant 6.400000e+01 : f32
    %147 = vector.broadcast %cst_56 : f32 to vector<64x1xf32>
    %148 = arith.divf %146, %147 : vector<64x1xf32>
    %149 = vector.broadcast %141 : vector<64x1xf32> to vector<64x64xf32>
    %150 = arith.subf %137, %149 : vector<64x64xf32>
    %cst_57 = arith.constant 9.99999997E-7 : f32
    %151 = vector.broadcast %cst_57 : f32 to vector<64x1xf32>
    %152 = arith.addf %148, %151 : vector<64x1xf32>
    %153 = math.rsqrt %152 : vector<64x1xf32>
    %154 = vector.broadcast %153 : vector<64x1xf32> to vector<64x64xf32>
    %155 = arith.mulf %150, %154 : vector<64x64xf32>
    %cst_58 = arith.constant 1.000000e+00 : f32
    %156 = vector.broadcast %cst_58 : f32 to vector<1x64xf32>
    %157 = arith.addf %156, %27 : vector<1x64xf32>
    %158 = vector.broadcast %157 : vector<1x64xf32> to vector<64x64xf32>
    %159 = arith.mulf %155, %158 : vector<64x64xf32>
    %160 = vector.broadcast %26 : vector<1x64xf32> to vector<64x64xf32>
    %161 = arith.addf %159, %160 : vector<64x64xf32>
    %c0_59 = arith.constant 0 : index
    %c0_60 = arith.constant 0 : index
    %c0_61 = arith.constant 0 : index
    %162 = vector.load %arg12[%c0_59, %c0_60, %c0_61] : memref<2x64x256xbf16, #tpu.memory_space<vmem>>, vector<1x64x256xbf16>
    %163 = vector.shape_cast %162 : vector<1x64x256xbf16> to vector<64x256xbf16>
    %164 = arith.truncf %161 : vector<64x64xf32> to vector<64x64xbf16>
    %cst_62 = arith.constant dense<0.000000e+00> : vector<64x256xf32>
    %165 = tpu.matmul %164, %163, %cst_62 {dimension_numbers = #tpu.dot_dimension_numbers<[1], [0], [0], [1], [0, 0, 1, 1], [], []>} : vector<64x64xbf16>, vector<64x256xbf16>, vector<64x256xf32> -> vector<64x256xf32>
    %c0_63 = arith.constant 0 : index
    %c0_64 = arith.constant 0 : index
    %c0_65 = arith.constant 0 : index
    %166 = vector.load %arg13[%c0_63, %c0_64, %c0_65] : memref<2x1x256xf32, #tpu.memory_space<vmem>>, vector<1x1x256xf32>
    %167 = vector.shape_cast %166 : vector<1x1x256xf32> to vector<1x256xf32>
    %168 = vector.broadcast %167 : vector<1x256xf32> to vector<64x256xf32>
    %169 = arith.addf %165, %168 : vector<64x256xf32>
    %cst_66 = arith.constant 5.000000e-01 : f32
    %170 = vector.broadcast %cst_66 : f32 to vector<64x256xf32>
    %171 = arith.mulf %170, %169 : vector<64x256xf32>
    %cst_67 = arith.constant 4.471500e-02 : f32
    %172 = vector.broadcast %cst_67 : f32 to vector<64x256xf32>
    %173 = arith.mulf %172, %169 : vector<64x256xf32>
    %174 = arith.mulf %173, %169 : vector<64x256xf32>
    %175 = arith.mulf %174, %169 : vector<64x256xf32>
    %176 = arith.addf %169, %175 : vector<64x256xf32>
    %cst_68 = arith.constant 0.797884583 : f32
    %177 = vector.broadcast %cst_68 : f32 to vector<64x256xf32>
    %178 = arith.mulf %177, %176 : vector<64x256xf32>
    %179 = math.tanh %178 : vector<64x256xf32>
    %cst_69 = arith.constant 1.000000e+00 : f32
    %180 = vector.broadcast %cst_69 : f32 to vector<64x256xf32>
    %181 = arith.addf %180, %179 : vector<64x256xf32>
    %182 = arith.mulf %171, %181 : vector<64x256xf32>
    %c0_70 = arith.constant 0 : index
    %c0_71 = arith.constant 0 : index
    %c0_72 = arith.constant 0 : index
    %183 = vector.load %arg14[%c0_70, %c0_71, %c0_72] : memref<2x256x64xbf16, #tpu.memory_space<vmem>>, vector<1x256x64xbf16>
    %184 = vector.shape_cast %183 : vector<1x256x64xbf16> to vector<256x64xbf16>
    %185 = arith.truncf %182 : vector<64x256xf32> to vector<64x256xbf16>
    %cst_73 = arith.constant dense<0.000000e+00> : vector<64x64xf32>
    %186 = tpu.matmul %185, %184, %cst_73 {dimension_numbers = #tpu.dot_dimension_numbers<[1], [0], [0], [1], [0, 0, 1, 1], [], []>} : vector<64x256xbf16>, vector<256x64xbf16>, vector<64x64xf32> -> vector<64x64xf32>
    %c0_74 = arith.constant 0 : index
    %c0_75 = arith.constant 0 : index
    %c0_76 = arith.constant 0 : index
    %187 = vector.load %arg15[%c0_74, %c0_75, %c0_76] : memref<2x1x64xf32, #tpu.memory_space<vmem>>, vector<1x1x64xf32>
    %188 = vector.shape_cast %187 : vector<1x1x64xf32> to vector<1x64xf32>
    %189 = vector.broadcast %188 : vector<1x64xf32> to vector<64x64xf32>
    %190 = arith.addf %186, %189 : vector<64x64xf32>
    %191 = vector.broadcast %28 : vector<1x64xf32> to vector<64x64xf32>
    %192 = arith.mulf %191, %190 : vector<64x64xf32>
    %193 = arith.addf %137, %192 : vector<64x64xf32>
    %194 = vector.extract_strided_slice %22 {offsets = [0, 384], sizes = [1, 64], strides = [1, 1]} : vector<1x896xf32> to vector<1x64xf32>
    %195 = vector.extract_strided_slice %22 {offsets = [0, 448], sizes = [1, 64], strides = [1, 1]} : vector<1x896xf32> to vector<1x64xf32>
    %196 = vector.extract_strided_slice %22 {offsets = [0, 512], sizes = [1, 64], strides = [1, 1]} : vector<1x896xf32> to vector<1x64xf32>
    %197 = vector.extract_strided_slice %22 {offsets = [0, 576], sizes = [1, 64], strides = [1, 1]} : vector<1x896xf32> to vector<1x64xf32>
    %198 = vector.extract_strided_slice %22 {offsets = [0, 640], sizes = [1, 64], strides = [1, 1]} : vector<1x896xf32> to vector<1x64xf32>
    %199 = vector.extract_strided_slice %22 {offsets = [0, 704], sizes = [1, 64], strides = [1, 1]} : vector<1x896xf32> to vector<1x64xf32>
    %cst_77 = arith.constant dense<0.000000e+00> : vector<64xf32>
    %200 = vector.multi_reduction <add>, %193, %cst_77 [1] : vector<64x64xf32> to vector<64xf32>
    %201 = vector.shape_cast %200 : vector<64xf32> to vector<64x1xf32>
    %cst_78 = arith.constant 6.400000e+01 : f32
    %202 = vector.broadcast %cst_78 : f32 to vector<64x1xf32>
    %203 = arith.divf %201, %202 : vector<64x1xf32>
    %204 = vector.broadcast %203 : vector<64x1xf32> to vector<64x64xf32>
    %205 = arith.subf %193, %204 : vector<64x64xf32>
    %206 = arith.mulf %205, %205 : vector<64x64xf32>
    %cst_79 = arith.constant dense<0.000000e+00> : vector<64xf32>
    %207 = vector.multi_reduction <add>, %206, %cst_79 [1] : vector<64x64xf32> to vector<64xf32>
    %208 = vector.shape_cast %207 : vector<64xf32> to vector<64x1xf32>
    %cst_80 = arith.constant 6.400000e+01 : f32
    %209 = vector.broadcast %cst_80 : f32 to vector<64x1xf32>
    %210 = arith.divf %208, %209 : vector<64x1xf32>
    %211 = vector.broadcast %203 : vector<64x1xf32> to vector<64x64xf32>
    %212 = arith.subf %193, %211 : vector<64x64xf32>
    %cst_81 = arith.constant 9.99999997E-7 : f32
    %213 = vector.broadcast %cst_81 : f32 to vector<64x1xf32>
    %214 = arith.addf %210, %213 : vector<64x1xf32>
    %215 = math.rsqrt %214 : vector<64x1xf32>
    %216 = vector.broadcast %215 : vector<64x1xf32> to vector<64x64xf32>
    %217 = arith.mulf %212, %216 : vector<64x64xf32>
    %cst_82 = arith.constant 1.000000e+00 : f32
    %218 = vector.broadcast %cst_82 : f32 to vector<1x64xf32>
    %219 = arith.addf %218, %195 : vector<1x64xf32>
    %220 = vector.broadcast %219 : vector<1x64xf32> to vector<64x64xf32>
    %221 = arith.mulf %217, %220 : vector<64x64xf32>
    %222 = vector.broadcast %194 : vector<1x64xf32> to vector<64x64xf32>
    %223 = arith.addf %221, %222 : vector<64x64xf32>
    %c1 = arith.constant 1 : index
    %c0_83 = arith.constant 0 : index
    %c0_84 = arith.constant 0 : index
    %224 = vector.load %arg8[%c1, %c0_83, %c0_84] : memref<2x64x192xbf16, #tpu.memory_space<vmem>>, vector<1x64x192xbf16>
    %225 = vector.shape_cast %224 : vector<1x64x192xbf16> to vector<64x192xbf16>
    %226 = arith.truncf %223 : vector<64x64xf32> to vector<64x64xbf16>
    %cst_85 = arith.constant dense<0.000000e+00> : vector<64x192xf32>
    %227 = tpu.matmul %226, %225, %cst_85 {dimension_numbers = #tpu.dot_dimension_numbers<[1], [0], [0], [1], [0, 0, 1, 1], [], []>} : vector<64x64xbf16>, vector<64x192xbf16>, vector<64x192xf32> -> vector<64x192xf32>
    %c1_86 = arith.constant 1 : index
    %c0_87 = arith.constant 0 : index
    %c0_88 = arith.constant 0 : index
    %228 = vector.load %arg9[%c1_86, %c0_87, %c0_88] : memref<2x1x192xf32, #tpu.memory_space<vmem>>, vector<1x1x192xf32>
    %229 = vector.shape_cast %228 : vector<1x1x192xf32> to vector<1x192xf32>
    %230 = vector.broadcast %229 : vector<1x192xf32> to vector<64x192xf32>
    %231 = arith.addf %227, %230 : vector<64x192xf32>
    %232 = arith.truncf %231 : vector<64x192xf32> to vector<64x192xbf16>
    %233 = vector.extract_strided_slice %232 {offsets = [0, 0], sizes = [64, 16], strides = [1, 1]} : vector<64x192xbf16> to vector<64x16xbf16>
    %234 = vector.extract_strided_slice %232 {offsets = [0, 64], sizes = [64, 16], strides = [1, 1]} : vector<64x192xbf16> to vector<64x16xbf16>
    %235 = vector.extract_strided_slice %232 {offsets = [0, 128], sizes = [64, 16], strides = [1, 1]} : vector<64x192xbf16> to vector<64x16xbf16>
    %cst_89 = arith.constant dense<0.000000e+00> : vector<64x64xf32>
    %236 = tpu.matmul %233, %234, %cst_89 {dimension_numbers = #tpu.dot_dimension_numbers<[1], [1], [0], [0], [0, 0, 1, 0], [], []>} : vector<64x16xbf16>, vector<64x16xbf16>, vector<64x64xf32> -> vector<64x64xf32>
    %cst_90 = arith.constant dense<0xFF800000> : vector<64xf32>
    %237 = vector.multi_reduction <maximumf>, %236, %cst_90 [1] : vector<64x64xf32> to vector<64xf32>
    %238 = vector.shape_cast %237 : vector<64xf32> to vector<64x1xf32>
    %239 = vector.broadcast %238 : vector<64x1xf32> to vector<64x64xf32>
    %240 = arith.subf %236, %239 : vector<64x64xf32>
    %241 = math.exp %240 : vector<64x64xf32>
    %cst_91 = arith.constant dense<0.000000e+00> : vector<64xf32>
    %242 = vector.multi_reduction <add>, %241, %cst_91 [1] : vector<64x64xf32> to vector<64xf32>
    %243 = vector.shape_cast %242 : vector<64xf32> to vector<64x1xf32>
    %244 = tpu.reciprocal %243 {approx = true} : vector<64x1xf32> -> vector<64x1xf32>
    %245 = vector.broadcast %244 : vector<64x1xf32> to vector<64x64xf32>
    %246 = arith.mulf %241, %245 : vector<64x64xf32>
    %247 = arith.truncf %246 : vector<64x64xf32> to vector<64x64xbf16>
    %cst_92 = arith.constant dense<0.000000e+00> : vector<64x16xf32>
    %248 = tpu.matmul %247, %235, %cst_92 {dimension_numbers = #tpu.dot_dimension_numbers<[1], [0], [0], [1], [0, 0, 1, 1], [], []>} : vector<64x64xbf16>, vector<64x16xbf16>, vector<64x16xf32> -> vector<64x16xf32>
    %249 = vector.extract_strided_slice %232 {offsets = [0, 16], sizes = [64, 16], strides = [1, 1]} : vector<64x192xbf16> to vector<64x16xbf16>
    %250 = vector.extract_strided_slice %232 {offsets = [0, 80], sizes = [64, 16], strides = [1, 1]} : vector<64x192xbf16> to vector<64x16xbf16>
    %251 = vector.extract_strided_slice %232 {offsets = [0, 144], sizes = [64, 16], strides = [1, 1]} : vector<64x192xbf16> to vector<64x16xbf16>
    %cst_93 = arith.constant dense<0.000000e+00> : vector<64x64xf32>
    %252 = tpu.matmul %249, %250, %cst_93 {dimension_numbers = #tpu.dot_dimension_numbers<[1], [1], [0], [0], [0, 0, 1, 0], [], []>} : vector<64x16xbf16>, vector<64x16xbf16>, vector<64x64xf32> -> vector<64x64xf32>
    %cst_94 = arith.constant dense<0xFF800000> : vector<64xf32>
    %253 = vector.multi_reduction <maximumf>, %252, %cst_94 [1] : vector<64x64xf32> to vector<64xf32>
    %254 = vector.shape_cast %253 : vector<64xf32> to vector<64x1xf32>
    %255 = vector.broadcast %254 : vector<64x1xf32> to vector<64x64xf32>
    %256 = arith.subf %252, %255 : vector<64x64xf32>
    %257 = math.exp %256 : vector<64x64xf32>
    %cst_95 = arith.constant dense<0.000000e+00> : vector<64xf32>
    %258 = vector.multi_reduction <add>, %257, %cst_95 [1] : vector<64x64xf32> to vector<64xf32>
    %259 = vector.shape_cast %258 : vector<64xf32> to vector<64x1xf32>
    %260 = tpu.reciprocal %259 {approx = true} : vector<64x1xf32> -> vector<64x1xf32>
    %261 = vector.broadcast %260 : vector<64x1xf32> to vector<64x64xf32>
    %262 = arith.mulf %257, %261 : vector<64x64xf32>
    %263 = arith.truncf %262 : vector<64x64xf32> to vector<64x64xbf16>
    %cst_96 = arith.constant dense<0.000000e+00> : vector<64x16xf32>
    %264 = tpu.matmul %263, %251, %cst_96 {dimension_numbers = #tpu.dot_dimension_numbers<[1], [0], [0], [1], [0, 0, 1, 1], [], []>} : vector<64x64xbf16>, vector<64x16xbf16>, vector<64x16xf32> -> vector<64x16xf32>
    %265 = vector.extract_strided_slice %232 {offsets = [0, 32], sizes = [64, 16], strides = [1, 1]} : vector<64x192xbf16> to vector<64x16xbf16>
    %266 = vector.extract_strided_slice %232 {offsets = [0, 96], sizes = [64, 16], strides = [1, 1]} : vector<64x192xbf16> to vector<64x16xbf16>
    %267 = vector.extract_strided_slice %232 {offsets = [0, 160], sizes = [64, 16], strides = [1, 1]} : vector<64x192xbf16> to vector<64x16xbf16>
    %cst_97 = arith.constant dense<0.000000e+00> : vector<64x64xf32>
    %268 = tpu.matmul %265, %266, %cst_97 {dimension_numbers = #tpu.dot_dimension_numbers<[1], [1], [0], [0], [0, 0, 1, 0], [], []>} : vector<64x16xbf16>, vector<64x16xbf16>, vector<64x64xf32> -> vector<64x64xf32>
    %cst_98 = arith.constant dense<0xFF800000> : vector<64xf32>
    %269 = vector.multi_reduction <maximumf>, %268, %cst_98 [1] : vector<64x64xf32> to vector<64xf32>
    %270 = vector.shape_cast %269 : vector<64xf32> to vector<64x1xf32>
    %271 = vector.broadcast %270 : vector<64x1xf32> to vector<64x64xf32>
    %272 = arith.subf %268, %271 : vector<64x64xf32>
    %273 = math.exp %272 : vector<64x64xf32>
    %cst_99 = arith.constant dense<0.000000e+00> : vector<64xf32>
    %274 = vector.multi_reduction <add>, %273, %cst_99 [1] : vector<64x64xf32> to vector<64xf32>
    %275 = vector.shape_cast %274 : vector<64xf32> to vector<64x1xf32>
    %276 = tpu.reciprocal %275 {approx = true} : vector<64x1xf32> -> vector<64x1xf32>
    %277 = vector.broadcast %276 : vector<64x1xf32> to vector<64x64xf32>
    %278 = arith.mulf %273, %277 : vector<64x64xf32>
    %279 = arith.truncf %278 : vector<64x64xf32> to vector<64x64xbf16>
    %cst_100 = arith.constant dense<0.000000e+00> : vector<64x16xf32>
    %280 = tpu.matmul %279, %267, %cst_100 {dimension_numbers = #tpu.dot_dimension_numbers<[1], [0], [0], [1], [0, 0, 1, 1], [], []>} : vector<64x64xbf16>, vector<64x16xbf16>, vector<64x16xf32> -> vector<64x16xf32>
    %281 = vector.extract_strided_slice %232 {offsets = [0, 48], sizes = [64, 16], strides = [1, 1]} : vector<64x192xbf16> to vector<64x16xbf16>
    %282 = vector.extract_strided_slice %232 {offsets = [0, 112], sizes = [64, 16], strides = [1, 1]} : vector<64x192xbf16> to vector<64x16xbf16>
    %283 = vector.extract_strided_slice %232 {offsets = [0, 176], sizes = [64, 16], strides = [1, 1]} : vector<64x192xbf16> to vector<64x16xbf16>
    %cst_101 = arith.constant dense<0.000000e+00> : vector<64x64xf32>
    %284 = tpu.matmul %281, %282, %cst_101 {dimension_numbers = #tpu.dot_dimension_numbers<[1], [1], [0], [0], [0, 0, 1, 0], [], []>} : vector<64x16xbf16>, vector<64x16xbf16>, vector<64x64xf32> -> vector<64x64xf32>
    %cst_102 = arith.constant dense<0xFF800000> : vector<64xf32>
    %285 = vector.multi_reduction <maximumf>, %284, %cst_102 [1] : vector<64x64xf32> to vector<64xf32>
    %286 = vector.shape_cast %285 : vector<64xf32> to vector<64x1xf32>
    %287 = vector.broadcast %286 : vector<64x1xf32> to vector<64x64xf32>
    %288 = arith.subf %284, %287 : vector<64x64xf32>
    %289 = math.exp %288 : vector<64x64xf32>
    %cst_103 = arith.constant dense<0.000000e+00> : vector<64xf32>
    %290 = vector.multi_reduction <add>, %289, %cst_103 [1] : vector<64x64xf32> to vector<64xf32>
    %291 = vector.shape_cast %290 : vector<64xf32> to vector<64x1xf32>
    %292 = tpu.reciprocal %291 {approx = true} : vector<64x1xf32> -> vector<64x1xf32>
    %293 = vector.broadcast %292 : vector<64x1xf32> to vector<64x64xf32>
    %294 = arith.mulf %289, %293 : vector<64x64xf32>
    %295 = arith.truncf %294 : vector<64x64xf32> to vector<64x64xbf16>
    %cst_104 = arith.constant dense<0.000000e+00> : vector<64x16xf32>
    %296 = tpu.matmul %295, %283, %cst_104 {dimension_numbers = #tpu.dot_dimension_numbers<[1], [0], [0], [1], [0, 0, 1, 1], [], []>} : vector<64x64xbf16>, vector<64x16xbf16>, vector<64x16xf32> -> vector<64x16xf32>
    %297 = tpu.concatenate %248, %264, %280, %296 in 1 : vector<64x16xf32>, vector<64x16xf32>, vector<64x16xf32>, vector<64x16xf32> -> vector<64x64xf32>
    %298 = arith.truncf %297 : vector<64x64xf32> to vector<64x64xbf16>
    %c1_105 = arith.constant 1 : index
    %c0_106 = arith.constant 0 : index
    %c0_107 = arith.constant 0 : index
    %299 = vector.load %arg10[%c1_105, %c0_106, %c0_107] : memref<2x64x64xbf16, #tpu.memory_space<vmem>>, vector<1x64x64xbf16>
    %300 = vector.shape_cast %299 : vector<1x64x64xbf16> to vector<64x64xbf16>
    %cst_108 = arith.constant dense<0.000000e+00> : vector<64x64xf32>
    %301 = tpu.matmul %298, %300, %cst_108 {dimension_numbers = #tpu.dot_dimension_numbers<[1], [0], [0], [1], [0, 0, 1, 1], [], []>} : vector<64x64xbf16>, vector<64x64xbf16>, vector<64x64xf32> -> vector<64x64xf32>
    %c1_109 = arith.constant 1 : index
    %c0_110 = arith.constant 0 : index
    %c0_111 = arith.constant 0 : index
    %302 = vector.load %arg11[%c1_109, %c0_110, %c0_111] : memref<2x1x64xf32, #tpu.memory_space<vmem>>, vector<1x1x64xf32>
    %303 = vector.shape_cast %302 : vector<1x1x64xf32> to vector<1x64xf32>
    %304 = vector.broadcast %303 : vector<1x64xf32> to vector<64x64xf32>
    %305 = arith.addf %301, %304 : vector<64x64xf32>
    %306 = vector.broadcast %196 : vector<1x64xf32> to vector<64x64xf32>
    %307 = arith.mulf %306, %305 : vector<64x64xf32>
    %308 = arith.addf %193, %307 : vector<64x64xf32>
    %cst_112 = arith.constant dense<0.000000e+00> : vector<64xf32>
    %309 = vector.multi_reduction <add>, %308, %cst_112 [1] : vector<64x64xf32> to vector<64xf32>
    %310 = vector.shape_cast %309 : vector<64xf32> to vector<64x1xf32>
    %cst_113 = arith.constant 6.400000e+01 : f32
    %311 = vector.broadcast %cst_113 : f32 to vector<64x1xf32>
    %312 = arith.divf %310, %311 : vector<64x1xf32>
    %313 = vector.broadcast %312 : vector<64x1xf32> to vector<64x64xf32>
    %314 = arith.subf %308, %313 : vector<64x64xf32>
    %315 = arith.mulf %314, %314 : vector<64x64xf32>
    %cst_114 = arith.constant dense<0.000000e+00> : vector<64xf32>
    %316 = vector.multi_reduction <add>, %315, %cst_114 [1] : vector<64x64xf32> to vector<64xf32>
    %317 = vector.shape_cast %316 : vector<64xf32> to vector<64x1xf32>
    %cst_115 = arith.constant 6.400000e+01 : f32
    %318 = vector.broadcast %cst_115 : f32 to vector<64x1xf32>
    %319 = arith.divf %317, %318 : vector<64x1xf32>
    %320 = vector.broadcast %312 : vector<64x1xf32> to vector<64x64xf32>
    %321 = arith.subf %308, %320 : vector<64x64xf32>
    %cst_116 = arith.constant 9.99999997E-7 : f32
    %322 = vector.broadcast %cst_116 : f32 to vector<64x1xf32>
    %323 = arith.addf %319, %322 : vector<64x1xf32>
    %324 = math.rsqrt %323 : vector<64x1xf32>
    %325 = vector.broadcast %324 : vector<64x1xf32> to vector<64x64xf32>
    %326 = arith.mulf %321, %325 : vector<64x64xf32>
    %cst_117 = arith.constant 1.000000e+00 : f32
    %327 = vector.broadcast %cst_117 : f32 to vector<1x64xf32>
    %328 = arith.addf %327, %198 : vector<1x64xf32>
    %329 = vector.broadcast %328 : vector<1x64xf32> to vector<64x64xf32>
    %330 = arith.mulf %326, %329 : vector<64x64xf32>
    %331 = vector.broadcast %197 : vector<1x64xf32> to vector<64x64xf32>
    %332 = arith.addf %330, %331 : vector<64x64xf32>
    %c1_118 = arith.constant 1 : index
    %c0_119 = arith.constant 0 : index
    %c0_120 = arith.constant 0 : index
    %333 = vector.load %arg12[%c1_118, %c0_119, %c0_120] : memref<2x64x256xbf16, #tpu.memory_space<vmem>>, vector<1x64x256xbf16>
    %334 = vector.shape_cast %333 : vector<1x64x256xbf16> to vector<64x256xbf16>
    %335 = arith.truncf %332 : vector<64x64xf32> to vector<64x64xbf16>
    %cst_121 = arith.constant dense<0.000000e+00> : vector<64x256xf32>
    %336 = tpu.matmul %335, %334, %cst_121 {dimension_numbers = #tpu.dot_dimension_numbers<[1], [0], [0], [1], [0, 0, 1, 1], [], []>} : vector<64x64xbf16>, vector<64x256xbf16>, vector<64x256xf32> -> vector<64x256xf32>
    %c1_122 = arith.constant 1 : index
    %c0_123 = arith.constant 0 : index
    %c0_124 = arith.constant 0 : index
    %337 = vector.load %arg13[%c1_122, %c0_123, %c0_124] : memref<2x1x256xf32, #tpu.memory_space<vmem>>, vector<1x1x256xf32>
    %338 = vector.shape_cast %337 : vector<1x1x256xf32> to vector<1x256xf32>
    %339 = vector.broadcast %338 : vector<1x256xf32> to vector<64x256xf32>
    %340 = arith.addf %336, %339 : vector<64x256xf32>
    %cst_125 = arith.constant 5.000000e-01 : f32
    %341 = vector.broadcast %cst_125 : f32 to vector<64x256xf32>
    %342 = arith.mulf %341, %340 : vector<64x256xf32>
    %cst_126 = arith.constant 4.471500e-02 : f32
    %343 = vector.broadcast %cst_126 : f32 to vector<64x256xf32>
    %344 = arith.mulf %343, %340 : vector<64x256xf32>
    %345 = arith.mulf %344, %340 : vector<64x256xf32>
    %346 = arith.mulf %345, %340 : vector<64x256xf32>
    %347 = arith.addf %340, %346 : vector<64x256xf32>
    %cst_127 = arith.constant 0.797884583 : f32
    %348 = vector.broadcast %cst_127 : f32 to vector<64x256xf32>
    %349 = arith.mulf %348, %347 : vector<64x256xf32>
    %350 = math.tanh %349 : vector<64x256xf32>
    %cst_128 = arith.constant 1.000000e+00 : f32
    %351 = vector.broadcast %cst_128 : f32 to vector<64x256xf32>
    %352 = arith.addf %351, %350 : vector<64x256xf32>
    %353 = arith.mulf %342, %352 : vector<64x256xf32>
    %c1_129 = arith.constant 1 : index
    %c0_130 = arith.constant 0 : index
    %c0_131 = arith.constant 0 : index
    %354 = vector.load %arg14[%c1_129, %c0_130, %c0_131] : memref<2x256x64xbf16, #tpu.memory_space<vmem>>, vector<1x256x64xbf16>
    %355 = vector.shape_cast %354 : vector<1x256x64xbf16> to vector<256x64xbf16>
    %356 = arith.truncf %353 : vector<64x256xf32> to vector<64x256xbf16>
    %cst_132 = arith.constant dense<0.000000e+00> : vector<64x64xf32>
    %357 = tpu.matmul %356, %355, %cst_132 {dimension_numbers = #tpu.dot_dimension_numbers<[1], [0], [0], [1], [0, 0, 1, 1], [], []>} : vector<64x256xbf16>, vector<256x64xbf16>, vector<64x64xf32> -> vector<64x64xf32>
    %c1_133 = arith.constant 1 : index
    %c0_134 = arith.constant 0 : index
    %c0_135 = arith.constant 0 : index
    %358 = vector.load %arg15[%c1_133, %c0_134, %c0_135] : memref<2x1x64xf32, #tpu.memory_space<vmem>>, vector<1x1x64xf32>
    %359 = vector.shape_cast %358 : vector<1x1x64xf32> to vector<1x64xf32>
    %360 = vector.broadcast %359 : vector<1x64xf32> to vector<64x64xf32>
    %361 = arith.addf %357, %360 : vector<64x64xf32>
    %362 = vector.broadcast %199 : vector<1x64xf32> to vector<64x64xf32>
    %363 = arith.mulf %362, %361 : vector<64x64xf32>
    %364 = arith.addf %308, %363 : vector<64x64xf32>
    %365 = vector.extract_strided_slice %22 {offsets = [0, 768], sizes = [1, 64], strides = [1, 1]} : vector<1x896xf32> to vector<1x64xf32>
    %366 = vector.extract_strided_slice %22 {offsets = [0, 832], sizes = [1, 64], strides = [1, 1]} : vector<1x896xf32> to vector<1x64xf32>
    %cst_136 = arith.constant dense<0.000000e+00> : vector<64xf32>
    %367 = vector.multi_reduction <add>, %364, %cst_136 [1] : vector<64x64xf32> to vector<64xf32>
    %368 = vector.shape_cast %367 : vector<64xf32> to vector<64x1xf32>
    %cst_137 = arith.constant 6.400000e+01 : f32
    %369 = vector.broadcast %cst_137 : f32 to vector<64x1xf32>
    %370 = arith.divf %368, %369 : vector<64x1xf32>
    %371 = vector.broadcast %370 : vector<64x1xf32> to vector<64x64xf32>
    %372 = arith.subf %364, %371 : vector<64x64xf32>
    %373 = arith.mulf %372, %372 : vector<64x64xf32>
    %cst_138 = arith.constant dense<0.000000e+00> : vector<64xf32>
    %374 = vector.multi_reduction <add>, %373, %cst_138 [1] : vector<64x64xf32> to vector<64xf32>
    %375 = vector.shape_cast %374 : vector<64xf32> to vector<64x1xf32>
    %cst_139 = arith.constant 6.400000e+01 : f32
    %376 = vector.broadcast %cst_139 : f32 to vector<64x1xf32>
    %377 = arith.divf %375, %376 : vector<64x1xf32>
    %378 = vector.broadcast %370 : vector<64x1xf32> to vector<64x64xf32>
    %379 = arith.subf %364, %378 : vector<64x64xf32>
    %cst_140 = arith.constant 9.99999997E-7 : f32
    %380 = vector.broadcast %cst_140 : f32 to vector<64x1xf32>
    %381 = arith.addf %377, %380 : vector<64x1xf32>
    %382 = math.rsqrt %381 : vector<64x1xf32>
    %383 = vector.broadcast %382 : vector<64x1xf32> to vector<64x64xf32>
    %384 = arith.mulf %379, %383 : vector<64x64xf32>
    %cst_141 = arith.constant 1.000000e+00 : f32
    %385 = vector.broadcast %cst_141 : f32 to vector<1x64xf32>
    %386 = arith.addf %385, %366 : vector<1x64xf32>
    %387 = vector.broadcast %386 : vector<1x64xf32> to vector<64x64xf32>
    %388 = arith.mulf %384, %387 : vector<64x64xf32>
    %389 = vector.broadcast %365 : vector<1x64xf32> to vector<64x64xf32>
    %390 = arith.addf %388, %389 : vector<64x64xf32>
    %c0_142 = arith.constant 0 : index
    %c0_143 = arith.constant 0 : index
    %391 = vector.load %arg16[%c0_142, %c0_143] : memref<64x32xbf16, #tpu.memory_space<vmem>>, vector<64x32xbf16>
    %392 = arith.truncf %390 : vector<64x64xf32> to vector<64x64xbf16>
    %cst_144 = arith.constant dense<0.000000e+00> : vector<64x32xf32>
    %393 = tpu.matmul %392, %391, %cst_144 {dimension_numbers = #tpu.dot_dimension_numbers<[1], [0], [0], [1], [0, 0, 1, 1], [], []>} : vector<64x64xbf16>, vector<64x32xbf16>, vector<64x32xf32> -> vector<64x32xf32>
    %c0_145 = arith.constant 0 : index
    %c0_146 = arith.constant 0 : index
    %394 = vector.load %arg17[%c0_145, %c0_146] : memref<1x32xf32, #tpu.memory_space<vmem>>, vector<1x32xf32>
    %395 = vector.broadcast %394 : vector<1x32xf32> to vector<64x32xf32>
    %396 = arith.addf %393, %395 : vector<64x32xf32>
    %397 = vector.extract_strided_slice %396 {offsets = [0, 0], sizes = [16, 32], strides = [1, 1]} : vector<64x32xf32> to vector<16x32xf32>
    %398 = vector.extract_strided_slice %396 {offsets = [16, 0], sizes = [16, 32], strides = [1, 1]} : vector<64x32xf32> to vector<16x32xf32>
    %399 = vector.extract_strided_slice %396 {offsets = [32, 0], sizes = [16, 32], strides = [1, 1]} : vector<64x32xf32> to vector<16x32xf32>
    %400 = vector.extract_strided_slice %396 {offsets = [48, 0], sizes = [16, 32], strides = [1, 1]} : vector<64x32xf32> to vector<16x32xf32>
    %401 = tpu.concatenate %397, %398, %399, %400 in 1 : vector<16x32xf32>, vector<16x32xf32>, vector<16x32xf32>, vector<16x32xf32> -> vector<16x128xf32>
    %c0_147 = arith.constant 0 : index
    %c0_148 = arith.constant 0 : index
    %c0_149 = arith.constant 0 : index
    %402 = vector.load %arg18[%c0_147, %c0_148, %c0_149] : memref<1x16x128xf32, #tpu.memory_space<vmem>>, vector<1x16x128xf32>
    %403 = vector.shape_cast %402 : vector<1x16x128xf32> to vector<16x128xf32>
    %404 = vector.shape_cast %401 : vector<16x128xf32> to vector<1x16x128xf32>
    tpu.vector_store %arg18[%c0_147, %c0_148, %c0_149], %404 {strides = array<i32>} : memref<1x16x128xf32, #tpu.memory_space<vmem>>, vector<1x16x128xf32>,
    return
  }
  func.func @transform_0(%arg0: i32) -> (i32, i32, i32) {
    %c0_i32 = arith.constant 0 : i32
    %c0_i32_0 = arith.constant 0 : i32
    %c0_i32_1 = arith.constant 0 : i32
    return %arg0, %c0_i32, %c0_i32_0 : i32, i32, i32
  }
  func.func @transform_1(%arg0: i32) -> (i32, i32) {
    %c0_i32 = arith.constant 0 : i32
    %c0_i32_0 = arith.constant 0 : i32
    %c0_i32_1 = arith.constant 0 : i32
    return %c0_i32, %c0_i32_0 : i32, i32
  }
  func.func @transform_2(%arg0: i32) -> (i32, i32) {
    %c0_i32 = arith.constant 0 : i32
    %c0_i32_0 = arith.constant 0 : i32
    %c0_i32_1 = arith.constant 0 : i32
    return %c0_i32, %c0_i32_0 : i32, i32
  }
  func.func @transform_3(%arg0: i32) -> (i32, i32) {
    %c0_i32 = arith.constant 0 : i32
    %c0_i32_0 = arith.constant 0 : i32
    %c0_i32_1 = arith.constant 0 : i32
    return %c0_i32, %c0_i32_0 : i32, i32
  }
  func.func @transform_4(%arg0: i32) -> (i32, i32, i32) {
    %c0_i32 = arith.constant 0 : i32
    %c0_i32_0 = arith.constant 0 : i32
    %c0_i32_1 = arith.constant 0 : i32
    return %arg0, %c0_i32, %c0_i32_0 : i32, i32, i32
  }
  func.func @transform_5(%arg0: i32) -> (i32, i32) {
    %c0_i32 = arith.constant 0 : i32
    %c0_i32_0 = arith.constant 0 : i32
    %c0_i32_1 = arith.constant 0 : i32
    return %c0_i32, %c0_i32_0 : i32, i32
  }
  func.func @transform_6(%arg0: i32) -> (i32, i32) {
    %c0_i32 = arith.constant 0 : i32
    %c0_i32_0 = arith.constant 0 : i32
    %c0_i32_1 = arith.constant 0 : i32
    return %c0_i32, %c0_i32_0 : i32, i32
  }
  func.func @transform_7(%arg0: i32) -> (i32, i32, i32) {
    %c0_i32 = arith.constant 0 : i32
    %c0_i32_0 = arith.constant 0 : i32
    %c0_i32_1 = arith.constant 0 : i32
    %c0_i32_2 = arith.constant 0 : i32
    return %c0_i32, %c0_i32_0, %c0_i32_1 : i32, i32, i32
  }
  func.func @transform_8(%arg0: i32) -> (i32, i32, i32) {
    %c0_i32 = arith.constant 0 : i32
    %c0_i32_0 = arith.constant 0 : i32
    %c0_i32_1 = arith.constant 0 : i32
    %c0_i32_2 = arith.constant 0 : i32
    return %c0_i32, %c0_i32_0, %c0_i32_1 : i32, i32, i32
  }
  func.func @transform_9(%arg0: i32) -> (i32, i32, i32) {
    %c0_i32 = arith.constant 0 : i32
    %c0_i32_0 = arith.constant 0 : i32
    %c0_i32_1 = arith.constant 0 : i32
    %c0_i32_2 = arith.constant 0 : i32
    return %c0_i32, %c0_i32_0, %c0_i32_1 : i32, i32, i32
  }
  func.func @transform_10(%arg0: i32) -> (i32, i32, i32) {
    %c0_i32 = arith.constant 0 : i32
    %c0_i32_0 = arith.constant 0 : i32
    %c0_i32_1 = arith.constant 0 : i32
    %c0_i32_2 = arith.constant 0 : i32
    return %c0_i32, %c0_i32_0, %c0_i32_1 : i32, i32, i32
  }
  func.func @transform_11(%arg0: i32) -> (i32, i32, i32) {
    %c0_i32 = arith.constant 0 : i32
    %c0_i32_0 = arith.constant 0 : i32
    %c0_i32_1 = arith.constant 0 : i32
    %c0_i32_2 = arith.constant 0 : i32
    return %c0_i32, %c0_i32_0, %c0_i32_1 : i32, i32, i32
  }
  func.func @transform_12(%arg0: i32) -> (i32, i32, i32) {
    %c0_i32 = arith.constant 0 : i32
    %c0_i32_0 = arith.constant 0 : i32
    %c0_i32_1 = arith.constant 0 : i32
    %c0_i32_2 = arith.constant 0 : i32
    return %c0_i32, %c0_i32_0, %c0_i32_1 : i32, i32, i32
  }
  func.func @transform_13(%arg0: i32) -> (i32, i32, i32) {
    %c0_i32 = arith.constant 0 : i32
    %c0_i32_0 = arith.constant 0 : i32
    %c0_i32_1 = arith.constant 0 : i32
    %c0_i32_2 = arith.constant 0 : i32
    return %c0_i32, %c0_i32_0, %c0_i32_1 : i32, i32, i32
  }
  func.func @transform_14(%arg0: i32) -> (i32, i32, i32) {
    %c0_i32 = arith.constant 0 : i32
    %c0_i32_0 = arith.constant 0 : i32
    %c0_i32_1 = arith.constant 0 : i32
    %c0_i32_2 = arith.constant 0 : i32
    return %c0_i32, %c0_i32_0, %c0_i32_1 : i32, i32, i32
  }
  func.func @transform_15(%arg0: i32) -> (i32, i32) {
    %c0_i32 = arith.constant 0 : i32
    %c0_i32_0 = arith.constant 0 : i32
    %c0_i32_1 = arith.constant 0 : i32
    return %c0_i32, %c0_i32_0 : i32, i32
  }
  func.func @transform_16(%arg0: i32) -> (i32, i32) {
    %c0_i32 = arith.constant 0 : i32
    %c0_i32_0 = arith.constant 0 : i32
    %c0_i32_1 = arith.constant 0 : i32
    return %c0_i32, %c0_i32_0 : i32, i32
  }
  func.func @transform_17(%arg0: i32) -> (i32, i32, i32) {
    %c0_i32 = arith.constant 0 : i32
    %c0_i32_0 = arith.constant 0 : i32
    %c0_i32_1 = arith.constant 0 : i32
    return %arg0, %c0_i32, %c0_i32_0 : i32, i32, i32
  }
}

</mosaic_0001>

<llo_original>
// kernel: dit_forward.1
$region0: #{dit_forward.1}
  #allocation0 [shape = 'u32[]', space=smem, size = 0x4, offset = 0x4, fixed_abs, tag = 'smem constant byte address 0x4 - core index']
  #allocation1 [shape = 'u32[144,128]{1,0:T(1,128)}', space=vmem, size = 0x12000, scoped, tag = 'internal scratch']
  %s0 = inlined_call_operand.vmem [shape: f32[2,64,16], index: 0, kind: input, shape index: {}]
  %s1 = inlined_call_operand.vmem [shape: f32[64,64], index: 1, kind: input, shape index: {}]
  %s2 = inlined_call_operand.vmem [shape: bf16[16,64], index: 2, kind: input, shape index: {}]
  %s3 = inlined_call_operand.vmem [shape: f32[1,64], index: 3, kind: input, shape index: {}]
  %s4 = inlined_call_operand.vmem [shape: f32[2,1,64], index: 4, kind: input, shape index: {}]
  %s5 = inlined_call_operand.vmem [shape: bf16[64,896], index: 5, kind: input, shape index: {}]
  %s6 = inlined_call_operand.vmem [shape: f32[1,896], index: 6, kind: input, shape index: {}]
  %s7 = inlined_call_operand.vmem [shape: bf16[2,64,192], index: 7, kind: input, shape index: {}]
  %s8 = inlined_call_operand.vmem [shape: f32[2,1,192], index: 8, kind: input, shape index: {}]
  %s9 = inlined_call_operand.vmem [shape: bf16[2,64,64], index: 9, kind: input, shape index: {}]
  %s10 = inlined_call_operand.vmem [shape: f32[2,1,64], index: 10, kind: input, shape index: {}]
  %s11 = inlined_call_operand.vmem [shape: bf16[2,64,256], index: 11, kind: input, shape index: {}]
  %s12 = inlined_call_operand.vmem [shape: f32[2,1,256], index: 12, kind: input, shape index: {}]
  %s13 = inlined_call_operand.vmem [shape: bf16[2,256,64], index: 13, kind: input, shape index: {}]
  %s14 = inlined_call_operand.vmem [shape: f32[2,1,64], index: 14, kind: input, shape index: {}]
  %s15 = inlined_call_operand.vmem [shape: bf16[64,32], index: 15, kind: input, shape index: {}]
  %s16 = inlined_call_operand.vmem [shape: f32[1,32], index: 16, kind: input, shape index: {}]
  %s17 = inlined_call_operand.vmem [shape: f32[2,16,128], index: 17, kind: output, shape index: {}]
  %s18 = sld [smem:[#allocation0]]
  $region101: #{dit_forward.1} parent=0
    _
  %s20 = ssub.s32 1, %s18
  %s21 = scalar_select 0, %s20, %s18
  loop: start=0, step=1, limit=4
  $region2: #{dit_forward.1} parent=0 // loop_pre_header
    _
  $region3: #{dit_forward.1} parent=0 // loop_header
    %s23 = sphi 0, %s27
    %p24 = scmp.ge.s32.totalorder %s23, 4
    %s33 = sphi 0, %s35
    %s36 = sphi 0, %s33
    %s37 = sphi 0, %s36
    %s53 = sphi 0, %s37
    %s57 = sphi 0, %s57
    %s59 = sphi 0, %s57
    %s60 = sphi 0, %s59
    %s74 = sphi 0, %s60
    %s78 = sphi 0, %s78
    %s80 = sphi 0, %s78
    %s81 = sphi 0, %s80
    %s95 = sphi 0, %s81
    %s99 = sphi 0, %s99
    %s101 = sphi 0, %s99
    %s102 = sphi 0, %s101
    %s116 = sphi 0, %s102
    %s122 = sphi 0, %s124
    %s125 = sphi 0, %s122
    %s126 = sphi 0, %s125
    %s142 = sphi 0, %s126
    %s146 = sphi 0, %s146
    %s148 = sphi 0, %s146
    %s149 = sphi 0, %s148
    %s163 = sphi 0, %s149
    %s167 = sphi 0, %s167
    %s169 = sphi 0, %s167
    %s170 = sphi 0, %s169
    %s184 = sphi 0, %s170
    %s188 = sphi 0, %s188
    %s190 = sphi 0, %s188
    %s191 = sphi 0, %s190
    %s205 = sphi 0, %s191
    %s209 = sphi 0, %s209
    %s211 = sphi 0, %s209
    %s212 = sphi 0, %s211
    %s226 = sphi 0, %s212
    %s230 = sphi 0, %s230
    %s232 = sphi 0, %s230
    %s233 = sphi 0, %s232
    %s247 = sphi 0, %s233
    %s251 = sphi 0, %s251
    %s253 = sphi 0, %s251
    %s254 = sphi 0, %s253
    %s268 = sphi 0, %s254
    %s272 = sphi 0, %s272
    %s274 = sphi 0, %s272
    %s275 = sphi 0, %s274
    %s289 = sphi 0, %s275
    %s293 = sphi 0, %s293
    %s295 = sphi 0, %s293
    %s296 = sphi 0, %s295
    %s310 = sphi 0, %s296
    %s314 = sphi 0, %s314
    %s316 = sphi 0, %s314
    %s317 = sphi 0, %s316
    %s331 = sphi 0, %s317
    %s335 = sphi 0, %s335
    %s337 = sphi 0, %s335
    %s338 = sphi 0, %s337
    %s352 = sphi 0, %s338
    %s356 = sphi 0, %s356
    %s358 = sphi 0, %s356
    %s359 = sphi 0, %s358
    %s373 = sphi 0, %s359
    %s377 = sphi 0, %s377
    %s379 = sphi 0, %s377
    %s380 = sphi 0, %s379
    %s394 = sphi 0, %s380
    %s400 = sphi 0, %s402
    %s403 = sphi 0, %s400
    %s404 = sphi 0, %s403
    %s420 = sphi 0, %s404
  $region4: #{dit_forward.1} parent=0 // loop_header_branch
    %26 = sbr.rel (%p24) target = $region8
  $region5: #{dit_forward.1} parent=0 // loop_body
    %s28 = ssub.s32 %s23, 1
    %s29 = ssub.s32 %s23, 2
    %s30 = sadd.s32 %s23, 1
    %s31 = ssub.s32 %s23, %s30
    %p32 = scmp.eq.s32.totalorder %s31, 0
    %s34 = sadd.s32 %s33, 1
    %s35 = scalar_select %p32, %s33, %s34
    %p38 = pneg %p32
    %p39 = scmp.eq.s32.totalorder %s23, 1
    %p40 = por %p38, %p39
    %p41 = scmp.ne.s32.totalorder %s33, %s36
    %p42 = scmp.eq.s32.totalorder %s23, 0
    %p43 = por %p41, %p42
    %p44 = scmp.ne.s32.totalorder %s33, %s36
    %p45 = scmp.eq.s32.totalorder %s28, 1
    %p46 = por %p44, %p45
    %p47 = scmp.ne.s32.totalorder %s36, %s37
    %p48 = scmp.eq.s32.totalorder %s28, 0
    %p49 = por %p47, %p48
    %p50 = scmp.ne.s32.totalorder %s36, %s37
    %p51 = scmp.eq.s32.totalorder %s29, 1
    %p52 = por %p50, %p51
    %p54 = scmp.ne.s32.totalorder %s37, %s53
    %p55 = scmp.eq.s32.totalorder %s29, 0
    %p56 = por %p54, %p55
    %s58 = sadd.s32 %s57, 1
    %p61 = scmp.eq.s32.totalorder %s23, 1
    %p62 = scmp.ne.s32.totalorder %s57, %s59
    %p63 = scmp.eq.s32.totalorder %s23, 0
    %p64 = por %p62, %p63
    %p65 = scmp.ne.s32.totalorder %s57, %s59
    %p66 = scmp.eq.s32.totalorder %s28, 1
    %p67 = por %p65, %p66
    %p68 = scmp.ne.s32.totalorder %s59, %s60
    %p69 = scmp.eq.s32.totalorder %s28, 0
    %p70 = por %p68, %p69
    %p71 = scmp.ne.s32.totalorder %s59, %s60
    %p72 = scmp.eq.s32.totalorder %s29, 1
    %p73 = por %p71, %p72
    %p75 = scmp.ne.s32.totalorder %s60, %s74
    %p76 = scmp.eq.s32.totalorder %s29, 0
    %p77 = por %p75, %p76
    %s79 = sadd.s32 %s78, 1
    %p82 = scmp.eq.s32.totalorder %s23, 1
    %p83 = scmp.ne.s32.totalorder %s78, %s80
    %p84 = scmp.eq.s32.totalorder %s23, 0
    %p85 = por %p83, %p84
    %p86 = scmp.ne.s32.totalorder %s78, %s80
    %p87 = scmp.eq.s32.totalorder %s28, 1
    %p88 = por %p86, %p87
    %p89 = scmp.ne.s32.totalorder %s80, %s81
    %p90 = scmp.eq.s32.totalorder %s28, 0
    %p91 = por %p89, %p90
    %p92 = scmp.ne.s32.totalorder %s80, %s81
    %p93 = scmp.eq.s32.totalorder %s29, 1
    %p94 = por %p92, %p93
    %p96 = scmp.ne.s32.totalorder %s81, %s95
    %p97 = scmp.eq.s32.totalorder %s29, 0
    %p98 = por %p96, %p97
    %s100 = sadd.s32 %s99, 1
    %p103 = scmp.eq.s32.totalorder %s23, 1
    %p104 = scmp.ne.s32.totalorder %s99, %s101
    %p105 = scmp.eq.s32.totalorder %s23, 0
    %p106 = por %p104, %p105
    %p107 = scmp.ne.s32.totalorder %s99, %s101
    %p108 = scmp.eq.s32.totalorder %s28, 1
    %p109 = por %p107, %p108
    %p110 = scmp.ne.s32.totalorder %s101, %s102
    %p111 = scmp.eq.s32.totalorder %s28, 0
    %p112 = por %p110, %p111
    %p113 = scmp.ne.s32.totalorder %s101, %s102
    %p114 = scmp.eq.s32.totalorder %s29, 1
    %p115 = por %p113, %p114
    %p117 = scmp.ne.s32.totalorder %s102, %s116
    %p118 = scmp.eq.s32.totalorder %s29, 0
    %p119 = por %p117, %p118
    %s120 = ssub.s32 %s23, %s30
    %p121 = scmp.eq.s32.totalorder %s120, 0
    %s123 = sadd.s32 %s122, 1
    %s124 = scalar_select %p121, %s122, %s123
    %p127 = pneg %p121
    %p128 = scmp.eq.s32.totalorder %s23, 1
    %p129 = por %p127, %p128
    %p130 = scmp.ne.s32.totalorder %s122, %s125
    %p131 = scmp.eq.s32.totalorder %s23, 0
    %p132 = por %p130, %p131
    %p133 = scmp.ne.s32.totalorder %s122, %s125
    %p134 = scmp.eq.s32.totalorder %s28, 1
    %p135 = por %p133, %p134
    %p136 = scmp.ne.s32.totalorder %s125, %s126
    %p137 = scmp.eq.s32.totalorder %s28, 0
    %p138 = por %p136, %p137
    %p139 = scmp.ne.s32.totalorder %s125, %s126
    %p140 = scmp.eq.s32.totalorder %s29, 1
    %p141 = por %p139, %p140
    %p143 = scmp.ne.s32.totalorder %s126, %s142
    %p144 = scmp.eq.s32.totalorder %s29, 0
    %p145 = por %p143, %p144
    %s147 = sadd.s32 %s146, 1
    %p150 = scmp.eq.s32.totalorder %s23, 1
    %p151 = scmp.ne.s32.totalorder %s146, %s148
    %p152 = scmp.eq.s32.totalorder %s23, 0
    %p153 = por %p151, %p152
    %p154 = scmp.ne.s32.totalorder %s146, %s148
    %p155 = scmp.eq.s32.totalorder %s28, 1
    %p156 = por %p154, %p155
    %p157 = scmp.ne.s32.totalorder %s148, %s149
    %p158 = scmp.eq.s32.totalorder %s28, 0
    %p159 = por %p157, %p158
    %p160 = scmp.ne.s32.totalorder %s148, %s149
    %p161 = scmp.eq.s32.totalorder %s29, 1
    %p162 = por %p160, %p161
    %p164 = scmp.ne.s32.totalorder %s149, %s163
    %p165 = scmp.eq.s32.totalorder %s29, 0
    %p166 = por %p164, %p165
    %s168 = sadd.s32 %s167, 1
    %p171 = scmp.eq.s32.totalorder %s23, 1
    %p172 = scmp.ne.s32.totalorder %s167, %s169
    %p173 = scmp.eq.s32.totalorder %s23, 0
    %p174 = por %p172, %p173
    %p175 = scmp.ne.s32.totalorder %s167, %s169
    %p176 = scmp.eq.s32.totalorder %s28, 1
    %p177 = por %p175, %p176
    %p178 = scmp.ne.s32.totalorder %s169, %s170
    %p179 = scmp.eq.s32.totalorder %s28, 0
    %p180 = por %p178, %p179
    %p181 = scmp.ne.s32.totalorder %s169, %s170
    %p182 = scmp.eq.s32.totalorder %s29, 1
    %p183 = por %p181, %p182
    %p185 = scmp.ne.s32.totalorder %s170, %s184
    %p186 = scmp.eq.s32.totalorder %s29, 0
    %p187 = por %p185, %p186
    %s189 = sadd.s32 %s188, 1
    %p192 = scmp.eq.s32.totalorder %s23, 1
    %p193 = scmp.ne.s32.totalorder %s188, %s190
    %p194 = scmp.eq.s32.totalorder %s23, 0
    %p195 = por %p193, %p194
    %p196 = scmp.ne.s32.totalorder %s188, %s190
    %p197 = scmp.eq.s32.totalorder %s28, 1
    %p198 = por %p196, %p197
    %p199 = scmp.ne.s32.totalorder %s190, %s191
    %p200 = scmp.eq.s32.totalorder %s28, 0
    %p201 = por %p199, %p200
    %p202 = scmp.ne.s32.totalorder %s190, %s191
    %p203 = scmp.eq.s32.totalorder %s29, 1
    %p204 = por %p202, %p203
    %p206 = scmp.ne.s32.totalorder %s191, %s205
    %p207 = scmp.eq.s32.totalorder %s29, 0
    %p208 = por %p206, %p207
    %s210 = sadd.s32 %s209, 1
    %p213 = scmp.eq.s32.totalorder %s23, 1
    %p214 = scmp.ne.s32.totalorder %s209, %s211
    %p215 = scmp.eq.s32.totalorder %s23, 0
    %p216 = por %p214, %p215
    %p217 = scmp.ne.s32.totalorder %s209, %s211
    %p218 = scmp.eq.s32.totalorder %s28, 1
    %p219 = por %p217, %p218
    %p220 = scmp.ne.s32.totalorder %s211, %s212
    %p221 = scmp.eq.s32.totalorder %s28, 0
    %p222 = por %p220, %p221
    %p223 = scmp.ne.s32.totalorder %s211, %s212
    %p224 = scmp.eq.s32.totalorder %s29, 1
    %p225 = por %p223, %p224
    %p227 = scmp.ne.s32.totalorder %s212, %s226
    %p228 = scmp.eq.s32.totalorder %s29, 0
    %p229 = por %p227, %p228
    %s231 = sadd.s32 %s230, 1
    %p234 = scmp.eq.s32.totalorder %s23, 1
    %p235 = scmp.ne.s32.totalorder %s230, %s232
    %p236 = scmp.eq.s32.totalorder %s23, 0
    %p237 = por %p235, %p236
    %p238 = scmp.ne.s32.totalorder %s230, %s232
    %p239 = scmp.eq.s32.totalorder %s28, 1
    %p240 = por %p238, %p239
    %p241 = scmp.ne.s32.totalorder %s232, %s233
    %p242 = scmp.eq.s32.totalorder %s28, 0
    %p243 = por %p241, %p242
    %p244 = scmp.ne.s32.totalorder %s232, %s233
    %p245 = scmp.eq.s32.totalorder %s29, 1
    %p246 = por %p244, %p245
    %p248 = scmp.ne.s32.totalorder %s233, %s247
    %p249 = scmp.eq.s32.totalorder %s29, 0
    %p250 = por %p248, %p249
    %s252 = sadd.s32 %s251, 1
    %p255 = scmp.eq.s32.totalorder %s23, 1
    %p256 = scmp.ne.s32.totalorder %s251, %s253
    %p257 = scmp.eq.s32.totalorder %s23, 0
    %p258 = por %p256, %p257
    %p259 = scmp.ne.s32.totalorder %s251, %s253
    %p260 = scmp.eq.s32.totalorder %s28, 1
    %p261 = por %p259, %p260
    %p262 = scmp.ne.s32.totalorder %s253, %s254
    %p263 = scmp.eq.s32.totalorder %s28, 0
    %p264 = por %p262, %p263
    %p265 = scmp.ne.s32.totalorder %s253, %s254
    %p266 = scmp.eq.s32.totalorder %s29, 1
    %p267 = por %p265, %p266
    %p269 = scmp.ne.s32.totalorder %s254, %s268
    %p270 = scmp.eq.s32.totalorder %s29, 0
    %p271 = por %p269, %p270
    %s273 = sadd.s32 %s272, 1
    %p276 = scmp.eq.s32.totalorder %s23, 1
    %p277 = scmp.ne.s32.totalorder %s272, %s274
    %p278 = scmp.eq.s32.totalorder %s23, 0
    %p279 = por %p277, %p278
    %p280 = scmp.ne.s32.totalorder %s272, %s274
    %p281 = scmp.eq.s32.totalorder %s28, 1
    %p282 = por %p280, %p281
    %p283 = scmp.ne.s32.totalorder %s274, %s275
    %p284 = scmp.eq.s32.totalorder %s28, 0
    %p285 = por %p283, %p284
    %p286 = scmp.ne.s32.totalorder %s274, %s275
    %p287 = scmp.eq.s32.totalorder %s29, 1
    %p288 = por %p286, %p287
    %p290 = scmp.ne.s32.totalorder %s275, %s289
    %p291 = scmp.eq.s32.totalorder %s29, 0
    %p292 = por %p290, %p291
    %s294 = sadd.s32 %s293, 1
    %p297 = scmp.eq.s32.totalorder %s23, 1
    %p298 = scmp.ne.s32.totalorder %s293, %s295
    %p299 = scmp.eq.s32.totalorder %s23, 0
    %p300 = por %p298, %p299
    %p301 = scmp.ne.s32.totalorder %s293, %s295
    %p302 = scmp.eq.s32.totalorder %s28, 1
    %p303 = por %p301, %p302
    %p304 = scmp.ne.s32.totalorder %s295, %s296
    %p305 = scmp.eq.s32.totalorder %s28, 0
    %p306 = por %p304, %p305
    %p307 = scmp.ne.s32.totalorder %s295, %s296
    %p308 = scmp.eq.s32.totalorder %s29, 1
    %p309 = por %p307, %p308
    %p311 = scmp.ne.s32.totalorder %s296, %s310
    %p312 = scmp.eq.s32.totalorder %s29, 0
    %p313 = por %p311, %p312
    %s315 = sadd.s32 %s314, 1
    %p318 = scmp.eq.s32.totalorder %s23, 1
    %p319 = scmp.ne.s32.totalorder %s314, %s316
    %p320 = scmp.eq.s32.totalorder %s23, 0
    %p321 = por %p319, %p320
    %p322 = scmp.ne.s32.totalorder %s314, %s316
    %p323 = scmp.eq.s32.totalorder %s28, 1
    %p324 = por %p322, %p323
    %p325 = scmp.ne.s32.totalorder %s316, %s317
    %p326 = scmp.eq.s32.totalorder %s28, 0
    %p327 = por %p325, %p326
    %p328 = scmp.ne.s32.totalorder %s316, %s317
    %p329 = scmp.eq.s32.totalorder %s29, 1
    %p330 = por %p328, %p329
    %p332 = scmp.ne.s32.totalorder %s317, %s331
    %p333 = scmp.eq.s32.totalorder %s29, 0
    %p334 = por %p332, %p333
    %s336 = sadd.s32 %s335, 1
    %p339 = scmp.eq.s32.totalorder %s23, 1
    %p340 = scmp.ne.s32.totalorder %s335, %s337
    %p341 = scmp.eq.s32.totalorder %s23, 0
    %p342 = por %p340, %p341
    %p343 = scmp.ne.s32.totalorder %s335, %s337
    %p344 = scmp.eq.s32.totalorder %s28, 1
    %p345 = por %p343, %p344
    %p346 = scmp.ne.s32.totalorder %s337, %s338
    %p347 = scmp.eq.s32.totalorder %s28, 0
    %p348 = por %p346, %p347
    %p349 = scmp.ne.s32.totalorder %s337, %s338
    %p350 = scmp.eq.s32.totalorder %s29, 1
    %p351 = por %p349, %p350
    %p353 = scmp.ne.s32.totalorder %s338, %s352
    %p354 = scmp.eq.s32.totalorder %s29, 0
    %p355 = por %p353, %p354
    %s357 = sadd.s32 %s356, 1
    %p360 = scmp.eq.s32.totalorder %s23, 1
    %p361 = scmp.ne.s32.totalorder %s356, %s358
    %p362 = scmp.eq.s32.totalorder %s23, 0
    %p363 = por %p361, %p362
    %p364 = scmp.ne.s32.totalorder %s356, %s358
    %p365 = scmp.eq.s32.totalorder %s28, 1
    %p366 = por %p364, %p365
    %p367 = scmp.ne.s32.totalorder %s358, %s359
    %p368 = scmp.eq.s32.totalorder %s28, 0
    %p369 = por %p367, %p368
    %p370 = scmp.ne.s32.totalorder %s358, %s359
    %p371 = scmp.eq.s32.totalorder %s29, 1
    %p372 = por %p370, %p371
    %p374 = scmp.ne.s32.totalorder %s359, %s373
    %p375 = scmp.eq.s32.totalorder %s29, 0
    %p376 = por %p374, %p375
    %s378 = sadd.s32 %s377, 1
    %p381 = scmp.eq.s32.totalorder %s23, 1
    %p382 = scmp.ne.s32.totalorder %s377, %s379
    %p383 = scmp.eq.s32.totalorder %s23, 0
    %p384 = por %p382, %p383
    %p385 = scmp.ne.s32.totalorder %s377, %s379
    %p386 = scmp.eq.s32.totalorder %s28, 1
    %p387 = por %p385, %p386
    %p388 = scmp.ne.s32.totalorder %s379, %s380
    %p389 = scmp.eq.s32.totalorder %s28, 0
    %p390 = por %p388, %p389
    %p391 = scmp.ne.s32.totalorder %s379, %s380
    %p392 = scmp.eq.s32.totalorder %s29, 1
    %p393 = por %p391, %p392
    %p395 = scmp.ne.s32.totalorder %s380, %s394
    %p396 = scmp.eq.s32.totalorder %s29, 0
    %p397 = por %p395, %p396
    %s398 = ssub.s32 %s23, %s30
    %p399 = scmp.eq.s32.totalorder %s398, 0
    %s401 = sadd.s32 %s400, 1
    %s402 = scalar_select %p399, %s400, %s401
    %p405 = pneg %p399
    %p406 = scmp.eq.s32.totalorder %s23, 1
    %p407 = por %p405, %p406
    %p408 = scmp.ne.s32.totalorder %s400, %s403
    %p409 = scmp.eq.s32.totalorder %s23, 0
    %p410 = por %p408, %p409
    %p411 = scmp.ne.s32.totalorder %s400, %s403
    %p412 = scmp.eq.s32.totalorder %s28, 1
    %p413 = por %p411, %p412
    %p414 = scmp.ne.s32.totalorder %s403, %s404
    %p415 = scmp.eq.s32.totalorder %s28, 0
    %p416 = por %p414, %p415
    %p417 = scmp.ne.s32.totalorder %s403, %s404
    %p418 = scmp.eq.s32.totalorder %s29, 1
    %p419 = por %p417, %p418
    %p421 = scmp.ne.s32.totalorder %s404, %s420
    %p422 = scmp.eq.s32.totalorder %s29, 0
    %p423 = por %p421, %p422
    %p424 = scmp.le.s32.totalorder 1, %s23
    %p425 = scmp.lt.s32.totalorder %s23, 3
    %p426 = pnand %p424, %p425
    %p427 = pneg %p426
    // Predicated region
    $region9: #{dit_forward.1} parent=5 // pred_check
      _
    $region10: #{dit_forward.1} parent=5 // pred_check_branch
      %429 = sbr.rel (%p426) target = $region12
    $region11: #{dit_forward.1} parent=5 // pred_region
      %s430 = ssub.s32 %s23, 1
      // Predicated region
      $region13: #{dit_forward.1} parent=11 // pred_check
        %p431 = pneg %p70
      $region14: #{dit_forward.1} parent=11 // pred_check_branch
        %433 = sbr.rel (%p431) target = $region16
      $region15: #{dit_forward.1} parent=11 // pred_region
        _
      $region16: #{dit_forward.1} parent=11 // pred_fallthru
        _
      // Predicated region
      $region17: #{dit_forward.1} parent=11 // pred_check
        %p434 = pneg %p91
      $region18: #{dit_forward.1} parent=11 // pred_check_branch
        %436 = sbr.rel (%p434) target = $region20
      $region19: #{dit_forward.1} parent=11 // pred_region
        _
      $region20: #{dit_forward.1} parent=11 // pred_fallthru
        _
      // Predicated region
      $region21: #{dit_forward.1} parent=11 // pred_check
        %p437 = pneg %p112
      $region22: #{dit_forward.1} parent=11 // pred_check_branch
        %439 = sbr.rel (%p437) target = $region24
      $region23: #{dit_forward.1} parent=11 // pred_region
        _
      $region24: #{dit_forward.1} parent=11 // pred_fallthru
        _
      // Predicated region
      $region25: #{dit_forward.1} parent=11 // pred_check
        %p440 = pneg %p159
      $region26: #{dit_forward.1} parent=11 // pred_check_branch
        %442 = sbr.rel (%p440) target = $region28
      $region27: #{dit_forward.1} parent=11 // pred_region
        _
      $region28: #{dit_forward.1} parent=11 // pred_fallthru
        _
      // Predicated region
      $region29: #{dit_forward.1} parent=11 // pred_check
        %p443 = pneg %p180
      $region30: #{dit_forward.1} parent=11 // pred_check_branch
        %445 = sbr.rel (%p443) target = $region32
      $region31: #{dit_forward.1} parent=11 // pred_region
        _
      $region32: #{dit_forward.1} parent=11 // pred_fallthru
        _
      // Predicated region
      $region33: #{dit_forward.1} parent=11 // pred_check
        %p446 = pneg %p201
      $region34: #{dit_forward.1} parent=11 // pred_check_branch
        %448 = sbr.rel (%p446) target = $region36
      $region35: #{dit_forward.1} parent=11 // pred_region
        _
      $region36: #{dit_forward.1} parent=11 // pred_fallthru
        _
      // Predicated region
      $region37: #{dit_forward.1} parent=11 // pred_check
        %p449 = pneg %p222
      $region38: #{dit_forward.1} parent=11 // pred_check_branch
        %451 = sbr.rel (%p449) target = $region40
      $region39: #{dit_forward.1} parent=11 // pred_region
        _
      $region40: #{dit_forward.1} parent=11 // pred_fallthru
        _
      // Predicated region
      $region41: #{dit_forward.1} parent=11 // pred_check
        %p452 = pneg %p243
      $region42: #{dit_forward.1} parent=11 // pred_check_branch
        %454 = sbr.rel (%p452) target = $region44
      $region43: #{dit_forward.1} parent=11 // pred_region
        _
      $region44: #{dit_forward.1} parent=11 // pred_fallthru
        _
      // Predicated region
      $region45: #{dit_forward.1} parent=11 // pred_check
        %p455 = pneg %p264
      $region46: #{dit_forward.1} parent=11 // pred_check_branch
        %457 = sbr.rel (%p455) target = $region48
      $region47: #{dit_forward.1} parent=11 // pred_region
        _
      $region48: #{dit_forward.1} parent=11 // pred_fallthru
        _
      // Predicated region
      $region49: #{dit_forward.1} parent=11 // pred_check
        %p458 = pneg %p285
      $region50: #{dit_forward.1} parent=11 // pred_check_branch
        %460 = sbr.rel (%p458) target = $region52
      $region51: #{dit_forward.1} parent=11 // pred_region
        _
      $region52: #{dit_forward.1} parent=11 // pred_fallthru
        _
      // Predicated region
      $region53: #{dit_forward.1} parent=11 // pred_check
        %p461 = pneg %p306
      $region54: #{dit_forward.1} parent=11 // pred_check_branch
        %463 = sbr.rel (%p461) target = $region56
      $region55: #{dit_forward.1} parent=11 // pred_region
        _
      $region56: #{dit_forward.1} parent=11 // pred_fallthru
        _
      // Predicated region
      $region57: #{dit_forward.1} parent=11 // pred_check
        %p464 = pneg %p327
      $region58: #{dit_forward.1} parent=11 // pred_check_branch
        %466 = sbr.rel (%p464) target = $region60
      $region59: #{dit_forward.1} parent=11 // pred_region
        _
      $region60: #{dit_forward.1} parent=11 // pred_fallthru
        _
      // Predicated region
      $region61: #{dit_forward.1} parent=11 // pred_check
        %p467 = pneg %p348
      $region62: #{dit_forward.1} parent=11 // pred_check_branch
        %469 = sbr.rel (%p467) target = $region64
      $region63: #{dit_forward.1} parent=11 // pred_region
        _
      $region64: #{dit_forward.1} parent=11 // pred_fallthru
        _
      // Predicated region
      $region65: #{dit_forward.1} parent=11 // pred_check
        %p470 = pneg %p369
      $region66: #{dit_forward.1} parent=11 // pred_check_branch
        %472 = sbr.rel (%p470) target = $region68
      $region67: #{dit_forward.1} parent=11 // pred_region
        _
      $region68: #{dit_forward.1} parent=11 // pred_fallthru
        _
      // Predicated region
      $region69: #{dit_forward.1} parent=11 // pred_check
        %p473 = pneg %p390
      $region70: #{dit_forward.1} parent=11 // pred_check_branch
        %475 = sbr.rel (%p473) target = $region72
      $region71: #{dit_forward.1} parent=11 // pred_region
        _
      $region72: #{dit_forward.1} parent=11 // pred_fallthru
        _
    $region12: #{dit_forward.1} parent=5 // pred_fallthru
      _
    %p476 = scmp.lt.s32.totalorder %s23, 2
    // Predicated region
    $region73: #{dit_forward.1} parent=5 // pred_check
      %p477 = pneg %p476
    $region74: #{dit_forward.1} parent=5 // pred_check_branch
      %479 = sbr.rel (%p477) target = $region76
    $region75: #{dit_forward.1} parent=5 // pred_region
      // Predicated region
      $region77: #{dit_forward.1} parent=75 // pred_check
        %p480 = pneg %p43
      $region78: #{dit_forward.1} parent=75 // pred_check_branch
        %482 = sbr.rel (%p480) target = $region80
      $region79: #{dit_forward.1} parent=75 // pred_region
        %p483 = scmp.lt.s32.totalorder %s23, 1
        %s484 = scalar_select %p483, %s23, 1
        %s485 = smul.addr %s484, 8
        %s486 = smul.addr %s485, 8
        %s487 = scalar_lea.vmem %s0, %s486
      $region80: #{dit_forward.1} parent=75 // pred_fallthru
        _
      // Predicated region
      $region81: #{dit_forward.1} parent=75 // pred_check
        %p488 = pneg %p132
      $region82: #{dit_forward.1} parent=75 // pred_check_branch
        %490 = sbr.rel (%p488) target = $region84
      $region83: #{dit_forward.1} parent=75 // pred_region
        %p491 = scmp.lt.s32.totalorder %s23, 1
        %s492 = scalar_select %p491, %s23, 1
        %s493 = scalar_lea.vmem %s4, %s492
      $region84: #{dit_forward.1} parent=75 // pred_fallthru
        _
    $region76: #{dit_forward.1} parent=5 // pred_fallthru
      _
    %p494 = scmp.le.s32.totalorder 1, %s23
    %p495 = scmp.lt.s32.totalorder %s23, 3
    %p496 = pnand %p494, %p495
    %p497 = pneg %p496
    // Predicated region
    $region85: #{dit_forward.1} parent=5 // pred_check
      _
    $region86: #{dit_forward.1} parent=5 // pred_check_branch
      %499 = sbr.rel (%p496) target = $region88
    $region87: #{dit_forward.1} parent=5 // pred_region
      %s500 = ssub.s32 %s23, 1
      %p501 = scmp.lt.s32.totalorder %s28, 1
      %s502 = scalar_select %p501, %s28, 1
      %s503 = smul.addr %s502, 8
      %s504 = smul.addr %s503, 8
      %s505 = scalar_lea.vmem %s0, %s504
      %p506 = pneg %p49
      %p507 = pneg %p46
      %p508 = pneg %p70
      %p509 = pneg %p67
      %p510 = pneg %p91
      %p511 = pneg %p88
      %p512 = pneg %p112
      %p513 = pneg %p109
      %p514 = scmp.lt.s32.totalorder %s28, 1
      %s515 = scalar_select %p514, %s28, 1
      %s516 = scalar_lea.vmem %s4, %s515
      %p517 = pneg %p138
      %p518 = pneg %p135
      %p519 = pneg %p159
      %p520 = pneg %p156
      %p521 = pneg %p180
      %p522 = pneg %p177
      %p523 = pneg %p201
      %p524 = pneg %p198
      %p525 = pneg %p222
      %p526 = pneg %p219
      %p527 = pneg %p243
      %p528 = pneg %p240
      %p529 = pneg %p264
      %p530 = pneg %p261
      %p531 = pneg %p285
      %p532 = pneg %p282
      %p533 = pneg %p306
      %p534 = pneg %p303
      %p535 = pneg %p327
      %p536 = pneg %p324
      %p537 = pneg %p348
      %p538 = pneg %p345
      %p539 = pneg %p369
      %p540 = pneg %p366
      %p541 = pneg %p390
      %p542 = pneg %p387
      %p543 = pneg %p416
      %p544 = pneg %p413
      %p545 = scmp.lt.s32.totalorder %s28, 1
      %s546 = scalar_select %p545, %s28, 1
      %s547 = smul.addr %s546, 2
      %s548 = smul.addr %s547, 8
      %s549 = scalar_lea.vmem %s17, %s548
      %p550 = scmp.lt.s32.totalorder %s28, 1
      %s551 = scalar_select %p550, %s28, 1
      %s552 = smul.addr %s551, 8
      %s553 = smul.addr %s552, 8
      %s554 = scalar_lea.vmem %s0, %s553
      %p555 = scmp.lt.s32.totalorder %s28, 1
      %s556 = scalar_select %p555, %s28, 1
      %s557 = scalar_lea.vmem %s4, %s556
      %p558 = scmp.lt.s32.totalorder %s28, 1
      %s559 = scalar_select %p558, %s28, 1
      %s560 = smul.addr %s559, 2
      %s561 = smul.addr %s560, 8
      %s562 = scalar_lea.vmem %s17, %s561
      %v564 = vld [vmem:[%s554] sm:$0xff]
      %v565 = vld [vmem:[%s554 + $0x8] sm:$0xff]
      %v566 = vld [vmem:[%s554 + $0x10] sm:$0xff]
      %v567 = vld [vmem:[%s554 + $0x18] sm:$0xff]
      %v568 = vld [vmem:[%s554 + $0x20] sm:$0xff]
      %v569 = vld [vmem:[%s554 + $0x28] sm:$0xff]
      %v570 = vld [vmem:[%s554 + $0x30] sm:$0xff]
      %v571 = vld [vmem:[%s554 + $0x38] sm:$0xff]
      %v572 = vld [vmem:[%s2] sm:$0xf]
      %v573 = vld [vmem:[%s2 + $0x4] sm:$0xf]
      %v574 = vpack.c.bf16 %v565, %v564
      %v575 = vpack.c.bf16 %v567, %v566
      %v576 = vpack.c.bf16 %v569, %v568
      %v577 = vpack.c.bf16 %v571, %v570
      %v578 = vld [vmem:[%s3] sm:$0x1]
      %v580 = vlaneseq
      %v581 = vshrl.u32 %v580, 7
      %v582 = vsub.s32 0, %v581
      %v583 = vrot.slane %v578, %v582
      %v587 = vunpack.c.l.b16 %v572
      %v588 = vunpack.c.l.b16 %v573
      %v589 = vpack.c.b16 %v588, %v587
      %vm591 = vcmask 130048
      %v593 = vsel %vm591, %v574, 0
      %v596 = vsel %vm591, %v575, 0
      %v599 = vsel %vm591, %v576, 0
      %v602 = vsel %vm591, %v577, 0
      %604 = vmatprep.subr.bf16.mxu0 0
      %605 = vmatpush1.bf16.msra.mxu0 0
      %606 = vmatprep.subr.bf16.mxu0 0
      %607 = vmatpush1.bf16.msra.mxu0 0
      %608 = vmatprep.subr.bf16.mxu0 0
      %609 = vmatpush1.bf16.msra.mxu0 0
      %610 = vmatprep.subr.bf16.mxu0 0
      %611 = vmatpush1.bf16.msra.mxu0 0
      %612 = vmatprep.subr.bf16.mxu0 0
      %613 = vmatpush1.bf16.msra.mxu0 0
      %614 = vmatprep.subr.bf16.mxu0 0
      %615 = vmatpush1.bf16.msra.mxu0 0
      %616 = vmatprep.subr.bf16.mxu0 0
      %617 = vmatpush1.bf16.msra.mxu0 0
      %618 = vmatprep.subr.bf16.mxu0 0
      %619 = vmatpush1.bf16.msra.mxu0 %v589
      %620 = vmatprep.subr.bf16.mxu0 0
      %621 = vmatpush2.bf16.msra.mxu0 0
      %622 = vmatprep.subr.bf16.mxu0 0
      %623 = vmatpush2.bf16.msra.mxu0 0
      %624 = vmatprep.subr.bf16.mxu0 0
      %625 = vmatpush2.bf16.msra.mxu0 0
      %626 = vmatprep.subr.bf16.mxu0 0
      %627 = vmatpush2.bf16.msra.mxu0 0
      %628 = vmatprep.subr.bf16.mxu0 0
      %629 = vmatpush2.bf16.msra.mxu0 0
      %630 = vmatprep.subr.bf16.mxu0 0
      %631 = vmatpush2.bf16.msra.mxu0 0
      %632 = vmatprep.subr.bf16.mxu0 0
      %633 = vmatpush2.bf16.msra.mxu0 0
      %634 = vmatprep.subr.bf16.mxu0 0
      %635 = vmatpush2.bf16.msra.mxu0 0
      %636 = vmatprep.mubr.bf16.mxu0 0
      %637 = vmatmul.mubr.bf16.gmra.mxu0 %v593
      %v638 = vpop.f32.mrf.mxu0
      %v639 = vadd.f32 %v583, %v638
      %v640 = vpop.f32.mrf.mxu0
      %v641 = vpop.f32.mrf.mxu0
      %v642 = vadd.f32 %v583, %v641
      %v643 = vpop.f32.mrf.mxu0
      %644 = vmatprep.mubr.bf16.mxu0 0
      %645 = vmatmul.mubr.bf16.gmra.mxu0 %v596
      %v646 = vpop.f32.mrf.mxu0
      %v647 = vadd.f32 %v583, %v646
      %v648 = vpop.f32.mrf.mxu0
      %v649 = vpop.f32.mrf.mxu0
      %v650 = vadd.f32 %v583, %v649
      %v651 = vpop.f32.mrf.mxu0
      %652 = vmatprep.mubr.bf16.mxu0 0
      %653 = vmatmul.mubr.bf16.gmra.mxu0 %v599
      %v654 = vpop.f32.mrf.mxu0
      %v655 = vadd.f32 %v583, %v654
      %v656 = vpop.f32.mrf.mxu0
      %v657 = vpop.f32.mrf.mxu0
      %v658 = vadd.f32 %v583, %v657
      %v659 = vpop.f32.mrf.mxu0
      %660 = vmatprep.mubr.bf16.mxu0 0
      %661 = vmatmul.mubr.bf16.gmra.mxu0 %v602
      %v662 = vpop.f32.mrf.mxu0
      %v663 = vadd.f32 %v583, %v662
      %v664 = vpop.f32.mrf.mxu0
      %v665 = vpop.f32.mrf.mxu0
      %v666 = vadd.f32 %v583, %v665
      %v667 = vpop.f32.mrf.mxu0
      %668 = vdwg.mxu0
      %v669 = vld [vmem:[%s1] sm:$0xff]
      %v670 = vld [vmem:[%s1 + $0x8] sm:$0xff]
      %v671 = vld [vmem:[%s1 + $0x10] sm:$0xff]
      %v672 = vld [vmem:[%s1 + $0x18] sm:$0xff]
      %v673 = vld [vmem:[%s1 + $0x20] sm:$0xff]
      %v674 = vld [vmem:[%s1 + $0x28] sm:$0xff]
      %v675 = vld [vmem:[%s1 + $0x30] sm:$0xff]
      %v676 = vld [vmem:[%s1 + $0x38] sm:$0xff]
      %v677 = vadd.f32 %v639, %v669
      %v678 = vadd.f32 %v642, %v670
      %v679 = vadd.f32 %v647, %v671
      %v680 = vadd.f32 %v650, %v672
      %v681 = vadd.f32 %v655, %v673
      %v682 = vadd.f32 %v658, %v674
      %v683 = vadd.f32 %v663, %v675
      %v684 = vadd.f32 %v666, %v676
      %v685 = vld [vmem:[%s557] sm:$0x1]
      %v686 = vxor.u32 %v685, 2147483648
      %v687 = vmul.f32 %v686, 1.442695
      %v688 = vpow.pop %v687
      %v689 = vadd.f32 %v688, 1.0
      %v690 = vrcp.pop %v689
      %v691 = vmul.f32 1.0, %v690
      %v692 = vmul.f32 %v685, %v691
      %v693 = vld [vmem:[%s5] sm:$0xff]
      %v694 = vld [vmem:[%s5 + $0x8] sm:$0xff]
      %v695 = vld [vmem:[%s5 + $0x10] sm:$0xff]
      %v696 = vld [vmem:[%s5 + $0x18] sm:$0xf]
      %v697 = vld [vmem:[%s5 + $0x1c] sm:$0xff]
      %v698 = vld [vmem:[%s5 + $0x24] sm:$0xff]
      %v699 = vld [vmem:[%s5 + $0x2c] sm:$0xff]
      %v700 = vld [vmem:[%s5 + $0x34] sm:$0xf]
      %v701 = vld [vmem:[%s5 + $0x38] sm:$0xff]
      %v702 = vld [vmem:[%s5 + $0x40] sm:$0xff]
      %v703 = vld [vmem:[%s5 + $0x48] sm:$0xff]
      %v704 = vld [vmem:[%s5 + $0x50] sm:$0xf]
      %v705 = vld [vmem:[%s5 + $0x54] sm:$0xff]
      %v706 = vld [vmem:[%s5 + $0x5c] sm:$0xff]
      %v707 = vld [vmem:[%s5 + $0x64] sm:$0xff]
      %v708 = vld [vmem:[%s5 + $0x6c] sm:$0xf]
      %v709 = vld [vmem:[%s5 + $0x70] sm:$0xff]
      %v710 = vld [vmem:[%s5 + $0x78] sm:$0xff]
      %v711 = vld [vmem:[%s5 + $0x80] sm:$0xff]
      %v712 = vld [vmem:[%s5 + $0x88] sm:$0xf]
      %v713 = vld [vmem:[%s5 + $0x8c] sm:$0xff]
      %v714 = vld [vmem:[%s5 + $0x94] sm:$0xff]
      %v715 = vld [vmem:[%s5 + $0x9c] sm:$0xff]
      %v716 = vld [vmem:[%s5 + $0xa4] sm:$0xf]
      %v717 = vld [vmem:[%s5 + $0xa8] sm:$0xff]
      %v718 = vld [vmem:[%s5 + $0xb0] sm:$0xff]
      %v719 = vld [vmem:[%s5 + $0xb8] sm:$0xff]
      %v720 = vld [vmem:[%s5 + $0xc0] sm:$0xf]
      %v721 = vld [vmem:[%s5 + $0xc4] sm:$0xff]
      %v722 = vld [vmem:[%s5 + $0xcc] sm:$0xff]
      %v723 = vld [vmem:[%s5 + $0xd4] sm:$0xff]
      %v724 = vld [vmem:[%s5 + $0xdc] sm:$0xf]
      %v725 = vpack.c.bf16 %v692, %v692
      %v726 = vld [vmem:[%s6] sm:$0xff]
      %v759 = vunpack.c.l.b16 %v693
      %v760 = vunpack.c.h.b16 %v693
      %v761 = vunpack.c.l.b16 %v694
      %v762 = vunpack.c.h.b16 %v694
      %v763 = vunpack.c.l.b16 %v695
      %v764 = vunpack.c.h.b16 %v695
      %v765 = vunpack.c.l.b16 %v696
      %v766 = vunpack.c.l.b16 %v697
      %v767 = vunpack.c.h.b16 %v697
      %v768 = vunpack.c.l.b16 %v698
      %v769 = vunpack.c.h.b16 %v698
      %v770 = vunpack.c.l.b16 %v699
      %v771 = vunpack.c.h.b16 %v699
      %v772 = vunpack.c.l.b16 %v700
      %v773 = vunpack.c.l.b16 %v701
      %v774 = vunpack.c.h.b16 %v701
      %v775 = vunpack.c.l.b16 %v702
      %v776 = vunpack.c.h.b16 %v702
      %v777 = vunpack.c.l.b16 %v703
      %v778 = vunpack.c.h.b16 %v703
      %v779 = vunpack.c.l.b16 %v704
      %v780 = vunpack.c.l.b16 %v705
      %v781 = vunpack.c.h.b16 %v705
      %v782 = vunpack.c.l.b16 %v706
      %v783 = vunpack.c.h.b16 %v706
      %v784 = vunpack.c.l.b16 %v707
      %v785 = vunpack.c.h.b16 %v707
      %v786 = vunpack.c.l.b16 %v708
      %v787 = vunpack.c.l.b16 %v709
      %v788 = vunpack.c.h.b16 %v709
      %v789 = vunpack.c.l.b16 %v710
      %v790 = vunpack.c.h.b16 %v710
      %v791 = vunpack.c.l.b16 %v711
      %v792 = vunpack.c.h.b16 %v711
      %v793 = vunpack.c.l.b16 %v712
      %v794 = vunpack.c.l.b16 %v713
      %v795 = vunpack.c.h.b16 %v713
      %v796 = vunpack.c.l.b16 %v714
      %v797 = vunpack.c.h.b16 %v714
      %v798 = vunpack.c.l.b16 %v715
      %v799 = vunpack.c.h.b16 %v715
      %v800 = vunpack.c.l.b16 %v716
      %v801 = vunpack.c.l.b16 %v717
      %v802 = vunpack.c.h.b16 %v717
      %v803 = vunpack.c.l.b16 %v718
      %v804 = vunpack.c.h.b16 %v718
      %v805 = vunpack.c.l.b16 %v719
      %v806 = vunpack.c.h.b16 %v719
      %v807 = vunpack.c.l.b16 %v720
      %v808 = vunpack.c.l.b16 %v721
      %v809 = vunpack.c.h.b16 %v721
      %v810 = vunpack.c.l.b16 %v722
      %v811 = vunpack.c.h.b16 %v722
      %v812 = vunpack.c.l.b16 %v723
      %v813 = vunpack.c.h.b16 %v723
      %v814 = vunpack.c.l.b16 %v724
      %v815 = vpack.c.b16 %v766, %v759
      %v816 = vpack.c.b16 %v767, %v760
      %v817 = vpack.c.b16 %v768, %v761
      %v818 = vpack.c.b16 %v769, %v762
      %v819 = vpack.c.b16 %v770, %v763
      %v820 = vpack.c.b16 %v771, %v764
      %v821 = vpack.c.b16 %v772, %v765
      %v822 = vpack.c.b16 %v780, %v773
      %v823 = vpack.c.b16 %v781, %v774
      %v824 = vpack.c.b16 %v782, %v775
      %v825 = vpack.c.b16 %v783, %v776
      %v826 = vpack.c.b16 %v784, %v777
      %v827 = vpack.c.b16 %v785, %v778
      %v828 = vpack.c.b16 %v786, %v779
      %v829 = vpack.c.b16 %v794, %v787
      %v830 = vpack.c.b16 %v795, %v788
      %v831 = vpack.c.b16 %v796, %v789
      %v832 = vpack.c.b16 %v797, %v790
      %v833 = vpack.c.b16 %v798, %v791
      %v834 = vpack.c.b16 %v799, %v792
      %v835 = vpack.c.b16 %v800, %v793
      %v836 = vpack.c.b16 %v808, %v801
      %v837 = vpack.c.b16 %v809, %v802
      %v838 = vpack.c.b16 %v810, %v803
      %v839 = vpack.c.b16 %v811, %v804
      %v840 = vpack.c.b16 %v812, %v805
      %v841 = vpack.c.b16 %v813, %v806
      %v842 = vpack.c.b16 %v814, %v807
      %v872 = vlaneseq
      %v873 = vshrl.u32 %v872, 7
      %v874 = vsub.s32 0, %v873
      %v875 = vrot.slane %v726, %v874
      %v876 = vlaneseq
      %v877 = vshrl.u32 %v876, 7
      %v878 = vsub.s32 1, %v877
      %v879 = vrot.slane %v726, %v878
      %v880 = vlaneseq
      %v881 = vshrl.u32 %v880, 7
      %v882 = vsub.s32 2, %v881
      %v883 = vrot.slane %v726, %v882
      %v884 = vlaneseq
      %v885 = vshrl.u32 %v884, 7
      %v886 = vsub.s32 3, %v885
      %v887 = vrot.slane %v726, %v886
      %v888 = vlaneseq
      %v889 = vshrl.u32 %v888, 7
      %v890 = vsub.s32 4, %v889
      %v891 = vrot.slane %v726, %v890
      %v892 = vlaneseq
      %v893 = vshrl.u32 %v892, 7
      %v894 = vsub.s32 5, %v893
      %v895 = vrot.slane %v726, %v894
      %v896 = vlaneseq
      %v897 = vshrl.u32 %v896, 7
      %v898 = vsub.s32 6, %v897
      %v899 = vrot.slane %v726, %v898
      %vm907 = vcmask 523264
      %v909 = vsel %vm907, %v725, 0
      %911 = vmatprep.subr.bf16.mxu0 0
      %912 = vmatpush1.bf16.msra.mxu0 0
      %913 = vmatprep.subr.bf16.mxu0 0
      %914 = vmatpush1.bf16.msra.mxu0 0
      %915 = vmatprep.subr.bf16.mxu0 0
      %916 = vmatpush1.bf16.msra.mxu0 0
      %917 = vmatprep.subr.bf16.mxu0 0
      %918 = vmatpush1.bf16.msra.mxu0 0
      %919 = vmatprep.subr.bf16.mxu0 %v837
      %920 = vmatpush1.bf16.msra.mxu0 %v836
      %921 = vmatprep.subr.bf16.mxu0 %v830
      %922 = vmatpush1.bf16.msra.mxu0 %v829
      %923 = vmatprep.subr.bf16.mxu0 %v823
      %924 = vmatpush1.bf16.msra.mxu0 %v822
      %925 = vmatprep.subr.bf16.mxu0 %v816
      %926 = vmatpush1.bf16.msra.mxu0 %v815
      %927 = vmatprep.subr.bf16.mxu0 0
      %928 = vmatpush2.bf16.msra.mxu0 0
      %929 = vmatprep.subr.bf16.mxu0 0
      %930 = vmatpush2.bf16.msra.mxu0 0
      %931 = vmatprep.subr.bf16.mxu0 0
      %932 = vmatpush2.bf16.msra.mxu0 0
      %933 = vmatprep.subr.bf16.mxu0 0
      %934 = vmatpush2.bf16.msra.mxu0 0
      %935 = vmatprep.subr.bf16.mxu0 0
      %936 = vmatpush2.bf16.msra.mxu0 0
      %937 = vmatprep.subr.bf16.mxu0 0
      %938 = vmatpush2.bf16.msra.mxu0 0
      %939 = vmatprep.subr.bf16.mxu0 0
      %940 = vmatpush2.bf16.msra.mxu0 0
      %941 = vmatprep.subr.bf16.mxu0 0
      %942 = vmatpush2.bf16.msra.mxu0 0
      %943 = vmatprep.mubr.bf16.mxu0 0
      %944 = vmatmul.mubr.bf16.gmra.mxu0 %v909
      %v945 = vpop.f32.mrf.mxu0
      %v946 = vadd.f32 %v875, %v945
      %v947 = vpop.f32.mrf.mxu0
      %v948 = vadd.f32 %v879, %v947
      %v949 = vpop.f32.mrf.mxu0
      %v950 = vpop.f32.mrf.mxu0
      %951 = vdwg.mxu0
      %952 = vmatprep.subr.bf16.mxu0 0
      %953 = vmatpush1.bf16.msra.mxu0 0
      %954 = vmatprep.subr.bf16.mxu0 0
      %955 = vmatpush1.bf16.msra.mxu0 0
      %956 = vmatprep.subr.bf16.mxu0 0
      %957 = vmatpush1.bf16.msra.mxu0 0
      %958 = vmatprep.subr.bf16.mxu0 0
      %959 = vmatpush1.bf16.msra.mxu0 0
      %960 = vmatprep.subr.bf16.mxu0 %v839
      %961 = vmatpush1.bf16.msra.mxu0 %v838
      %962 = vmatprep.subr.bf16.mxu0 %v832
      %963 = vmatpush1.bf16.msra.mxu0 %v831
      %964 = vmatprep.subr.bf16.mxu0 %v825
      %965 = vmatpush1.bf16.msra.mxu0 %v824
      %966 = vmatprep.subr.bf16.mxu0 %v818
      %967 = vmatpush1.bf16.msra.mxu0 %v817
      %968 = vmatprep.subr.bf16.mxu0 0
      %969 = vmatpush2.bf16.msra.mxu0 0
      %970 = vmatprep.subr.bf16.mxu0 0
      %971 = vmatpush2.bf16.msra.mxu0 0
      %972 = vmatprep.subr.bf16.mxu0 0
      %973 = vmatpush2.bf16.msra.mxu0 0
      %974 = vmatprep.subr.bf16.mxu0 0
      %975 = vmatpush2.bf16.msra.mxu0 0
      %976 = vmatprep.subr.bf16.mxu0 0
      %977 = vmatpush2.bf16.msra.mxu0 0
      %978 = vmatprep.subr.bf16.mxu0 0
      %979 = vmatpush2.bf16.msra.mxu0 0
      %980 = vmatprep.subr.bf16.mxu0 0
      %981 = vmatpush2.bf16.msra.mxu0 0
      %982 = vmatprep.subr.bf16.mxu0 0
      %983 = vmatpush2.bf16.msra.mxu0 0
      %984 = vmatprep.mubr.bf16.mxu0 0
      %985 = vmatmul.mubr.bf16.gmra.mxu0 %v909
      %v986 = vpop.f32.mrf.mxu0
      %v987 = vadd.f32 %v883, %v986
      %v988 = vpop.f32.mrf.mxu0
      %v989 = vadd.f32 %v887, %v988
      %v990 = vpop.f32.mrf.mxu0
      %v991 = vpop.f32.mrf.mxu0
      %992 = vdwg.mxu0
      %993 = vmatprep.subr.bf16.mxu0 0
      %994 = vmatpush1.bf16.msra.mxu0 0
      %995 = vmatprep.subr.bf16.mxu0 0
      %996 = vmatpush1.bf16.msra.mxu0 0
      %997 = vmatprep.subr.bf16.mxu0 0
      %998 = vmatpush1.bf16.msra.mxu0 0
      %999 = vmatprep.subr.bf16.mxu0 0
      %1000 = vmatpush1.bf16.msra.mxu0 0
      %1001 = vmatprep.subr.bf16.mxu0 %v841
      %1002 = vmatpush1.bf16.msra.mxu0 %v840
      %1003 = vmatprep.subr.bf16.mxu0 %v834
      %1004 = vmatpush1.bf16.msra.mxu0 %v833
      %1005 = vmatprep.subr.bf16.mxu0 %v827
      %1006 = vmatpush1.bf16.msra.mxu0 %v826
      %1007 = vmatprep.subr.bf16.mxu0 %v820
      %1008 = vmatpush1.bf16.msra.mxu0 %v819
      %1009 = vmatprep.subr.bf16.mxu0 0
      %1010 = vmatpush2.bf16.msra.mxu0 0
      %1011 = vmatprep.subr.bf16.mxu0 0
      %1012 = vmatpush2.bf16.msra.mxu0 0
      %1013 = vmatprep.subr.bf16.mxu0 0
      %1014 = vmatpush2.bf16.msra.mxu0 0
      %1015 = vmatprep.subr.bf16.mxu0 0
      %1016 = vmatpush2.bf16.msra.mxu0 0
      %1017 = vmatprep.subr.bf16.mxu0 0
      %1018 = vmatpush2.bf16.msra.mxu0 0
      %1019 = vmatprep.subr.bf16.mxu0 0
      %1020 = vmatpush2.bf16.msra.mxu0 0
      %1021 = vmatprep.subr.bf16.mxu0 0
      %1022 = vmatpush2.bf16.msra.mxu0 0
      %1023 = vmatprep.subr.bf16.mxu0 0
      %1024 = vmatpush2.bf16.msra.mxu0 0
      %1025 = vmatprep.mubr.bf16.mxu0 0
      %1026 = vmatmul.mubr.bf16.gmra.mxu0 %v909
      %v1027 = vpop.f32.mrf.mxu0
      %v1028 = vadd.f32 %v891, %v1027
      %v1029 = vpop.f32.mrf.mxu0
      %v1030 = vadd.f32 %v895, %v1029
      %v1031 = vpop.f32.mrf.mxu0
      %v1032 = vpop.f32.mrf.mxu0
      %1033 = vdwg.mxu0
      %1034 = vmatprep.subr.bf16.mxu0 0
      %1035 = vmatpush1.bf16.msra.mxu0 0
      %1036 = vmatprep.subr.bf16.mxu0 0
      %1037 = vmatpush1.bf16.msra.mxu0 0
      %1038 = vmatprep.subr.bf16.mxu0 0
      %1039 = vmatpush1.bf16.msra.mxu0 0
      %1040 = vmatprep.subr.bf16.mxu0 0
      %1041 = vmatpush1.bf16.msra.mxu0 0
      %1042 = vmatprep.subr.bf16.mxu0 0
      %1043 = vmatpush1.bf16.msra.mxu0 %v842
      %1044 = vmatprep.subr.bf16.mxu0 0
      %1045 = vmatpush1.bf16.msra.mxu0 %v835
      %1046 = vmatprep.subr.bf16.mxu0 0
      %1047 = vmatpush1.bf16.msra.mxu0 %v828
      %1048 = vmatprep.subr.bf16.mxu0 0
      %1049 = vmatpush1.bf16.msra.mxu0 %v821
      %1050 = vmatprep.subr.bf16.mxu0 0
      %1051 = vmatpush2.bf16.msra.mxu0 0
      %1052 = vmatprep.subr.bf16.mxu0 0
      %1053 = vmatpush2.bf16.msra.mxu0 0
      %1054 = vmatprep.subr.bf16.mxu0 0
      %1055 = vmatpush2.bf16.msra.mxu0 0
      %1056 = vmatprep.subr.bf16.mxu0 0
      %1057 = vmatpush2.bf16.msra.mxu0 0
      %1058 = vmatprep.subr.bf16.mxu0 0
      %1059 = vmatpush2.bf16.msra.mxu0 0
      %1060 = vmatprep.subr.bf16.mxu0 0
      %1061 = vmatpush2.bf16.msra.mxu0 0
      %1062 = vmatprep.subr.bf16.mxu0 0
      %1063 = vmatpush2.bf16.msra.mxu0 0
      %1064 = vmatprep.subr.bf16.mxu0 0
      %1065 = vmatpush2.bf16.msra.mxu0 0
      %1066 = vmatprep.mubr.bf16.mxu0 0
      %1067 = vmatmul.mubr.bf16.gmra.mxu0 %v909
      %v1068 = vpop.f32.mrf.mxu0
      %v1069 = vadd.f32 %v899, %v1068
      %v1070 = vpop.f32.mrf.mxu0
      %v1071 = vpop.f32.mrf.mxu0
      %v1072 = vpop.f32.mrf.mxu0
      %1073 = vdwg.mxu0
      %v1074 = vsel %vm907, %v677, 0.0
      %1075 = vadd.xlane.f32.xlu0 %v1074
      %v1076 = vpop.xlane.xlu0 %1075
      %v1077 = vsel %vm907, %v678, 0.0
      %1078 = vadd.xlane.f32.xlu0 %v1077
      %v1079 = vpop.xlane.xlu0 %1078
      %v1080 = vsel %vm907, %v679, 0.0
      %1081 = vadd.xlane.f32.xlu0 %v1080
      %v1082 = vpop.xlane.xlu0 %1081
      %v1083 = vsel %vm907, %v680, 0.0
      %1084 = vadd.xlane.f32.xlu0 %v1083
      %v1085 = vpop.xlane.xlu0 %1084
      %v1086 = vsel %vm907, %v681, 0.0
      %1087 = vadd.xlane.f32.xlu0 %v1086
      %v1088 = vpop.xlane.xlu0 %1087
      %v1089 = vsel %vm907, %v682, 0.0
      %1090 = vadd.xlane.f32.xlu0 %v1089
      %v1091 = vpop.xlane.xlu0 %1090
      %v1092 = vsel %vm907, %v683, 0.0
      %1093 = vadd.xlane.f32.xlu0 %v1092
      %v1094 = vpop.xlane.xlu0 %1093
      %v1095 = vsel %vm907, %v684, 0.0
      %1096 = vadd.xlane.f32.xlu0 %v1095
      %v1097 = vpop.xlane.xlu0 %1096
      %v1098 = vrcp.pop 64.0
      %v1099 = vmul.f32 %v1076, %v1098
      %v1100 = vmul.f32 %v1079, %v1098
      %v1101 = vmul.f32 %v1082, %v1098
      %v1102 = vmul.f32 %v1085, %v1098
      %v1103 = vmul.f32 %v1088, %v1098
      %v1104 = vmul.f32 %v1091, %v1098
      %v1105 = vmul.f32 %v1094, %v1098
      %v1106 = vmul.f32 %v1097, %v1098
      %v1107 = vsub.f32 %v677, %v1099
      %v1108 = vsub.f32 %v678, %v1100
      %v1109 = vsub.f32 %v679, %v1101
      %v1110 = vsub.f32 %v680, %v1102
      %v1111 = vsub.f32 %v681, %v1103
      %v1112 = vsub.f32 %v682, %v1104
      %v1113 = vsub.f32 %v683, %v1105
      %v1114 = vsub.f32 %v684, %v1106
      %v1115 = vmul.f32 %v1107, %v1107
      %v1116 = vmul.f32 %v1108, %v1108
      %v1117 = vmul.f32 %v1109, %v1109
      %v1118 = vmul.f32 %v1110, %v1110
      %v1119 = vmul.f32 %v1111, %v1111
      %v1120 = vmul.f32 %v1112, %v1112
      %v1121 = vmul.f32 %v1113, %v1113
      %v1122 = vmul.f32 %v1114, %v1114
      %v1123 = vsel %vm907, %v1115, 0.0
      %1124 = vadd.xlane.f32.xlu0 %v1123
      %v1125 = vpop.xlane.xlu0 %1124
      %v1126 = vsel %vm907, %v1116, 0.0
      %1127 = vadd.xlane.f32.xlu0 %v1126
      %v1128 = vpop.xlane.xlu0 %1127
      %v1129 = vsel %vm907, %v1117, 0.0
      %1130 = vadd.xlane.f32.xlu0 %v1129
      %v1131 = vpop.xlane.xlu0 %1130
      %v1132 = vsel %vm907, %v1118, 0.0
      %1133 = vadd.xlane.f32.xlu0 %v1132
      %v1134 = vpop.xlane.xlu0 %1133
      %v1135 = vsel %vm907, %v1119, 0.0
      %1136 = vadd.xlane.f32.xlu0 %v1135
      %v1137 = vpop.xlane.xlu0 %1136
      %v1138 = vsel %vm907, %v1120, 0.0
      %1139 = vadd.xlane.f32.xlu0 %v1138
      %v1140 = vpop.xlane.xlu0 %1139
      %v1141 = vsel %vm907, %v1121, 0.0
      %1142 = vadd.xlane.f32.xlu0 %v1141
      %v1143 = vpop.xlane.xlu0 %1142
      %v1144 = vsel %vm907, %v1122, 0.0
      %1145 = vadd.xlane.f32.xlu0 %v1144
      %v1146 = vpop.xlane.xlu0 %1145
      %v1147 = vmul.f32 %v1125, %v1098
      %v1148 = vmul.f32 %v1128, %v1098
      %v1149 = vmul.f32 %v1131, %v1098
      %v1150 = vmul.f32 %v1134, %v1098
      %v1151 = vmul.f32 %v1137, %v1098
      %v1152 = vmul.f32 %v1140, %v1098
      %v1153 = vmul.f32 %v1143, %v1098
      %v1154 = vmul.f32 %v1146, %v1098
      %v1155 = vadd.f32 %v1147, 1e-06
      %v1156 = vadd.f32 %v1148, 1e-06
      %v1157 = vadd.f32 %v1149, 1e-06
      %v1158 = vadd.f32 %v1150, 1e-06
      %v1159 = vadd.f32 %v1151, 1e-06
      %v1160 = vadd.f32 %v1152, 1e-06
      %v1161 = vadd.f32 %v1153, 1e-06
      %v1162 = vadd.f32 %v1154, 1e-06
      %v1163 = vrsqrt.pop %v1155
      %v1164 = vrsqrt.pop %v1156
      %v1165 = vrsqrt.pop %v1157
      %v1166 = vrsqrt.pop %v1158
      %v1167 = vrsqrt.pop %v1159
      %v1168 = vrsqrt.pop %v1160
      %v1169 = vrsqrt.pop %v1161
      %v1170 = vrsqrt.pop %v1162
      %v1171 = vmul.f32 %v1107, %v1163
      %v1172 = vmul.f32 %v1108, %v1164
      %v1173 = vmul.f32 %v1109, %v1165
      %v1174 = vmul.f32 %v1110, %v1166
      %v1175 = vmul.f32 %v1111, %v1167
      %v1176 = vmul.f32 %v1112, %v1168
      %v1177 = vmul.f32 %v1113, %v1169
      %v1178 = vmul.f32 %v1114, %v1170
      %v1179 = vadd.f32 %v946, 1.0
      %v1180 = vlaneseq
      %v1181 = vshrl.u32 %v1180, 7
      %v1182 = vsub.s32 0, %v1181
      %v1183 = vrot.slane %v1179, %v1182
      %1185 = vrot.lane.b32.xlu0 %v1183, 64
      %v1186 = vpop.permute.xlu0 %1185
      %v1188 = vmul.f32 %v1171, %v1186
      %v1189 = vmul.f32 %v1172, %v1186
      %v1190 = vmul.f32 %v1173, %v1186
      %v1191 = vmul.f32 %v1174, %v1186
      %v1192 = vmul.f32 %v1175, %v1186
      %v1193 = vmul.f32 %v1176, %v1186
      %v1194 = vmul.f32 %v1177, %v1186
      %v1195 = vmul.f32 %v1178, %v1186
      %v1196 = vlaneseq
      %v1197 = vshrl.u32 %v1196, 7
      %v1198 = vsub.s32 0, %v1197
      %v1199 = vrot.slane %v946, %v1198
      %v1200 = vadd.f32 %v1188, %v1199
      %v1201 = vadd.f32 %v1189, %v1199
      %v1202 = vadd.f32 %v1190, %v1199
      %v1203 = vadd.f32 %v1191, %v1199
      %v1204 = vadd.f32 %v1192, %v1199
      %v1205 = vadd.f32 %v1193, %v1199
      %v1206 = vadd.f32 %v1194, %v1199
      %v1207 = vadd.f32 %v1195, %v1199
      %v1208 = vld [vmem:[%s7] sm:$0xff]
      %v1209 = vld [vmem:[%s7 + $0x8] sm:$0xff]
      %v1210 = vld [vmem:[%s7 + $0x10] sm:$0xff]
      %v1211 = vld [vmem:[%s7 + $0x18] sm:$0xff]
      %v1212 = vld [vmem:[%s7 + $0x20] sm:$0xff]
      %v1213 = vld [vmem:[%s7 + $0x28] sm:$0xff]
      %v1214 = vld [vmem:[%s7 + $0x30] sm:$0xff]
      %v1215 = vld [vmem:[%s7 + $0x38] sm:$0xff]
      %v1216 = vpack.c.bf16 %v1201, %v1200
      %v1217 = vpack.c.bf16 %v1203, %v1202
      %v1218 = vpack.c.bf16 %v1205, %v1204
      %v1219 = vpack.c.bf16 %v1207, %v1206
      %v1220 = vld [vmem:[%s8] sm:$0x3]
      %v1222 = vlaneseq
      %v1223 = vshrl.u32 %v1222, 7
      %v1224 = vsub.s32 0, %v1223
      %v1225 = vrot.slane %v1220, %v1224
      %v1226 = vlaneseq
      %v1227 = vshrl.u32 %v1226, 7
      %v1228 = vsub.s32 1, %v1227
      %v1229 = vrot.slane %v1220, %v1228
      %v1240 = vunpack.c.l.b16 %v1208
      %v1241 = vunpack.c.h.b16 %v1208
      %v1242 = vunpack.c.l.b16 %v1209
      %v1243 = vunpack.c.h.b16 %v1209
      %v1244 = vunpack.c.l.b16 %v1210
      %v1245 = vunpack.c.h.b16 %v1210
      %v1246 = vunpack.c.l.b16 %v1211
      %v1247 = vunpack.c.h.b16 %v1211
      %v1248 = vunpack.c.l.b16 %v1212
      %v1249 = vunpack.c.h.b16 %v1212
      %v1250 = vunpack.c.l.b16 %v1213
      %v1251 = vunpack.c.h.b16 %v1213
      %v1252 = vunpack.c.l.b16 %v1214
      %v1253 = vunpack.c.h.b16 %v1214
      %v1254 = vunpack.c.l.b16 %v1215
      %v1255 = vunpack.c.h.b16 %v1215
      %v1256 = vpack.c.b16 %v1242, %v1240
      %v1257 = vpack.c.b16 %v1243, %v1241
      %v1258 = vpack.c.b16 %v1246, %v1244
      %v1259 = vpack.c.b16 %v1247, %v1245
      %v1260 = vpack.c.b16 %v1250, %v1248
      %v1261 = vpack.c.b16 %v1251, %v1249
      %v1262 = vpack.c.b16 %v1254, %v1252
      %v1263 = vpack.c.b16 %v1255, %v1253
      %v1273 = vsel %vm907, %v1216, 0
      %v1276 = vsel %vm907, %v1217, 0
      %v1279 = vsel %vm907, %v1218, 0
      %v1282 = vsel %vm907, %v1219, 0
      %1284 = vmatprep.subr.bf16.mxu0 0
      %1285 = vmatpush1.bf16.msra.mxu0 0
      %1286 = vmatprep.subr.bf16.mxu0 0
      %1287 = vmatpush1.bf16.msra.mxu0 0
      %1288 = vmatprep.subr.bf16.mxu0 0
      %1289 = vmatpush1.bf16.msra.mxu0 0
      %1290 = vmatprep.subr.bf16.mxu0 0
      %1291 = vmatpush1.bf16.msra.mxu0 0
      %1292 = vmatprep.subr.bf16.mxu0 %v1263
      %1293 = vmatpush1.bf16.msra.mxu0 %v1262
      %1294 = vmatprep.subr.bf16.mxu0 %v1261
      %1295 = vmatpush1.bf16.msra.mxu0 %v1260
      %1296 = vmatprep.subr.bf16.mxu0 %v1259
      %1297 = vmatpush1.bf16.msra.mxu0 %v1258
      %1298 = vmatprep.subr.bf16.mxu0 %v1257
      %1299 = vmatpush1.bf16.msra.mxu0 %v1256
      %1300 = vmatprep.subr.bf16.mxu0 0
      %1301 = vmatpush2.bf16.msra.mxu0 0
      %1302 = vmatprep.subr.bf16.mxu0 0
      %1303 = vmatpush2.bf16.msra.mxu0 0
      %1304 = vmatprep.subr.bf16.mxu0 0
      %1305 = vmatpush2.bf16.msra.mxu0 0
      %1306 = vmatprep.subr.bf16.mxu0 0
      %1307 = vmatpush2.bf16.msra.mxu0 0
      %1308 = vmatprep.subr.bf16.mxu0 0
      %1309 = vmatpush2.bf16.msra.mxu0 0
      %1310 = vmatprep.subr.bf16.mxu0 0
      %1311 = vmatpush2.bf16.msra.mxu0 0
      %1312 = vmatprep.subr.bf16.mxu0 0
      %1313 = vmatpush2.bf16.msra.mxu0 0
      %1314 = vmatprep.subr.bf16.mxu0 0
      %1315 = vmatpush2.bf16.msra.mxu0 0
      %1316 = vmatprep.mubr.bf16.mxu0 0
      %1317 = vmatmul.mubr.bf16.gmra.mxu0 %v1273
      %v1318 = vpop.f32.mrf.mxu0
      %v1319 = vadd.f32 %v1225, %v1318
      %v1320 = vpop.f32.mrf.mxu0
      %v1321 = vadd.f32 %v1229, %v1320
      %v1322 = vpop.f32.mrf.mxu0
      %v1323 = vadd.f32 %v1225, %v1322
      %v1324 = vpop.f32.mrf.mxu0
      %v1325 = vadd.f32 %v1229, %v1324
      %1326 = vmatprep.mubr.bf16.mxu0 0
      %1327 = vmatmul.mubr.bf16.gmra.mxu0 %v1276
      %v1328 = vpop.f32.mrf.mxu0
      %v1329 = vadd.f32 %v1225, %v1328
      %v1330 = vpop.f32.mrf.mxu0
      %v1331 = vadd.f32 %v1229, %v1330
      %v1332 = vpop.f32.mrf.mxu0
      %v1333 = vadd.f32 %v1225, %v1332
      %v1334 = vpop.f32.mrf.mxu0
      %v1335 = vadd.f32 %v1229, %v1334
      %1336 = vmatprep.mubr.bf16.mxu0 0
      %1337 = vmatmul.mubr.bf16.gmra.mxu0 %v1279
      %v1338 = vpop.f32.mrf.mxu0
      %v1339 = vadd.f32 %v1225, %v1338
      %v1340 = vpop.f32.mrf.mxu0
      %v1341 = vadd.f32 %v1229, %v1340
      %v1342 = vpop.f32.mrf.mxu0
      %v1343 = vadd.f32 %v1225, %v1342
      %v1344 = vpop.f32.mrf.mxu0
      %v1345 = vadd.f32 %v1229, %v1344
      %1346 = vmatprep.mubr.bf16.mxu0 0
      %1347 = vmatmul.mubr.bf16.gmra.mxu0 %v1282
      %v1348 = vpop.f32.mrf.mxu0
      %v1349 = vadd.f32 %v1225, %v1348
      %v1350 = vpop.f32.mrf.mxu0
      %v1351 = vadd.f32 %v1229, %v1350
      %v1352 = vpop.f32.mrf.mxu0
      %v1353 = vadd.f32 %v1225, %v1352
      %v1354 = vpop.f32.mrf.mxu0
      %v1355 = vadd.f32 %v1229, %v1354
      %1356 = vdwg.mxu0
      %v1357 = vpack.c.bf16 %v1323, %v1319
      %v1358 = vpack.c.bf16 %v1325, %v1321
      %v1359 = vpack.c.bf16 %v1333, %v1329
      %v1360 = vpack.c.bf16 %v1335, %v1331
      %v1361 = vpack.c.bf16 %v1343, %v1339
      %v1362 = vpack.c.bf16 %v1345, %v1341
      %v1363 = vpack.c.bf16 %v1353, %v1349
      %v1364 = vpack.c.bf16 %v1355, %v1351
      %1369 = vrot.lane.b32.xlu0 %v1357, 64
      %v1370 = vpop.permute.xlu0 %1369
      %1371 = vrot.lane.b32.xlu0 %v1359, 64
      %v1372 = vpop.permute.xlu0 %1371
      %1373 = vrot.lane.b32.xlu0 %v1361, 64
      %v1374 = vpop.permute.xlu0 %1373
      %1375 = vrot.lane.b32.xlu0 %v1363, 64
      %v1376 = vpop.permute.xlu0 %1375
      %v1378 = vsel %vm591, %v1357, 0
      %v1381 = vsel %vm591, %v1359, 0
      %v1384 = vsel %vm591, %v1361, 0
      %v1387 = vsel %vm591, %v1363, 0
      %v1390 = vsel %vm591, %v1370, 0
      %v1393 = vsel %vm591, %v1372, 0
      %v1396 = vsel %vm591, %v1374, 0
      %v1399 = vsel %vm591, %v1376, 0
      %1401 = vmatprep.subr.bf16.mxu0 0
      %1402 = vmatpush1.bf16.xpose.msra.mxu0 0
      %1403 = vmatprep.subr.bf16.mxu0 0
      %1404 = vmatpush1.bf16.xpose.msra.mxu0 0
      %1405 = vmatprep.subr.bf16.mxu0 0
      %1406 = vmatpush1.bf16.xpose.msra.mxu0 0
      %1407 = vmatprep.subr.bf16.mxu0 0
      %1408 = vmatpush1.bf16.xpose.msra.mxu0 0
      %1409 = vmatprep.subr.bf16.mxu0 0
      %1410 = vmatpush1.bf16.xpose.msra.mxu0 %v1399
      %1411 = vmatprep.subr.bf16.mxu0 0
      %1412 = vmatpush1.bf16.xpose.msra.mxu0 %v1396
      %1413 = vmatprep.subr.bf16.mxu0 0
      %1414 = vmatpush1.bf16.xpose.msra.mxu0 %v1393
      %1415 = vmatprep.subr.bf16.mxu0 0
      %1416 = vmatpush1.bf16.xpose.msra.mxu0 %v1390
      %1417 = vmatprep.subr.bf16.mxu0 0
      %1418 = vmatpush2.bf16.xpose.msra.mxu0 0
      %1419 = vmatprep.subr.bf16.mxu0 0
      %1420 = vmatpush2.bf16.xpose.msra.mxu0 0
      %1421 = vmatprep.subr.bf16.mxu0 0
      %1422 = vmatpush2.bf16.xpose.msra.mxu0 0
      %1423 = vmatprep.subr.bf16.mxu0 0
      %1424 = vmatpush2.bf16.xpose.msra.mxu0 0
      %1425 = vmatprep.subr.bf16.mxu0 0
      %1426 = vmatpush2.bf16.xpose.msra.mxu0 0
      %1427 = vmatprep.subr.bf16.mxu0 0
      %1428 = vmatpush2.bf16.xpose.msra.mxu0 0
      %1429 = vmatprep.subr.bf16.mxu0 0
      %1430 = vmatpush2.bf16.xpose.msra.mxu0 0
      %1431 = vmatprep.subr.bf16.mxu0 0
      %1432 = vmatpush2.bf16.xpose.msra.mxu0 0
      %1433 = vmatprep.mubr.bf16.mxu0 0
      %1434 = vmatmul.mubr.bf16.gmra.mxu0 %v1378
      %v1435 = vpop.f32.mrf.mxu0
      %v1436 = vadd.f32 0.0, %v1435
      %v1437 = vpop.f32.mrf.mxu0
      %v1438 = vpop.f32.mrf.mxu0
      %v1439 = vadd.f32 0.0, %v1438
      %v1440 = vpop.f32.mrf.mxu0
      %1441 = vmatprep.mubr.bf16.mxu0 0
      %1442 = vmatmul.mubr.bf16.gmra.mxu0 %v1381
      %v1443 = vpop.f32.mrf.mxu0
      %v1444 = vadd.f32 0.0, %v1443
      %v1445 = vpop.f32.mrf.mxu0
      %v1446 = vpop.f32.mrf.mxu0
      %v1447 = vadd.f32 0.0, %v1446
      %v1448 = vpop.f32.mrf.mxu0
      %1449 = vmatprep.mubr.bf16.mxu0 0
      %1450 = vmatmul.mubr.bf16.gmra.mxu0 %v1384
      %v1451 = vpop.f32.mrf.mxu0
      %v1452 = vadd.f32 0.0, %v1451
      %v1453 = vpop.f32.mrf.mxu0
      %v1454 = vpop.f32.mrf.mxu0
      %v1455 = vadd.f32 0.0, %v1454
      %v1456 = vpop.f32.mrf.mxu0
      %1457 = vmatprep.mubr.bf16.mxu0 0
      %1458 = vmatmul.mubr.bf16.gmra.mxu0 %v1387
      %v1459 = vpop.f32.mrf.mxu0
      %v1460 = vadd.f32 0.0, %v1459
      %v1461 = vpop.f32.mrf.mxu0
      %v1462 = vpop.f32.mrf.mxu0
      %v1463 = vadd.f32 0.0, %v1462
      %v1464 = vpop.f32.mrf.mxu0
      %1465 = vdwg.mxu0
      %v1466 = vsel %vm907, %v1436, -inf
      %1467 = vmax.xlane.f32.xlu0 %v1466
      %v1468 = vpop.xlane.xlu0 %1467
      %v1469 = vsel %vm907, %v1439, -inf
      %1470 = vmax.xlane.f32.xlu0 %v1469
      %v1471 = vpop.xlane.xlu0 %1470
      %v1472 = vsel %vm907, %v1444, -inf
      %1473 = vmax.xlane.f32.xlu0 %v1472
      %v1474 = vpop.xlane.xlu0 %1473
      %v1475 = vsel %vm907, %v1447, -inf
      %1476 = vmax.xlane.f32.xlu0 %v1475
      %v1477 = vpop.xlane.xlu0 %1476
      %v1478 = vsel %vm907, %v1452, -inf
      %1479 = vmax.xlane.f32.xlu0 %v1478
      %v1480 = vpop.xlane.xlu0 %1479
      %v1481 = vsel %vm907, %v1455, -inf
      %1482 = vmax.xlane.f32.xlu0 %v1481
      %v1483 = vpop.xlane.xlu0 %1482
      %v1484 = vsel %vm907, %v1460, -inf
      %1485 = vmax.xlane.f32.xlu0 %v1484
      %v1486 = vpop.xlane.xlu0 %1485
      %v1487 = vsel %vm907, %v1463, -inf
      %1488 = vmax.xlane.f32.xlu0 %v1487
      %v1489 = vpop.xlane.xlu0 %1488
      %v1490 = vsub.f32 %v1436, %v1468
      %v1491 = vsub.f32 %v1439, %v1471
      %v1492 = vsub.f32 %v1444, %v1474
      %v1493 = vsub.f32 %v1447, %v1477
      %v1494 = vsub.f32 %v1452, %v1480
      %v1495 = vsub.f32 %v1455, %v1483
      %v1496 = vsub.f32 %v1460, %v1486
      %v1497 = vsub.f32 %v1463, %v1489
      %v1498 = vmul.f32 %v1490, 1.442695
      %v1499 = vpow.pop %v1498
      %v1500 = vmul.f32 %v1491, 1.442695
      %v1501 = vpow.pop %v1500
      %v1502 = vmul.f32 %v1492, 1.442695
      %v1503 = vpow.pop %v1502
      %v1504 = vmul.f32 %v1493, 1.442695
      %v1505 = vpow.pop %v1504
      %v1506 = vmul.f32 %v1494, 1.442695
      %v1507 = vpow.pop %v1506
      %v1508 = vmul.f32 %v1495, 1.442695
      %v1509 = vpow.pop %v1508
      %v1510 = vmul.f32 %v1496, 1.442695
      %v1511 = vpow.pop %v1510
      %v1512 = vmul.f32 %v1497, 1.442695
      %v1513 = vpow.pop %v1512
      %v1514 = vsel %vm907, %v1499, 0.0
      %1515 = vadd.xlane.f32.xlu0 %v1514
      %v1516 = vpop.xlane.xlu0 %1515
      %v1517 = vsel %vm907, %v1501, 0.0
      %1518 = vadd.xlane.f32.xlu0 %v1517
      %v1519 = vpop.xlane.xlu0 %1518
      %v1520 = vsel %vm907, %v1503, 0.0
      %1521 = vadd.xlane.f32.xlu0 %v1520
      %v1522 = vpop.xlane.xlu0 %1521
      %v1523 = vsel %vm907, %v1505, 0.0
      %1524 = vadd.xlane.f32.xlu0 %v1523
      %v1525 = vpop.xlane.xlu0 %1524
      %v1526 = vsel %vm907, %v1507, 0.0
      %1527 = vadd.xlane.f32.xlu0 %v1526
      %v1528 = vpop.xlane.xlu0 %1527
      %v1529 = vsel %vm907, %v1509, 0.0
      %1530 = vadd.xlane.f32.xlu0 %v1529
      %v1531 = vpop.xlane.xlu0 %1530
      %v1532 = vsel %vm907, %v1511, 0.0
      %1533 = vadd.xlane.f32.xlu0 %v1532
      %v1534 = vpop.xlane.xlu0 %1533
      %v1535 = vsel %vm907, %v1513, 0.0
      %1536 = vadd.xlane.f32.xlu0 %v1535
      %v1537 = vpop.xlane.xlu0 %1536
      %v1538 = vrcp.pop %v1516
      %v1539 = vrcp.pop %v1519
      %v1540 = vrcp.pop %v1522
      %v1541 = vrcp.pop %v1525
      %v1542 = vrcp.pop %v1528
      %v1543 = vrcp.pop %v1531
      %v1544 = vrcp.pop %v1534
      %v1545 = vrcp.pop %v1537
      %v1546 = vmul.f32 %v1499, %v1538
      %v1547 = vmul.f32 %v1501, %v1539
      %v1548 = vmul.f32 %v1503, %v1540
      %v1549 = vmul.f32 %v1505, %v1541
      %v1550 = vmul.f32 %v1507, %v1542
      %v1551 = vmul.f32 %v1509, %v1543
      %v1552 = vmul.f32 %v1511, %v1544
      %v1553 = vmul.f32 %v1513, %v1545
      %v1554 = vpack.c.bf16 %v1547, %v1546
      %v1555 = vpack.c.bf16 %v1549, %v1548
      %v1556 = vpack.c.bf16 %v1551, %v1550
      %v1557 = vpack.c.bf16 %v1553, %v1552
      %v1559 = vsel %vm907, %v1554, 0
      %v1562 = vsel %vm907, %v1555, 0
      %v1565 = vsel %vm907, %v1556, 0
      %v1568 = vsel %vm907, %v1557, 0
      %1570 = vmatprep.subr.bf16.mxu0 0
      %1571 = vmatpush1.bf16.msra.mxu0 0
      %1572 = vmatprep.subr.bf16.mxu0 0
      %1573 = vmatpush1.bf16.msra.mxu0 0
      %1574 = vmatprep.subr.bf16.mxu0 0
      %1575 = vmatpush1.bf16.msra.mxu0 0
      %1576 = vmatprep.subr.bf16.mxu0 0
      %1577 = vmatpush1.bf16.msra.mxu0 0
      %1578 = vmatprep.subr.bf16.mxu0 0
      %1579 = vmatpush1.bf16.msra.mxu0 %v1364
      %1580 = vmatprep.subr.bf16.mxu0 0
      %1581 = vmatpush1.bf16.msra.mxu0 %v1362
      %1582 = vmatprep.subr.bf16.mxu0 0
      %1583 = vmatpush1.bf16.msra.mxu0 %v1360
      %1584 = vmatprep.subr.bf16.mxu0 0
      %1585 = vmatpush1.bf16.msra.mxu0 %v1358
      %1586 = vmatprep.subr.bf16.mxu0 0
      %1587 = vmatpush2.bf16.msra.mxu0 0
      %1588 = vmatprep.subr.bf16.mxu0 0
      %1589 = vmatpush2.bf16.msra.mxu0 0
      %1590 = vmatprep.subr.bf16.mxu0 0
      %1591 = vmatpush2.bf16.msra.mxu0 0
      %1592 = vmatprep.subr.bf16.mxu0 0
      %1593 = vmatpush2.bf16.msra.mxu0 0
      %1594 = vmatprep.subr.bf16.mxu0 0
      %1595 = vmatpush2.bf16.msra.mxu0 0
      %1596 = vmatprep.subr.bf16.mxu0 0
      %1597 = vmatpush2.bf16.msra.mxu0 0
      %1598 = vmatprep.subr.bf16.mxu0 0
      %1599 = vmatpush2.bf16.msra.mxu0 0
      %1600 = vmatprep.subr.bf16.mxu0 0
      %1601 = vmatpush2.bf16.msra.mxu0 0
      %1602 = vmatprep.mubr.bf16.mxu0 0
      %1603 = vmatmul.mubr.bf16.gmra.mxu0 %v1559
      %v1604 = vpop.f32.mrf.mxu0
      %v1605 = vadd.f32 0.0, %v1604
      %v1606 = vpop.f32.mrf.mxu0
      %v1607 = vpop.f32.mrf.mxu0
      %v1608 = vadd.f32 0.0, %v1607
      %v1609 = vpop.f32.mrf.mxu0
      %1610 = vmatprep.mubr.bf16.mxu0 0
      %1611 = vmatmul.mubr.bf16.gmra.mxu0 %v1562
      %v1612 = vpop.f32.mrf.mxu0
      %v1613 = vadd.f32 0.0, %v1612
      %v1614 = vpop.f32.mrf.mxu0
      %v1615 = vpop.f32.mrf.mxu0
      %v1616 = vadd.f32 0.0, %v1615
      %v1617 = vpop.f32.mrf.mxu0
      %1618 = vmatprep.mubr.bf16.mxu0 0
      %1619 = vmatmul.mubr.bf16.gmra.mxu0 %v1565
      %v1620 = vpop.f32.mrf.mxu0
      %v1621 = vadd.f32 0.0, %v1620
      %v1622 = vpop.f32.mrf.mxu0
      %v1623 = vpop.f32.mrf.mxu0
      %v1624 = vadd.f32 0.0, %v1623
      %v1625 = vpop.f32.mrf.mxu0
      %1626 = vmatprep.mubr.bf16.mxu0 0
      %1627 = vmatmul.mubr.bf16.gmra.mxu0 %v1568
      %v1628 = vpop.f32.mrf.mxu0
      %v1629 = vadd.f32 0.0, %v1628
      %v1630 = vpop.f32.mrf.mxu0
      %v1631 = vpop.f32.mrf.mxu0
      %v1632 = vadd.f32 0.0, %v1631
      %v1633 = vpop.f32.mrf.mxu0
      %1634 = vdwg.mxu0
      %1635 = vrot.lane.b32.xlu0 %v1357, 112
      %v1636 = vpop.permute.xlu0 %1635
      %1637 = vrot.lane.b32.xlu0 %v1359, 112
      %v1638 = vpop.permute.xlu0 %1637
      %1639 = vrot.lane.b32.xlu0 %v1361, 112
      %v1640 = vpop.permute.xlu0 %1639
      %1641 = vrot.lane.b32.xlu0 %v1363, 112
      %v1642 = vpop.permute.xlu0 %1641
      %1643 = vrot.lane.b32.xlu0 %v1357, 48
      %v1644 = vpop.permute.xlu0 %1643
      %1645 = vrot.lane.b32.xlu0 %v1359, 48
      %v1646 = vpop.permute.xlu0 %1645
      %1647 = vrot.lane.b32.xlu0 %v1361, 48
      %v1648 = vpop.permute.xlu0 %1647
      %1649 = vrot.lane.b32.xlu0 %v1363, 48
      %v1650 = vpop.permute.xlu0 %1649
      %v1652 = vsel %vm591, %v1636, 0
      %v1655 = vsel %vm591, %v1638, 0
      %v1658 = vsel %vm591, %v1640, 0
      %v1661 = vsel %vm591, %v1642, 0
      %v1664 = vsel %vm591, %v1644, 0
      %v1667 = vsel %vm591, %v1646, 0
      %v1670 = vsel %vm591, %v1648, 0
      %v1673 = vsel %vm591, %v1650, 0
      %1675 = vmatprep.subr.bf16.mxu0 0
      %1676 = vmatpush1.bf16.xpose.msra.mxu0 0
      %1677 = vmatprep.subr.bf16.mxu0 0
      %1678 = vmatpush1.bf16.xpose.msra.mxu0 0
      %1679 = vmatprep.subr.bf16.mxu0 0
      %1680 = vmatpush1.bf16.xpose.msra.mxu0 0
      %1681 = vmatprep.subr.bf16.mxu0 0
      %1682 = vmatpush1.bf16.xpose.msra.mxu0 0
      %1683 = vmatprep.subr.bf16.mxu0 0
      %1684 = vmatpush1.bf16.xpose.msra.mxu0 %v1673
      %1685 = vmatprep.subr.bf16.mxu0 0
      %1686 = vmatpush1.bf16.xpose.msra.mxu0 %v1670
      %1687 = vmatprep.subr.bf16.mxu0 0
      %1688 = vmatpush1.bf16.xpose.msra.mxu0 %v1667
      %1689 = vmatprep.subr.bf16.mxu0 0
      %1690 = vmatpush1.bf16.xpose.msra.mxu0 %v1664
      %1691 = vmatprep.subr.bf16.mxu0 0
      %1692 = vmatpush2.bf16.xpose.msra.mxu0 0
      %1693 = vmatprep.subr.bf16.mxu0 0
      %1694 = vmatpush2.bf16.xpose.msra.mxu0 0
      %1695 = vmatprep.subr.bf16.mxu0 0
      %1696 = vmatpush2.bf16.xpose.msra.mxu0 0
      %1697 = vmatprep.subr.bf16.mxu0 0
      %1698 = vmatpush2.bf16.xpose.msra.mxu0 0
      %1699 = vmatprep.subr.bf16.mxu0 0
      %1700 = vmatpush2.bf16.xpose.msra.mxu0 0
      %1701 = vmatprep.subr.bf16.mxu0 0
      %1702 = vmatpush2.bf16.xpose.msra.mxu0 0
      %1703 = vmatprep.subr.bf16.mxu0 0
      %1704 = vmatpush2.bf16.xpose.msra.mxu0 0
      %1705 = vmatprep.subr.bf16.mxu0 0
      %1706 = vmatpush2.bf16.xpose.msra.mxu0 0
      %1707 = vmatprep.mubr.bf16.mxu0 0
      %1708 = vmatmul.mubr.bf16.gmra.mxu0 %v1652
      %v1709 = vpop.f32.mrf.mxu0
      %v1710 = vadd.f32 0.0, %v1709
      %v1711 = vpop.f32.mrf.mxu0
      %v1712 = vpop.f32.mrf.mxu0
      %v1713 = vadd.f32 0.0, %v1712
      %v1714 = vpop.f32.mrf.mxu0
      %1715 = vmatprep.mubr.bf16.mxu0 0
      %1716 = vmatmul.mubr.bf16.gmra.mxu0 %v1655
      %v1717 = vpop.f32.mrf.mxu0
      %v1718 = vadd.f32 0.0, %v1717
      %v1719 = vpop.f32.mrf.mxu0
      %v1720 = vpop.f32.mrf.mxu0
      %v1721 = vadd.f32 0.0, %v1720
      %v1722 = vpop.f32.mrf.mxu0
      %1723 = vmatprep.mubr.bf16.mxu0 0
      %1724 = vmatmul.mubr.bf16.gmra.mxu0 %v1658
      %v1725 = vpop.f32.mrf.mxu0
      %v1726 = vadd.f32 0.0, %v1725
      %v1727 = vpop.f32.mrf.mxu0
      %v1728 = vpop.f32.mrf.mxu0
      %v1729 = vadd.f32 0.0, %v1728
      %v1730 = vpop.f32.mrf.mxu0
      %1731 = vmatprep.mubr.bf16.mxu0 0
      %1732 = vmatmul.mubr.bf16.gmra.mxu0 %v1661
      %v1733 = vpop.f32.mrf.mxu0
      %v1734 = vadd.f32 0.0, %v1733
      %v1735 = vpop.f32.mrf.mxu0
      %v1736 = vpop.f32.mrf.mxu0
      %v1737 = vadd.f32 0.0, %v1736
      %v1738 = vpop.f32.mrf.mxu0
      %1739 = vdwg.mxu0
      %v1740 = vsel %vm907, %v1710, -inf
      %1741 = vmax.xlane.f32.xlu0 %v1740
      %v1742 = vpop.xlane.xlu0 %1741
      %v1743 = vsel %vm907, %v1713, -inf
      %1744 = vmax.xlane.f32.xlu0 %v1743
      %v1745 = vpop.xlane.xlu0 %1744
      %v1746 = vsel %vm907, %v1718, -inf
      %1747 = vmax.xlane.f32.xlu0 %v1746
      %v1748 = vpop.xlane.xlu0 %1747
      %v1749 = vsel %vm907, %v1721, -inf
      %1750 = vmax.xlane.f32.xlu0 %v1749
      %v1751 = vpop.xlane.xlu0 %1750
      %v1752 = vsel %vm907, %v1726, -inf
      %1753 = vmax.xlane.f32.xlu0 %v1752
      %v1754 = vpop.xlane.xlu0 %1753
      %v1755 = vsel %vm907, %v1729, -inf
      %1756 = vmax.xlane.f32.xlu0 %v1755
      %v1757 = vpop.xlane.xlu0 %1756
      %v1758 = vsel %vm907, %v1734, -inf
      %1759 = vmax.xlane.f32.xlu0 %v1758
      %v1760 = vpop.xlane.xlu0 %1759
      %v1761 = vsel %vm907, %v1737, -inf
      %1762 = vmax.xlane.f32.xlu0 %v1761
      %v1763 = vpop.xlane.xlu0 %1762
      %v1764 = vsub.f32 %v1710, %v1742
      %v1765 = vsub.f32 %v1713, %v1745
      %v1766 = vsub.f32 %v1718, %v1748
      %v1767 = vsub.f32 %v1721, %v1751
      %v1768 = vsub.f32 %v1726, %v1754
      %v1769 = vsub.f32 %v1729, %v1757
      %v1770 = vsub.f32 %v1734, %v1760
      %v1771 = vsub.f32 %v1737, %v1763
      %v1772 = vmul.f32 %v1764, 1.442695
      %v1773 = vpow.pop %v1772
      %v1774 = vmul.f32 %v1765, 1.442695
      %v1775 = vpow.pop %v1774
      %v1776 = vmul.f32 %v1766, 1.442695
      %v1777 = vpow.pop %v1776
      %v1778 = vmul.f32 %v1767, 1.442695
      %v1779 = vpow.pop %v1778
      %v1780 = vmul.f32 %v1768, 1.442695
      %v1781 = vpow.pop %v1780
      %v1782 = vmul.f32 %v1769, 1.442695
      %v1783 = vpow.pop %v1782
      %v1784 = vmul.f32 %v1770, 1.442695
      %v1785 = vpow.pop %v1784
      %v1786 = vmul.f32 %v1771, 1.442695
      %v1787 = vpow.pop %v1786
      %v1788 = vsel %vm907, %v1773, 0.0
      %1789 = vadd.xlane.f32.xlu0 %v1788
      %v1790 = vpop.xlane.xlu0 %1789
      %v1791 = vsel %vm907, %v1775, 0.0
      %1792 = vadd.xlane.f32.xlu0 %v1791
      %v1793 = vpop.xlane.xlu0 %1792
      %v1794 = vsel %vm907, %v1777, 0.0
      %1795 = vadd.xlane.f32.xlu0 %v1794
      %v1796 = vpop.xlane.xlu0 %1795
      %v1797 = vsel %vm907, %v1779, 0.0
      %1798 = vadd.xlane.f32.xlu0 %v1797
      %v1799 = vpop.xlane.xlu0 %1798
      %v1800 = vsel %vm907, %v1781, 0.0
      %1801 = vadd.xlane.f32.xlu0 %v1800
      %v1802 = vpop.xlane.xlu0 %1801
      %v1803 = vsel %vm907, %v1783, 0.0
      %1804 = vadd.xlane.f32.xlu0 %v1803
      %v1805 = vpop.xlane.xlu0 %1804
      %v1806 = vsel %vm907, %v1785, 0.0
      %1807 = vadd.xlane.f32.xlu0 %v1806
      %v1808 = vpop.xlane.xlu0 %1807
      %v1809 = vsel %vm907, %v1787, 0.0
      %1810 = vadd.xlane.f32.xlu0 %v1809
      %v1811 = vpop.xlane.xlu0 %1810
      %v1812 = vrcp.pop %v1790
      %v1813 = vrcp.pop %v1793
      %v1814 = vrcp.pop %v1796
      %v1815 = vrcp.pop %v1799
      %v1816 = vrcp.pop %v1802
      %v1817 = vrcp.pop %v1805
      %v1818 = vrcp.pop %v1808
      %v1819 = vrcp.pop %v1811
      %v1820 = vmul.f32 %v1773, %v1812
      %v1821 = vmul.f32 %v1775, %v1813
      %v1822 = vmul.f32 %v1777, %v1814
      %v1823 = vmul.f32 %v1779, %v1815
      %v1824 = vmul.f32 %v1781, %v1816
      %v1825 = vmul.f32 %v1783, %v1817
      %v1826 = vmul.f32 %v1785, %v1818
      %v1827 = vmul.f32 %v1787, %v1819
      %v1828 = vpack.c.bf16 %v1821, %v1820
      %v1829 = vpack.c.bf16 %v1823, %v1822
      %v1830 = vpack.c.bf16 %v1825, %v1824
      %v1831 = vpack.c.bf16 %v1827, %v1826
      %1836 = vrot.lane.b32.xlu0 %v1358, 112
      %v1837 = vpop.permute.xlu0 %1836
      %1838 = vrot.lane.b32.xlu0 %v1360, 112
      %v1839 = vpop.permute.xlu0 %1838
      %1840 = vrot.lane.b32.xlu0 %v1362, 112
      %v1841 = vpop.permute.xlu0 %1840
      %1842 = vrot.lane.b32.xlu0 %v1364, 112
      %v1843 = vpop.permute.xlu0 %1842
      %v1849 = vsel %vm907, %v1828, 0
      %v1852 = vsel %vm907, %v1829, 0
      %v1855 = vsel %vm907, %v1830, 0
      %v1858 = vsel %vm907, %v1831, 0
      %1860 = vmatprep.subr.bf16.mxu0 0
      %1861 = vmatpush1.bf16.msra.mxu0 0
      %1862 = vmatprep.subr.bf16.mxu0 0
      %1863 = vmatpush1.bf16.msra.mxu0 0
      %1864 = vmatprep.subr.bf16.mxu0 0
      %1865 = vmatpush1.bf16.msra.mxu0 0
      %1866 = vmatprep.subr.bf16.mxu0 0
      %1867 = vmatpush1.bf16.msra.mxu0 0
      %1868 = vmatprep.subr.bf16.mxu0 0
      %1869 = vmatpush1.bf16.msra.mxu0 %v1843
      %1870 = vmatprep.subr.bf16.mxu0 0
      %1871 = vmatpush1.bf16.msra.mxu0 %v1841
      %1872 = vmatprep.subr.bf16.mxu0 0
      %1873 = vmatpush1.bf16.msra.mxu0 %v1839
      %1874 = vmatprep.subr.bf16.mxu0 0
      %1875 = vmatpush1.bf16.msra.mxu0 %v1837
      %1876 = vmatprep.subr.bf16.mxu0 0
      %1877 = vmatpush2.bf16.msra.mxu0 0
      %1878 = vmatprep.subr.bf16.mxu0 0
      %1879 = vmatpush2.bf16.msra.mxu0 0
      %1880 = vmatprep.subr.bf16.mxu0 0
      %1881 = vmatpush2.bf16.msra.mxu0 0
      %1882 = vmatprep.subr.bf16.mxu0 0
      %1883 = vmatpush2.bf16.msra.mxu0 0
      %1884 = vmatprep.subr.bf16.mxu0 0
      %1885 = vmatpush2.bf16.msra.mxu0 0
      %1886 = vmatprep.subr.bf16.mxu0 0
      %1887 = vmatpush2.bf16.msra.mxu0 0
      %1888 = vmatprep.subr.bf16.mxu0 0
      %1889 = vmatpush2.bf16.msra.mxu0 0
      %1890 = vmatprep.subr.bf16.mxu0 0
      %1891 = vmatpush2.bf16.msra.mxu0 0
      %1892 = vmatprep.mubr.bf16.mxu0 0
      %1893 = vmatmul.mubr.bf16.gmra.mxu0 %v1849
      %v1894 = vpop.f32.mrf.mxu0
      %v1895 = vadd.f32 0.0, %v1894
      %v1896 = vpop.f32.mrf.mxu0
      %v1897 = vpop.f32.mrf.mxu0
      %v1898 = vadd.f32 0.0, %v1897
      %v1899 = vpop.f32.mrf.mxu0
      %1900 = vmatprep.mubr.bf16.mxu0 0
      %1901 = vmatmul.mubr.bf16.gmra.mxu0 %v1852
      %v1902 = vpop.f32.mrf.mxu0
      %v1903 = vadd.f32 0.0, %v1902
      %v1904 = vpop.f32.mrf.mxu0
      %v1905 = vpop.f32.mrf.mxu0
      %v1906 = vadd.f32 0.0, %v1905
      %v1907 = vpop.f32.mrf.mxu0
      %1908 = vmatprep.mubr.bf16.mxu0 0
      %1909 = vmatmul.mubr.bf16.gmra.mxu0 %v1855
      %v1910 = vpop.f32.mrf.mxu0
      %v1911 = vadd.f32 0.0, %v1910
      %v1912 = vpop.f32.mrf.mxu0
      %v1913 = vpop.f32.mrf.mxu0
      %v1914 = vadd.f32 0.0, %v1913
      %v1915 = vpop.f32.mrf.mxu0
      %1916 = vmatprep.mubr.bf16.mxu0 0
      %1917 = vmatmul.mubr.bf16.gmra.mxu0 %v1858
      %v1918 = vpop.f32.mrf.mxu0
      %v1919 = vadd.f32 0.0, %v1918
      %v1920 = vpop.f32.mrf.mxu0
      %v1921 = vpop.f32.mrf.mxu0
      %v1922 = vadd.f32 0.0, %v1921
      %v1923 = vpop.f32.mrf.mxu0
      %1924 = vdwg.mxu0
      %1925 = vrot.lane.b32.xlu0 %v1357, 96
      %v1926 = vpop.permute.xlu0 %1925
      %1927 = vrot.lane.b32.xlu0 %v1359, 96
      %v1928 = vpop.permute.xlu0 %1927
      %1929 = vrot.lane.b32.xlu0 %v1361, 96
      %v1930 = vpop.permute.xlu0 %1929
      %1931 = vrot.lane.b32.xlu0 %v1363, 96
      %v1932 = vpop.permute.xlu0 %1931
      %1933 = vrot.lane.b32.xlu0 %v1357, 32
      %v1934 = vpop.permute.xlu0 %1933
      %1935 = vrot.lane.b32.xlu0 %v1359, 32
      %v1936 = vpop.permute.xlu0 %1935
      %1937 = vrot.lane.b32.xlu0 %v1361, 32
      %v1938 = vpop.permute.xlu0 %1937
      %1939 = vrot.lane.b32.xlu0 %v1363, 32
      %v1940 = vpop.permute.xlu0 %1939
      %v1942 = vsel %vm591, %v1926, 0
      %v1945 = vsel %vm591, %v1928, 0
      %v1948 = vsel %vm591, %v1930, 0
      %v1951 = vsel %vm591, %v1932, 0
      %v1954 = vsel %vm591, %v1934, 0
      %v1957 = vsel %vm591, %v1936, 0
      %v1960 = vsel %vm591, %v1938, 0
      %v1963 = vsel %vm591, %v1940, 0
      %1965 = vmatprep.subr.bf16.mxu0 0
      %1966 = vmatpush1.bf16.xpose.msra.mxu0 0
      %1967 = vmatprep.subr.bf16.mxu0 0
      %1968 = vmatpush1.bf16.xpose.msra.mxu0 0
      %1969 = vmatprep.subr.bf16.mxu0 0
      %1970 = vmatpush1.bf16.xpose.msra.mxu0 0
      %1971 = vmatprep.subr.bf16.mxu0 0
      %1972 = vmatpush1.bf16.xpose.msra.mxu0 0
      %1973 = vmatprep.subr.bf16.mxu0 0
      %1974 = vmatpush1.bf16.xpose.msra.mxu0 %v1963
      %1975 = vmatprep.subr.bf16.mxu0 0
      %1976 = vmatpush1.bf16.xpose.msra.mxu0 %v1960
      %1977 = vmatprep.subr.bf16.mxu0 0
      %1978 = vmatpush1.bf16.xpose.msra.mxu0 %v1957
      %1979 = vmatprep.subr.bf16.mxu0 0
      %1980 = vmatpush1.bf16.xpose.msra.mxu0 %v1954
      %1981 = vmatprep.subr.bf16.mxu0 0
      %1982 = vmatpush2.bf16.xpose.msra.mxu0 0
      %1983 = vmatprep.subr.bf16.mxu0 0
      %1984 = vmatpush2.bf16.xpose.msra.mxu0 0
      %1985 = vmatprep.subr.bf16.mxu0 0
      %1986 = vmatpush2.bf16.xpose.msra.mxu0 0
      %1987 = vmatprep.subr.bf16.mxu0 0
      %1988 = vmatpush2.bf16.xpose.msra.mxu0 0
      %1989 = vmatprep.subr.bf16.mxu0 0
      %1990 = vmatpush2.bf16.xpose.msra.mxu0 0
      %1991 = vmatprep.subr.bf16.mxu0 0
      %1992 = vmatpush2.bf16.xpose.msra.mxu0 0
      %1993 = vmatprep.subr.bf16.mxu0 0
      %1994 = vmatpush2.bf16.xpose.msra.mxu0 0
      %1995 = vmatprep.subr.bf16.mxu0 0
      %1996 = vmatpush2.bf16.xpose.msra.mxu0 0
      %1997 = vmatprep.mubr.bf16.mxu0 0
      %1998 = vmatmul.mubr.bf16.gmra.mxu0 %v1942
      %v1999 = vpop.f32.mrf.mxu0
      %v2000 = vadd.f32 0.0, %v1999
      %v2001 = vpop.f32.mrf.mxu0
      %v2002 = vpop.f32.mrf.mxu0
      %v2003 = vadd.f32 0.0, %v2002
      %v2004 = vpop.f32.mrf.mxu0
      %2005 = vmatprep.mubr.bf16.mxu0 0
      %2006 = vmatmul.mubr.bf16.gmra.mxu0 %v1945
      %v2007 = vpop.f32.mrf.mxu0
      %v2008 = vadd.f32 0.0, %v2007
      %v2009 = vpop.f32.mrf.mxu0
      %v2010 = vpop.f32.mrf.mxu0
      %v2011 = vadd.f32 0.0, %v2010
      %v2012 = vpop.f32.mrf.mxu0
      %2013 = vmatprep.mubr.bf16.mxu0 0
      %2014 = vmatmul.mubr.bf16.gmra.mxu0 %v1948
      %v2015 = vpop.f32.mrf.mxu0
      %v2016 = vadd.f32 0.0, %v2015
      %v2017 = vpop.f32.mrf.mxu0
      %v2018 = vpop.f32.mrf.mxu0
      %v2019 = vadd.f32 0.0, %v2018
      %v2020 = vpop.f32.mrf.mxu0
      %2021 = vmatprep.mubr.bf16.mxu0 0
      %2022 = vmatmul.mubr.bf16.gmra.mxu0 %v1951
      %v2023 = vpop.f32.mrf.mxu0
      %v2024 = vadd.f32 0.0, %v2023
      %v2025 = vpop.f32.mrf.mxu0
      %v2026 = vpop.f32.mrf.mxu0
      %v2027 = vadd.f32 0.0, %v2026
      %v2028 = vpop.f32.mrf.mxu0
      %2029 = vdwg.mxu0
      %v2030 = vsel %vm907, %v2000, -inf
      %2031 = vmax.xlane.f32.xlu0 %v2030
      %v2032 = vpop.xlane.xlu0 %2031
      %v2033 = vsel %vm907, %v2003, -inf
      %2034 = vmax.xlane.f32.xlu0 %v2033
      %v2035 = vpop.xlane.xlu0 %2034
      %v2036 = vsel %vm907, %v2008, -inf
      %2037 = vmax.xlane.f32.xlu0 %v2036
      %v2038 = vpop.xlane.xlu0 %2037
      %v2039 = vsel %vm907, %v2011, -inf
      %2040 = vmax.xlane.f32.xlu0 %v2039
      %v2041 = vpop.xlane.xlu0 %2040
      %v2042 = vsel %vm907, %v2016, -inf
      %2043 = vmax.xlane.f32.xlu0 %v2042
      %v2044 = vpop.xlane.xlu0 %2043
      %v2045 = vsel %vm907, %v2019, -inf
      %2046 = vmax.xlane.f32.xlu0 %v2045
      %v2047 = vpop.xlane.xlu0 %2046
      %v2048 = vsel %vm907, %v2024, -inf
      %2049 = vmax.xlane.f32.xlu0 %v2048
      %v2050 = vpop.xlane.xlu0 %2049
      %v2051 = vsel %vm907, %v2027, -inf
      %2052 = vmax.xlane.f32.xlu0 %v2051
      %v2053 = vpop.xlane.xlu0 %2052
      %v2054 = vsub.f32 %v2000, %v2032
      %v2055 = vsub.f32 %v2003, %v2035
      %v2056 = vsub.f32 %v2008, %v2038
      %v2057 = vsub.f32 %v2011, %v2041
      %v2058 = vsub.f32 %v2016, %v2044
      %v2059 = vsub.f32 %v2019, %v2047
      %v2060 = vsub.f32 %v2024, %v2050
      %v2061 = vsub.f32 %v2027, %v2053
      %v2062 = vmul.f32 %v2054, 1.442695
      %v2063 = vpow.pop %v2062
      %v2064 = vmul.f32 %v2055, 1.442695
      %v2065 = vpow.pop %v2064
      %v2066 = vmul.f32 %v2056, 1.442695
      %v2067 = vpow.pop %v2066
      %v2068 = vmul.f32 %v2057, 1.442695
      %v2069 = vpow.pop %v2068
      %v2070 = vmul.f32 %v2058, 1.442695
      %v2071 = vpow.pop %v2070
      %v2072 = vmul.f32 %v2059, 1.442695
      %v2073 = vpow.pop %v2072
      %v2074 = vmul.f32 %v2060, 1.442695
      %v2075 = vpow.pop %v2074
      %v2076 = vmul.f32 %v2061, 1.442695
      %v2077 = vpow.pop %v2076
      %v2078 = vsel %vm907, %v2063, 0.0
      %2079 = vadd.xlane.f32.xlu0 %v2078
      %v2080 = vpop.xlane.xlu0 %2079
      %v2081 = vsel %vm907, %v2065, 0.0
      %2082 = vadd.xlane.f32.xlu0 %v2081
      %v2083 = vpop.xlane.xlu0 %2082
      %v2084 = vsel %vm907, %v2067, 0.0
      %2085 = vadd.xlane.f32.xlu0 %v2084
      %v2086 = vpop.xlane.xlu0 %2085
      %v2087 = vsel %vm907, %v2069, 0.0
      %2088 = vadd.xlane.f32.xlu0 %v2087
      %v2089 = vpop.xlane.xlu0 %2088
      %v2090 = vsel %vm907, %v2071, 0.0
      %2091 = vadd.xlane.f32.xlu0 %v2090
      %v2092 = vpop.xlane.xlu0 %2091
      %v2093 = vsel %vm907, %v2073, 0.0
      %2094 = vadd.xlane.f32.xlu0 %v2093
      %v2095 = vpop.xlane.xlu0 %2094
      %v2096 = vsel %vm907, %v2075, 0.0
      %2097 = vadd.xlane.f32.xlu0 %v2096
      %v2098 = vpop.xlane.xlu0 %2097
      %v2099 = vsel %vm907, %v2077, 0.0
      %2100 = vadd.xlane.f32.xlu0 %v2099
      %v2101 = vpop.xlane.xlu0 %2100
      %v2102 = vrcp.pop %v2080
      %v2103 = vrcp.pop %v2083
      %v2104 = vrcp.pop %v2086
      %v2105 = vrcp.pop %v2089
      %v2106 = vrcp.pop %v2092
      %v2107 = vrcp.pop %v2095
      %v2108 = vrcp.pop %v2098
      %v2109 = vrcp.pop %v2101
      %v2110 = vmul.f32 %v2063, %v2102
      %v2111 = vmul.f32 %v2065, %v2103
      %v2112 = vmul.f32 %v2067, %v2104
      %v2113 = vmul.f32 %v2069, %v2105
      %v2114 = vmul.f32 %v2071, %v2106
      %v2115 = vmul.f32 %v2073, %v2107
      %v2116 = vmul.f32 %v2075, %v2108
      %v2117 = vmul.f32 %v2077, %v2109
      %v2118 = vpack.c.bf16 %v2111, %v2110
      %v2119 = vpack.c.bf16 %v2113, %v2112
      %v2120 = vpack.c.bf16 %v2115, %v2114
      %v2121 = vpack.c.bf16 %v2117, %v2116
      %2122 = vrot.lane.b32.xlu0 %v1358, 96
      %v2123 = vpop.permute.xlu0 %2122
      %2124 = vrot.lane.b32.xlu0 %v1360, 96
      %v2125 = vpop.permute.xlu0 %2124
      %2126 = vrot.lane.b32.xlu0 %v1362, 96
      %v2127 = vpop.permute.xlu0 %2126
      %2128 = vrot.lane.b32.xlu0 %v1364, 96
      %v2129 = vpop.permute.xlu0 %2128
      %v2135 = vsel %vm907, %v2118, 0
      %v2138 = vsel %vm907, %v2119, 0
      %v2141 = vsel %vm907, %v2120, 0
      %v2144 = vsel %vm907, %v2121, 0
      %2146 = vmatprep.subr.bf16.mxu0 0
      %2147 = vmatpush1.bf16.msra.mxu0 0
      %2148 = vmatprep.subr.bf16.mxu0 0
      %2149 = vmatpush1.bf16.msra.mxu0 0
      %2150 = vmatprep.subr.bf16.mxu0 0
      %2151 = vmatpush1.bf16.msra.mxu0 0
      %2152 = vmatprep.subr.bf16.mxu0 0
      %2153 = vmatpush1.bf16.msra.mxu0 0
      %2154 = vmatprep.subr.bf16.mxu0 0
      %2155 = vmatpush1.bf16.msra.mxu0 %v2129
      %2156 = vmatprep.subr.bf16.mxu0 0
      %2157 = vmatpush1.bf16.msra.mxu0 %v2127
      %2158 = vmatprep.subr.bf16.mxu0 0
      %2159 = vmatpush1.bf16.msra.mxu0 %v2125
      %2160 = vmatprep.subr.bf16.mxu0 0
      %2161 = vmatpush1.bf16.msra.mxu0 %v2123
      %2162 = vmatprep.subr.bf16.mxu0 0
      %2163 = vmatpush2.bf16.msra.mxu0 0
      %2164 = vmatprep.subr.bf16.mxu0 0
      %2165 = vmatpush2.bf16.msra.mxu0 0
      %2166 = vmatprep.subr.bf16.mxu0 0
      %2167 = vmatpush2.bf16.msra.mxu0 0
      %2168 = vmatprep.subr.bf16.mxu0 0
      %2169 = vmatpush2.bf16.msra.mxu0 0
      %2170 = vmatprep.subr.bf16.mxu0 0
      %2171 = vmatpush2.bf16.msra.mxu0 0
      %2172 = vmatprep.subr.bf16.mxu0 0
      %2173 = vmatpush2.bf16.msra.mxu0 0
      %2174 = vmatprep.subr.bf16.mxu0 0
      %2175 = vmatpush2.bf16.msra.mxu0 0
      %2176 = vmatprep.subr.bf16.mxu0 0
      %2177 = vmatpush2.bf16.msra.mxu0 0
      %2178 = vmatprep.mubr.bf16.mxu0 0
      %2179 = vmatmul.mubr.bf16.gmra.mxu0 %v2135
      %v2180 = vpop.f32.mrf.mxu0
      %v2181 = vadd.f32 0.0, %v2180
      %v2182 = vpop.f32.mrf.mxu0
      %v2183 = vpop.f32.mrf.mxu0
      %v2184 = vadd.f32 0.0, %v2183
      %v2185 = vpop.f32.mrf.mxu0
      %2186 = vmatprep.mubr.bf16.mxu0 0
      %2187 = vmatmul.mubr.bf16.gmra.mxu0 %v2138
      %v2188 = vpop.f32.mrf.mxu0
      %v2189 = vadd.f32 0.0, %v2188
      %v2190 = vpop.f32.mrf.mxu0
      %v2191 = vpop.f32.mrf.mxu0
      %v2192 = vadd.f32 0.0, %v2191
      %v2193 = vpop.f32.mrf.mxu0
      %2194 = vmatprep.mubr.bf16.mxu0 0
      %2195 = vmatmul.mubr.bf16.gmra.mxu0 %v2141
      %v2196 = vpop.f32.mrf.mxu0
      %v2197 = vadd.f32 0.0, %v2196
      %v2198 = vpop.f32.mrf.mxu0
      %v2199 = vpop.f32.mrf.mxu0
      %v2200 = vadd.f32 0.0, %v2199
      %v2201 = vpop.f32.mrf.mxu0
      %2202 = vmatprep.mubr.bf16.mxu0 0
      %2203 = vmatmul.mubr.bf16.gmra.mxu0 %v2144
      %v2204 = vpop.f32.mrf.mxu0
      %v2205 = vadd.f32 0.0, %v2204
      %v2206 = vpop.f32.mrf.mxu0
      %v2207 = vpop.f32.mrf.mxu0
      %v2208 = vadd.f32 0.0, %v2207
      %v2209 = vpop.f32.mrf.mxu0
      %2210 = vdwg.mxu0
      %2211 = vrot.lane.b32.xlu0 %v1357, 80
      %v2212 = vpop.permute.xlu0 %2211
      %2213 = vrot.lane.b32.xlu0 %v1359, 80
      %v2214 = vpop.permute.xlu0 %2213
      %2215 = vrot.lane.b32.xlu0 %v1361, 80
      %v2216 = vpop.permute.xlu0 %2215
      %2217 = vrot.lane.b32.xlu0 %v1363, 80
      %v2218 = vpop.permute.xlu0 %2217
      %2219 = vrot.lane.b32.xlu0 %v1357, 16
      %v2220 = vpop.permute.xlu0 %2219
      %2221 = vrot.lane.b32.xlu0 %v1359, 16
      %v2222 = vpop.permute.xlu0 %2221
      %2223 = vrot.lane.b32.xlu0 %v1361, 16
      %v2224 = vpop.permute.xlu0 %2223
      %2225 = vrot.lane.b32.xlu0 %v1363, 16
      %v2226 = vpop.permute.xlu0 %2225
      %v2228 = vsel %vm591, %v2212, 0
      %v2231 = vsel %vm591, %v2214, 0
      %v2234 = vsel %vm591, %v2216, 0
      %v2237 = vsel %vm591, %v2218, 0
      %v2240 = vsel %vm591, %v2220, 0
      %v2243 = vsel %vm591, %v2222, 0
      %v2246 = vsel %vm591, %v2224, 0
      %v2249 = vsel %vm591, %v2226, 0
      %2251 = vmatprep.subr.bf16.mxu0 0
      %2252 = vmatpush1.bf16.xpose.msra.mxu0 0
      %2253 = vmatprep.subr.bf16.mxu0 0
      %2254 = vmatpush1.bf16.xpose.msra.mxu0 0
      %2255 = vmatprep.subr.bf16.mxu0 0
      %2256 = vmatpush1.bf16.xpose.msra.mxu0 0
      %2257 = vmatprep.subr.bf16.mxu0 0
      %2258 = vmatpush1.bf16.xpose.msra.mxu0 0
      %2259 = vmatprep.subr.bf16.mxu0 0
      %2260 = vmatpush1.bf16.xpose.msra.mxu0 %v2249
      %2261 = vmatprep.subr.bf16.mxu0 0
      %2262 = vmatpush1.bf16.xpose.msra.mxu0 %v2246
      %2263 = vmatprep.subr.bf16.mxu0 0
      %2264 = vmatpush1.bf16.xpose.msra.mxu0 %v2243
      %2265 = vmatprep.subr.bf16.mxu0 0
      %2266 = vmatpush1.bf16.xpose.msra.mxu0 %v2240
      %2267 = vmatprep.subr.bf16.mxu0 0
      %2268 = vmatpush2.bf16.xpose.msra.mxu0 0
      %2269 = vmatprep.subr.bf16.mxu0 0
      %2270 = vmatpush2.bf16.xpose.msra.mxu0 0
      %2271 = vmatprep.subr.bf16.mxu0 0
      %2272 = vmatpush2.bf16.xpose.msra.mxu0 0
      %2273 = vmatprep.subr.bf16.mxu0 0
      %2274 = vmatpush2.bf16.xpose.msra.mxu0 0
      %2275 = vmatprep.subr.bf16.mxu0 0
      %2276 = vmatpush2.bf16.xpose.msra.mxu0 0
      %2277 = vmatprep.subr.bf16.mxu0 0
      %2278 = vmatpush2.bf16.xpose.msra.mxu0 0
      %2279 = vmatprep.subr.bf16.mxu0 0
      %2280 = vmatpush2.bf16.xpose.msra.mxu0 0
      %2281 = vmatprep.subr.bf16.mxu0 0
      %2282 = vmatpush2.bf16.xpose.msra.mxu0 0
      %2283 = vmatprep.mubr.bf16.mxu0 0
      %2284 = vmatmul.mubr.bf16.gmra.mxu0 %v2228
      %v2285 = vpop.f32.mrf.mxu0
      %v2286 = vadd.f32 0.0, %v2285
      %v2287 = vpop.f32.mrf.mxu0
      %v2288 = vpop.f32.mrf.mxu0
      %v2289 = vadd.f32 0.0, %v2288
      %v2290 = vpop.f32.mrf.mxu0
      %2291 = vmatprep.mubr.bf16.mxu0 0
      %2292 = vmatmul.mubr.bf16.gmra.mxu0 %v2231
      %v2293 = vpop.f32.mrf.mxu0
      %v2294 = vadd.f32 0.0, %v2293
      %v2295 = vpop.f32.mrf.mxu0
      %v2296 = vpop.f32.mrf.mxu0
      %v2297 = vadd.f32 0.0, %v2296
      %v2298 = vpop.f32.mrf.mxu0
      %2299 = vmatprep.mubr.bf16.mxu0 0
      %2300 = vmatmul.mubr.bf16.gmra.mxu0 %v2234
      %v2301 = vpop.f32.mrf.mxu0
      %v2302 = vadd.f32 0.0, %v2301
      %v2303 = vpop.f32.mrf.mxu0
      %v2304 = vpop.f32.mrf.mxu0
      %v2305 = vadd.f32 0.0, %v2304
      %v2306 = vpop.f32.mrf.mxu0
      %2307 = vmatprep.mubr.bf16.mxu0 0
      %2308 = vmatmul.mubr.bf16.gmra.mxu0 %v2237
      %v2309 = vpop.f32.mrf.mxu0
      %v2310 = vadd.f32 0.0, %v2309
      %v2311 = vpop.f32.mrf.mxu0
      %v2312 = vpop.f32.mrf.mxu0
      %v2313 = vadd.f32 0.0, %v2312
      %v2314 = vpop.f32.mrf.mxu0
      %2315 = vdwg.mxu0
      %v2316 = vsel %vm907, %v2286, -inf
      %2317 = vmax.xlane.f32.xlu0 %v2316
      %v2318 = vpop.xlane.xlu0 %2317
      %v2319 = vsel %vm907, %v2289, -inf
      %2320 = vmax.xlane.f32.xlu0 %v2319
      %v2321 = vpop.xlane.xlu0 %2320
      %v2322 = vsel %vm907, %v2294, -inf
      %2323 = vmax.xlane.f32.xlu0 %v2322
      %v2324 = vpop.xlane.xlu0 %2323
      %v2325 = vsel %vm907, %v2297, -inf
      %2326 = vmax.xlane.f32.xlu0 %v2325
      %v2327 = vpop.xlane.xlu0 %2326
      %v2328 = vsel %vm907, %v2302, -inf
      %2329 = vmax.xlane.f32.xlu0 %v2328
      %v2330 = vpop.xlane.xlu0 %2329
      %v2331 = vsel %vm907, %v2305, -inf
      %2332 = vmax.xlane.f32.xlu0 %v2331
      %v2333 = vpop.xlane.xlu0 %2332
      %v2334 = vsel %vm907, %v2310, -inf
      %2335 = vmax.xlane.f32.xlu0 %v2334
      %v2336 = vpop.xlane.xlu0 %2335
      %v2337 = vsel %vm907, %v2313, -inf
      %2338 = vmax.xlane.f32.xlu0 %v2337
      %v2339 = vpop.xlane.xlu0 %2338
      %v2340 = vsub.f32 %v2286, %v2318
      %v2341 = vsub.f32 %v2289, %v2321
      %v2342 = vsub.f32 %v2294, %v2324
      %v2343 = vsub.f32 %v2297, %v2327
      %v2344 = vsub.f32 %v2302, %v2330
      %v2345 = vsub.f32 %v2305, %v2333
      %v2346 = vsub.f32 %v2310, %v2336
      %v2347 = vsub.f32 %v2313, %v2339
      %v2348 = vmul.f32 %v2340, 1.442695
      %v2349 = vpow.pop %v2348
      %v2350 = vmul.f32 %v2341, 1.442695
      %v2351 = vpow.pop %v2350
      %v2352 = vmul.f32 %v2342, 1.442695
      %v2353 = vpow.pop %v2352
      %v2354 = vmul.f32 %v2343, 1.442695
      %v2355 = vpow.pop %v2354
      %v2356 = vmul.f32 %v2344, 1.442695
      %v2357 = vpow.pop %v2356
      %v2358 = vmul.f32 %v2345, 1.442695
      %v2359 = vpow.pop %v2358
      %v2360 = vmul.f32 %v2346, 1.442695
      %v2361 = vpow.pop %v2360
      %v2362 = vmul.f32 %v2347, 1.442695
      %v2363 = vpow.pop %v2362
      %v2364 = vsel %vm907, %v2349, 0.0
      %2365 = vadd.xlane.f32.xlu0 %v2364
      %v2366 = vpop.xlane.xlu0 %2365
      %v2367 = vsel %vm907, %v2351, 0.0
      %2368 = vadd.xlane.f32.xlu0 %v2367
      %v2369 = vpop.xlane.xlu0 %2368
      %v2370 = vsel %vm907, %v2353, 0.0
      %2371 = vadd.xlane.f32.xlu0 %v2370
      %v2372 = vpop.xlane.xlu0 %2371
      %v2373 = vsel %vm907, %v2355, 0.0
      %2374 = vadd.xlane.f32.xlu0 %v2373
      %v2375 = vpop.xlane.xlu0 %2374
      %v2376 = vsel %vm907, %v2357, 0.0
      %2377 = vadd.xlane.f32.xlu0 %v2376
      %v2378 = vpop.xlane.xlu0 %2377
      %v2379 = vsel %vm907, %v2359, 0.0
      %2380 = vadd.xlane.f32.xlu0 %v2379
      %v2381 = vpop.xlane.xlu0 %2380
      %v2382 = vsel %vm907, %v2361, 0.0
      %2383 = vadd.xlane.f32.xlu0 %v2382
      %v2384 = vpop.xlane.xlu0 %2383
      %v2385 = vsel %vm907, %v2363, 0.0
      %2386 = vadd.xlane.f32.xlu0 %v2385
      %v2387 = vpop.xlane.xlu0 %2386
      %v2388 = vrcp.pop %v2366
      %v2389 = vrcp.pop %v2369
      %v2390 = vrcp.pop %v2372
      %v2391 = vrcp.pop %v2375
      %v2392 = vrcp.pop %v2378
      %v2393 = vrcp.pop %v2381
      %v2394 = vrcp.pop %v2384
      %v2395 = vrcp.pop %v2387
      %v2396 = vmul.f32 %v2349, %v2388
      %v2397 = vmul.f32 %v2351, %v2389
      %v2398 = vmul.f32 %v2353, %v2390
      %v2399 = vmul.f32 %v2355, %v2391
      %v2400 = vmul.f32 %v2357, %v2392
      %v2401 = vmul.f32 %v2359, %v2393
      %v2402 = vmul.f32 %v2361, %v2394
      %v2403 = vmul.f32 %v2363, %v2395
      %v2404 = vpack.c.bf16 %v2397, %v2396
      %v2405 = vpack.c.bf16 %v2399, %v2398
      %v2406 = vpack.c.bf16 %v2401, %v2400
      %v2407 = vpack.c.bf16 %v2403, %v2402
      %2408 = vrot.lane.b32.xlu0 %v1358, 80
      %v2409 = vpop.permute.xlu0 %2408
      %2410 = vrot.lane.b32.xlu0 %v1360, 80
      %v2411 = vpop.permute.xlu0 %2410
      %2412 = vrot.lane.b32.xlu0 %v1362, 80
      %v2413 = vpop.permute.xlu0 %2412
      %2414 = vrot.lane.b32.xlu0 %v1364, 80
      %v2415 = vpop.permute.xlu0 %2414
      %v2421 = vsel %vm907, %v2404, 0
      %v2424 = vsel %vm907, %v2405, 0
      %v2427 = vsel %vm907, %v2406, 0
      %v2430 = vsel %vm907, %v2407, 0
      %2432 = vmatprep.subr.bf16.mxu0 0
      %2433 = vmatpush1.bf16.msra.mxu0 0
      %2434 = vmatprep.subr.bf16.mxu0 0
      %2435 = vmatpush1.bf16.msra.mxu0 0
      %2436 = vmatprep.subr.bf16.mxu0 0
      %2437 = vmatpush1.bf16.msra.mxu0 0
      %2438 = vmatprep.subr.bf16.mxu0 0
      %2439 = vmatpush1.bf16.msra.mxu0 0
      %2440 = vmatprep.subr.bf16.mxu0 0
      %2441 = vmatpush1.bf16.msra.mxu0 %v2415
      %2442 = vmatprep.subr.bf16.mxu0 0
      %2443 = vmatpush1.bf16.msra.mxu0 %v2413
      %2444 = vmatprep.subr.bf16.mxu0 0
      %2445 = vmatpush1.bf16.msra.mxu0 %v2411
      %2446 = vmatprep.subr.bf16.mxu0 0
      %2447 = vmatpush1.bf16.msra.mxu0 %v2409
      %2448 = vmatprep.subr.bf16.mxu0 0
      %2449 = vmatpush2.bf16.msra.mxu0 0
      %2450 = vmatprep.subr.bf16.mxu0 0
      %2451 = vmatpush2.bf16.msra.mxu0 0
      %2452 = vmatprep.subr.bf16.mxu0 0
      %2453 = vmatpush2.bf16.msra.mxu0 0
      %2454 = vmatprep.subr.bf16.mxu0 0
      %2455 = vmatpush2.bf16.msra.mxu0 0
      %2456 = vmatprep.subr.bf16.mxu0 0
      %2457 = vmatpush2.bf16.msra.mxu0 0
      %2458 = vmatprep.subr.bf16.mxu0 0
      %2459 = vmatpush2.bf16.msra.mxu0 0
      %2460 = vmatprep.subr.bf16.mxu0 0
      %2461 = vmatpush2.bf16.msra.mxu0 0
      %2462 = vmatprep.subr.bf16.mxu0 0
      %2463 = vmatpush2.bf16.msra.mxu0 0
      %2464 = vmatprep.mubr.bf16.mxu0 0
      %2465 = vmatmul.mubr.bf16.gmra.mxu0 %v2421
      %v2466 = vpop.f32.mrf.mxu0
      %v2467 = vadd.f32 0.0, %v2466
      %v2468 = vpop.f32.mrf.mxu0
      %v2469 = vpop.f32.mrf.mxu0
      %v2470 = vadd.f32 0.0, %v2469
      %v2471 = vpop.f32.mrf.mxu0
      %2472 = vmatprep.mubr.bf16.mxu0 0
      %2473 = vmatmul.mubr.bf16.gmra.mxu0 %v2424
      %v2474 = vpop.f32.mrf.mxu0
      %v2475 = vadd.f32 0.0, %v2474
      %v2476 = vpop.f32.mrf.mxu0
      %v2477 = vpop.f32.mrf.mxu0
      %v2478 = vadd.f32 0.0, %v2477
      %v2479 = vpop.f32.mrf.mxu0
      %2480 = vmatprep.mubr.bf16.mxu0 0
      %2481 = vmatmul.mubr.bf16.gmra.mxu0 %v2427
      %v2482 = vpop.f32.mrf.mxu0
      %v2483 = vadd.f32 0.0, %v2482
      %v2484 = vpop.f32.mrf.mxu0
      %v2485 = vpop.f32.mrf.mxu0
      %v2486 = vadd.f32 0.0, %v2485
      %v2487 = vpop.f32.mrf.mxu0
      %2488 = vmatprep.mubr.bf16.mxu0 0
      %2489 = vmatmul.mubr.bf16.gmra.mxu0 %v2430
      %v2490 = vpop.f32.mrf.mxu0
      %v2491 = vadd.f32 0.0, %v2490
      %v2492 = vpop.f32.mrf.mxu0
      %v2493 = vpop.f32.mrf.mxu0
      %v2494 = vadd.f32 0.0, %v2493
      %v2495 = vpop.f32.mrf.mxu0
      %2496 = vdwg.mxu0
      %2505 = vrot.lane.b32.xlu0 %v1895, 16
      %v2506 = vpop.permute.xlu0 %2505
      %2507 = vrot.lane.b32.xlu0 %v1898, 16
      %v2508 = vpop.permute.xlu0 %2507
      %2509 = vrot.lane.b32.xlu0 %v1903, 16
      %v2510 = vpop.permute.xlu0 %2509
      %2511 = vrot.lane.b32.xlu0 %v1906, 16
      %v2512 = vpop.permute.xlu0 %2511
      %2513 = vrot.lane.b32.xlu0 %v1911, 16
      %v2514 = vpop.permute.xlu0 %2513
      %2515 = vrot.lane.b32.xlu0 %v1914, 16
      %v2516 = vpop.permute.xlu0 %2515
      %2517 = vrot.lane.b32.xlu0 %v1919, 16
      %v2518 = vpop.permute.xlu0 %2517
      %2519 = vrot.lane.b32.xlu0 %v1922, 16
      %v2520 = vpop.permute.xlu0 %2519
      %2537 = vrot.lane.b32.xlu0 %v2181, 32
      %v2538 = vpop.permute.xlu0 %2537
      %2539 = vrot.lane.b32.xlu0 %v2184, 32
      %v2540 = vpop.permute.xlu0 %2539
      %2541 = vrot.lane.b32.xlu0 %v2189, 32
      %v2542 = vpop.permute.xlu0 %2541
      %2543 = vrot.lane.b32.xlu0 %v2192, 32
      %v2544 = vpop.permute.xlu0 %2543
      %2545 = vrot.lane.b32.xlu0 %v2197, 32
      %v2546 = vpop.permute.xlu0 %2545
      %2547 = vrot.lane.b32.xlu0 %v2200, 32
      %v2548 = vpop.permute.xlu0 %2547
      %2549 = vrot.lane.b32.xlu0 %v2205, 32
      %v2550 = vpop.permute.xlu0 %2549
      %2551 = vrot.lane.b32.xlu0 %v2208, 32
      %v2552 = vpop.permute.xlu0 %2551
      %2569 = vrot.lane.b32.xlu0 %v2467, 48
      %v2570 = vpop.permute.xlu0 %2569
      %2571 = vrot.lane.b32.xlu0 %v2470, 48
      %v2572 = vpop.permute.xlu0 %2571
      %2573 = vrot.lane.b32.xlu0 %v2475, 48
      %v2574 = vpop.permute.xlu0 %2573
      %2575 = vrot.lane.b32.xlu0 %v2478, 48
      %v2576 = vpop.permute.xlu0 %2575
      %2577 = vrot.lane.b32.xlu0 %v2483, 48
      %v2578 = vpop.permute.xlu0 %2577
      %2579 = vrot.lane.b32.xlu0 %v2486, 48
      %v2580 = vpop.permute.xlu0 %2579
      %2581 = vrot.lane.b32.xlu0 %v2491, 48
      %v2582 = vpop.permute.xlu0 %2581
      %2583 = vrot.lane.b32.xlu0 %v2494, 48
      %v2584 = vpop.permute.xlu0 %2583
      %v2593 = vsel %vm591, %v1605, %v2506
      %v2594 = vsel %vm591, %v1608, %v2508
      %v2595 = vsel %vm591, %v1613, %v2510
      %v2596 = vsel %vm591, %v1616, %v2512
      %v2597 = vsel %vm591, %v1621, %v2514
      %v2598 = vsel %vm591, %v1624, %v2516
      %v2599 = vsel %vm591, %v1629, %v2518
      %v2600 = vsel %vm591, %v1632, %v2520
      %vm2601 = vcmask 261120
      %v2602 = vsel %vm2601, %v2593, %v2538
      %v2603 = vsel %vm2601, %v2594, %v2540
      %v2604 = vsel %vm2601, %v2595, %v2542
      %v2605 = vsel %vm2601, %v2596, %v2544
      %v2606 = vsel %vm2601, %v2597, %v2546
      %v2607 = vsel %vm2601, %v2598, %v2548
      %v2608 = vsel %vm2601, %v2599, %v2550
      %v2609 = vsel %vm2601, %v2600, %v2552
      %vm2610 = vcmask 392192
      %v2611 = vsel %vm2610, %v2602, %v2570
      %v2612 = vsel %vm2610, %v2603, %v2572
      %v2613 = vsel %vm2610, %v2604, %v2574
      %v2614 = vsel %vm2610, %v2605, %v2576
      %v2615 = vsel %vm2610, %v2606, %v2578
      %v2616 = vsel %vm2610, %v2607, %v2580
      %v2617 = vsel %vm2610, %v2608, %v2582
      %v2618 = vsel %vm2610, %v2609, %v2584
      %v2619 = vpack.c.bf16 %v2612, %v2611
      %v2620 = vpack.c.bf16 %v2614, %v2613
      %v2621 = vpack.c.bf16 %v2616, %v2615
      %v2622 = vpack.c.bf16 %v2618, %v2617
      %v2623 = vld [vmem:[%s9] sm:$0xf]
      %v2624 = vld [vmem:[%s9 + $0x4] sm:$0xf]
      %v2625 = vld [vmem:[%s9 + $0x8] sm:$0xf]
      %v2626 = vld [vmem:[%s9 + $0xc] sm:$0xf]
      %v2627 = vld [vmem:[%s9 + $0x10] sm:$0xf]
      %v2628 = vld [vmem:[%s9 + $0x14] sm:$0xf]
      %v2629 = vld [vmem:[%s9 + $0x18] sm:$0xf]
      %v2630 = vld [vmem:[%s9 + $0x1c] sm:$0xf]
      %v2631 = vld [vmem:[%s10] sm:$0x1]
      %v2633 = vlaneseq
      %v2634 = vshrl.u32 %v2633, 7
      %v2635 = vsub.s32 0, %v2634
      %v2636 = vrot.slane %v2631, %v2635
      %v2646 = vunpack.c.l.b16 %v2623
      %v2647 = vunpack.c.l.b16 %v2624
      %v2648 = vunpack.c.l.b16 %v2625
      %v2649 = vunpack.c.l.b16 %v2626
      %v2650 = vunpack.c.l.b16 %v2627
      %v2651 = vunpack.c.l.b16 %v2628
      %v2652 = vunpack.c.l.b16 %v2629
      %v2653 = vunpack.c.l.b16 %v2630
      %v2654 = vpack.c.b16 %v2647, %v2646
      %v2655 = vpack.c.b16 %v2649, %v2648
      %v2656 = vpack.c.b16 %v2651, %v2650
      %v2657 = vpack.c.b16 %v2653, %v2652
      %v2663 = vsel %vm907, %v2619, 0
      %v2666 = vsel %vm907, %v2620, 0
      %v2669 = vsel %vm907, %v2621, 0
      %v2672 = vsel %vm907, %v2622, 0
      %2674 = vmatprep.subr.bf16.mxu0 0
      %2675 = vmatpush1.bf16.msra.mxu0 0
      %2676 = vmatprep.subr.bf16.mxu0 0
      %2677 = vmatpush1.bf16.msra.mxu0 0
      %2678 = vmatprep.subr.bf16.mxu0 0
      %2679 = vmatpush1.bf16.msra.mxu0 0
      %2680 = vmatprep.subr.bf16.mxu0 0
      %2681 = vmatpush1.bf16.msra.mxu0 0
      %2682 = vmatprep.subr.bf16.mxu0 0
      %2683 = vmatpush1.bf16.msra.mxu0 %v2657
      %2684 = vmatprep.subr.bf16.mxu0 0
      %2685 = vmatpush1.bf16.msra.mxu0 %v2656
      %2686 = vmatprep.subr.bf16.mxu0 0
      %2687 = vmatpush1.bf16.msra.mxu0 %v2655
      %2688 = vmatprep.subr.bf16.mxu0 0
      %2689 = vmatpush1.bf16.msra.mxu0 %v2654
      %2690 = vmatprep.subr.bf16.mxu0 0
      %2691 = vmatpush2.bf16.msra.mxu0 0
      %2692 = vmatprep.subr.bf16.mxu0 0
      %2693 = vmatpush2.bf16.msra.mxu0 0
      %2694 = vmatprep.subr.bf16.mxu0 0
      %2695 = vmatpush2.bf16.msra.mxu0 0
      %2696 = vmatprep.subr.bf16.mxu0 0
      %2697 = vmatpush2.bf16.msra.mxu0 0
      %2698 = vmatprep.subr.bf16.mxu0 0
      %2699 = vmatpush2.bf16.msra.mxu0 0
      %2700 = vmatprep.subr.bf16.mxu0 0
      %2701 = vmatpush2.bf16.msra.mxu0 0
      %2702 = vmatprep.subr.bf16.mxu0 0
      %2703 = vmatpush2.bf16.msra.mxu0 0
      %2704 = vmatprep.subr.bf16.mxu0 0
      %2705 = vmatpush2.bf16.msra.mxu0 0
      %2706 = vmatprep.mubr.bf16.mxu0 0
      %2707 = vmatmul.mubr.bf16.gmra.mxu0 %v2663
      %v2708 = vpop.f32.mrf.mxu0
      %v2709 = vadd.f32 %v2636, %v2708
      %v2710 = vpop.f32.mrf.mxu0
      %v2711 = vpop.f32.mrf.mxu0
      %v2712 = vadd.f32 %v2636, %v2711
      %v2713 = vpop.f32.mrf.mxu0
      %2714 = vmatprep.mubr.bf16.mxu0 0
      %2715 = vmatmul.mubr.bf16.gmra.mxu0 %v2666
      %v2716 = vpop.f32.mrf.mxu0
      %v2717 = vadd.f32 %v2636, %v2716
      %v2718 = vpop.f32.mrf.mxu0
      %v2719 = vpop.f32.mrf.mxu0
      %v2720 = vadd.f32 %v2636, %v2719
      %v2721 = vpop.f32.mrf.mxu0
      %2722 = vmatprep.mubr.bf16.mxu0 0
      %2723 = vmatmul.mubr.bf16.gmra.mxu0 %v2669
      %v2724 = vpop.f32.mrf.mxu0
      %v2725 = vadd.f32 %v2636, %v2724
      %v2726 = vpop.f32.mrf.mxu0
      %v2727 = vpop.f32.mrf.mxu0
      %v2728 = vadd.f32 %v2636, %v2727
      %v2729 = vpop.f32.mrf.mxu0
      %2730 = vmatprep.mubr.bf16.mxu0 0
      %2731 = vmatmul.mubr.bf16.gmra.mxu0 %v2672
      %v2732 = vpop.f32.mrf.mxu0
      %v2733 = vadd.f32 %v2636, %v2732
      %v2734 = vpop.f32.mrf.mxu0
      %v2735 = vpop.f32.mrf.mxu0
      %v2736 = vadd.f32 %v2636, %v2735
      %v2737 = vpop.f32.mrf.mxu0
      %2738 = vdwg.mxu0
      %v2739 = vlaneseq
      %v2740 = vshrl.u32 %v2739, 7
      %v2741 = vsub.s32 0, %v2740
      %v2742 = vrot.slane %v948, %v2741
      %v2743 = vmul.f32 %v2742, %v2709
      %v2744 = vmul.f32 %v2742, %v2712
      %v2745 = vmul.f32 %v2742, %v2717
      %v2746 = vmul.f32 %v2742, %v2720
      %v2747 = vmul.f32 %v2742, %v2725
      %v2748 = vmul.f32 %v2742, %v2728
      %v2749 = vmul.f32 %v2742, %v2733
      %v2750 = vmul.f32 %v2742, %v2736
      %v2751 = vadd.f32 %v677, %v2743
      %v2752 = vadd.f32 %v678, %v2744
      %v2753 = vadd.f32 %v679, %v2745
      %v2754 = vadd.f32 %v680, %v2746
      %v2755 = vadd.f32 %v681, %v2747
      %v2756 = vadd.f32 %v682, %v2748
      %v2757 = vadd.f32 %v683, %v2749
      %v2758 = vadd.f32 %v684, %v2750
      %v2759 = vsel %vm907, %v2751, 0.0
      %2760 = vadd.xlane.f32.xlu0 %v2759
      %v2761 = vpop.xlane.xlu0 %2760
      %v2762 = vsel %vm907, %v2752, 0.0
      %2763 = vadd.xlane.f32.xlu0 %v2762
      %v2764 = vpop.xlane.xlu0 %2763
      %v2765 = vsel %vm907, %v2753, 0.0
      %2766 = vadd.xlane.f32.xlu0 %v2765
      %v2767 = vpop.xlane.xlu0 %2766
      %v2768 = vsel %vm907, %v2754, 0.0
      %2769 = vadd.xlane.f32.xlu0 %v2768
      %v2770 = vpop.xlane.xlu0 %2769
      %v2771 = vsel %vm907, %v2755, 0.0
      %2772 = vadd.xlane.f32.xlu0 %v2771
      %v2773 = vpop.xlane.xlu0 %2772
      %v2774 = vsel %vm907, %v2756, 0.0
      %2775 = vadd.xlane.f32.xlu0 %v2774
      %v2776 = vpop.xlane.xlu0 %2775
      %v2777 = vsel %vm907, %v2757, 0.0
      %2778 = vadd.xlane.f32.xlu0 %v2777
      %v2779 = vpop.xlane.xlu0 %2778
      %v2780 = vsel %vm907, %v2758, 0.0
      %2781 = vadd.xlane.f32.xlu0 %v2780
      %v2782 = vpop.xlane.xlu0 %2781
      %v2783 = vmul.f32 %v2761, %v1098
      %v2784 = vmul.f32 %v2764, %v1098
      %v2785 = vmul.f32 %v2767, %v1098
      %v2786 = vmul.f32 %v2770, %v1098
      %v2787 = vmul.f32 %v2773, %v1098
      %v2788 = vmul.f32 %v2776, %v1098
      %v2789 = vmul.f32 %v2779, %v1098
      %v2790 = vmul.f32 %v2782, %v1098
      %v2791 = vsub.f32 %v2751, %v2783
      %v2792 = vsub.f32 %v2752, %v2784
      %v2793 = vsub.f32 %v2753, %v2785
      %v2794 = vsub.f32 %v2754, %v2786
      %v2795 = vsub.f32 %v2755, %v2787
      %v2796 = vsub.f32 %v2756, %v2788
      %v2797 = vsub.f32 %v2757, %v2789
      %v2798 = vsub.f32 %v2758, %v2790
      %v2799 = vmul.f32 %v2791, %v2791
      %v2800 = vmul.f32 %v2792, %v2792
      %v2801 = vmul.f32 %v2793, %v2793
      %v2802 = vmul.f32 %v2794, %v2794
      %v2803 = vmul.f32 %v2795, %v2795
      %v2804 = vmul.f32 %v2796, %v2796
      %v2805 = vmul.f32 %v2797, %v2797
      %v2806 = vmul.f32 %v2798, %v2798
      %v2807 = vsel %vm907, %v2799, 0.0
      %2808 = vadd.xlane.f32.xlu0 %v2807
      %v2809 = vpop.xlane.xlu0 %2808
      %v2810 = vsel %vm907, %v2800, 0.0
      %2811 = vadd.xlane.f32.xlu0 %v2810
      %v2812 = vpop.xlane.xlu0 %2811
      %v2813 = vsel %vm907, %v2801, 0.0
      %2814 = vadd.xlane.f32.xlu0 %v2813
      %v2815 = vpop.xlane.xlu0 %2814
      %v2816 = vsel %vm907, %v2802, 0.0
      %2817 = vadd.xlane.f32.xlu0 %v2816
      %v2818 = vpop.xlane.xlu0 %2817
      %v2819 = vsel %vm907, %v2803, 0.0
      %2820 = vadd.xlane.f32.xlu0 %v2819
      %v2821 = vpop.xlane.xlu0 %2820
      %v2822 = vsel %vm907, %v2804, 0.0
      %2823 = vadd.xlane.f32.xlu0 %v2822
      %v2824 = vpop.xlane.xlu0 %2823
      %v2825 = vsel %vm907, %v2805, 0.0
      %2826 = vadd.xlane.f32.xlu0 %v2825
      %v2827 = vpop.xlane.xlu0 %2826
      %v2828 = vsel %vm907, %v2806, 0.0
      %2829 = vadd.xlane.f32.xlu0 %v2828
      %v2830 = vpop.xlane.xlu0 %2829
      %v2831 = vmul.f32 %v2809, %v1098
      %v2832 = vmul.f32 %v2812, %v1098
      %v2833 = vmul.f32 %v2815, %v1098
      %v2834 = vmul.f32 %v2818, %v1098
      %v2835 = vmul.f32 %v2821, %v1098
      %v2836 = vmul.f32 %v2824, %v1098
      %v2837 = vmul.f32 %v2827, %v1098
      %v2838 = vmul.f32 %v2830, %v1098
      %v2839 = vadd.f32 %v2831, 1e-06
      %v2840 = vadd.f32 %v2832, 1e-06
      %v2841 = vadd.f32 %v2833, 1e-06
      %v2842 = vadd.f32 %v2834, 1e-06
      %v2843 = vadd.f32 %v2835, 1e-06
      %v2844 = vadd.f32 %v2836, 1e-06
      %v2845 = vadd.f32 %v2837, 1e-06
      %v2846 = vadd.f32 %v2838, 1e-06
      %v2847 = vrsqrt.pop %v2839
      %v2848 = vrsqrt.pop %v2840
      %v2849 = vrsqrt.pop %v2841
      %v2850 = vrsqrt.pop %v2842
      %v2851 = vrsqrt.pop %v2843
      %v2852 = vrsqrt.pop %v2844
      %v2853 = vrsqrt.pop %v2845
      %v2854 = vrsqrt.pop %v2846
      %v2855 = vmul.f32 %v2791, %v2847
      %v2856 = vmul.f32 %v2792, %v2848
      %v2857 = vmul.f32 %v2793, %v2849
      %v2858 = vmul.f32 %v2794, %v2850
      %v2859 = vmul.f32 %v2795, %v2851
      %v2860 = vmul.f32 %v2796, %v2852
      %v2861 = vmul.f32 %v2797, %v2853
      %v2862 = vmul.f32 %v2798, %v2854
      %v2863 = vadd.f32 %v987, 1.0
      %v2864 = vlaneseq
      %v2865 = vshrl.u32 %v2864, 7
      %v2866 = vsub.s32 0, %v2865
      %v2867 = vrot.slane %v2863, %v2866
      %v2868 = vmul.f32 %v2855, %v2867
      %v2869 = vmul.f32 %v2856, %v2867
      %v2870 = vmul.f32 %v2857, %v2867
      %v2871 = vmul.f32 %v2858, %v2867
      %v2872 = vmul.f32 %v2859, %v2867
      %v2873 = vmul.f32 %v2860, %v2867
      %v2874 = vmul.f32 %v2861, %v2867
      %v2875 = vmul.f32 %v2862, %v2867
      %2877 = vrot.lane.b32.xlu0 %v2742, 64
      %v2878 = vpop.permute.xlu0 %2877
      %v2880 = vadd.f32 %v2868, %v2878
      %v2881 = vadd.f32 %v2869, %v2878
      %v2882 = vadd.f32 %v2870, %v2878
      %v2883 = vadd.f32 %v2871, %v2878
      %v2884 = vadd.f32 %v2872, %v2878
      %v2885 = vadd.f32 %v2873, %v2878
      %v2886 = vadd.f32 %v2874, %v2878
      %v2887 = vadd.f32 %v2875, %v2878
      %v2888 = vld [vmem:[%s11] sm:$0xff]
      %v2889 = vld [vmem:[%s11 + $0x8] sm:$0xff]
      %v2890 = vld [vmem:[%s11 + $0x10] sm:$0xff]
      %v2891 = vld [vmem:[%s11 + $0x18] sm:$0xff]
      %v2892 = vld [vmem:[%s11 + $0x20] sm:$0xff]
      %v2893 = vld [vmem:[%s11 + $0x28] sm:$0xff]
      %v2894 = vld [vmem:[%s11 + $0x30] sm:$0xff]
      %v2895 = vld [vmem:[%s11 + $0x38] sm:$0xff]
      %v2896 = vpack.c.bf16 %v2881, %v2880
      %v2897 = vpack.c.bf16 %v2883, %v2882
      %v2898 = vpack.c.bf16 %v2885, %v2884
      %v2899 = vpack.c.bf16 %v2887, %v2886
      %v2900 = vld [vmem:[%s12] sm:$0x3]
      %v2902 = vlaneseq
      %v2903 = vshrl.u32 %v2902, 7
      %v2904 = vsub.s32 0, %v2903
      %v2905 = vrot.slane %v2900, %v2904
      %v2906 = vlaneseq
      %v2907 = vshrl.u32 %v2906, 7
      %v2908 = vsub.s32 1, %v2907
      %v2909 = vrot.slane %v2900, %v2908
      %v2920 = vunpack.c.l.b16 %v2888
      %v2921 = vunpack.c.h.b16 %v2888
      %v2922 = vunpack.c.l.b16 %v2889
      %v2923 = vunpack.c.h.b16 %v2889
      %v2924 = vunpack.c.l.b16 %v2890
      %v2925 = vunpack.c.h.b16 %v2890
      %v2926 = vunpack.c.l.b16 %v2891
      %v2927 = vunpack.c.h.b16 %v2891
      %v2928 = vunpack.c.l.b16 %v2892
      %v2929 = vunpack.c.h.b16 %v2892
      %v2930 = vunpack.c.l.b16 %v2893
      %v2931 = vunpack.c.h.b16 %v2893
      %v2932 = vunpack.c.l.b16 %v2894
      %v2933 = vunpack.c.h.b16 %v2894
      %v2934 = vunpack.c.l.b16 %v2895
      %v2935 = vunpack.c.h.b16 %v2895
      %v2936 = vpack.c.b16 %v2922, %v2920
      %v2937 = vpack.c.b16 %v2923, %v2921
      %v2938 = vpack.c.b16 %v2926, %v2924
      %v2939 = vpack.c.b16 %v2927, %v2925
      %v2940 = vpack.c.b16 %v2930, %v2928
      %v2941 = vpack.c.b16 %v2931, %v2929
      %v2942 = vpack.c.b16 %v2934, %v2932
      %v2943 = vpack.c.b16 %v2935, %v2933
      %v2953 = vsel %vm907, %v2896, 0
      %v2956 = vsel %vm907, %v2897, 0
      %v2959 = vsel %vm907, %v2898, 0
      %v2962 = vsel %vm907, %v2899, 0
      %2964 = vmatprep.subr.bf16.mxu0 0
      %2965 = vmatpush1.bf16.msra.mxu0 0
      %2966 = vmatprep.subr.bf16.mxu0 0
      %2967 = vmatpush1.bf16.msra.mxu0 0
      %2968 = vmatprep.subr.bf16.mxu0 0
      %2969 = vmatpush1.bf16.msra.mxu0 0
      %2970 = vmatprep.subr.bf16.mxu0 0
      %2971 = vmatpush1.bf16.msra.mxu0 0
      %2972 = vmatprep.subr.bf16.mxu0 %v2943
      %2973 = vmatpush1.bf16.msra.mxu0 %v2942
      %2974 = vmatprep.subr.bf16.mxu0 %v2941
      %2975 = vmatpush1.bf16.msra.mxu0 %v2940
      %2976 = vmatprep.subr.bf16.mxu0 %v2939
      %2977 = vmatpush1.bf16.msra.mxu0 %v2938
      %2978 = vmatprep.subr.bf16.mxu0 %v2937
      %2979 = vmatpush1.bf16.msra.mxu0 %v2936
      %2980 = vmatprep.subr.bf16.mxu0 0
      %2981 = vmatpush2.bf16.msra.mxu0 0
      %2982 = vmatprep.subr.bf16.mxu0 0
      %2983 = vmatpush2.bf16.msra.mxu0 0
      %2984 = vmatprep.subr.bf16.mxu0 0
      %2985 = vmatpush2.bf16.msra.mxu0 0
      %2986 = vmatprep.subr.bf16.mxu0 0
      %2987 = vmatpush2.bf16.msra.mxu0 0
      %2988 = vmatprep.subr.bf16.mxu0 0
      %2989 = vmatpush2.bf16.msra.mxu0 0
      %2990 = vmatprep.subr.bf16.mxu0 0
      %2991 = vmatpush2.bf16.msra.mxu0 0
      %2992 = vmatprep.subr.bf16.mxu0 0
      %2993 = vmatpush2.bf16.msra.mxu0 0
      %2994 = vmatprep.subr.bf16.mxu0 0
      %2995 = vmatpush2.bf16.msra.mxu0 0
      %2996 = vmatprep.mubr.bf16.mxu0 0
      %2997 = vmatmul.mubr.bf16.gmra.mxu0 %v2953
      %v2998 = vpop.f32.mrf.mxu0
      %v2999 = vadd.f32 %v2905, %v2998
      %v3000 = vpop.f32.mrf.mxu0
      %v3001 = vadd.f32 %v2909, %v3000
      %v3002 = vpop.f32.mrf.mxu0
      %v3003 = vadd.f32 %v2905, %v3002
      %v3004 = vpop.f32.mrf.mxu0
      %v3005 = vadd.f32 %v2909, %v3004
      %3006 = vmatprep.mubr.bf16.mxu0 0
      %3007 = vmatmul.mubr.bf16.gmra.mxu0 %v2956
      %v3008 = vpop.f32.mrf.mxu0
      %v3009 = vadd.f32 %v2905, %v3008
      %v3010 = vpop.f32.mrf.mxu0
      %v3011 = vadd.f32 %v2909, %v3010
      %v3012 = vpop.f32.mrf.mxu0
      %v3013 = vadd.f32 %v2905, %v3012
      %v3014 = vpop.f32.mrf.mxu0
      %v3015 = vadd.f32 %v2909, %v3014
      %3016 = vmatprep.mubr.bf16.mxu0 0
      %3017 = vmatmul.mubr.bf16.gmra.mxu0 %v2959
      %v3018 = vpop.f32.mrf.mxu0
      %v3019 = vadd.f32 %v2905, %v3018
      %v3020 = vpop.f32.mrf.mxu0
      %v3021 = vadd.f32 %v2909, %v3020
      %v3022 = vpop.f32.mrf.mxu0
      %v3023 = vadd.f32 %v2905, %v3022
      %v3024 = vpop.f32.mrf.mxu0
      %v3025 = vadd.f32 %v2909, %v3024
      %3026 = vmatprep.mubr.bf16.mxu0 0
      %3027 = vmatmul.mubr.bf16.gmra.mxu0 %v2962
      %v3028 = vpop.f32.mrf.mxu0
      %v3029 = vadd.f32 %v2905, %v3028
      %v3030 = vpop.f32.mrf.mxu0
      %v3031 = vadd.f32 %v2909, %v3030
      %v3032 = vpop.f32.mrf.mxu0
      %v3033 = vadd.f32 %v2905, %v3032
      %v3034 = vpop.f32.mrf.mxu0
      %v3035 = vadd.f32 %v2909, %v3034
      %3036 = vdwg.mxu0
      %v3037 = vmul.f32 %v2999, 0.5
      %v3038 = vmul.f32 %v3001, 0.5
      %v3039 = vmul.f32 %v3003, 0.5
      %v3040 = vmul.f32 %v3005, 0.5
      %v3041 = vmul.f32 %v3009, 0.5
      %v3042 = vmul.f32 %v3011, 0.5
      %v3043 = vmul.f32 %v3013, 0.5
      %v3044 = vmul.f32 %v3015, 0.5
      %v3045 = vmul.f32 %v3019, 0.5
      %v3046 = vmul.f32 %v3021, 0.5
      %v3047 = vmul.f32 %v3023, 0.5
      %v3048 = vmul.f32 %v3025, 0.5
      %v3049 = vmul.f32 %v3029, 0.5
      %v3050 = vmul.f32 %v3031, 0.5
      %v3051 = vmul.f32 %v3033, 0.5
      %v3052 = vmul.f32 %v3035, 0.5
      %v3053 = vmul.f32 %v2999, 0.044715
      %v3054 = vmul.f32 %v3001, 0.044715
      %v3055 = vmul.f32 %v3003, 0.044715
      %v3056 = vmul.f32 %v3005, 0.044715
      %v3057 = vmul.f32 %v3009, 0.044715
      %v3058 = vmul.f32 %v3011, 0.044715
      %v3059 = vmul.f32 %v3013, 0.044715
      %v3060 = vmul.f32 %v3015, 0.044715
      %v3061 = vmul.f32 %v3019, 0.044715
      %v3062 = vmul.f32 %v3021, 0.044715
      %v3063 = vmul.f32 %v3023, 0.044715
      %v3064 = vmul.f32 %v3025, 0.044715
      %v3065 = vmul.f32 %v3029, 0.044715
      %v3066 = vmul.f32 %v3031, 0.044715
      %v3067 = vmul.f32 %v3033, 0.044715
      %v3068 = vmul.f32 %v3035, 0.044715
      %v3069 = vmul.f32 %v3053, %v2999
      %v3070 = vmul.f32 %v3054, %v3001
      %v3071 = vmul.f32 %v3055, %v3003
      %v3072 = vmul.f32 %v3056, %v3005
      %v3073 = vmul.f32 %v3057, %v3009
      %v3074 = vmul.f32 %v3058, %v3011
      %v3075 = vmul.f32 %v3059, %v3013
      %v3076 = vmul.f32 %v3060, %v3015
      %v3077 = vmul.f32 %v3061, %v3019
      %v3078 = vmul.f32 %v3062, %v3021
      %v3079 = vmul.f32 %v3063, %v3023
      %v3080 = vmul.f32 %v3064, %v3025
      %v3081 = vmul.f32 %v3065, %v3029
      %v3082 = vmul.f32 %v3066, %v3031
      %v3083 = vmul.f32 %v3067, %v3033
      %v3084 = vmul.f32 %v3068, %v3035
      %v3085 = vmul.f32 %v3069, %v2999
      %v3086 = vmul.f32 %v3070, %v3001
      %v3087 = vmul.f32 %v3071, %v3003
      %v3088 = vmul.f32 %v3072, %v3005
      %v3089 = vmul.f32 %v3073, %v3009
      %v3090 = vmul.f32 %v3074, %v3011
      %v3091 = vmul.f32 %v3075, %v3013
      %v3092 = vmul.f32 %v3076, %v3015
      %v3093 = vmul.f32 %v3077, %v3019
      %v3094 = vmul.f32 %v3078, %v3021
      %v3095 = vmul.f32 %v3079, %v3023
      %v3096 = vmul.f32 %v3080, %v3025
      %v3097 = vmul.f32 %v3081, %v3029
      %v3098 = vmul.f32 %v3082, %v3031
      %v3099 = vmul.f32 %v3083, %v3033
      %v3100 = vmul.f32 %v3084, %v3035
      %v3101 = vadd.f32 %v2999, %v3085
      %v3102 = vadd.f32 %v3001, %v3086
      %v3103 = vadd.f32 %v3003, %v3087
      %v3104 = vadd.f32 %v3005, %v3088
      %v3105 = vadd.f32 %v3009, %v3089
      %v3106 = vadd.f32 %v3011, %v3090
      %v3107 = vadd.f32 %v3013, %v3091
      %v3108 = vadd.f32 %v3015, %v3092
      %v3109 = vadd.f32 %v3019, %v3093
      %v3110 = vadd.f32 %v3021, %v3094
      %v3111 = vadd.f32 %v3023, %v3095
      %v3112 = vadd.f32 %v3025, %v3096
      %v3113 = vadd.f32 %v3029, %v3097
      %v3114 = vadd.f32 %v3031, %v3098
      %v3115 = vadd.f32 %v3033, %v3099
      %v3116 = vadd.f32 %v3035, %v3100
      %v3117 = vmul.f32 %v3101, 0.7978846
      %v3118 = vmul.f32 %v3102, 0.7978846
      %v3119 = vmul.f32 %v3103, 0.7978846
      %v3120 = vmul.f32 %v3104, 0.7978846
      %v3121 = vmul.f32 %v3105, 0.7978846
      %v3122 = vmul.f32 %v3106, 0.7978846
      %v3123 = vmul.f32 %v3107, 0.7978846
      %v3124 = vmul.f32 %v3108, 0.7978846
      %v3125 = vmul.f32 %v3109, 0.7978846
      %v3126 = vmul.f32 %v3110, 0.7978846
      %v3127 = vmul.f32 %v3111, 0.7978846
      %v3128 = vmul.f32 %v3112, 0.7978846
      %v3129 = vmul.f32 %v3113, 0.7978846
      %v3130 = vmul.f32 %v3114, 0.7978846
      %v3131 = vmul.f32 %v3115, 0.7978846
      %v3132 = vmul.f32 %v3116, 0.7978846
      %v3133 = vtanh.pop %v3117
      %v3134 = vtanh.pop %v3118
      %v3135 = vtanh.pop %v3119
      %v3136 = vtanh.pop %v3120
      %v3137 = vtanh.pop %v3121
      %v3138 = vtanh.pop %v3122
      %v3139 = vtanh.pop %v3123
      %v3140 = vtanh.pop %v3124
      %v3141 = vtanh.pop %v3125
      %v3142 = vtanh.pop %v3126
      %v3143 = vtanh.pop %v3127
      %v3144 = vtanh.pop %v3128
      %v3145 = vtanh.pop %v3129
      %v3146 = vtanh.pop %v3130
      %v3147 = vtanh.pop %v3131
      %v3148 = vtanh.pop %v3132
      %v3149 = vadd.f32 %v3133, 1.0
      %v3150 = vadd.f32 %v3134, 1.0
      %v3151 = vadd.f32 %v3135, 1.0
      %v3152 = vadd.f32 %v3136, 1.0
      %v3153 = vadd.f32 %v3137, 1.0
      %v3154 = vadd.f32 %v3138, 1.0
      %v3155 = vadd.f32 %v3139, 1.0
      %v3156 = vadd.f32 %v3140, 1.0
      %v3157 = vadd.f32 %v3141, 1.0
      %v3158 = vadd.f32 %v3142, 1.0
      %v3159 = vadd.f32 %v3143, 1.0
      %v3160 = vadd.f32 %v3144, 1.0
      %v3161 = vadd.f32 %v3145, 1.0
      %v3162 = vadd.f32 %v3146, 1.0
      %v3163 = vadd.f32 %v3147, 1.0
      %v3164 = vadd.f32 %v3148, 1.0
      %v3165 = vmul.f32 %v3037, %v3149
      %v3166 = vmul.f32 %v3038, %v3150
      %v3167 = vmul.f32 %v3039, %v3151
      %v3168 = vmul.f32 %v3040, %v3152
      %v3169 = vmul.f32 %v3041, %v3153
      %v3170 = vmul.f32 %v3042, %v3154
      %v3171 = vmul.f32 %v3043, %v3155
      %v3172 = vmul.f32 %v3044, %v3156
      %v3173 = vmul.f32 %v3045, %v3157
      %v3174 = vmul.f32 %v3046, %v3158
      %v3175 = vmul.f32 %v3047, %v3159
      %v3176 = vmul.f32 %v3048, %v3160
      %v3177 = vmul.f32 %v3049, %v3161
      %v3178 = vmul.f32 %v3050, %v3162
      %v3179 = vmul.f32 %v3051, %v3163
      %v3180 = vmul.f32 %v3052, %v3164
      %v3181 = vld [vmem:[%s13] sm:$0xf]
      %v3182 = vld [vmem:[%s13 + $0x4] sm:$0xf]
      %v3183 = vld [vmem:[%s13 + $0x8] sm:$0xf]
      %v3184 = vld [vmem:[%s13 + $0xc] sm:$0xf]
      %v3185 = vld [vmem:[%s13 + $0x10] sm:$0xf]
      %v3186 = vld [vmem:[%s13 + $0x14] sm:$0xf]
      %v3187 = vld [vmem:[%s13 + $0x18] sm:$0xf]
      %v3188 = vld [vmem:[%s13 + $0x1c] sm:$0xf]
      %v3189 = vld [vmem:[%s13 + $0x20] sm:$0xf]
      %v3190 = vld [vmem:[%s13 + $0x24] sm:$0xf]
      %v3191 = vld [vmem:[%s13 + $0x28] sm:$0xf]
      %v3192 = vld [vmem:[%s13 + $0x2c] sm:$0xf]
      %v3193 = vld [vmem:[%s13 + $0x30] sm:$0xf]
      %v3194 = vld [vmem:[%s13 + $0x34] sm:$0xf]
      %v3195 = vld [vmem:[%s13 + $0x38] sm:$0xf]
      %v3196 = vld [vmem:[%s13 + $0x3c] sm:$0xf]
      %v3197 = vld [vmem:[%s13 + $0x40] sm:$0xf]
      %v3198 = vld [vmem:[%s13 + $0x44] sm:$0xf]
      %v3199 = vld [vmem:[%s13 + $0x48] sm:$0xf]
      %v3200 = vld [vmem:[%s13 + $0x4c] sm:$0xf]
      %v3201 = vld [vmem:[%s13 + $0x50] sm:$0xf]
      %v3202 = vld [vmem:[%s13 + $0x54] sm:$0xf]
      %v3203 = vld [vmem:[%s13 + $0x58] sm:$0xf]
      %v3204 = vld [vmem:[%s13 + $0x5c] sm:$0xf]
      %v3205 = vld [vmem:[%s13 + $0x60] sm:$0xf]
      %v3206 = vld [vmem:[%s13 + $0x64] sm:$0xf]
      %v3207 = vld [vmem:[%s13 + $0x68] sm:$0xf]
      %v3208 = vld [vmem:[%s13 + $0x6c] sm:$0xf]
      %v3209 = vld [vmem:[%s13 + $0x70] sm:$0xf]
      %v3210 = vld [vmem:[%s13 + $0x74] sm:$0xf]
      %v3211 = vld [vmem:[%s13 + $0x78] sm:$0xf]
      %v3212 = vld [vmem:[%s13 + $0x7c] sm:$0xf]
      %v3213 = vpack.c.bf16 %v3167, %v3165
      %v3214 = vpack.c.bf16 %v3168, %v3166
      %v3215 = vpack.c.bf16 %v3171, %v3169
      %v3216 = vpack.c.bf16 %v3172, %v3170
      %v3217 = vpack.c.bf16 %v3175, %v3173
      %v3218 = vpack.c.bf16 %v3176, %v3174
      %v3219 = vpack.c.bf16 %v3179, %v3177
      %v3220 = vpack.c.bf16 %v3180, %v3178
      %v3221 = vld [vmem:[%s14] sm:$0x1]
      %v3223 = vlaneseq
      %v3224 = vshrl.u32 %v3223, 7
      %v3225 = vsub.s32 0, %v3224
      %v3226 = vrot.slane %v3221, %v3225
      %v3260 = vunpack.c.l.b16 %v3181
      %v3261 = vunpack.c.l.b16 %v3182
      %v3262 = vunpack.c.l.b16 %v3183
      %v3263 = vunpack.c.l.b16 %v3184
      %v3264 = vunpack.c.l.b16 %v3185
      %v3265 = vunpack.c.l.b16 %v3186
      %v3266 = vunpack.c.l.b16 %v3187
      %v3267 = vunpack.c.l.b16 %v3188
      %v3268 = vunpack.c.l.b16 %v3189
      %v3269 = vunpack.c.l.b16 %v3190
      %v3270 = vunpack.c.l.b16 %v3191
      %v3271 = vunpack.c.l.b16 %v3192
      %v3272 = vunpack.c.l.b16 %v3193
      %v3273 = vunpack.c.l.b16 %v3194
      %v3274 = vunpack.c.l.b16 %v3195
      %v3275 = vunpack.c.l.b16 %v3196
      %v3276 = vunpack.c.l.b16 %v3197
      %v3277 = vunpack.c.l.b16 %v3198
      %v3278 = vunpack.c.l.b16 %v3199
      %v3279 = vunpack.c.l.b16 %v3200
      %v3280 = vunpack.c.l.b16 %v3201
      %v3281 = vunpack.c.l.b16 %v3202
      %v3282 = vunpack.c.l.b16 %v3203
      %v3283 = vunpack.c.l.b16 %v3204
      %v3284 = vunpack.c.l.b16 %v3205
      %v3285 = vunpack.c.l.b16 %v3206
      %v3286 = vunpack.c.l.b16 %v3207
      %v3287 = vunpack.c.l.b16 %v3208
      %v3288 = vunpack.c.l.b16 %v3209
      %v3289 = vunpack.c.l.b16 %v3210
      %v3290 = vunpack.c.l.b16 %v3211
      %v3291 = vunpack.c.l.b16 %v3212
      %v3292 = vpack.c.b16 %v3261, %v3260
      %v3293 = vpack.c.b16 %v3263, %v3262
      %v3294 = vpack.c.b16 %v3265, %v3264
      %v3295 = vpack.c.b16 %v3267, %v3266
      %v3296 = vpack.c.b16 %v3269, %v3268
      %v3297 = vpack.c.b16 %v3271, %v3270
      %v3298 = vpack.c.b16 %v3273, %v3272
      %v3299 = vpack.c.b16 %v3275, %v3274
      %v3300 = vpack.c.b16 %v3277, %v3276
      %v3301 = vpack.c.b16 %v3279, %v3278
      %v3302 = vpack.c.b16 %v3281, %v3280
      %v3303 = vpack.c.b16 %v3283, %v3282
      %v3304 = vpack.c.b16 %v3285, %v3284
      %v3305 = vpack.c.b16 %v3287, %v3286
      %v3306 = vpack.c.b16 %v3289, %v3288
      %v3307 = vpack.c.b16 %v3291, %v3290
      %3324 = vmatprep.subr.bf16.mxu0 0
      %3325 = vmatpush1.bf16.msra.mxu0 %v3299
      %3326 = vmatprep.subr.bf16.mxu0 0
      %3327 = vmatpush1.bf16.msra.mxu0 %v3298
      %3328 = vmatprep.subr.bf16.mxu0 0
      %3329 = vmatpush1.bf16.msra.mxu0 %v3297
      %3330 = vmatprep.subr.bf16.mxu0 0
      %3331 = vmatpush1.bf16.msra.mxu0 %v3296
      %3332 = vmatprep.subr.bf16.mxu0 0
      %3333 = vmatpush1.bf16.msra.mxu0 %v3295
      %3334 = vmatprep.subr.bf16.mxu0 0
      %3335 = vmatpush1.bf16.msra.mxu0 %v3294
      %3336 = vmatprep.subr.bf16.mxu0 0
      %3337 = vmatpush1.bf16.msra.mxu0 %v3293
      %3338 = vmatprep.subr.bf16.mxu0 0
      %3339 = vmatpush1.bf16.msra.mxu0 %v3292
      %3340 = vmatprep.subr.bf16.mxu0 0
      %3341 = vmatpush2.bf16.msra.mxu0 %v3307
      %3342 = vmatprep.subr.bf16.mxu0 0
      %3343 = vmatpush2.bf16.msra.mxu0 %v3306
      %3344 = vmatprep.subr.bf16.mxu0 0
      %3345 = vmatpush2.bf16.msra.mxu0 %v3305
      %3346 = vmatprep.subr.bf16.mxu0 0
      %3347 = vmatpush2.bf16.msra.mxu0 %v3304
      %3348 = vmatprep.subr.bf16.mxu0 0
      %3349 = vmatpush2.bf16.msra.mxu0 %v3303
      %3350 = vmatprep.subr.bf16.mxu0 0
      %3351 = vmatpush2.bf16.msra.mxu0 %v3302
      %3352 = vmatprep.subr.bf16.mxu0 0
      %3353 = vmatpush2.bf16.msra.mxu0 %v3301
      %3354 = vmatprep.subr.bf16.mxu0 0
      %3355 = vmatpush2.bf16.msra.mxu0 %v3300
      %3356 = vmatprep.mubr.bf16.mxu0 %v3214
      %3357 = vmatmul.mubr.bf16.gmra.mxu0 %v3213
      %v3358 = vpop.f32.mrf.mxu0
      %v3359 = vadd.f32 %v3226, %v3358
      %v3360 = vpop.f32.mrf.mxu0
      %v3361 = vpop.f32.mrf.mxu0
      %v3362 = vadd.f32 %v3226, %v3361
      %v3363 = vpop.f32.mrf.mxu0
      %3364 = vmatprep.mubr.bf16.mxu0 %v3216
      %3365 = vmatmul.mubr.bf16.gmra.mxu0 %v3215
      %v3366 = vpop.f32.mrf.mxu0
      %v3367 = vadd.f32 %v3226, %v3366
      %v3368 = vpop.f32.mrf.mxu0
      %v3369 = vpop.f32.mrf.mxu0
      %v3370 = vadd.f32 %v3226, %v3369
      %v3371 = vpop.f32.mrf.mxu0
      %3372 = vmatprep.mubr.bf16.mxu0 %v3218
      %3373 = vmatmul.mubr.bf16.gmra.mxu0 %v3217
      %v3374 = vpop.f32.mrf.mxu0
      %v3375 = vadd.f32 %v3226, %v3374
      %v3376 = vpop.f32.mrf.mxu0
      %v3377 = vpop.f32.mrf.mxu0
      %v3378 = vadd.f32 %v3226, %v3377
      %v3379 = vpop.f32.mrf.mxu0
      %3380 = vmatprep.mubr.bf16.mxu0 %v3220
      %3381 = vmatmul.mubr.bf16.gmra.mxu0 %v3219
      %v3382 = vpop.f32.mrf.mxu0
      %v3383 = vadd.f32 %v3226, %v3382
      %v3384 = vpop.f32.mrf.mxu0
      %v3385 = vpop.f32.mrf.mxu0
      %v3386 = vadd.f32 %v3226, %v3385
      %v3387 = vpop.f32.mrf.mxu0
      %3388 = vdwg.mxu0
      %v3389 = vlaneseq
      %v3390 = vshrl.u32 %v3389, 7
      %v3391 = vsub.s32 0, %v3390
      %v3392 = vrot.slane %v987, %v3391
      %3401 = vrot.lane.b32.xlu0 %v3359, 64
      %v3402 = vpop.permute.xlu0 %3401
      %3403 = vrot.lane.b32.xlu0 %v3362, 64
      %v3404 = vpop.permute.xlu0 %3403
      %3405 = vrot.lane.b32.xlu0 %v3367, 64
      %v3406 = vpop.permute.xlu0 %3405
      %3407 = vrot.lane.b32.xlu0 %v3370, 64
      %v3408 = vpop.permute.xlu0 %3407
      %3409 = vrot.lane.b32.xlu0 %v3375, 64
      %v3410 = vpop.permute.xlu0 %3409
      %3411 = vrot.lane.b32.xlu0 %v3378, 64
      %v3412 = vpop.permute.xlu0 %3411
      %3413 = vrot.lane.b32.xlu0 %v3383, 64
      %v3414 = vpop.permute.xlu0 %3413
      %3415 = vrot.lane.b32.xlu0 %v3386, 64
      %v3416 = vpop.permute.xlu0 %3415
      %v3425 = vmul.f32 %v3392, %v3402
      %v3426 = vmul.f32 %v3392, %v3404
      %v3427 = vmul.f32 %v3392, %v3406
      %v3428 = vmul.f32 %v3392, %v3408
      %v3429 = vmul.f32 %v3392, %v3410
      %v3430 = vmul.f32 %v3392, %v3412
      %v3431 = vmul.f32 %v3392, %v3414
      %v3432 = vmul.f32 %v3392, %v3416
      %3441 = vrot.lane.b32.xlu0 %v3425, 64
      %v3442 = vpop.permute.xlu0 %3441
      %3443 = vrot.lane.b32.xlu0 %v3426, 64
      %v3444 = vpop.permute.xlu0 %3443
      %3445 = vrot.lane.b32.xlu0 %v3427, 64
      %v3446 = vpop.permute.xlu0 %3445
      %3447 = vrot.lane.b32.xlu0 %v3428, 64
      %v3448 = vpop.permute.xlu0 %3447
      %3449 = vrot.lane.b32.xlu0 %v3429, 64
      %v3450 = vpop.permute.xlu0 %3449
      %3451 = vrot.lane.b32.xlu0 %v3430, 64
      %v3452 = vpop.permute.xlu0 %3451
      %3453 = vrot.lane.b32.xlu0 %v3431, 64
      %v3454 = vpop.permute.xlu0 %3453
      %3455 = vrot.lane.b32.xlu0 %v3432, 64
      %v3456 = vpop.permute.xlu0 %3455
      %v3465 = vadd.f32 %v2751, %v3442
      %v3466 = vadd.f32 %v2752, %v3444
      %v3467 = vadd.f32 %v2753, %v3446
      %v3468 = vadd.f32 %v2754, %v3448
      %v3469 = vadd.f32 %v2755, %v3450
      %v3470 = vadd.f32 %v2756, %v3452
      %v3471 = vadd.f32 %v2757, %v3454
      %v3472 = vadd.f32 %v2758, %v3456
      %v3473 = vsel %vm907, %v3465, 0.0
      %3474 = vadd.xlane.f32.xlu0 %v3473
      %v3475 = vpop.xlane.xlu0 %3474
      %v3476 = vsel %vm907, %v3466, 0.0
      %3477 = vadd.xlane.f32.xlu0 %v3476
      %v3478 = vpop.xlane.xlu0 %3477
      %v3479 = vsel %vm907, %v3467, 0.0
      %3480 = vadd.xlane.f32.xlu0 %v3479
      %v3481 = vpop.xlane.xlu0 %3480
      %v3482 = vsel %vm907, %v3468, 0.0
      %3483 = vadd.xlane.f32.xlu0 %v3482
      %v3484 = vpop.xlane.xlu0 %3483
      %v3485 = vsel %vm907, %v3469, 0.0
      %3486 = vadd.xlane.f32.xlu0 %v3485
      %v3487 = vpop.xlane.xlu0 %3486
      %v3488 = vsel %vm907, %v3470, 0.0
      %3489 = vadd.xlane.f32.xlu0 %v3488
      %v3490 = vpop.xlane.xlu0 %3489
      %v3491 = vsel %vm907, %v3471, 0.0
      %3492 = vadd.xlane.f32.xlu0 %v3491
      %v3493 = vpop.xlane.xlu0 %3492
      %v3494 = vsel %vm907, %v3472, 0.0
      %3495 = vadd.xlane.f32.xlu0 %v3494
      %v3496 = vpop.xlane.xlu0 %3495
      %v3497 = vmul.f32 %v3475, %v1098
      %v3498 = vmul.f32 %v3478, %v1098
      %v3499 = vmul.f32 %v3481, %v1098
      %v3500 = vmul.f32 %v3484, %v1098
      %v3501 = vmul.f32 %v3487, %v1098
      %v3502 = vmul.f32 %v3490, %v1098
      %v3503 = vmul.f32 %v3493, %v1098
      %v3504 = vmul.f32 %v3496, %v1098
      %v3505 = vsub.f32 %v3465, %v3497
      %v3506 = vsub.f32 %v3466, %v3498
      %v3507 = vsub.f32 %v3467, %v3499
      %v3508 = vsub.f32 %v3468, %v3500
      %v3509 = vsub.f32 %v3469, %v3501
      %v3510 = vsub.f32 %v3470, %v3502
      %v3511 = vsub.f32 %v3471, %v3503
      %v3512 = vsub.f32 %v3472, %v3504
      %v3513 = vmul.f32 %v3505, %v3505
      %v3514 = vmul.f32 %v3506, %v3506
      %v3515 = vmul.f32 %v3507, %v3507
      %v3516 = vmul.f32 %v3508, %v3508
      %v3517 = vmul.f32 %v3509, %v3509
      %v3518 = vmul.f32 %v3510, %v3510
      %v3519 = vmul.f32 %v3511, %v3511
      %v3520 = vmul.f32 %v3512, %v3512
      %v3521 = vsel %vm907, %v3513, 0.0
      %3522 = vadd.xlane.f32.xlu0 %v3521
      %v3523 = vpop.xlane.xlu0 %3522
      %v3524 = vsel %vm907, %v3514, 0.0
      %3525 = vadd.xlane.f32.xlu0 %v3524
      %v3526 = vpop.xlane.xlu0 %3525
      %v3527 = vsel %vm907, %v3515, 0.0
      %3528 = vadd.xlane.f32.xlu0 %v3527
      %v3529 = vpop.xlane.xlu0 %3528
      %v3530 = vsel %vm907, %v3516, 0.0
      %3531 = vadd.xlane.f32.xlu0 %v3530
      %v3532 = vpop.xlane.xlu0 %3531
      %v3533 = vsel %vm907, %v3517, 0.0
      %3534 = vadd.xlane.f32.xlu0 %v3533
      %v3535 = vpop.xlane.xlu0 %3534
      %v3536 = vsel %vm907, %v3518, 0.0
      %3537 = vadd.xlane.f32.xlu0 %v3536
      %v3538 = vpop.xlane.xlu0 %3537
      %v3539 = vsel %vm907, %v3519, 0.0
      %3540 = vadd.xlane.f32.xlu0 %v3539
      %v3541 = vpop.xlane.xlu0 %3540
      %v3542 = vsel %vm907, %v3520, 0.0
      %3543 = vadd.xlane.f32.xlu0 %v3542
      %v3544 = vpop.xlane.xlu0 %3543
      %v3545 = vmul.f32 %v3523, %v1098
      %v3546 = vmul.f32 %v3526, %v1098
      %v3547 = vmul.f32 %v3529, %v1098
      %v3548 = vmul.f32 %v3532, %v1098
      %v3549 = vmul.f32 %v3535, %v1098
      %v3550 = vmul.f32 %v3538, %v1098
      %v3551 = vmul.f32 %v3541, %v1098
      %v3552 = vmul.f32 %v3544, %v1098
      %v3553 = vadd.f32 %v3545, 1e-06
      %v3554 = vadd.f32 %v3546, 1e-06
      %v3555 = vadd.f32 %v3547, 1e-06
      %v3556 = vadd.f32 %v3548, 1e-06
      %v3557 = vadd.f32 %v3549, 1e-06
      %v3558 = vadd.f32 %v3550, 1e-06
      %v3559 = vadd.f32 %v3551, 1e-06
      %v3560 = vadd.f32 %v3552, 1e-06
      %v3561 = vrsqrt.pop %v3553
      %v3562 = vrsqrt.pop %v3554
      %v3563 = vrsqrt.pop %v3555
      %v3564 = vrsqrt.pop %v3556
      %v3565 = vrsqrt.pop %v3557
      %v3566 = vrsqrt.pop %v3558
      %v3567 = vrsqrt.pop %v3559
      %v3568 = vrsqrt.pop %v3560
      %v3569 = vmul.f32 %v3505, %v3561
      %v3570 = vmul.f32 %v3506, %v3562
      %v3571 = vmul.f32 %v3507, %v3563
      %v3572 = vmul.f32 %v3508, %v3564
      %v3573 = vmul.f32 %v3509, %v3565
      %v3574 = vmul.f32 %v3510, %v3566
      %v3575 = vmul.f32 %v3511, %v3567
      %v3576 = vmul.f32 %v3512, %v3568
      %v3577 = vadd.f32 %v989, 1.0
      %v3578 = vlaneseq
      %v3579 = vshrl.u32 %v3578, 7
      %v3580 = vsub.s32 0, %v3579
      %v3581 = vrot.slane %v3577, %v3580
      %3583 = vrot.lane.b32.xlu0 %v3581, 64
      %v3584 = vpop.permute.xlu0 %3583
      %v3586 = vmul.f32 %v3569, %v3584
      %v3587 = vmul.f32 %v3570, %v3584
      %v3588 = vmul.f32 %v3571, %v3584
      %v3589 = vmul.f32 %v3572, %v3584
      %v3590 = vmul.f32 %v3573, %v3584
      %v3591 = vmul.f32 %v3574, %v3584
      %v3592 = vmul.f32 %v3575, %v3584
      %v3593 = vmul.f32 %v3576, %v3584
      %v3594 = vlaneseq
      %v3595 = vshrl.u32 %v3594, 7
      %v3596 = vsub.s32 0, %v3595
      %v3597 = vrot.slane %v989, %v3596
      %v3598 = vadd.f32 %v3586, %v3597
      %v3599 = vadd.f32 %v3587, %v3597
      %v3600 = vadd.f32 %v3588, %v3597
      %v3601 = vadd.f32 %v3589, %v3597
      %v3602 = vadd.f32 %v3590, %v3597
      %v3603 = vadd.f32 %v3591, %v3597
      %v3604 = vadd.f32 %v3592, %v3597
      %v3605 = vadd.f32 %v3593, %v3597
      %s3606 = scalar_lea.vmem %s7, 64
      %v3607 = vld [vmem:[%s3606] sm:$0xff]
      %v3608 = vld [vmem:[%s3606 + $0x8] sm:$0xff]
      %v3609 = vld [vmem:[%s3606 + $0x10] sm:$0xff]
      %v3610 = vld [vmem:[%s3606 + $0x18] sm:$0xff]
      %v3611 = vld [vmem:[%s3606 + $0x20] sm:$0xff]
      %v3612 = vld [vmem:[%s3606 + $0x28] sm:$0xff]
      %v3613 = vld [vmem:[%s3606 + $0x30] sm:$0xff]
      %v3614 = vld [vmem:[%s3606 + $0x38] sm:$0xff]
      %v3615 = vpack.c.bf16 %v3599, %v3598
      %v3616 = vpack.c.bf16 %v3601, %v3600
      %v3617 = vpack.c.bf16 %v3603, %v3602
      %v3618 = vpack.c.bf16 %v3605, %v3604
      %s3619 = scalar_lea.vmem %s8, 2
      %v3620 = vld [vmem:[%s3619] sm:$0x3]
      %v3622 = vlaneseq
      %v3623 = vshrl.u32 %v3622, 7
      %v3624 = vsub.s32 0, %v3623
      %v3625 = vrot.slane %v3620, %v3624
      %v3626 = vlaneseq
      %v3627 = vshrl.u32 %v3626, 7
      %v3628 = vsub.s32 1, %v3627
      %v3629 = vrot.slane %v3620, %v3628
      %v3640 = vunpack.c.l.b16 %v3607
      %v3641 = vunpack.c.h.b16 %v3607
      %v3642 = vunpack.c.l.b16 %v3608
      %v3643 = vunpack.c.h.b16 %v3608
      %v3644 = vunpack.c.l.b16 %v3609
      %v3645 = vunpack.c.h.b16 %v3609
      %v3646 = vunpack.c.l.b16 %v3610
      %v3647 = vunpack.c.h.b16 %v3610
      %v3648 = vunpack.c.l.b16 %v3611
      %v3649 = vunpack.c.h.b16 %v3611
      %v3650 = vunpack.c.l.b16 %v3612
      %v3651 = vunpack.c.h.b16 %v3612
      %v3652 = vunpack.c.l.b16 %v3613
      %v3653 = vunpack.c.h.b16 %v3613
      %v3654 = vunpack.c.l.b16 %v3614
      %v3655 = vunpack.c.h.b16 %v3614
      %v3656 = vpack.c.b16 %v3642, %v3640
      %v3657 = vpack.c.b16 %v3643, %v3641
      %v3658 = vpack.c.b16 %v3646, %v3644
      %v3659 = vpack.c.b16 %v3647, %v3645
      %v3660 = vpack.c.b16 %v3650, %v3648
      %v3661 = vpack.c.b16 %v3651, %v3649
      %v3662 = vpack.c.b16 %v3654, %v3652
      %v3663 = vpack.c.b16 %v3655, %v3653
      %v3673 = vsel %vm907, %v3615, 0
      %v3676 = vsel %vm907, %v3616, 0
      %v3679 = vsel %vm907, %v3617, 0
      %v3682 = vsel %vm907, %v3618, 0
      %3684 = vmatprep.subr.bf16.mxu0 0
      %3685 = vmatpush1.bf16.msra.mxu0 0
      %3686 = vmatprep.subr.bf16.mxu0 0
      %3687 = vmatpush1.bf16.msra.mxu0 0
      %3688 = vmatprep.subr.bf16.mxu0 0
      %3689 = vmatpush1.bf16.msra.mxu0 0
      %3690 = vmatprep.subr.bf16.mxu0 0
      %3691 = vmatpush1.bf16.msra.mxu0 0
      %3692 = vmatprep.subr.bf16.mxu0 %v3663
      %3693 = vmatpush1.bf16.msra.mxu0 %v3662
      %3694 = vmatprep.subr.bf16.mxu0 %v3661
      %3695 = vmatpush1.bf16.msra.mxu0 %v3660
      %3696 = vmatprep.subr.bf16.mxu0 %v3659
      %3697 = vmatpush1.bf16.msra.mxu0 %v3658
      %3698 = vmatprep.subr.bf16.mxu0 %v3657
      %3699 = vmatpush1.bf16.msra.mxu0 %v3656
      %3700 = vmatprep.subr.bf16.mxu0 0
      %3701 = vmatpush2.bf16.msra.mxu0 0
      %3702 = vmatprep.subr.bf16.mxu0 0
      %3703 = vmatpush2.bf16.msra.mxu0 0
      %3704 = vmatprep.subr.bf16.mxu0 0
      %3705 = vmatpush2.bf16.msra.mxu0 0
      %3706 = vmatprep.subr.bf16.mxu0 0
      %3707 = vmatpush2.bf16.msra.mxu0 0
      %3708 = vmatprep.subr.bf16.mxu0 0
      %3709 = vmatpush2.bf16.msra.mxu0 0
      %3710 = vmatprep.subr.bf16.mxu0 0
      %3711 = vmatpush2.bf16.msra.mxu0 0
      %3712 = vmatprep.subr.bf16.mxu0 0
      %3713 = vmatpush2.bf16.msra.mxu0 0
      %3714 = vmatprep.subr.bf16.mxu0 0
      %3715 = vmatpush2.bf16.msra.mxu0 0
      %3716 = vmatprep.mubr.bf16.mxu0 0
      %3717 = vmatmul.mubr.bf16.gmra.mxu0 %v3673
      %v3718 = vpop.f32.mrf.mxu0
      %v3719 = vadd.f32 %v3625, %v3718
      %v3720 = vpop.f32.mrf.mxu0
      %v3721 = vadd.f32 %v3629, %v3720
      %v3722 = vpop.f32.mrf.mxu0
      %v3723 = vadd.f32 %v3625, %v3722
      %v3724 = vpop.f32.mrf.mxu0
      %v3725 = vadd.f32 %v3629, %v3724
      %3726 = vmatprep.mubr.bf16.mxu0 0
      %3727 = vmatmul.mubr.bf16.gmra.mxu0 %v3676
      %v3728 = vpop.f32.mrf.mxu0
      %v3729 = vadd.f32 %v3625, %v3728
      %v3730 = vpop.f32.mrf.mxu0
      %v3731 = vadd.f32 %v3629, %v3730
      %v3732 = vpop.f32.mrf.mxu0
      %v3733 = vadd.f32 %v3625, %v3732
      %v3734 = vpop.f32.mrf.mxu0
      %v3735 = vadd.f32 %v3629, %v3734
      %3736 = vmatprep.mubr.bf16.mxu0 0
      %3737 = vmatmul.mubr.bf16.gmra.mxu0 %v3679
      %v3738 = vpop.f32.mrf.mxu0
      %v3739 = vadd.f32 %v3625, %v3738
      %v3740 = vpop.f32.mrf.mxu0
      %v3741 = vadd.f32 %v3629, %v3740
      %v3742 = vpop.f32.mrf.mxu0
      %v3743 = vadd.f32 %v3625, %v3742
      %v3744 = vpop.f32.mrf.mxu0
      %v3745 = vadd.f32 %v3629, %v3744
      %3746 = vmatprep.mubr.bf16.mxu0 0
      %3747 = vmatmul.mubr.bf16.gmra.mxu0 %v3682
      %v3748 = vpop.f32.mrf.mxu0
      %v3749 = vadd.f32 %v3625, %v3748
      %v3750 = vpop.f32.mrf.mxu0
      %v3751 = vadd.f32 %v3629, %v3750
      %v3752 = vpop.f32.mrf.mxu0
      %v3753 = vadd.f32 %v3625, %v3752
      %v3754 = vpop.f32.mrf.mxu0
      %v3755 = vadd.f32 %v3629, %v3754
      %3756 = vdwg.mxu0
      %v3757 = vpack.c.bf16 %v3723, %v3719
      %v3758 = vpack.c.bf16 %v3725, %v3721
      %v3759 = vpack.c.bf16 %v3733, %v3729
      %v3760 = vpack.c.bf16 %v3735, %v3731
      %v3761 = vpack.c.bf16 %v3743, %v3739
      %v3762 = vpack.c.bf16 %v3745, %v3741
      %v3763 = vpack.c.bf16 %v3753, %v3749
      %v3764 = vpack.c.bf16 %v3755, %v3751
      %3769 = vrot.lane.b32.xlu0 %v3757, 64
      %v3770 = vpop.permute.xlu0 %3769
      %3771 = vrot.lane.b32.xlu0 %v3759, 64
      %v3772 = vpop.permute.xlu0 %3771
      %3773 = vrot.lane.b32.xlu0 %v3761, 64
      %v3774 = vpop.permute.xlu0 %3773
      %3775 = vrot.lane.b32.xlu0 %v3763, 64
      %v3776 = vpop.permute.xlu0 %3775
      %v3778 = vsel %vm591, %v3757, 0
      %v3781 = vsel %vm591, %v3759, 0
      %v3784 = vsel %vm591, %v3761, 0
      %v3787 = vsel %vm591, %v3763, 0
      %v3790 = vsel %vm591, %v3770, 0
      %v3793 = vsel %vm591, %v3772, 0
      %v3796 = vsel %vm591, %v3774, 0
      %v3799 = vsel %vm591, %v3776, 0
      %3801 = vmatprep.subr.bf16.mxu0 0
      %3802 = vmatpush1.bf16.xpose.msra.mxu0 0
      %3803 = vmatprep.subr.bf16.mxu0 0
      %3804 = vmatpush1.bf16.xpose.msra.mxu0 0
      %3805 = vmatprep.subr.bf16.mxu0 0
      %3806 = vmatpush1.bf16.xpose.msra.mxu0 0
      %3807 = vmatprep.subr.bf16.mxu0 0
      %3808 = vmatpush1.bf16.xpose.msra.mxu0 0
      %3809 = vmatprep.subr.bf16.mxu0 0
      %3810 = vmatpush1.bf16.xpose.msra.mxu0 %v3799
      %3811 = vmatprep.subr.bf16.mxu0 0
      %3812 = vmatpush1.bf16.xpose.msra.mxu0 %v3796
      %3813 = vmatprep.subr.bf16.mxu0 0
      %3814 = vmatpush1.bf16.xpose.msra.mxu0 %v3793
      %3815 = vmatprep.subr.bf16.mxu0 0
      %3816 = vmatpush1.bf16.xpose.msra.mxu0 %v3790
      %3817 = vmatprep.subr.bf16.mxu0 0
      %3818 = vmatpush2.bf16.xpose.msra.mxu0 0
      %3819 = vmatprep.subr.bf16.mxu0 0
      %3820 = vmatpush2.bf16.xpose.msra.mxu0 0
      %3821 = vmatprep.subr.bf16.mxu0 0
      %3822 = vmatpush2.bf16.xpose.msra.mxu0 0
      %3823 = vmatprep.subr.bf16.mxu0 0
      %3824 = vmatpush2.bf16.xpose.msra.mxu0 0
      %3825 = vmatprep.subr.bf16.mxu0 0
      %3826 = vmatpush2.bf16.xpose.msra.mxu0 0
      %3827 = vmatprep.subr.bf16.mxu0 0
      %3828 = vmatpush2.bf16.xpose.msra.mxu0 0
      %3829 = vmatprep.subr.bf16.mxu0 0
      %3830 = vmatpush2.bf16.xpose.msra.mxu0 0
      %3831 = vmatprep.subr.bf16.mxu0 0
      %3832 = vmatpush2.bf16.xpose.msra.mxu0 0
      %3833 = vmatprep.mubr.bf16.mxu0 0
      %3834 = vmatmul.mubr.bf16.gmra.mxu0 %v3778
      %v3835 = vpop.f32.mrf.mxu0
      %v3836 = vadd.f32 0.0, %v3835
      %v3837 = vpop.f32.mrf.mxu0
      %v3838 = vpop.f32.mrf.mxu0
      %v3839 = vadd.f32 0.0, %v3838
      %v3840 = vpop.f32.mrf.mxu0
      %3841 = vmatprep.mubr.bf16.mxu0 0
      %3842 = vmatmul.mubr.bf16.gmra.mxu0 %v3781
      %v3843 = vpop.f32.mrf.mxu0
      %v3844 = vadd.f32 0.0, %v3843
      %v3845 = vpop.f32.mrf.mxu0
      %v3846 = vpop.f32.mrf.mxu0
      %v3847 = vadd.f32 0.0, %v3846
      %v3848 = vpop.f32.mrf.mxu0
      %3849 = vmatprep.mubr.bf16.mxu0 0
      %3850 = vmatmul.mubr.bf16.gmra.mxu0 %v3784
      %v3851 = vpop.f32.mrf.mxu0
      %v3852 = vadd.f32 0.0, %v3851
      %v3853 = vpop.f32.mrf.mxu0
      %v3854 = vpop.f32.mrf.mxu0
      %v3855 = vadd.f32 0.0, %v3854
      %v3856 = vpop.f32.mrf.mxu0
      %3857 = vmatprep.mubr.bf16.mxu0 0
      %3858 = vmatmul.mubr.bf16.gmra.mxu0 %v3787
      %v3859 = vpop.f32.mrf.mxu0
      %v3860 = vadd.f32 0.0, %v3859
      %v3861 = vpop.f32.mrf.mxu0
      %v3862 = vpop.f32.mrf.mxu0
      %v3863 = vadd.f32 0.0, %v3862
      %v3864 = vpop.f32.mrf.mxu0
      %3865 = vdwg.mxu0
      %v3866 = vsel %vm907, %v3836, -inf
      %3867 = vmax.xlane.f32.xlu0 %v3866
      %v3868 = vpop.xlane.xlu0 %3867
      %v3869 = vsel %vm907, %v3839, -inf
      %3870 = vmax.xlane.f32.xlu0 %v3869
      %v3871 = vpop.xlane.xlu0 %3870
      %v3872 = vsel %vm907, %v3844, -inf
      %3873 = vmax.xlane.f32.xlu0 %v3872
      %v3874 = vpop.xlane.xlu0 %3873
      %v3875 = vsel %vm907, %v3847, -inf
      %3876 = vmax.xlane.f32.xlu0 %v3875
      %v3877 = vpop.xlane.xlu0 %3876
      %v3878 = vsel %vm907, %v3852, -inf
      %3879 = vmax.xlane.f32.xlu0 %v3878
      %v3880 = vpop.xlane.xlu0 %3879
      %v3881 = vsel %vm907, %v3855, -inf
      %3882 = vmax.xlane.f32.xlu0 %v3881
      %v3883 = vpop.xlane.xlu0 %3882
      %v3884 = vsel %vm907, %v3860, -inf
      %3885 = vmax.xlane.f32.xlu0 %v3884
      %v3886 = vpop.xlane.xlu0 %3885
      %v3887 = vsel %vm907, %v3863, -inf
      %3888 = vmax.xlane.f32.xlu0 %v3887
      %v3889 = vpop.xlane.xlu0 %3888
      %v3890 = vsub.f32 %v3836, %v3868
      %v3891 = vsub.f32 %v3839, %v3871
      %v3892 = vsub.f32 %v3844, %v3874
      %v3893 = vsub.f32 %v3847, %v3877
      %v3894 = vsub.f32 %v3852, %v3880
      %v3895 = vsub.f32 %v3855, %v3883
      %v3896 = vsub.f32 %v3860, %v3886
      %v3897 = vsub.f32 %v3863, %v3889
      %v3898 = vmul.f32 %v3890, 1.442695
      %v3899 = vpow.pop %v3898
      %v3900 = vmul.f32 %v3891, 1.442695
      %v3901 = vpow.pop %v3900
      %v3902 = vmul.f32 %v3892, 1.442695
      %v3903 = vpow.pop %v3902
      %v3904 = vmul.f32 %v3893, 1.442695
      %v3905 = vpow.pop %v3904
      %v3906 = vmul.f32 %v3894, 1.442695
      %v3907 = vpow.pop %v3906
      %v3908 = vmul.f32 %v3895, 1.442695
      %v3909 = vpow.pop %v3908
      %v3910 = vmul.f32 %v3896, 1.442695
      %v3911 = vpow.pop %v3910
      %v3912 = vmul.f32 %v3897, 1.442695
      %v3913 = vpow.pop %v3912
      %v3914 = vsel %vm907, %v3899, 0.0
      %3915 = vadd.xlane.f32.xlu0 %v3914
      %v3916 = vpop.xlane.xlu0 %3915
      %v3917 = vsel %vm907, %v3901, 0.0
      %3918 = vadd.xlane.f32.xlu0 %v3917
      %v3919 = vpop.xlane.xlu0 %3918
      %v3920 = vsel %vm907, %v3903, 0.0
      %3921 = vadd.xlane.f32.xlu0 %v3920
      %v3922 = vpop.xlane.xlu0 %3921
      %v3923 = vsel %vm907, %v3905, 0.0
      %3924 = vadd.xlane.f32.xlu0 %v3923
      %v3925 = vpop.xlane.xlu0 %3924
      %v3926 = vsel %vm907, %v3907, 0.0
      %3927 = vadd.xlane.f32.xlu0 %v3926
      %v3928 = vpop.xlane.xlu0 %3927
      %v3929 = vsel %vm907, %v3909, 0.0
      %3930 = vadd.xlane.f32.xlu0 %v3929
      %v3931 = vpop.xlane.xlu0 %3930
      %v3932 = vsel %vm907, %v3911, 0.0
      %3933 = vadd.xlane.f32.xlu0 %v3932
      %v3934 = vpop.xlane.xlu0 %3933
      %v3935 = vsel %vm907, %v3913, 0.0
      %3936 = vadd.xlane.f32.xlu0 %v3935
      %v3937 = vpop.xlane.xlu0 %3936
      %v3938 = vrcp.pop %v3916
      %v3939 = vrcp.pop %v3919
      %v3940 = vrcp.pop %v3922
      %v3941 = vrcp.pop %v3925
      %v3942 = vrcp.pop %v3928
      %v3943 = vrcp.pop %v3931
      %v3944 = vrcp.pop %v3934
      %v3945 = vrcp.pop %v3937
      %v3946 = vmul.f32 %v3899, %v3938
      %v3947 = vmul.f32 %v3901, %v3939
      %v3948 = vmul.f32 %v3903, %v3940
      %v3949 = vmul.f32 %v3905, %v3941
      %v3950 = vmul.f32 %v3907, %v3942
      %v3951 = vmul.f32 %v3909, %v3943
      %v3952 = vmul.f32 %v3911, %v3944
      %v3953 = vmul.f32 %v3913, %v3945
      %v3954 = vpack.c.bf16 %v3947, %v3946
      %v3955 = vpack.c.bf16 %v3949, %v3948
      %v3956 = vpack.c.bf16 %v3951, %v3950
      %v3957 = vpack.c.bf16 %v3953, %v3952
      %v3959 = vsel %vm907, %v3954, 0
      %v3962 = vsel %vm907, %v3955, 0
      %v3965 = vsel %vm907, %v3956, 0
      %v3968 = vsel %vm907, %v3957, 0
      %3970 = vmatprep.subr.bf16.mxu0 0
      %3971 = vmatpush1.bf16.msra.mxu0 0
      %3972 = vmatprep.subr.bf16.mxu0 0
      %3973 = vmatpush1.bf16.msra.mxu0 0
      %3974 = vmatprep.subr.bf16.mxu0 0
      %3975 = vmatpush1.bf16.msra.mxu0 0
      %3976 = vmatprep.subr.bf16.mxu0 0
      %3977 = vmatpush1.bf16.msra.mxu0 0
      %3978 = vmatprep.subr.bf16.mxu0 0
      %3979 = vmatpush1.bf16.msra.mxu0 %v3764
      %3980 = vmatprep.subr.bf16.mxu0 0
      %3981 = vmatpush1.bf16.msra.mxu0 %v3762
      %3982 = vmatprep.subr.bf16.mxu0 0
      %3983 = vmatpush1.bf16.msra.mxu0 %v3760
      %3984 = vmatprep.subr.bf16.mxu0 0
      %3985 = vmatpush1.bf16.msra.mxu0 %v3758
      %3986 = vmatprep.subr.bf16.mxu0 0
      %3987 = vmatpush2.bf16.msra.mxu0 0
      %3988 = vmatprep.subr.bf16.mxu0 0
      %3989 = vmatpush2.bf16.msra.mxu0 0
      %3990 = vmatprep.subr.bf16.mxu0 0
      %3991 = vmatpush2.bf16.msra.mxu0 0
      %3992 = vmatprep.subr.bf16.mxu0 0
      %3993 = vmatpush2.bf16.msra.mxu0 0
      %3994 = vmatprep.subr.bf16.mxu0 0
      %3995 = vmatpush2.bf16.msra.mxu0 0
      %3996 = vmatprep.subr.bf16.mxu0 0
      %3997 = vmatpush2.bf16.msra.mxu0 0
      %3998 = vmatprep.subr.bf16.mxu0 0
      %3999 = vmatpush2.bf16.msra.mxu0 0
      %4000 = vmatprep.subr.bf16.mxu0 0
      %4001 = vmatpush2.bf16.msra.mxu0 0
      %4002 = vmatprep.mubr.bf16.mxu0 0
      %4003 = vmatmul.mubr.bf16.gmra.mxu0 %v3959
      %v4004 = vpop.f32.mrf.mxu0
      %v4005 = vadd.f32 0.0, %v4004
      %v4006 = vpop.f32.mrf.mxu0
      %v4007 = vpop.f32.mrf.mxu0
      %v4008 = vadd.f32 0.0, %v4007
      %v4009 = vpop.f32.mrf.mxu0
      %4010 = vmatprep.mubr.bf16.mxu0 0
      %4011 = vmatmul.mubr.bf16.gmra.mxu0 %v3962
      %v4012 = vpop.f32.mrf.mxu0
      %v4013 = vadd.f32 0.0, %v4012
      %v4014 = vpop.f32.mrf.mxu0
      %v4015 = vpop.f32.mrf.mxu0
      %v4016 = vadd.f32 0.0, %v4015
      %v4017 = vpop.f32.mrf.mxu0
      %4018 = vmatprep.mubr.bf16.mxu0 0
      %4019 = vmatmul.mubr.bf16.gmra.mxu0 %v3965
      %v4020 = vpop.f32.mrf.mxu0
      %v4021 = vadd.f32 0.0, %v4020
      %v4022 = vpop.f32.mrf.mxu0
      %v4023 = vpop.f32.mrf.mxu0
      %v4024 = vadd.f32 0.0, %v4023
      %v4025 = vpop.f32.mrf.mxu0
      %4026 = vmatprep.mubr.bf16.mxu0 0
      %4027 = vmatmul.mubr.bf16.gmra.mxu0 %v3968
      %v4028 = vpop.f32.mrf.mxu0
      %v4029 = vadd.f32 0.0, %v4028
      %v4030 = vpop.f32.mrf.mxu0
      %v4031 = vpop.f32.mrf.mxu0
      %v4032 = vadd.f32 0.0, %v4031
      %v4033 = vpop.f32.mrf.mxu0
      %4034 = vdwg.mxu0
      %4035 = vrot.lane.b32.xlu0 %v3757, 112
      %v4036 = vpop.permute.xlu0 %4035
      %4037 = vrot.lane.b32.xlu0 %v3759, 112
      %v4038 = vpop.permute.xlu0 %4037
      %4039 = vrot.lane.b32.xlu0 %v3761, 112
      %v4040 = vpop.permute.xlu0 %4039
      %4041 = vrot.lane.b32.xlu0 %v3763, 112
      %v4042 = vpop.permute.xlu0 %4041
      %4043 = vrot.lane.b32.xlu0 %v3757, 48
      %v4044 = vpop.permute.xlu0 %4043
      %4045 = vrot.lane.b32.xlu0 %v3759, 48
      %v4046 = vpop.permute.xlu0 %4045
      %4047 = vrot.lane.b32.xlu0 %v3761, 48
      %v4048 = vpop.permute.xlu0 %4047
      %4049 = vrot.lane.b32.xlu0 %v3763, 48
      %v4050 = vpop.permute.xlu0 %4049
      %v4052 = vsel %vm591, %v4036, 0
      %v4055 = vsel %vm591, %v4038, 0
      %v4058 = vsel %vm591, %v4040, 0
      %v4061 = vsel %vm591, %v4042, 0
      %v4064 = vsel %vm591, %v4044, 0
      %v4067 = vsel %vm591, %v4046, 0
      %v4070 = vsel %vm591, %v4048, 0
      %v4073 = vsel %vm591, %v4050, 0
      %4075 = vmatprep.subr.bf16.mxu0 0
      %4076 = vmatpush1.bf16.xpose.msra.mxu0 0
      %4077 = vmatprep.subr.bf16.mxu0 0
      %4078 = vmatpush1.bf16.xpose.msra.mxu0 0
      %4079 = vmatprep.subr.bf16.mxu0 0
      %4080 = vmatpush1.bf16.xpose.msra.mxu0 0
      %4081 = vmatprep.subr.bf16.mxu0 0
      %4082 = vmatpush1.bf16.xpose.msra.mxu0 0
      %4083 = vmatprep.subr.bf16.mxu0 0
      %4084 = vmatpush1.bf16.xpose.msra.mxu0 %v4073
      %4085 = vmatprep.subr.bf16.mxu0 0
      %4086 = vmatpush1.bf16.xpose.msra.mxu0 %v4070
      %4087 = vmatprep.subr.bf16.mxu0 0
      %4088 = vmatpush1.bf16.xpose.msra.mxu0 %v4067
      %4089 = vmatprep.subr.bf16.mxu0 0
      %4090 = vmatpush1.bf16.xpose.msra.mxu0 %v4064
      %4091 = vmatprep.subr.bf16.mxu0 0
      %4092 = vmatpush2.bf16.xpose.msra.mxu0 0
      %4093 = vmatprep.subr.bf16.mxu0 0
      %4094 = vmatpush2.bf16.xpose.msra.mxu0 0
      %4095 = vmatprep.subr.bf16.mxu0 0
      %4096 = vmatpush2.bf16.xpose.msra.mxu0 0
      %4097 = vmatprep.subr.bf16.mxu0 0
      %4098 = vmatpush2.bf16.xpose.msra.mxu0 0
      %4099 = vmatprep.subr.bf16.mxu0 0
      %4100 = vmatpush2.bf16.xpose.msra.mxu0 0
      %4101 = vmatprep.subr.bf16.mxu0 0
      %4102 = vmatpush2.bf16.xpose.msra.mxu0 0
      %4103 = vmatprep.subr.bf16.mxu0 0
      %4104 = vmatpush2.bf16.xpose.msra.mxu0 0
      %4105 = vmatprep.subr.bf16.mxu0 0
      %4106 = vmatpush2.bf16.xpose.msra.mxu0 0
      %4107 = vmatprep.mubr.bf16.mxu0 0
      %4108 = vmatmul.mubr.bf16.gmra.mxu0 %v4052
      %v4109 = vpop.f32.mrf.mxu0
      %v4110 = vadd.f32 0.0, %v4109
      %v4111 = vpop.f32.mrf.mxu0
      %v4112 = vpop.f32.mrf.mxu0
      %v4113 = vadd.f32 0.0, %v4112
      %v4114 = vpop.f32.mrf.mxu0
      %4115 = vmatprep.mubr.bf16.mxu0 0
      %4116 = vmatmul.mubr.bf16.gmra.mxu0 %v4055
      %v4117 = vpop.f32.mrf.mxu0
      %v4118 = vadd.f32 0.0, %v4117
      %v4119 = vpop.f32.mrf.mxu0
      %v4120 = vpop.f32.mrf.mxu0
      %v4121 = vadd.f32 0.0, %v4120
      %v4122 = vpop.f32.mrf.mxu0
      %4123 = vmatprep.mubr.bf16.mxu0 0
      %4124 = vmatmul.mubr.bf16.gmra.mxu0 %v4058
      %v4125 = vpop.f32.mrf.mxu0
      %v4126 = vadd.f32 0.0, %v4125
      %v4127 = vpop.f32.mrf.mxu0
      %v4128 = vpop.f32.mrf.mxu0
      %v4129 = vadd.f32 0.0, %v4128
      %v4130 = vpop.f32.mrf.mxu0
      %4131 = vmatprep.mubr.bf16.mxu0 0
      %4132 = vmatmul.mubr.bf16.gmra.mxu0 %v4061
      %v4133 = vpop.f32.mrf.mxu0
      %v4134 = vadd.f32 0.0, %v4133
      %v4135 = vpop.f32.mrf.mxu0
      %v4136 = vpop.f32.mrf.mxu0
      %v4137 = vadd.f32 0.0, %v4136
      %v4138 = vpop.f32.mrf.mxu0
      %4139 = vdwg.mxu0
      %v4140 = vsel %vm907, %v4110, -inf
      %4141 = vmax.xlane.f32.xlu0 %v4140
      %v4142 = vpop.xlane.xlu0 %4141
      %v4143 = vsel %vm907, %v4113, -inf
      %4144 = vmax.xlane.f32.xlu0 %v4143
      %v4145 = vpop.xlane.xlu0 %4144
      %v4146 = vsel %vm907, %v4118, -inf
      %4147 = vmax.xlane.f32.xlu0 %v4146
      %v4148 = vpop.xlane.xlu0 %4147
      %v4149 = vsel %vm907, %v4121, -inf
      %4150 = vmax.xlane.f32.xlu0 %v4149
      %v4151 = vpop.xlane.xlu0 %4150
      %v4152 = vsel %vm907, %v4126, -inf
      %4153 = vmax.xlane.f32.xlu0 %v4152
      %v4154 = vpop.xlane.xlu0 %4153
      %v4155 = vsel %vm907, %v4129, -inf
      %4156 = vmax.xlane.f32.xlu0 %v4155
      %v4157 = vpop.xlane.xlu0 %4156
      %v4158 = vsel %vm907, %v4134, -inf
      %4159 = vmax.xlane.f32.xlu0 %v4158
      %v4160 = vpop.xlane.xlu0 %4159
      %v4161 = vsel %vm907, %v4137, -inf
      %4162 = vmax.xlane.f32.xlu0 %v4161
      %v4163 = vpop.xlane.xlu0 %4162
      %v4164 = vsub.f32 %v4110, %v4142
      %v4165 = vsub.f32 %v4113, %v4145
      %v4166 = vsub.f32 %v4118, %v4148
      %v4167 = vsub.f32 %v4121, %v4151
      %v4168 = vsub.f32 %v4126, %v4154
      %v4169 = vsub.f32 %v4129, %v4157
      %v4170 = vsub.f32 %v4134, %v4160
      %v4171 = vsub.f32 %v4137, %v4163
      %v4172 = vmul.f32 %v4164, 1.442695
      %v4173 = vpow.pop %v4172
      %v4174 = vmul.f32 %v4165, 1.442695
      %v4175 = vpow.pop %v4174
      %v4176 = vmul.f32 %v4166, 1.442695
      %v4177 = vpow.pop %v4176
      %v4178 = vmul.f32 %v4167, 1.442695
      %v4179 = vpow.pop %v4178
      %v4180 = vmul.f32 %v4168, 1.442695
      %v4181 = vpow.pop %v4180
      %v4182 = vmul.f32 %v4169, 1.442695
      %v4183 = vpow.pop %v4182
      %v4184 = vmul.f32 %v4170, 1.442695
      %v4185 = vpow.pop %v4184
      %v4186 = vmul.f32 %v4171, 1.442695
      %v4187 = vpow.pop %v4186
      %v4188 = vsel %vm907, %v4173, 0.0
      %4189 = vadd.xlane.f32.xlu0 %v4188
      %v4190 = vpop.xlane.xlu0 %4189
      %v4191 = vsel %vm907, %v4175, 0.0
      %4192 = vadd.xlane.f32.xlu0 %v4191
      %v4193 = vpop.xlane.xlu0 %4192
      %v4194 = vsel %vm907, %v4177, 0.0
      %4195 = vadd.xlane.f32.xlu0 %v4194
      %v4196 = vpop.xlane.xlu0 %4195
      %v4197 = vsel %vm907, %v4179, 0.0
      %4198 = vadd.xlane.f32.xlu0 %v4197
      %v4199 = vpop.xlane.xlu0 %4198
      %v4200 = vsel %vm907, %v4181, 0.0
      %4201 = vadd.xlane.f32.xlu0 %v4200
      %v4202 = vpop.xlane.xlu0 %4201
      %v4203 = vsel %vm907, %v4183, 0.0
      %4204 = vadd.xlane.f32.xlu0 %v4203
      %v4205 = vpop.xlane.xlu0 %4204
      %v4206 = vsel %vm907, %v4185, 0.0
      %4207 = vadd.xlane.f32.xlu0 %v4206
      %v4208 = vpop.xlane.xlu0 %4207
      %v4209 = vsel %vm907, %v4187, 0.0
      %4210 = vadd.xlane.f32.xlu0 %v4209
      %v4211 = vpop.xlane.xlu0 %4210
      %v4212 = vrcp.pop %v4190
      %v4213 = vrcp.pop %v4193
      %v4214 = vrcp.pop %v4196
      %v4215 = vrcp.pop %v4199
      %v4216 = vrcp.pop %v4202
      %v4217 = vrcp.pop %v4205
      %v4218 = vrcp.pop %v4208
      %v4219 = vrcp.pop %v4211
      %v4220 = vmul.f32 %v4173, %v4212
      %v4221 = vmul.f32 %v4175, %v4213
      %v4222 = vmul.f32 %v4177, %v4214
      %v4223 = vmul.f32 %v4179, %v4215
      %v4224 = vmul.f32 %v4181, %v4216
      %v4225 = vmul.f32 %v4183, %v4217
      %v4226 = vmul.f32 %v4185, %v4218
      %v4227 = vmul.f32 %v4187, %v4219
      %v4228 = vpack.c.bf16 %v4221, %v4220
      %v4229 = vpack.c.bf16 %v4223, %v4222
      %v4230 = vpack.c.bf16 %v4225, %v4224
      %v4231 = vpack.c.bf16 %v4227, %v4226
      %4236 = vrot.lane.b32.xlu0 %v3758, 112
      %v4237 = vpop.permute.xlu0 %4236
      %4238 = vrot.lane.b32.xlu0 %v3760, 112
      %v4239 = vpop.permute.xlu0 %4238
      %4240 = vrot.lane.b32.xlu0 %v3762, 112
      %v4241 = vpop.permute.xlu0 %4240
      %4242 = vrot.lane.b32.xlu0 %v3764, 112
      %v4243 = vpop.permute.xlu0 %4242
      %v4249 = vsel %vm907, %v4228, 0
      %v4252 = vsel %vm907, %v4229, 0
      %v4255 = vsel %vm907, %v4230, 0
      %v4258 = vsel %vm907, %v4231, 0
      %4260 = vmatprep.subr.bf16.mxu0 0
      %4261 = vmatpush1.bf16.msra.mxu0 0
      %4262 = vmatprep.subr.bf16.mxu0 0
      %4263 = vmatpush1.bf16.msra.mxu0 0
      %4264 = vmatprep.subr.bf16.mxu0 0
      %4265 = vmatpush1.bf16.msra.mxu0 0
      %4266 = vmatprep.subr.bf16.mxu0 0
      %4267 = vmatpush1.bf16.msra.mxu0 0
      %4268 = vmatprep.subr.bf16.mxu0 0
      %4269 = vmatpush1.bf16.msra.mxu0 %v4243
      %4270 = vmatprep.subr.bf16.mxu0 0
      %4271 = vmatpush1.bf16.msra.mxu0 %v4241
      %4272 = vmatprep.subr.bf16.mxu0 0
      %4273 = vmatpush1.bf16.msra.mxu0 %v4239
      %4274 = vmatprep.subr.bf16.mxu0 0
      %4275 = vmatpush1.bf16.msra.mxu0 %v4237
      %4276 = vmatprep.subr.bf16.mxu0 0
      %4277 = vmatpush2.bf16.msra.mxu0 0
      %4278 = vmatprep.subr.bf16.mxu0 0
      %4279 = vmatpush2.bf16.msra.mxu0 0
      %4280 = vmatprep.subr.bf16.mxu0 0
      %4281 = vmatpush2.bf16.msra.mxu0 0
      %4282 = vmatprep.subr.bf16.mxu0 0
      %4283 = vmatpush2.bf16.msra.mxu0 0
      %4284 = vmatprep.subr.bf16.mxu0 0
      %4285 = vmatpush2.bf16.msra.mxu0 0
      %4286 = vmatprep.subr.bf16.mxu0 0
      %4287 = vmatpush2.bf16.msra.mxu0 0
      %4288 = vmatprep.subr.bf16.mxu0 0
      %4289 = vmatpush2.bf16.msra.mxu0 0
      %4290 = vmatprep.subr.bf16.mxu0 0
      %4291 = vmatpush2.bf16.msra.mxu0 0
      %4292 = vmatprep.mubr.bf16.mxu0 0
      %4293 = vmatmul.mubr.bf16.gmra.mxu0 %v4249
      %v4294 = vpop.f32.mrf.mxu0
      %v4295 = vadd.f32 0.0, %v4294
      %v4296 = vpop.f32.mrf.mxu0
      %v4297 = vpop.f32.mrf.mxu0
      %v4298 = vadd.f32 0.0, %v4297
      %v4299 = vpop.f32.mrf.mxu0
      %4300 = vmatprep.mubr.bf16.mxu0 0
      %4301 = vmatmul.mubr.bf16.gmra.mxu0 %v4252
      %v4302 = vpop.f32.mrf.mxu0
      %v4303 = vadd.f32 0.0, %v4302
      %v4304 = vpop.f32.mrf.mxu0
      %v4305 = vpop.f32.mrf.mxu0
      %v4306 = vadd.f32 0.0, %v4305
      %v4307 = vpop.f32.mrf.mxu0
      %4308 = vmatprep.mubr.bf16.mxu0 0
      %4309 = vmatmul.mubr.bf16.gmra.mxu0 %v4255
      %v4310 = vpop.f32.mrf.mxu0
      %v4311 = vadd.f32 0.0, %v4310
      %v4312 = vpop.f32.mrf.mxu0
      %v4313 = vpop.f32.mrf.mxu0
      %v4314 = vadd.f32 0.0, %v4313
      %v4315 = vpop.f32.mrf.mxu0
      %4316 = vmatprep.mubr.bf16.mxu0 0
      %4317 = vmatmul.mubr.bf16.gmra.mxu0 %v4258
      %v4318 = vpop.f32.mrf.mxu0
      %v4319 = vadd.f32 0.0, %v4318
      %v4320 = vpop.f32.mrf.mxu0
      %v4321 = vpop.f32.mrf.mxu0
      %v4322 = vadd.f32 0.0, %v4321
      %v4323 = vpop.f32.mrf.mxu0
      %4324 = vdwg.mxu0
      %4325 = vrot.lane.b32.xlu0 %v3757, 96
      %v4326 = vpop.permute.xlu0 %4325
      %4327 = vrot.lane.b32.xlu0 %v3759, 96
      %v4328 = vpop.permute.xlu0 %4327
      %4329 = vrot.lane.b32.xlu0 %v3761, 96
      %v4330 = vpop.permute.xlu0 %4329
      %4331 = vrot.lane.b32.xlu0 %v3763, 96
      %v4332 = vpop.permute.xlu0 %4331
      %4333 = vrot.lane.b32.xlu0 %v3757, 32
      %v4334 = vpop.permute.xlu0 %4333
      %4335 = vrot.lane.b32.xlu0 %v3759, 32
      %v4336 = vpop.permute.xlu0 %4335
      %4337 = vrot.lane.b32.xlu0 %v3761, 32
      %v4338 = vpop.permute.xlu0 %4337
      %4339 = vrot.lane.b32.xlu0 %v3763, 32
      %v4340 = vpop.permute.xlu0 %4339
      %v4342 = vsel %vm591, %v4326, 0
      %v4345 = vsel %vm591, %v4328, 0
      %v4348 = vsel %vm591, %v4330, 0
      %v4351 = vsel %vm591, %v4332, 0
      %v4354 = vsel %vm591, %v4334, 0
      %v4357 = vsel %vm591, %v4336, 0
      %v4360 = vsel %vm591, %v4338, 0
      %v4363 = vsel %vm591, %v4340, 0
      %4365 = vmatprep.subr.bf16.mxu0 0
      %4366 = vmatpush1.bf16.xpose.msra.mxu0 0
      %4367 = vmatprep.subr.bf16.mxu0 0
      %4368 = vmatpush1.bf16.xpose.msra.mxu0 0
      %4369 = vmatprep.subr.bf16.mxu0 0
      %4370 = vmatpush1.bf16.xpose.msra.mxu0 0
      %4371 = vmatprep.subr.bf16.mxu0 0
      %4372 = vmatpush1.bf16.xpose.msra.mxu0 0
      %4373 = vmatprep.subr.bf16.mxu0 0
      %4374 = vmatpush1.bf16.xpose.msra.mxu0 %v4363
      %4375 = vmatprep.subr.bf16.mxu0 0
      %4376 = vmatpush1.bf16.xpose.msra.mxu0 %v4360
      %4377 = vmatprep.subr.bf16.mxu0 0
      %4378 = vmatpush1.bf16.xpose.msra.mxu0 %v4357
      %4379 = vmatprep.subr.bf16.mxu0 0
      %4380 = vmatpush1.bf16.xpose.msra.mxu0 %v4354
      %4381 = vmatprep.subr.bf16.mxu0 0
      %4382 = vmatpush2.bf16.xpose.msra.mxu0 0
      %4383 = vmatprep.subr.bf16.mxu0 0
      %4384 = vmatpush2.bf16.xpose.msra.mxu0 0
      %4385 = vmatprep.subr.bf16.mxu0 0
      %4386 = vmatpush2.bf16.xpose.msra.mxu0 0
      %4387 = vmatprep.subr.bf16.mxu0 0
      %4388 = vmatpush2.bf16.xpose.msra.mxu0 0
      %4389 = vmatprep.subr.bf16.mxu0 0
      %4390 = vmatpush2.bf16.xpose.msra.mxu0 0
      %4391 = vmatprep.subr.bf16.mxu0 0
      %4392 = vmatpush2.bf16.xpose.msra.mxu0 0
      %4393 = vmatprep.subr.bf16.mxu0 0
      %4394 = vmatpush2.bf16.xpose.msra.mxu0 0
      %4395 = vmatprep.subr.bf16.mxu0 0
      %4396 = vmatpush2.bf16.xpose.msra.mxu0 0
      %4397 = vmatprep.mubr.bf16.mxu0 0
      %4398 = vmatmul.mubr.bf16.gmra.mxu0 %v4342
      %v4399 = vpop.f32.mrf.mxu0
      %v4400 = vadd.f32 0.0, %v4399
      %v4401 = vpop.f32.mrf.mxu0
      %v4402 = vpop.f32.mrf.mxu0
      %v4403 = vadd.f32 0.0, %v4402
      %v4404 = vpop.f32.mrf.mxu0
      %4405 = vmatprep.mubr.bf16.mxu0 0
      %4406 = vmatmul.mubr.bf16.gmra.mxu0 %v4345
      %v4407 = vpop.f32.mrf.mxu0
      %v4408 = vadd.f32 0.0, %v4407
      %v4409 = vpop.f32.mrf.mxu0
      %v4410 = vpop.f32.mrf.mxu0
      %v4411 = vadd.f32 0.0, %v4410
      %v4412 = vpop.f32.mrf.mxu0
      %4413 = vmatprep.mubr.bf16.mxu0 0
      %4414 = vmatmul.mubr.bf16.gmra.mxu0 %v4348
      %v4415 = vpop.f32.mrf.mxu0
      %v4416 = vadd.f32 0.0, %v4415
      %v4417 = vpop.f32.mrf.mxu0
      %v4418 = vpop.f32.mrf.mxu0
      %v4419 = vadd.f32 0.0, %v4418
      %v4420 = vpop.f32.mrf.mxu0
      %4421 = vmatprep.mubr.bf16.mxu0 0
      %4422 = vmatmul.mubr.bf16.gmra.mxu0 %v4351
      %v4423 = vpop.f32.mrf.mxu0
      %v4424 = vadd.f32 0.0, %v4423
      %v4425 = vpop.f32.mrf.mxu0
      %v4426 = vpop.f32.mrf.mxu0
      %v4427 = vadd.f32 0.0, %v4426
      %v4428 = vpop.f32.mrf.mxu0
      %4429 = vdwg.mxu0
      %v4430 = vsel %vm907, %v4400, -inf
      %4431 = vmax.xlane.f32.xlu0 %v4430
      %v4432 = vpop.xlane.xlu0 %4431
      %v4433 = vsel %vm907, %v4403, -inf
      %4434 = vmax.xlane.f32.xlu0 %v4433
      %v4435 = vpop.xlane.xlu0 %4434
      %v4436 = vsel %vm907, %v4408, -inf
      %4437 = vmax.xlane.f32.xlu0 %v4436
      %v4438 = vpop.xlane.xlu0 %4437
      %v4439 = vsel %vm907, %v4411, -inf
      %4440 = vmax.xlane.f32.xlu0 %v4439
      %v4441 = vpop.xlane.xlu0 %4440
      %v4442 = vsel %vm907, %v4416, -inf
      %4443 = vmax.xlane.f32.xlu0 %v4442
      %v4444 = vpop.xlane.xlu0 %4443
      %v4445 = vsel %vm907, %v4419, -inf
      %4446 = vmax.xlane.f32.xlu0 %v4445
      %v4447 = vpop.xlane.xlu0 %4446
      %v4448 = vsel %vm907, %v4424, -inf
      %4449 = vmax.xlane.f32.xlu0 %v4448
      %v4450 = vpop.xlane.xlu0 %4449
      %v4451 = vsel %vm907, %v4427, -inf
      %4452 = vmax.xlane.f32.xlu0 %v4451
      %v4453 = vpop.xlane.xlu0 %4452
      %v4454 = vsub.f32 %v4400, %v4432
      %v4455 = vsub.f32 %v4403, %v4435
      %v4456 = vsub.f32 %v4408, %v4438
      %v4457 = vsub.f32 %v4411, %v4441
      %v4458 = vsub.f32 %v4416, %v4444
      %v4459 = vsub.f32 %v4419, %v4447
      %v4460 = vsub.f32 %v4424, %v4450
      %v4461 = vsub.f32 %v4427, %v4453
      %v4462 = vmul.f32 %v4454, 1.442695
      %v4463 = vpow.pop %v4462
      %v4464 = vmul.f32 %v4455, 1.442695
      %v4465 = vpow.pop %v4464
      %v4466 = vmul.f32 %v4456, 1.442695
      %v4467 = vpow.pop %v4466
      %v4468 = vmul.f32 %v4457, 1.442695
      %v4469 = vpow.pop %v4468
      %v4470 = vmul.f32 %v4458, 1.442695
      %v4471 = vpow.pop %v4470
      %v4472 = vmul.f32 %v4459, 1.442695
      %v4473 = vpow.pop %v4472
      %v4474 = vmul.f32 %v4460, 1.442695
      %v4475 = vpow.pop %v4474
      %v4476 = vmul.f32 %v4461, 1.442695
      %v4477 = vpow.pop %v4476
      %v4478 = vsel %vm907, %v4463, 0.0
      %4479 = vadd.xlane.f32.xlu0 %v4478
      %v4480 = vpop.xlane.xlu0 %4479
      %v4481 = vsel %vm907, %v4465, 0.0
      %4482 = vadd.xlane.f32.xlu0 %v4481
      %v4483 = vpop.xlane.xlu0 %4482
      %v4484 = vsel %vm907, %v4467, 0.0
      %4485 = vadd.xlane.f32.xlu0 %v4484
      %v4486 = vpop.xlane.xlu0 %4485
      %v4487 = vsel %vm907, %v4469, 0.0
      %4488 = vadd.xlane.f32.xlu0 %v4487
      %v4489 = vpop.xlane.xlu0 %4488
      %v4490 = vsel %vm907, %v4471, 0.0
      %4491 = vadd.xlane.f32.xlu0 %v4490
      %v4492 = vpop.xlane.xlu0 %4491
      %v4493 = vsel %vm907, %v4473, 0.0
      %4494 = vadd.xlane.f32.xlu0 %v4493
      %v4495 = vpop.xlane.xlu0 %4494
      %v4496 = vsel %vm907, %v4475, 0.0
      %4497 = vadd.xlane.f32.xlu0 %v4496
      %v4498 = vpop.xlane.xlu0 %4497
      %v4499 = vsel %vm907, %v4477, 0.0
      %4500 = vadd.xlane.f32.xlu0 %v4499
      %v4501 = vpop.xlane.xlu0 %4500
      %v4502 = vrcp.pop %v4480
      %v4503 = vrcp.pop %v4483
      %v4504 = vrcp.pop %v4486
      %v4505 = vrcp.pop %v4489
      %v4506 = vrcp.pop %v4492
      %v4507 = vrcp.pop %v4495
      %v4508 = vrcp.pop %v4498
      %v4509 = vrcp.pop %v4501
      %v4510 = vmul.f32 %v4463, %v4502
      %v4511 = vmul.f32 %v4465, %v4503
      %v4512 = vmul.f32 %v4467, %v4504
      %v4513 = vmul.f32 %v4469, %v4505
      %v4514 = vmul.f32 %v4471, %v4506
      %v4515 = vmul.f32 %v4473, %v4507
      %v4516 = vmul.f32 %v4475, %v4508
      %v4517 = vmul.f32 %v4477, %v4509
      %v4518 = vpack.c.bf16 %v4511, %v4510
      %v4519 = vpack.c.bf16 %v4513, %v4512
      %v4520 = vpack.c.bf16 %v4515, %v4514
      %v4521 = vpack.c.bf16 %v4517, %v4516
      %4522 = vrot.lane.b32.xlu0 %v3758, 96
      %v4523 = vpop.permute.xlu0 %4522
      %4524 = vrot.lane.b32.xlu0 %v3760, 96
      %v4525 = vpop.permute.xlu0 %4524
      %4526 = vrot.lane.b32.xlu0 %v3762, 96
      %v4527 = vpop.permute.xlu0 %4526
      %4528 = vrot.lane.b32.xlu0 %v3764, 96
      %v4529 = vpop.permute.xlu0 %4528
      %v4535 = vsel %vm907, %v4518, 0
      %v4538 = vsel %vm907, %v4519, 0
      %v4541 = vsel %vm907, %v4520, 0
      %v4544 = vsel %vm907, %v4521, 0
      %4546 = vmatprep.subr.bf16.mxu0 0
      %4547 = vmatpush1.bf16.msra.mxu0 0
      %4548 = vmatprep.subr.bf16.mxu0 0
      %4549 = vmatpush1.bf16.msra.mxu0 0
      %4550 = vmatprep.subr.bf16.mxu0 0
      %4551 = vmatpush1.bf16.msra.mxu0 0
      %4552 = vmatprep.subr.bf16.mxu0 0
      %4553 = vmatpush1.bf16.msra.mxu0 0
      %4554 = vmatprep.subr.bf16.mxu0 0
      %4555 = vmatpush1.bf16.msra.mxu0 %v4529
      %4556 = vmatprep.subr.bf16.mxu0 0
      %4557 = vmatpush1.bf16.msra.mxu0 %v4527
      %4558 = vmatprep.subr.bf16.mxu0 0
      %4559 = vmatpush1.bf16.msra.mxu0 %v4525
      %4560 = vmatprep.subr.bf16.mxu0 0
      %4561 = vmatpush1.bf16.msra.mxu0 %v4523
      %4562 = vmatprep.subr.bf16.mxu0 0
      %4563 = vmatpush2.bf16.msra.mxu0 0
      %4564 = vmatprep.subr.bf16.mxu0 0
      %4565 = vmatpush2.bf16.msra.mxu0 0
      %4566 = vmatprep.subr.bf16.mxu0 0
      %4567 = vmatpush2.bf16.msra.mxu0 0
      %4568 = vmatprep.subr.bf16.mxu0 0
      %4569 = vmatpush2.bf16.msra.mxu0 0
      %4570 = vmatprep.subr.bf16.mxu0 0
      %4571 = vmatpush2.bf16.msra.mxu0 0
      %4572 = vmatprep.subr.bf16.mxu0 0
      %4573 = vmatpush2.bf16.msra.mxu0 0
      %4574 = vmatprep.subr.bf16.mxu0 0
      %4575 = vmatpush2.bf16.msra.mxu0 0
      %4576 = vmatprep.subr.bf16.mxu0 0
      %4577 = vmatpush2.bf16.msra.mxu0 0
      %4578 = vmatprep.mubr.bf16.mxu0 0
      %4579 = vmatmul.mubr.bf16.gmra.mxu0 %v4535
      %v4580 = vpop.f32.mrf.mxu0
      %v4581 = vadd.f32 0.0, %v4580
      %v4582 = vpop.f32.mrf.mxu0
      %v4583 = vpop.f32.mrf.mxu0
      %v4584 = vadd.f32 0.0, %v4583
      %v4585 = vpop.f32.mrf.mxu0
      %4586 = vmatprep.mubr.bf16.mxu0 0
      %4587 = vmatmul.mubr.bf16.gmra.mxu0 %v4538
      %v4588 = vpop.f32.mrf.mxu0
      %v4589 = vadd.f32 0.0, %v4588
      %v4590 = vpop.f32.mrf.mxu0
      %v4591 = vpop.f32.mrf.mxu0
      %v4592 = vadd.f32 0.0, %v4591
      %v4593 = vpop.f32.mrf.mxu0
      %4594 = vmatprep.mubr.bf16.mxu0 0
      %4595 = vmatmul.mubr.bf16.gmra.mxu0 %v4541
      %v4596 = vpop.f32.mrf.mxu0
      %v4597 = vadd.f32 0.0, %v4596
      %v4598 = vpop.f32.mrf.mxu0
      %v4599 = vpop.f32.mrf.mxu0
      %v4600 = vadd.f32 0.0, %v4599
      %v4601 = vpop.f32.mrf.mxu0
      %4602 = vmatprep.mubr.bf16.mxu0 0
      %4603 = vmatmul.mubr.bf16.gmra.mxu0 %v4544
      %v4604 = vpop.f32.mrf.mxu0
      %v4605 = vadd.f32 0.0, %v4604
      %v4606 = vpop.f32.mrf.mxu0
      %v4607 = vpop.f32.mrf.mxu0
      %v4608 = vadd.f32 0.0, %v4607
      %v4609 = vpop.f32.mrf.mxu0
      %4610 = vdwg.mxu0
      %4611 = vrot.lane.b32.xlu0 %v3757, 80
      %v4612 = vpop.permute.xlu0 %4611
      %4613 = vrot.lane.b32.xlu0 %v3759, 80
      %v4614 = vpop.permute.xlu0 %4613
      %4615 = vrot.lane.b32.xlu0 %v3761, 80
      %v4616 = vpop.permute.xlu0 %4615
      %4617 = vrot.lane.b32.xlu0 %v3763, 80
      %v4618 = vpop.permute.xlu0 %4617
      %4619 = vrot.lane.b32.xlu0 %v3757, 16
      %v4620 = vpop.permute.xlu0 %4619
      %4621 = vrot.lane.b32.xlu0 %v3759, 16
      %v4622 = vpop.permute.xlu0 %4621
      %4623 = vrot.lane.b32.xlu0 %v3761, 16
      %v4624 = vpop.permute.xlu0 %4623
      %4625 = vrot.lane.b32.xlu0 %v3763, 16
      %v4626 = vpop.permute.xlu0 %4625
      %v4628 = vsel %vm591, %v4612, 0
      %v4631 = vsel %vm591, %v4614, 0
      %v4634 = vsel %vm591, %v4616, 0
      %v4637 = vsel %vm591, %v4618, 0
      %v4640 = vsel %vm591, %v4620, 0
      %v4643 = vsel %vm591, %v4622, 0
      %v4646 = vsel %vm591, %v4624, 0
      %v4649 = vsel %vm591, %v4626, 0
      %4651 = vmatprep.subr.bf16.mxu0 0
      %4652 = vmatpush1.bf16.xpose.msra.mxu0 0
      %4653 = vmatprep.subr.bf16.mxu0 0
      %4654 = vmatpush1.bf16.xpose.msra.mxu0 0
      %4655 = vmatprep.subr.bf16.mxu0 0
      %4656 = vmatpush1.bf16.xpose.msra.mxu0 0
      %4657 = vmatprep.subr.bf16.mxu0 0
      %4658 = vmatpush1.bf16.xpose.msra.mxu0 0
      %4659 = vmatprep.subr.bf16.mxu0 0
      %4660 = vmatpush1.bf16.xpose.msra.mxu0 %v4649
      %4661 = vmatprep.subr.bf16.mxu0 0
      %4662 = vmatpush1.bf16.xpose.msra.mxu0 %v4646
      %4663 = vmatprep.subr.bf16.mxu0 0
      %4664 = vmatpush1.bf16.xpose.msra.mxu0 %v4643
      %4665 = vmatprep.subr.bf16.mxu0 0
      %4666 = vmatpush1.bf16.xpose.msra.mxu0 %v4640
      %4667 = vmatprep.subr.bf16.mxu0 0
      %4668 = vmatpush2.bf16.xpose.msra.mxu0 0
      %4669 = vmatprep.subr.bf16.mxu0 0
      %4670 = vmatpush2.bf16.xpose.msra.mxu0 0
      %4671 = vmatprep.subr.bf16.mxu0 0
      %4672 = vmatpush2.bf16.xpose.msra.mxu0 0
      %4673 = vmatprep.subr.bf16.mxu0 0
      %4674 = vmatpush2.bf16.xpose.msra.mxu0 0
      %4675 = vmatprep.subr.bf16.mxu0 0
      %4676 = vmatpush2.bf16.xpose.msra.mxu0 0
      %4677 = vmatprep.subr.bf16.mxu0 0
      %4678 = vmatpush2.bf16.xpose.msra.mxu0 0
      %4679 = vmatprep.subr.bf16.mxu0 0
      %4680 = vmatpush2.bf16.xpose.msra.mxu0 0
      %4681 = vmatprep.subr.bf16.mxu0 0
      %4682 = vmatpush2.bf16.xpose.msra.mxu0 0
      %4683 = vmatprep.mubr.bf16.mxu0 0
      %4684 = vmatmul.mubr.bf16.gmra.mxu0 %v4628
      %v4685 = vpop.f32.mrf.mxu0
      %v4686 = vadd.f32 0.0, %v4685
      %v4687 = vpop.f32.mrf.mxu0
      %v4688 = vpop.f32.mrf.mxu0
      %v4689 = vadd.f32 0.0, %v4688
      %v4690 = vpop.f32.mrf.mxu0
      %4691 = vmatprep.mubr.bf16.mxu0 0
      %4692 = vmatmul.mubr.bf16.gmra.mxu0 %v4631
      %v4693 = vpop.f32.mrf.mxu0
      %v4694 = vadd.f32 0.0, %v4693
      %v4695 = vpop.f32.mrf.mxu0
      %v4696 = vpop.f32.mrf.mxu0
      %v4697 = vadd.f32 0.0, %v4696
      %v4698 = vpop.f32.mrf.mxu0
      %4699 = vmatprep.mubr.bf16.mxu0 0
      %4700 = vmatmul.mubr.bf16.gmra.mxu0 %v4634
      %v4701 = vpop.f32.mrf.mxu0
      %v4702 = vadd.f32 0.0, %v4701
      %v4703 = vpop.f32.mrf.mxu0
      %v4704 = vpop.f32.mrf.mxu0
      %v4705 = vadd.f32 0.0, %v4704
      %v4706 = vpop.f32.mrf.mxu0
      %4707 = vmatprep.mubr.bf16.mxu0 0
      %4708 = vmatmul.mubr.bf16.gmra.mxu0 %v4637
      %v4709 = vpop.f32.mrf.mxu0
      %v4710 = vadd.f32 0.0, %v4709
      %v4711 = vpop.f32.mrf.mxu0
      %v4712 = vpop.f32.mrf.mxu0
      %v4713 = vadd.f32 0.0, %v4712
      %v4714 = vpop.f32.mrf.mxu0
      %4715 = vdwg.mxu0
      %v4716 = vsel %vm907, %v4686, -inf
      %4717 = vmax.xlane.f32.xlu0 %v4716
      %v4718 = vpop.xlane.xlu0 %4717
      %v4719 = vsel %vm907, %v4689, -inf
      %4720 = vmax.xlane.f32.xlu0 %v4719
      %v4721 = vpop.xlane.xlu0 %4720
      %v4722 = vsel %vm907, %v4694, -inf
      %4723 = vmax.xlane.f32.xlu0 %v4722
      %v4724 = vpop.xlane.xlu0 %4723
      %v4725 = vsel %vm907, %v4697, -inf
      %4726 = vmax.xlane.f32.xlu0 %v4725
      %v4727 = vpop.xlane.xlu0 %4726
      %v4728 = vsel %vm907, %v4702, -inf
      %4729 = vmax.xlane.f32.xlu0 %v4728
      %v4730 = vpop.xlane.xlu0 %4729
      %v4731 = vsel %vm907, %v4705, -inf
      %4732 = vmax.xlane.f32.xlu0 %v4731
      %v4733 = vpop.xlane.xlu0 %4732
      %v4734 = vsel %vm907, %v4710, -inf
      %4735 = vmax.xlane.f32.xlu0 %v4734
      %v4736 = vpop.xlane.xlu0 %4735
      %v4737 = vsel %vm907, %v4713, -inf
      %4738 = vmax.xlane.f32.xlu0 %v4737
      %v4739 = vpop.xlane.xlu0 %4738
      %v4740 = vsub.f32 %v4686, %v4718
      %v4741 = vsub.f32 %v4689, %v4721
      %v4742 = vsub.f32 %v4694, %v4724
      %v4743 = vsub.f32 %v4697, %v4727
      %v4744 = vsub.f32 %v4702, %v4730
      %v4745 = vsub.f32 %v4705, %v4733
      %v4746 = vsub.f32 %v4710, %v4736
      %v4747 = vsub.f32 %v4713, %v4739
      %v4748 = vmul.f32 %v4740, 1.442695
      %v4749 = vpow.pop %v4748
      %v4750 = vmul.f32 %v4741, 1.442695
      %v4751 = vpow.pop %v4750
      %v4752 = vmul.f32 %v4742, 1.442695
      %v4753 = vpow.pop %v4752
      %v4754 = vmul.f32 %v4743, 1.442695
      %v4755 = vpow.pop %v4754
      %v4756 = vmul.f32 %v4744, 1.442695
      %v4757 = vpow.pop %v4756
      %v4758 = vmul.f32 %v4745, 1.442695
      %v4759 = vpow.pop %v4758
      %v4760 = vmul.f32 %v4746, 1.442695
      %v4761 = vpow.pop %v4760
      %v4762 = vmul.f32 %v4747, 1.442695
      %v4763 = vpow.pop %v4762
      %v4764 = vsel %vm907, %v4749, 0.0
      %4765 = vadd.xlane.f32.xlu0 %v4764
      %v4766 = vpop.xlane.xlu0 %4765
      %v4767 = vsel %vm907, %v4751, 0.0
      %4768 = vadd.xlane.f32.xlu0 %v4767
      %v4769 = vpop.xlane.xlu0 %4768
      %v4770 = vsel %vm907, %v4753, 0.0
      %4771 = vadd.xlane.f32.xlu0 %v4770
      %v4772 = vpop.xlane.xlu0 %4771
      %v4773 = vsel %vm907, %v4755, 0.0
      %4774 = vadd.xlane.f32.xlu0 %v4773
      %v4775 = vpop.xlane.xlu0 %4774
      %v4776 = vsel %vm907, %v4757, 0.0
      %4777 = vadd.xlane.f32.xlu0 %v4776
      %v4778 = vpop.xlane.xlu0 %4777
      %v4779 = vsel %vm907, %v4759, 0.0
      %4780 = vadd.xlane.f32.xlu0 %v4779
      %v4781 = vpop.xlane.xlu0 %4780
      %v4782 = vsel %vm907, %v4761, 0.0
      %4783 = vadd.xlane.f32.xlu0 %v4782
      %v4784 = vpop.xlane.xlu0 %4783
      %v4785 = vsel %vm907, %v4763, 0.0
      %4786 = vadd.xlane.f32.xlu0 %v4785
      %v4787 = vpop.xlane.xlu0 %4786
      %v4788 = vrcp.pop %v4766
      %v4789 = vrcp.pop %v4769
      %v4790 = vrcp.pop %v4772
      %v4791 = vrcp.pop %v4775
      %v4792 = vrcp.pop %v4778
      %v4793 = vrcp.pop %v4781
      %v4794 = vrcp.pop %v4784
      %v4795 = vrcp.pop %v4787
      %v4796 = vmul.f32 %v4749, %v4788
      %v4797 = vmul.f32 %v4751, %v4789
      %v4798 = vmul.f32 %v4753, %v4790
      %v4799 = vmul.f32 %v4755, %v4791
      %v4800 = vmul.f32 %v4757, %v4792
      %v4801 = vmul.f32 %v4759, %v4793
      %v4802 = vmul.f32 %v4761, %v4794
      %v4803 = vmul.f32 %v4763, %v4795
      %v4804 = vpack.c.bf16 %v4797, %v4796
      %v4805 = vpack.c.bf16 %v4799, %v4798
      %v4806 = vpack.c.bf16 %v4801, %v4800
      %v4807 = vpack.c.bf16 %v4803, %v4802
      %4808 = vrot.lane.b32.xlu0 %v3758, 80
      %v4809 = vpop.permute.xlu0 %4808
      %4810 = vrot.lane.b32.xlu0 %v3760, 80
      %v4811 = vpop.permute.xlu0 %4810
      %4812 = vrot.lane.b32.xlu0 %v3762, 80
      %v4813 = vpop.permute.xlu0 %4812
      %4814 = vrot.lane.b32.xlu0 %v3764, 80
      %v4815 = vpop.permute.xlu0 %4814
      %v4821 = vsel %vm907, %v4804, 0
      %v4824 = vsel %vm907, %v4805, 0
      %v4827 = vsel %vm907, %v4806, 0
      %v4830 = vsel %vm907, %v4807, 0
      %4832 = vmatprep.subr.bf16.mxu0 0
      %4833 = vmatpush1.bf16.msra.mxu0 0
      %4834 = vmatprep.subr.bf16.mxu0 0
      %4835 = vmatpush1.bf16.msra.mxu0 0
      %4836 = vmatprep.subr.bf16.mxu0 0
      %4837 = vmatpush1.bf16.msra.mxu0 0
      %4838 = vmatprep.subr.bf16.mxu0 0
      %4839 = vmatpush1.bf16.msra.mxu0 0
      %4840 = vmatprep.subr.bf16.mxu0 0
      %4841 = vmatpush1.bf16.msra.mxu0 %v4815
      %4842 = vmatprep.subr.bf16.mxu0 0
      %4843 = vmatpush1.bf16.msra.mxu0 %v4813
      %4844 = vmatprep.subr.bf16.mxu0 0
      %4845 = vmatpush1.bf16.msra.mxu0 %v4811
      %4846 = vmatprep.subr.bf16.mxu0 0
      %4847 = vmatpush1.bf16.msra.mxu0 %v4809
      %4848 = vmatprep.subr.bf16.mxu0 0
      %4849 = vmatpush2.bf16.msra.mxu0 0
      %4850 = vmatprep.subr.bf16.mxu0 0
      %4851 = vmatpush2.bf16.msra.mxu0 0
      %4852 = vmatprep.subr.bf16.mxu0 0
      %4853 = vmatpush2.bf16.msra.mxu0 0
      %4854 = vmatprep.subr.bf16.mxu0 0
      %4855 = vmatpush2.bf16.msra.mxu0 0
      %4856 = vmatprep.subr.bf16.mxu0 0
      %4857 = vmatpush2.bf16.msra.mxu0 0
      %4858 = vmatprep.subr.bf16.mxu0 0
      %4859 = vmatpush2.bf16.msra.mxu0 0
      %4860 = vmatprep.subr.bf16.mxu0 0
      %4861 = vmatpush2.bf16.msra.mxu0 0
      %4862 = vmatprep.subr.bf16.mxu0 0
      %4863 = vmatpush2.bf16.msra.mxu0 0
      %4864 = vmatprep.mubr.bf16.mxu0 0
      %4865 = vmatmul.mubr.bf16.gmra.mxu0 %v4821
      %v4866 = vpop.f32.mrf.mxu0
      %v4867 = vadd.f32 0.0, %v4866
      %v4868 = vpop.f32.mrf.mxu0
      %v4869 = vpop.f32.mrf.mxu0
      %v4870 = vadd.f32 0.0, %v4869
      %v4871 = vpop.f32.mrf.mxu0
      %4872 = vmatprep.mubr.bf16.mxu0 0
      %4873 = vmatmul.mubr.bf16.gmra.mxu0 %v4824
      %v4874 = vpop.f32.mrf.mxu0
      %v4875 = vadd.f32 0.0, %v4874
      %v4876 = vpop.f32.mrf.mxu0
      %v4877 = vpop.f32.mrf.mxu0
      %v4878 = vadd.f32 0.0, %v4877
      %v4879 = vpop.f32.mrf.mxu0
      %4880 = vmatprep.mubr.bf16.mxu0 0
      %4881 = vmatmul.mubr.bf16.gmra.mxu0 %v4827
      %v4882 = vpop.f32.mrf.mxu0
      %v4883 = vadd.f32 0.0, %v4882
      %v4884 = vpop.f32.mrf.mxu0
      %v4885 = vpop.f32.mrf.mxu0
      %v4886 = vadd.f32 0.0, %v4885
      %v4887 = vpop.f32.mrf.mxu0
      %4888 = vmatprep.mubr.bf16.mxu0 0
      %4889 = vmatmul.mubr.bf16.gmra.mxu0 %v4830
      %v4890 = vpop.f32.mrf.mxu0
      %v4891 = vadd.f32 0.0, %v4890
      %v4892 = vpop.f32.mrf.mxu0
      %v4893 = vpop.f32.mrf.mxu0
      %v4894 = vadd.f32 0.0, %v4893
      %v4895 = vpop.f32.mrf.mxu0
      %4896 = vdwg.mxu0
      %4905 = vrot.lane.b32.xlu0 %v4295, 16
      %v4906 = vpop.permute.xlu0 %4905
      %4907 = vrot.lane.b32.xlu0 %v4298, 16
      %v4908 = vpop.permute.xlu0 %4907
      %4909 = vrot.lane.b32.xlu0 %v4303, 16
      %v4910 = vpop.permute.xlu0 %4909
      %4911 = vrot.lane.b32.xlu0 %v4306, 16
      %v4912 = vpop.permute.xlu0 %4911
      %4913 = vrot.lane.b32.xlu0 %v4311, 16
      %v4914 = vpop.permute.xlu0 %4913
      %4915 = vrot.lane.b32.xlu0 %v4314, 16
      %v4916 = vpop.permute.xlu0 %4915
      %4917 = vrot.lane.b32.xlu0 %v4319, 16
      %v4918 = vpop.permute.xlu0 %4917
      %4919 = vrot.lane.b32.xlu0 %v4322, 16
      %v4920 = vpop.permute.xlu0 %4919
      %4937 = vrot.lane.b32.xlu0 %v4581, 32
      %v4938 = vpop.permute.xlu0 %4937
      %4939 = vrot.lane.b32.xlu0 %v4584, 32
      %v4940 = vpop.permute.xlu0 %4939
      %4941 = vrot.lane.b32.xlu0 %v4589, 32
      %v4942 = vpop.permute.xlu0 %4941
      %4943 = vrot.lane.b32.xlu0 %v4592, 32
      %v4944 = vpop.permute.xlu0 %4943
      %4945 = vrot.lane.b32.xlu0 %v4597, 32
      %v4946 = vpop.permute.xlu0 %4945
      %4947 = vrot.lane.b32.xlu0 %v4600, 32
      %v4948 = vpop.permute.xlu0 %4947
      %4949 = vrot.lane.b32.xlu0 %v4605, 32
      %v4950 = vpop.permute.xlu0 %4949
      %4951 = vrot.lane.b32.xlu0 %v4608, 32
      %v4952 = vpop.permute.xlu0 %4951
      %4969 = vrot.lane.b32.xlu0 %v4867, 48
      %v4970 = vpop.permute.xlu0 %4969
      %4971 = vrot.lane.b32.xlu0 %v4870, 48
      %v4972 = vpop.permute.xlu0 %4971
      %4973 = vrot.lane.b32.xlu0 %v4875, 48
      %v4974 = vpop.permute.xlu0 %4973
      %4975 = vrot.lane.b32.xlu0 %v4878, 48
      %v4976 = vpop.permute.xlu0 %4975
      %4977 = vrot.lane.b32.xlu0 %v4883, 48
      %v4978 = vpop.permute.xlu0 %4977
      %4979 = vrot.lane.b32.xlu0 %v4886, 48
      %v4980 = vpop.permute.xlu0 %4979
      %4981 = vrot.lane.b32.xlu0 %v4891, 48
      %v4982 = vpop.permute.xlu0 %4981
      %4983 = vrot.lane.b32.xlu0 %v4894, 48
      %v4984 = vpop.permute.xlu0 %4983
      %v4993 = vsel %vm591, %v4005, %v4906
      %v4994 = vsel %vm591, %v4008, %v4908
      %v4995 = vsel %vm591, %v4013, %v4910
      %v4996 = vsel %vm591, %v4016, %v4912
      %v4997 = vsel %vm591, %v4021, %v4914
      %v4998 = vsel %vm591, %v4024, %v4916
      %v4999 = vsel %vm591, %v4029, %v4918
      %v5000 = vsel %vm591, %v4032, %v4920
      %v5001 = vsel %vm2601, %v4993, %v4938
      %v5002 = vsel %vm2601, %v4994, %v4940
      %v5003 = vsel %vm2601, %v4995, %v4942
      %v5004 = vsel %vm2601, %v4996, %v4944
      %v5005 = vsel %vm2601, %v4997, %v4946
      %v5006 = vsel %vm2601, %v4998, %v4948
      %v5007 = vsel %vm2601, %v4999, %v4950
      %v5008 = vsel %vm2601, %v5000, %v4952
      %v5009 = vsel %vm2610, %v5001, %v4970
      %v5010 = vsel %vm2610, %v5002, %v4972
      %v5011 = vsel %vm2610, %v5003, %v4974
      %v5012 = vsel %vm2610, %v5004, %v4976
      %v5013 = vsel %vm2610, %v5005, %v4978
      %v5014 = vsel %vm2610, %v5006, %v4980
      %v5015 = vsel %vm2610, %v5007, %v4982
      %v5016 = vsel %vm2610, %v5008, %v4984
      %v5017 = vpack.c.bf16 %v5010, %v5009
      %v5018 = vpack.c.bf16 %v5012, %v5011
      %v5019 = vpack.c.bf16 %v5014, %v5013
      %v5020 = vpack.c.bf16 %v5016, %v5015
      %s5021 = scalar_lea.vmem %s9, 32
      %v5022 = vld [vmem:[%s5021] sm:$0xf]
      %v5023 = vld [vmem:[%s5021 + $0x4] sm:$0xf]
      %v5024 = vld [vmem:[%s5021 + $0x8] sm:$0xf]
      %v5025 = vld [vmem:[%s5021 + $0xc] sm:$0xf]
      %v5026 = vld [vmem:[%s5021 + $0x10] sm:$0xf]
      %v5027 = vld [vmem:[%s5021 + $0x14] sm:$0xf]
      %v5028 = vld [vmem:[%s5021 + $0x18] sm:$0xf]
      %v5029 = vld [vmem:[%s5021 + $0x1c] sm:$0xf]
      %s5030 = scalar_lea.vmem %s10, 1
      %v5031 = vld [vmem:[%s5030] sm:$0x1]
      %v5033 = vlaneseq
      %v5034 = vshrl.u32 %v5033, 7
      %v5035 = vsub.s32 0, %v5034
      %v5036 = vrot.slane %v5031, %v5035
      %v5046 = vunpack.c.l.b16 %v5022
      %v5047 = vunpack.c.l.b16 %v5023
      %v5048 = vunpack.c.l.b16 %v5024
      %v5049 = vunpack.c.l.b16 %v5025
      %v5050 = vunpack.c.l.b16 %v5026
      %v5051 = vunpack.c.l.b16 %v5027
      %v5052 = vunpack.c.l.b16 %v5028
      %v5053 = vunpack.c.l.b16 %v5029
      %v5054 = vpack.c.b16 %v5047, %v5046
      %v5055 = vpack.c.b16 %v5049, %v5048
      %v5056 = vpack.c.b16 %v5051, %v5050
      %v5057 = vpack.c.b16 %v5053, %v5052
      %v5063 = vsel %vm907, %v5017, 0
      %v5066 = vsel %vm907, %v5018, 0
      %v5069 = vsel %vm907, %v5019, 0
      %v5072 = vsel %vm907, %v5020, 0
      %5074 = vmatprep.subr.bf16.mxu0 0
      %5075 = vmatpush1.bf16.msra.mxu0 0
      %5076 = vmatprep.subr.bf16.mxu0 0
      %5077 = vmatpush1.bf16.msra.mxu0 0
      %5078 = vmatprep.subr.bf16.mxu0 0
      %5079 = vmatpush1.bf16.msra.mxu0 0
      %5080 = vmatprep.subr.bf16.mxu0 0
      %5081 = vmatpush1.bf16.msra.mxu0 0
      %5082 = vmatprep.subr.bf16.mxu0 0
      %5083 = vmatpush1.bf16.msra.mxu0 %v5057
      %5084 = vmatprep.subr.bf16.mxu0 0
      %5085 = vmatpush1.bf16.msra.mxu0 %v5056
      %5086 = vmatprep.subr.bf16.mxu0 0
      %5087 = vmatpush1.bf16.msra.mxu0 %v5055
      %5088 = vmatprep.subr.bf16.mxu0 0
      %5089 = vmatpush1.bf16.msra.mxu0 %v5054
      %5090 = vmatprep.subr.bf16.mxu0 0
      %5091 = vmatpush2.bf16.msra.mxu0 0
      %5092 = vmatprep.subr.bf16.mxu0 0
      %5093 = vmatpush2.bf16.msra.mxu0 0
      %5094 = vmatprep.subr.bf16.mxu0 0
      %5095 = vmatpush2.bf16.msra.mxu0 0
      %5096 = vmatprep.subr.bf16.mxu0 0
      %5097 = vmatpush2.bf16.msra.mxu0 0
      %5098 = vmatprep.subr.bf16.mxu0 0
      %5099 = vmatpush2.bf16.msra.mxu0 0
      %5100 = vmatprep.subr.bf16.mxu0 0
      %5101 = vmatpush2.bf16.msra.mxu0 0
      %5102 = vmatprep.subr.bf16.mxu0 0
      %5103 = vmatpush2.bf16.msra.mxu0 0
      %5104 = vmatprep.subr.bf16.mxu0 0
      %5105 = vmatpush2.bf16.msra.mxu0 0
      %5106 = vmatprep.mubr.bf16.mxu0 0
      %5107 = vmatmul.mubr.bf16.gmra.mxu0 %v5063
      %v5108 = vpop.f32.mrf.mxu0
      %v5109 = vadd.f32 %v5036, %v5108
      %v5110 = vpop.f32.mrf.mxu0
      %v5111 = vpop.f32.mrf.mxu0
      %v5112 = vadd.f32 %v5036, %v5111
      %v5113 = vpop.f32.mrf.mxu0
      %5114 = vmatprep.mubr.bf16.mxu0 0
      %5115 = vmatmul.mubr.bf16.gmra.mxu0 %v5066
      %v5116 = vpop.f32.mrf.mxu0
      %v5117 = vadd.f32 %v5036, %v5116
      %v5118 = vpop.f32.mrf.mxu0
      %v5119 = vpop.f32.mrf.mxu0
      %v5120 = vadd.f32 %v5036, %v5119
      %v5121 = vpop.f32.mrf.mxu0
      %5122 = vmatprep.mubr.bf16.mxu0 0
      %5123 = vmatmul.mubr.bf16.gmra.mxu0 %v5069
      %v5124 = vpop.f32.mrf.mxu0
      %v5125 = vadd.f32 %v5036, %v5124
      %v5126 = vpop.f32.mrf.mxu0
      %v5127 = vpop.f32.mrf.mxu0
      %v5128 = vadd.f32 %v5036, %v5127
      %v5129 = vpop.f32.mrf.mxu0
      %5130 = vmatprep.mubr.bf16.mxu0 0
      %5131 = vmatmul.mubr.bf16.gmra.mxu0 %v5072
      %v5132 = vpop.f32.mrf.mxu0
      %v5133 = vadd.f32 %v5036, %v5132
      %v5134 = vpop.f32.mrf.mxu0
      %v5135 = vpop.f32.mrf.mxu0
      %v5136 = vadd.f32 %v5036, %v5135
      %v5137 = vpop.f32.mrf.mxu0
      %5138 = vdwg.mxu0
      %v5139 = vlaneseq
      %v5140 = vshrl.u32 %v5139, 7
      %v5141 = vsub.s32 0, %v5140
      %v5142 = vrot.slane %v1028, %v5141
      %v5143 = vmul.f32 %v5142, %v5109
      %v5144 = vmul.f32 %v5142, %v5112
      %v5145 = vmul.f32 %v5142, %v5117
      %v5146 = vmul.f32 %v5142, %v5120
      %v5147 = vmul.f32 %v5142, %v5125
      %v5148 = vmul.f32 %v5142, %v5128
      %v5149 = vmul.f32 %v5142, %v5133
      %v5150 = vmul.f32 %v5142, %v5136
      %v5151 = vadd.f32 %v3465, %v5143
      %v5152 = vadd.f32 %v3466, %v5144
      %v5153 = vadd.f32 %v3467, %v5145
      %v5154 = vadd.f32 %v3468, %v5146
      %v5155 = vadd.f32 %v3469, %v5147
      %v5156 = vadd.f32 %v3470, %v5148
      %v5157 = vadd.f32 %v3471, %v5149
      %v5158 = vadd.f32 %v3472, %v5150
      %v5159 = vsel %vm907, %v5151, 0.0
      %5160 = vadd.xlane.f32.xlu0 %v5159
      %v5161 = vpop.xlane.xlu0 %5160
      %v5162 = vsel %vm907, %v5152, 0.0
      %5163 = vadd.xlane.f32.xlu0 %v5162
      %v5164 = vpop.xlane.xlu0 %5163
      %v5165 = vsel %vm907, %v5153, 0.0
      %5166 = vadd.xlane.f32.xlu0 %v5165
      %v5167 = vpop.xlane.xlu0 %5166
      %v5168 = vsel %vm907, %v5154, 0.0
      %5169 = vadd.xlane.f32.xlu0 %v5168
      %v5170 = vpop.xlane.xlu0 %5169
      %v5171 = vsel %vm907, %v5155, 0.0
      %5172 = vadd.xlane.f32.xlu0 %v5171
      %v5173 = vpop.xlane.xlu0 %5172
      %v5174 = vsel %vm907, %v5156, 0.0
      %5175 = vadd.xlane.f32.xlu0 %v5174
      %v5176 = vpop.xlane.xlu0 %5175
      %v5177 = vsel %vm907, %v5157, 0.0
      %5178 = vadd.xlane.f32.xlu0 %v5177
      %v5179 = vpop.xlane.xlu0 %5178
      %v5180 = vsel %vm907, %v5158, 0.0
      %5181 = vadd.xlane.f32.xlu0 %v5180
      %v5182 = vpop.xlane.xlu0 %5181
      %v5183 = vmul.f32 %v5161, %v1098
      %v5184 = vmul.f32 %v5164, %v1098
      %v5185 = vmul.f32 %v5167, %v1098
      %v5186 = vmul.f32 %v5170, %v1098
      %v5187 = vmul.f32 %v5173, %v1098
      %v5188 = vmul.f32 %v5176, %v1098
      %v5189 = vmul.f32 %v5179, %v1098
      %v5190 = vmul.f32 %v5182, %v1098
      %v5191 = vsub.f32 %v5151, %v5183
      %v5192 = vsub.f32 %v5152, %v5184
      %v5193 = vsub.f32 %v5153, %v5185
      %v5194 = vsub.f32 %v5154, %v5186
      %v5195 = vsub.f32 %v5155, %v5187
      %v5196 = vsub.f32 %v5156, %v5188
      %v5197 = vsub.f32 %v5157, %v5189
      %v5198 = vsub.f32 %v5158, %v5190
      %v5199 = vmul.f32 %v5191, %v5191
      %v5200 = vmul.f32 %v5192, %v5192
      %v5201 = vmul.f32 %v5193, %v5193
      %v5202 = vmul.f32 %v5194, %v5194
      %v5203 = vmul.f32 %v5195, %v5195
      %v5204 = vmul.f32 %v5196, %v5196
      %v5205 = vmul.f32 %v5197, %v5197
      %v5206 = vmul.f32 %v5198, %v5198
      %v5207 = vsel %vm907, %v5199, 0.0
      %5208 = vadd.xlane.f32.xlu0 %v5207
      %v5209 = vpop.xlane.xlu0 %5208
      %v5210 = vsel %vm907, %v5200, 0.0
      %5211 = vadd.xlane.f32.xlu0 %v5210
      %v5212 = vpop.xlane.xlu0 %5211
      %v5213 = vsel %vm907, %v5201, 0.0
      %5214 = vadd.xlane.f32.xlu0 %v5213
      %v5215 = vpop.xlane.xlu0 %5214
      %v5216 = vsel %vm907, %v5202, 0.0
      %5217 = vadd.xlane.f32.xlu0 %v5216
      %v5218 = vpop.xlane.xlu0 %5217
      %v5219 = vsel %vm907, %v5203, 0.0
      %5220 = vadd.xlane.f32.xlu0 %v5219
      %v5221 = vpop.xlane.xlu0 %5220
      %v5222 = vsel %vm907, %v5204, 0.0
      %5223 = vadd.xlane.f32.xlu0 %v5222
      %v5224 = vpop.xlane.xlu0 %5223
      %v5225 = vsel %vm907, %v5205, 0.0
      %5226 = vadd.xlane.f32.xlu0 %v5225
      %v5227 = vpop.xlane.xlu0 %5226
      %v5228 = vsel %vm907, %v5206, 0.0
      %5229 = vadd.xlane.f32.xlu0 %v5228
      %v5230 = vpop.xlane.xlu0 %5229
      %v5231 = vmul.f32 %v5209, %v1098
      %v5232 = vmul.f32 %v5212, %v1098
      %v5233 = vmul.f32 %v5215, %v1098
      %v5234 = vmul.f32 %v5218, %v1098
      %v5235 = vmul.f32 %v5221, %v1098
      %v5236 = vmul.f32 %v5224, %v1098
      %v5237 = vmul.f32 %v5227, %v1098
      %v5238 = vmul.f32 %v5230, %v1098
      %v5239 = vadd.f32 %v5231, 1e-06
      %v5240 = vadd.f32 %v5232, 1e-06
      %v5241 = vadd.f32 %v5233, 1e-06
      %v5242 = vadd.f32 %v5234, 1e-06
      %v5243 = vadd.f32 %v5235, 1e-06
      %v5244 = vadd.f32 %v5236, 1e-06
      %v5245 = vadd.f32 %v5237, 1e-06
      %v5246 = vadd.f32 %v5238, 1e-06
      %v5247 = vrsqrt.pop %v5239
      %v5248 = vrsqrt.pop %v5240
      %v5249 = vrsqrt.pop %v5241
      %v5250 = vrsqrt.pop %v5242
      %v5251 = vrsqrt.pop %v5243
      %v5252 = vrsqrt.pop %v5244
      %v5253 = vrsqrt.pop %v5245
      %v5254 = vrsqrt.pop %v5246
      %v5255 = vmul.f32 %v5191, %v5247
      %v5256 = vmul.f32 %v5192, %v5248
      %v5257 = vmul.f32 %v5193, %v5249
      %v5258 = vmul.f32 %v5194, %v5250
      %v5259 = vmul.f32 %v5195, %v5251
      %v5260 = vmul.f32 %v5196, %v5252
      %v5261 = vmul.f32 %v5197, %v5253
      %v5262 = vmul.f32 %v5198, %v5254
      %v5263 = vadd.f32 %v1030, 1.0
      %v5264 = vlaneseq
      %v5265 = vshrl.u32 %v5264, 7
      %v5266 = vsub.s32 0, %v5265
      %v5267 = vrot.slane %v5263, %v5266
      %v5268 = vmul.f32 %v5255, %v5267
      %v5269 = vmul.f32 %v5256, %v5267
      %v5270 = vmul.f32 %v5257, %v5267
      %v5271 = vmul.f32 %v5258, %v5267
      %v5272 = vmul.f32 %v5259, %v5267
      %v5273 = vmul.f32 %v5260, %v5267
      %v5274 = vmul.f32 %v5261, %v5267
      %v5275 = vmul.f32 %v5262, %v5267
      %5277 = vrot.lane.b32.xlu0 %v5142, 64
      %v5278 = vpop.permute.xlu0 %5277
      %v5280 = vadd.f32 %v5268, %v5278
      %v5281 = vadd.f32 %v5269, %v5278
      %v5282 = vadd.f32 %v5270, %v5278
      %v5283 = vadd.f32 %v5271, %v5278
      %v5284 = vadd.f32 %v5272, %v5278
      %v5285 = vadd.f32 %v5273, %v5278
      %v5286 = vadd.f32 %v5274, %v5278
      %v5287 = vadd.f32 %v5275, %v5278
      %s5288 = scalar_lea.vmem %s11, 64
      %v5289 = vld [vmem:[%s5288] sm:$0xff]
      %v5290 = vld [vmem:[%s5288 + $0x8] sm:$0xff]
      %v5291 = vld [vmem:[%s5288 + $0x10] sm:$0xff]
      %v5292 = vld [vmem:[%s5288 + $0x18] sm:$0xff]
      %v5293 = vld [vmem:[%s5288 + $0x20] sm:$0xff]
      %v5294 = vld [vmem:[%s5288 + $0x28] sm:$0xff]
      %v5295 = vld [vmem:[%s5288 + $0x30] sm:$0xff]
      %v5296 = vld [vmem:[%s5288 + $0x38] sm:$0xff]
      %v5297 = vpack.c.bf16 %v5281, %v5280
      %v5298 = vpack.c.bf16 %v5283, %v5282
      %v5299 = vpack.c.bf16 %v5285, %v5284
      %v5300 = vpack.c.bf16 %v5287, %v5286
      %s5301 = scalar_lea.vmem %s12, 2
      %v5302 = vld [vmem:[%s5301] sm:$0x3]
      %v5304 = vlaneseq
      %v5305 = vshrl.u32 %v5304, 7
      %v5306 = vsub.s32 0, %v5305
      %v5307 = vrot.slane %v5302, %v5306
      %v5308 = vlaneseq
      %v5309 = vshrl.u32 %v5308, 7
      %v5310 = vsub.s32 1, %v5309
      %v5311 = vrot.slane %v5302, %v5310
      %v5322 = vunpack.c.l.b16 %v5289
      %v5323 = vunpack.c.h.b16 %v5289
      %v5324 = vunpack.c.l.b16 %v5290
      %v5325 = vunpack.c.h.b16 %v5290
      %v5326 = vunpack.c.l.b16 %v5291
      %v5327 = vunpack.c.h.b16 %v5291
      %v5328 = vunpack.c.l.b16 %v5292
      %v5329 = vunpack.c.h.b16 %v5292
      %v5330 = vunpack.c.l.b16 %v5293
      %v5331 = vunpack.c.h.b16 %v5293
      %v5332 = vunpack.c.l.b16 %v5294
      %v5333 = vunpack.c.h.b16 %v5294
      %v5334 = vunpack.c.l.b16 %v5295
      %v5335 = vunpack.c.h.b16 %v5295
      %v5336 = vunpack.c.l.b16 %v5296
      %v5337 = vunpack.c.h.b16 %v5296
      %v5338 = vpack.c.b16 %v5324, %v5322
      %v5339 = vpack.c.b16 %v5325, %v5323
      %v5340 = vpack.c.b16 %v5328, %v5326
      %v5341 = vpack.c.b16 %v5329, %v5327
      %v5342 = vpack.c.b16 %v5332, %v5330
      %v5343 = vpack.c.b16 %v5333, %v5331
      %v5344 = vpack.c.b16 %v5336, %v5334
      %v5345 = vpack.c.b16 %v5337, %v5335
      %v5355 = vsel %vm907, %v5297, 0
      %v5358 = vsel %vm907, %v5298, 0
      %v5361 = vsel %vm907, %v5299, 0
      %v5364 = vsel %vm907, %v5300, 0
      %5366 = vmatprep.subr.bf16.mxu0 0
      %5367 = vmatpush1.bf16.msra.mxu0 0
      %5368 = vmatprep.subr.bf16.mxu0 0
      %5369 = vmatpush1.bf16.msra.mxu0 0
      %5370 = vmatprep.subr.bf16.mxu0 0
      %5371 = vmatpush1.bf16.msra.mxu0 0
      %5372 = vmatprep.subr.bf16.mxu0 0
      %5373 = vmatpush1.bf16.msra.mxu0 0
      %5374 = vmatprep.subr.bf16.mxu0 %v5345
      %5375 = vmatpush1.bf16.msra.mxu0 %v5344
      %5376 = vmatprep.subr.bf16.mxu0 %v5343
      %5377 = vmatpush1.bf16.msra.mxu0 %v5342
      %5378 = vmatprep.subr.bf16.mxu0 %v5341
      %5379 = vmatpush1.bf16.msra.mxu0 %v5340
      %5380 = vmatprep.subr.bf16.mxu0 %v5339
      %5381 = vmatpush1.bf16.msra.mxu0 %v5338
      %5382 = vmatprep.subr.bf16.mxu0 0
      %5383 = vmatpush2.bf16.msra.mxu0 0
      %5384 = vmatprep.subr.bf16.mxu0 0
      %5385 = vmatpush2.bf16.msra.mxu0 0
      %5386 = vmatprep.subr.bf16.mxu0 0
      %5387 = vmatpush2.bf16.msra.mxu0 0
      %5388 = vmatprep.subr.bf16.mxu0 0
      %5389 = vmatpush2.bf16.msra.mxu0 0
      %5390 = vmatprep.subr.bf16.mxu0 0
      %5391 = vmatpush2.bf16.msra.mxu0 0
      %5392 = vmatprep.subr.bf16.mxu0 0
      %5393 = vmatpush2.bf16.msra.mxu0 0
      %5394 = vmatprep.subr.bf16.mxu0 0
      %5395 = vmatpush2.bf16.msra.mxu0 0
      %5396 = vmatprep.subr.bf16.mxu0 0
      %5397 = vmatpush2.bf16.msra.mxu0 0
      %5398 = vmatprep.mubr.bf16.mxu0 0
      %5399 = vmatmul.mubr.bf16.gmra.mxu0 %v5355
      %v5400 = vpop.f32.mrf.mxu0
      %v5401 = vadd.f32 %v5307, %v5400
      %v5402 = vpop.f32.mrf.mxu0
      %v5403 = vadd.f32 %v5311, %v5402
      %v5404 = vpop.f32.mrf.mxu0
      %v5405 = vadd.f32 %v5307, %v5404
      %v5406 = vpop.f32.mrf.mxu0
      %v5407 = vadd.f32 %v5311, %v5406
      %5408 = vmatprep.mubr.bf16.mxu0 0
      %5409 = vmatmul.mubr.bf16.gmra.mxu0 %v5358
      %v5410 = vpop.f32.mrf.mxu0
      %v5411 = vadd.f32 %v5307, %v5410
      %v5412 = vpop.f32.mrf.mxu0
      %v5413 = vadd.f32 %v5311, %v5412
      %v5414 = vpop.f32.mrf.mxu0
      %v5415 = vadd.f32 %v5307, %v5414
      %v5416 = vpop.f32.mrf.mxu0
      %v5417 = vadd.f32 %v5311, %v5416
      %5418 = vmatprep.mubr.bf16.mxu0 0
      %5419 = vmatmul.mubr.bf16.gmra.mxu0 %v5361
      %v5420 = vpop.f32.mrf.mxu0
      %v5421 = vadd.f32 %v5307, %v5420
      %v5422 = vpop.f32.mrf.mxu0
      %v5423 = vadd.f32 %v5311, %v5422
      %v5424 = vpop.f32.mrf.mxu0
      %v5425 = vadd.f32 %v5307, %v5424
      %v5426 = vpop.f32.mrf.mxu0
      %v5427 = vadd.f32 %v5311, %v5426
      %5428 = vmatprep.mubr.bf16.mxu0 0
      %5429 = vmatmul.mubr.bf16.gmra.mxu0 %v5364
      %v5430 = vpop.f32.mrf.mxu0
      %v5431 = vadd.f32 %v5307, %v5430
      %v5432 = vpop.f32.mrf.mxu0
      %v5433 = vadd.f32 %v5311, %v5432
      %v5434 = vpop.f32.mrf.mxu0
      %v5435 = vadd.f32 %v5307, %v5434
      %v5436 = vpop.f32.mrf.mxu0
      %v5437 = vadd.f32 %v5311, %v5436
      %5438 = vdwg.mxu0
      %v5439 = vmul.f32 %v5401, 0.5
      %v5440 = vmul.f32 %v5403, 0.5
      %v5441 = vmul.f32 %v5405, 0.5
      %v5442 = vmul.f32 %v5407, 0.5
      %v5443 = vmul.f32 %v5411, 0.5
      %v5444 = vmul.f32 %v5413, 0.5
      %v5445 = vmul.f32 %v5415, 0.5
      %v5446 = vmul.f32 %v5417, 0.5
      %v5447 = vmul.f32 %v5421, 0.5
      %v5448 = vmul.f32 %v5423, 0.5
      %v5449 = vmul.f32 %v5425, 0.5
      %v5450 = vmul.f32 %v5427, 0.5
      %v5451 = vmul.f32 %v5431, 0.5
      %v5452 = vmul.f32 %v5433, 0.5
      %v5453 = vmul.f32 %v5435, 0.5
      %v5454 = vmul.f32 %v5437, 0.5
      %v5455 = vmul.f32 %v5401, 0.044715
      %v5456 = vmul.f32 %v5403, 0.044715
      %v5457 = vmul.f32 %v5405, 0.044715
      %v5458 = vmul.f32 %v5407, 0.044715
      %v5459 = vmul.f32 %v5411, 0.044715
      %v5460 = vmul.f32 %v5413, 0.044715
      %v5461 = vmul.f32 %v5415, 0.044715
      %v5462 = vmul.f32 %v5417, 0.044715
      %v5463 = vmul.f32 %v5421, 0.044715
      %v5464 = vmul.f32 %v5423, 0.044715
      %v5465 = vmul.f32 %v5425, 0.044715
      %v5466 = vmul.f32 %v5427, 0.044715
      %v5467 = vmul.f32 %v5431, 0.044715
      %v5468 = vmul.f32 %v5433, 0.044715
      %v5469 = vmul.f32 %v5435, 0.044715
      %v5470 = vmul.f32 %v5437, 0.044715
      %v5471 = vmul.f32 %v5455, %v5401
      %v5472 = vmul.f32 %v5456, %v5403
      %v5473 = vmul.f32 %v5457, %v5405
      %v5474 = vmul.f32 %v5458, %v5407
      %v5475 = vmul.f32 %v5459, %v5411
      %v5476 = vmul.f32 %v5460, %v5413
      %v5477 = vmul.f32 %v5461, %v5415
      %v5478 = vmul.f32 %v5462, %v5417
      %v5479 = vmul.f32 %v5463, %v5421
      %v5480 = vmul.f32 %v5464, %v5423
      %v5481 = vmul.f32 %v5465, %v5425
      %v5482 = vmul.f32 %v5466, %v5427
      %v5483 = vmul.f32 %v5467, %v5431
      %v5484 = vmul.f32 %v5468, %v5433
      %v5485 = vmul.f32 %v5469, %v5435
      %v5486 = vmul.f32 %v5470, %v5437
      %v5487 = vmul.f32 %v5471, %v5401
      %v5488 = vmul.f32 %v5472, %v5403
      %v5489 = vmul.f32 %v5473, %v5405
      %v5490 = vmul.f32 %v5474, %v5407
      %v5491 = vmul.f32 %v5475, %v5411
      %v5492 = vmul.f32 %v5476, %v5413
      %v5493 = vmul.f32 %v5477, %v5415
      %v5494 = vmul.f32 %v5478, %v5417
      %v5495 = vmul.f32 %v5479, %v5421
      %v5496 = vmul.f32 %v5480, %v5423
      %v5497 = vmul.f32 %v5481, %v5425
      %v5498 = vmul.f32 %v5482, %v5427
      %v5499 = vmul.f32 %v5483, %v5431
      %v5500 = vmul.f32 %v5484, %v5433
      %v5501 = vmul.f32 %v5485, %v5435
      %v5502 = vmul.f32 %v5486, %v5437
      %v5503 = vadd.f32 %v5401, %v5487
      %v5504 = vadd.f32 %v5403, %v5488
      %v5505 = vadd.f32 %v5405, %v5489
      %v5506 = vadd.f32 %v5407, %v5490
      %v5507 = vadd.f32 %v5411, %v5491
      %v5508 = vadd.f32 %v5413, %v5492
      %v5509 = vadd.f32 %v5415, %v5493
      %v5510 = vadd.f32 %v5417, %v5494
      %v5511 = vadd.f32 %v5421, %v5495
      %v5512 = vadd.f32 %v5423, %v5496
      %v5513 = vadd.f32 %v5425, %v5497
      %v5514 = vadd.f32 %v5427, %v5498
      %v5515 = vadd.f32 %v5431, %v5499
      %v5516 = vadd.f32 %v5433, %v5500
      %v5517 = vadd.f32 %v5435, %v5501
      %v5518 = vadd.f32 %v5437, %v5502
      %v5519 = vmul.f32 %v5503, 0.7978846
      %v5520 = vmul.f32 %v5504, 0.7978846
      %v5521 = vmul.f32 %v5505, 0.7978846
      %v5522 = vmul.f32 %v5506, 0.7978846
      %v5523 = vmul.f32 %v5507, 0.7978846
      %v5524 = vmul.f32 %v5508, 0.7978846
      %v5525 = vmul.f32 %v5509, 0.7978846
      %v5526 = vmul.f32 %v5510, 0.7978846
      %v5527 = vmul.f32 %v5511, 0.7978846
      %v5528 = vmul.f32 %v5512, 0.7978846
      %v5529 = vmul.f32 %v5513, 0.7978846
      %v5530 = vmul.f32 %v5514, 0.7978846
      %v5531 = vmul.f32 %v5515, 0.7978846
      %v5532 = vmul.f32 %v5516, 0.7978846
      %v5533 = vmul.f32 %v5517, 0.7978846
      %v5534 = vmul.f32 %v5518, 0.7978846
      %v5535 = vtanh.pop %v5519
      %v5536 = vtanh.pop %v5520
      %v5537 = vtanh.pop %v5521
      %v5538 = vtanh.pop %v5522
      %v5539 = vtanh.pop %v5523
      %v5540 = vtanh.pop %v5524
      %v5541 = vtanh.pop %v5525
      %v5542 = vtanh.pop %v5526
      %v5543 = vtanh.pop %v5527
      %v5544 = vtanh.pop %v5528
      %v5545 = vtanh.pop %v5529
      %v5546 = vtanh.pop %v5530
      %v5547 = vtanh.pop %v5531
      %v5548 = vtanh.pop %v5532
      %v5549 = vtanh.pop %v5533
      %v5550 = vtanh.pop %v5534
      %v5551 = vadd.f32 %v5535, 1.0
      %v5552 = vadd.f32 %v5536, 1.0
      %v5553 = vadd.f32 %v5537, 1.0
      %v5554 = vadd.f32 %v5538, 1.0
      %v5555 = vadd.f32 %v5539, 1.0
      %v5556 = vadd.f32 %v5540, 1.0
      %v5557 = vadd.f32 %v5541, 1.0
      %v5558 = vadd.f32 %v5542, 1.0
      %v5559 = vadd.f32 %v5543, 1.0
      %v5560 = vadd.f32 %v5544, 1.0
      %v5561 = vadd.f32 %v5545, 1.0
      %v5562 = vadd.f32 %v5546, 1.0
      %v5563 = vadd.f32 %v5547, 1.0
      %v5564 = vadd.f32 %v5548, 1.0
      %v5565 = vadd.f32 %v5549, 1.0
      %v5566 = vadd.f32 %v5550, 1.0
      %v5567 = vmul.f32 %v5439, %v5551
      %v5568 = vmul.f32 %v5440, %v5552
      %v5569 = vmul.f32 %v5441, %v5553
      %v5570 = vmul.f32 %v5442, %v5554
      %v5571 = vmul.f32 %v5443, %v5555
      %v5572 = vmul.f32 %v5444, %v5556
      %v5573 = vmul.f32 %v5445, %v5557
      %v5574 = vmul.f32 %v5446, %v5558
      %v5575 = vmul.f32 %v5447, %v5559
      %v5576 = vmul.f32 %v5448, %v5560
      %v5577 = vmul.f32 %v5449, %v5561
      %v5578 = vmul.f32 %v5450, %v5562
      %v5579 = vmul.f32 %v5451, %v5563
      %v5580 = vmul.f32 %v5452, %v5564
      %v5581 = vmul.f32 %v5453, %v5565
      %v5582 = vmul.f32 %v5454, %v5566
      %s5583 = scalar_lea.vmem %s13, 128
      %v5584 = vld [vmem:[%s5583] sm:$0xf]
      %v5585 = vld [vmem:[%s5583 + $0x4] sm:$0xf]
      %v5586 = vld [vmem:[%s5583 + $0x8] sm:$0xf]
      %v5587 = vld [vmem:[%s5583 + $0xc] sm:$0xf]
      %v5588 = vld [vmem:[%s5583 + $0x10] sm:$0xf]
      %v5589 = vld [vmem:[%s5583 + $0x14] sm:$0xf]
      %v5590 = vld [vmem:[%s5583 + $0x18] sm:$0xf]
      %v5591 = vld [vmem:[%s5583 + $0x1c] sm:$0xf]
      %v5592 = vld [vmem:[%s5583 + $0x20] sm:$0xf]
      %v5593 = vld [vmem:[%s5583 + $0x24] sm:$0xf]
      %v5594 = vld [vmem:[%s5583 + $0x28] sm:$0xf]
      %v5595 = vld [vmem:[%s5583 + $0x2c] sm:$0xf]
      %v5596 = vld [vmem:[%s5583 + $0x30] sm:$0xf]
      %v5597 = vld [vmem:[%s5583 + $0x34] sm:$0xf]
      %v5598 = vld [vmem:[%s5583 + $0x38] sm:$0xf]
      %v5599 = vld [vmem:[%s5583 + $0x3c] sm:$0xf]
      %v5600 = vld [vmem:[%s5583 + $0x40] sm:$0xf]
      %v5601 = vld [vmem:[%s5583 + $0x44] sm:$0xf]
      %v5602 = vld [vmem:[%s5583 + $0x48] sm:$0xf]
      %v5603 = vld [vmem:[%s5583 + $0x4c] sm:$0xf]
      %v5604 = vld [vmem:[%s5583 + $0x50] sm:$0xf]
      %v5605 = vld [vmem:[%s5583 + $0x54] sm:$0xf]
      %v5606 = vld [vmem:[%s5583 + $0x58] sm:$0xf]
      %v5607 = vld [vmem:[%s5583 + $0x5c] sm:$0xf]
      %v5608 = vld [vmem:[%s5583 + $0x60] sm:$0xf]
      %v5609 = vld [vmem:[%s5583 + $0x64] sm:$0xf]
      %v5610 = vld [vmem:[%s5583 + $0x68] sm:$0xf]
      %v5611 = vld [vmem:[%s5583 + $0x6c] sm:$0xf]
      %v5612 = vld [vmem:[%s5583 + $0x70] sm:$0xf]
      %v5613 = vld [vmem:[%s5583 + $0x74] sm:$0xf]
      %v5614 = vld [vmem:[%s5583 + $0x78] sm:$0xf]
      %v5615 = vld [vmem:[%s5583 + $0x7c] sm:$0xf]
      %v5616 = vpack.c.bf16 %v5569, %v5567
      %v5617 = vpack.c.bf16 %v5570, %v5568
      %v5618 = vpack.c.bf16 %v5573, %v5571
      %v5619 = vpack.c.bf16 %v5574, %v5572
      %v5620 = vpack.c.bf16 %v5577, %v5575
      %v5621 = vpack.c.bf16 %v5578, %v5576
      %v5622 = vpack.c.bf16 %v5581, %v5579
      %v5623 = vpack.c.bf16 %v5582, %v5580
      %s5624 = scalar_lea.vmem %s14, 1
      %v5625 = vld [vmem:[%s5624] sm:$0x1]
      %v5627 = vlaneseq
      %v5628 = vshrl.u32 %v5627, 7
      %v5629 = vsub.s32 0, %v5628
      %v5630 = vrot.slane %v5625, %v5629
      %v5664 = vunpack.c.l.b16 %v5584
      %v5665 = vunpack.c.l.b16 %v5585
      %v5666 = vunpack.c.l.b16 %v5586
      %v5667 = vunpack.c.l.b16 %v5587
      %v5668 = vunpack.c.l.b16 %v5588
      %v5669 = vunpack.c.l.b16 %v5589
      %v5670 = vunpack.c.l.b16 %v5590
      %v5671 = vunpack.c.l.b16 %v5591
      %v5672 = vunpack.c.l.b16 %v5592
      %v5673 = vunpack.c.l.b16 %v5593
      %v5674 = vunpack.c.l.b16 %v5594
      %v5675 = vunpack.c.l.b16 %v5595
      %v5676 = vunpack.c.l.b16 %v5596
      %v5677 = vunpack.c.l.b16 %v5597
      %v5678 = vunpack.c.l.b16 %v5598
      %v5679 = vunpack.c.l.b16 %v5599
      %v5680 = vunpack.c.l.b16 %v5600
      %v5681 = vunpack.c.l.b16 %v5601
      %v5682 = vunpack.c.l.b16 %v5602
      %v5683 = vunpack.c.l.b16 %v5603
      %v5684 = vunpack.c.l.b16 %v5604
      %v5685 = vunpack.c.l.b16 %v5605
      %v5686 = vunpack.c.l.b16 %v5606
      %v5687 = vunpack.c.l.b16 %v5607
      %v5688 = vunpack.c.l.b16 %v5608
      %v5689 = vunpack.c.l.b16 %v5609
      %v5690 = vunpack.c.l.b16 %v5610
      %v5691 = vunpack.c.l.b16 %v5611
      %v5692 = vunpack.c.l.b16 %v5612
      %v5693 = vunpack.c.l.b16 %v5613
      %v5694 = vunpack.c.l.b16 %v5614
      %v5695 = vunpack.c.l.b16 %v5615
      %v5696 = vpack.c.b16 %v5665, %v5664
      %v5697 = vpack.c.b16 %v5667, %v5666
      %v5698 = vpack.c.b16 %v5669, %v5668
      %v5699 = vpack.c.b16 %v5671, %v5670
      %v5700 = vpack.c.b16 %v5673, %v5672
      %v5701 = vpack.c.b16 %v5675, %v5674
      %v5702 = vpack.c.b16 %v5677, %v5676
      %v5703 = vpack.c.b16 %v5679, %v5678
      %v5704 = vpack.c.b16 %v5681, %v5680
      %v5705 = vpack.c.b16 %v5683, %v5682
      %v5706 = vpack.c.b16 %v5685, %v5684
      %v5707 = vpack.c.b16 %v5687, %v5686
      %v5708 = vpack.c.b16 %v5689, %v5688
      %v5709 = vpack.c.b16 %v5691, %v5690
      %v5710 = vpack.c.b16 %v5693, %v5692
      %v5711 = vpack.c.b16 %v5695, %v5694
      %5728 = vmatprep.subr.bf16.mxu0 0
      %5729 = vmatpush1.bf16.msra.mxu0 %v5703
      %5730 = vmatprep.subr.bf16.mxu0 0
      %5731 = vmatpush1.bf16.msra.mxu0 %v5702
      %5732 = vmatprep.subr.bf16.mxu0 0
      %5733 = vmatpush1.bf16.msra.mxu0 %v5701
      %5734 = vmatprep.subr.bf16.mxu0 0
      %5735 = vmatpush1.bf16.msra.mxu0 %v5700
      %5736 = vmatprep.subr.bf16.mxu0 0
      %5737 = vmatpush1.bf16.msra.mxu0 %v5699
      %5738 = vmatprep.subr.bf16.mxu0 0
      %5739 = vmatpush1.bf16.msra.mxu0 %v5698
      %5740 = vmatprep.subr.bf16.mxu0 0
      %5741 = vmatpush1.bf16.msra.mxu0 %v5697
      %5742 = vmatprep.subr.bf16.mxu0 0
      %5743 = vmatpush1.bf16.msra.mxu0 %v5696
      %5744 = vmatprep.subr.bf16.mxu0 0
      %5745 = vmatpush2.bf16.msra.mxu0 %v5711
      %5746 = vmatprep.subr.bf16.mxu0 0
      %5747 = vmatpush2.bf16.msra.mxu0 %v5710
      %5748 = vmatprep.subr.bf16.mxu0 0
      %5749 = vmatpush2.bf16.msra.mxu0 %v5709
      %5750 = vmatprep.subr.bf16.mxu0 0
      %5751 = vmatpush2.bf16.msra.mxu0 %v5708
      %5752 = vmatprep.subr.bf16.mxu0 0
      %5753 = vmatpush2.bf16.msra.mxu0 %v5707
      %5754 = vmatprep.subr.bf16.mxu0 0
      %5755 = vmatpush2.bf16.msra.mxu0 %v5706
      %5756 = vmatprep.subr.bf16.mxu0 0
      %5757 = vmatpush2.bf16.msra.mxu0 %v5705
      %5758 = vmatprep.subr.bf16.mxu0 0
      %5759 = vmatpush2.bf16.msra.mxu0 %v5704
      %5760 = vmatprep.mubr.bf16.mxu0 %v5617
      %5761 = vmatmul.mubr.bf16.gmra.mxu0 %v5616
      %v5762 = vpop.f32.mrf.mxu0
      %v5763 = vadd.f32 %v5630, %v5762
      %v5764 = vpop.f32.mrf.mxu0
      %v5765 = vpop.f32.mrf.mxu0
      %v5766 = vadd.f32 %v5630, %v5765
      %v5767 = vpop.f32.mrf.mxu0
      %5768 = vmatprep.mubr.bf16.mxu0 %v5619
      %5769 = vmatmul.mubr.bf16.gmra.mxu0 %v5618
      %v5770 = vpop.f32.mrf.mxu0
      %v5771 = vadd.f32 %v5630, %v5770
      %v5772 = vpop.f32.mrf.mxu0
      %v5773 = vpop.f32.mrf.mxu0
      %v5774 = vadd.f32 %v5630, %v5773
      %v5775 = vpop.f32.mrf.mxu0
      %5776 = vmatprep.mubr.bf16.mxu0 %v5621
      %5777 = vmatmul.mubr.bf16.gmra.mxu0 %v5620
      %v5778 = vpop.f32.mrf.mxu0
      %v5779 = vadd.f32 %v5630, %v5778
      %v5780 = vpop.f32.mrf.mxu0
      %v5781 = vpop.f32.mrf.mxu0
      %v5782 = vadd.f32 %v5630, %v5781
      %v5783 = vpop.f32.mrf.mxu0
      %5784 = vmatprep.mubr.bf16.mxu0 %v5623
      %5785 = vmatmul.mubr.bf16.gmra.mxu0 %v5622
      %v5786 = vpop.f32.mrf.mxu0
      %v5787 = vadd.f32 %v5630, %v5786
      %v5788 = vpop.f32.mrf.mxu0
      %v5789 = vpop.f32.mrf.mxu0
      %v5790 = vadd.f32 %v5630, %v5789
      %v5791 = vpop.f32.mrf.mxu0
      %5792 = vdwg.mxu0
      %v5793 = vlaneseq
      %v5794 = vshrl.u32 %v5793, 7
      %v5795 = vsub.s32 0, %v5794
      %v5796 = vrot.slane %v1030, %v5795
      %5805 = vrot.lane.b32.xlu0 %v5763, 64
      %v5806 = vpop.permute.xlu0 %5805
      %5807 = vrot.lane.b32.xlu0 %v5766, 64
      %v5808 = vpop.permute.xlu0 %5807
      %5809 = vrot.lane.b32.xlu0 %v5771, 64
      %v5810 = vpop.permute.xlu0 %5809
      %5811 = vrot.lane.b32.xlu0 %v5774, 64
      %v5812 = vpop.permute.xlu0 %5811
      %5813 = vrot.lane.b32.xlu0 %v5779, 64
      %v5814 = vpop.permute.xlu0 %5813
      %5815 = vrot.lane.b32.xlu0 %v5782, 64
      %v5816 = vpop.permute.xlu0 %5815
      %5817 = vrot.lane.b32.xlu0 %v5787, 64
      %v5818 = vpop.permute.xlu0 %5817
      %5819 = vrot.lane.b32.xlu0 %v5790, 64
      %v5820 = vpop.permute.xlu0 %5819
      %v5829 = vmul.f32 %v5796, %v5806
      %v5830 = vmul.f32 %v5796, %v5808
      %v5831 = vmul.f32 %v5796, %v5810
      %v5832 = vmul.f32 %v5796, %v5812
      %v5833 = vmul.f32 %v5796, %v5814
      %v5834 = vmul.f32 %v5796, %v5816
      %v5835 = vmul.f32 %v5796, %v5818
      %v5836 = vmul.f32 %v5796, %v5820
      %5845 = vrot.lane.b32.xlu0 %v5829, 64
      %v5846 = vpop.permute.xlu0 %5845
      %5847 = vrot.lane.b32.xlu0 %v5830, 64
      %v5848 = vpop.permute.xlu0 %5847
      %5849 = vrot.lane.b32.xlu0 %v5831, 64
      %v5850 = vpop.permute.xlu0 %5849
      %5851 = vrot.lane.b32.xlu0 %v5832, 64
      %v5852 = vpop.permute.xlu0 %5851
      %5853 = vrot.lane.b32.xlu0 %v5833, 64
      %v5854 = vpop.permute.xlu0 %5853
      %5855 = vrot.lane.b32.xlu0 %v5834, 64
      %v5856 = vpop.permute.xlu0 %5855
      %5857 = vrot.lane.b32.xlu0 %v5835, 64
      %v5858 = vpop.permute.xlu0 %5857
      %5859 = vrot.lane.b32.xlu0 %v5836, 64
      %v5860 = vpop.permute.xlu0 %5859
      %v5869 = vadd.f32 %v5151, %v5846
      %v5870 = vadd.f32 %v5152, %v5848
      %v5871 = vadd.f32 %v5153, %v5850
      %v5872 = vadd.f32 %v5154, %v5852
      %v5873 = vadd.f32 %v5155, %v5854
      %v5874 = vadd.f32 %v5156, %v5856
      %v5875 = vadd.f32 %v5157, %v5858
      %v5876 = vadd.f32 %v5158, %v5860
      %v5877 = vsel %vm907, %v5869, 0.0
      %5878 = vadd.xlane.f32.xlu0 %v5877
      %v5879 = vpop.xlane.xlu0 %5878
      %v5880 = vsel %vm907, %v5870, 0.0
      %5881 = vadd.xlane.f32.xlu0 %v5880
      %v5882 = vpop.xlane.xlu0 %5881
      %v5883 = vsel %vm907, %v5871, 0.0
      %5884 = vadd.xlane.f32.xlu0 %v5883
      %v5885 = vpop.xlane.xlu0 %5884
      %v5886 = vsel %vm907, %v5872, 0.0
      %5887 = vadd.xlane.f32.xlu0 %v5886
      %v5888 = vpop.xlane.xlu0 %5887
      %v5889 = vsel %vm907, %v5873, 0.0
      %5890 = vadd.xlane.f32.xlu0 %v5889
      %v5891 = vpop.xlane.xlu0 %5890
      %v5892 = vsel %vm907, %v5874, 0.0
      %5893 = vadd.xlane.f32.xlu0 %v5892
      %v5894 = vpop.xlane.xlu0 %5893
      %v5895 = vsel %vm907, %v5875, 0.0
      %5896 = vadd.xlane.f32.xlu0 %v5895
      %v5897 = vpop.xlane.xlu0 %5896
      %v5898 = vsel %vm907, %v5876, 0.0
      %5899 = vadd.xlane.f32.xlu0 %v5898
      %v5900 = vpop.xlane.xlu0 %5899
      %v5901 = vmul.f32 %v5879, %v1098
      %v5902 = vmul.f32 %v5882, %v1098
      %v5903 = vmul.f32 %v5885, %v1098
      %v5904 = vmul.f32 %v5888, %v1098
      %v5905 = vmul.f32 %v5891, %v1098
      %v5906 = vmul.f32 %v5894, %v1098
      %v5907 = vmul.f32 %v5897, %v1098
      %v5908 = vmul.f32 %v5900, %v1098
      %v5909 = vsub.f32 %v5869, %v5901
      %v5910 = vsub.f32 %v5870, %v5902
      %v5911 = vsub.f32 %v5871, %v5903
      %v5912 = vsub.f32 %v5872, %v5904
      %v5913 = vsub.f32 %v5873, %v5905
      %v5914 = vsub.f32 %v5874, %v5906
      %v5915 = vsub.f32 %v5875, %v5907
      %v5916 = vsub.f32 %v5876, %v5908
      %v5917 = vmul.f32 %v5909, %v5909
      %v5918 = vmul.f32 %v5910, %v5910
      %v5919 = vmul.f32 %v5911, %v5911
      %v5920 = vmul.f32 %v5912, %v5912
      %v5921 = vmul.f32 %v5913, %v5913
      %v5922 = vmul.f32 %v5914, %v5914
      %v5923 = vmul.f32 %v5915, %v5915
      %v5924 = vmul.f32 %v5916, %v5916
      %v5925 = vsel %vm907, %v5917, 0.0
      %5926 = vadd.xlane.f32.xlu0 %v5925
      %v5927 = vpop.xlane.xlu0 %5926
      %v5928 = vsel %vm907, %v5918, 0.0
      %5929 = vadd.xlane.f32.xlu0 %v5928
      %v5930 = vpop.xlane.xlu0 %5929
      %v5931 = vsel %vm907, %v5919, 0.0
      %5932 = vadd.xlane.f32.xlu0 %v5931
      %v5933 = vpop.xlane.xlu0 %5932
      %v5934 = vsel %vm907, %v5920, 0.0
      %5935 = vadd.xlane.f32.xlu0 %v5934
      %v5936 = vpop.xlane.xlu0 %5935
      %v5937 = vsel %vm907, %v5921, 0.0
      %5938 = vadd.xlane.f32.xlu0 %v5937
      %v5939 = vpop.xlane.xlu0 %5938
      %v5940 = vsel %vm907, %v5922, 0.0
      %5941 = vadd.xlane.f32.xlu0 %v5940
      %v5942 = vpop.xlane.xlu0 %5941
      %v5943 = vsel %vm907, %v5923, 0.0
      %5944 = vadd.xlane.f32.xlu0 %v5943
      %v5945 = vpop.xlane.xlu0 %5944
      %v5946 = vsel %vm907, %v5924, 0.0
      %5947 = vadd.xlane.f32.xlu0 %v5946
      %v5948 = vpop.xlane.xlu0 %5947
      %v5949 = vmul.f32 %v5927, %v1098
      %v5950 = vmul.f32 %v5930, %v1098
      %v5951 = vmul.f32 %v5933, %v1098
      %v5952 = vmul.f32 %v5936, %v1098
      %v5953 = vmul.f32 %v5939, %v1098
      %v5954 = vmul.f32 %v5942, %v1098
      %v5955 = vmul.f32 %v5945, %v1098
      %v5956 = vmul.f32 %v5948, %v1098
      %v5957 = vadd.f32 %v5949, 1e-06
      %v5958 = vadd.f32 %v5950, 1e-06
      %v5959 = vadd.f32 %v5951, 1e-06
      %v5960 = vadd.f32 %v5952, 1e-06
      %v5961 = vadd.f32 %v5953, 1e-06
      %v5962 = vadd.f32 %v5954, 1e-06
      %v5963 = vadd.f32 %v5955, 1e-06
      %v5964 = vadd.f32 %v5956, 1e-06
      %v5965 = vrsqrt.pop %v5957
      %v5966 = vrsqrt.pop %v5958
      %v5967 = vrsqrt.pop %v5959
      %v5968 = vrsqrt.pop %v5960
      %v5969 = vrsqrt.pop %v5961
      %v5970 = vrsqrt.pop %v5962
      %v5971 = vrsqrt.pop %v5963
      %v5972 = vrsqrt.pop %v5964
      %v5973 = vmul.f32 %v5909, %v5965
      %v5974 = vmul.f32 %v5910, %v5966
      %v5975 = vmul.f32 %v5911, %v5967
      %v5976 = vmul.f32 %v5912, %v5968
      %v5977 = vmul.f32 %v5913, %v5969
      %v5978 = vmul.f32 %v5914, %v5970
      %v5979 = vmul.f32 %v5915, %v5971
      %v5980 = vmul.f32 %v5916, %v5972
      %v5981 = vadd.f32 %v1069, 1.0
      %v5982 = vlaneseq
      %v5983 = vshrl.u32 %v5982, 7
      %v5984 = vsub.s32 0, %v5983
      %v5985 = vrot.slane %v5981, %v5984
      %5987 = vrot.lane.b32.xlu0 %v5985, 64
      %v5988 = vpop.permute.xlu0 %5987
      %v5990 = vmul.f32 %v5973, %v5988
      %v5991 = vmul.f32 %v5974, %v5988
      %v5992 = vmul.f32 %v5975, %v5988
      %v5993 = vmul.f32 %v5976, %v5988
      %v5994 = vmul.f32 %v5977, %v5988
      %v5995 = vmul.f32 %v5978, %v5988
      %v5996 = vmul.f32 %v5979, %v5988
      %v5997 = vmul.f32 %v5980, %v5988
      %v5998 = vlaneseq
      %v5999 = vshrl.u32 %v5998, 7
      %v6000 = vsub.s32 0, %v5999
      %v6001 = vrot.slane %v1069, %v6000
      %v6002 = vadd.f32 %v5990, %v6001
      %v6003 = vadd.f32 %v5991, %v6001
      %v6004 = vadd.f32 %v5992, %v6001
      %v6005 = vadd.f32 %v5993, %v6001
      %v6006 = vadd.f32 %v5994, %v6001
      %v6007 = vadd.f32 %v5995, %v6001
      %v6008 = vadd.f32 %v5996, %v6001
      %v6009 = vadd.f32 %v5997, %v6001
      %v6010 = vld [vmem:[%s15] sm:$0xf]
      %v6011 = vld [vmem:[%s15 + $0x4] sm:$0xf]
      %v6012 = vld [vmem:[%s15 + $0x8] sm:$0xf]
      %v6013 = vld [vmem:[%s15 + $0xc] sm:$0xf]
      %v6014 = vld [vmem:[%s15 + $0x10] sm:$0xf]
      %v6015 = vld [vmem:[%s15 + $0x14] sm:$0xf]
      %v6016 = vld [vmem:[%s15 + $0x18] sm:$0xf]
      %v6017 = vld [vmem:[%s15 + $0x1c] sm:$0xf]
      %v6018 = vpack.c.bf16 %v6003, %v6002
      %v6019 = vpack.c.bf16 %v6005, %v6004
      %v6020 = vpack.c.bf16 %v6007, %v6006
      %v6021 = vpack.c.bf16 %v6009, %v6008
      %v6022 = vld [vmem:[%s16] sm:$0x1]
      %v6024 = vlaneseq
      %v6025 = vshrl.u32 %v6024, 7
      %v6026 = vsub.s32 0, %v6025
      %v6027 = vrot.slane %v6022, %v6026
      %v6037 = vunpack.c.l.b16 %v6010
      %v6038 = vunpack.c.l.b16 %v6011
      %v6039 = vunpack.c.l.b16 %v6012
      %v6040 = vunpack.c.l.b16 %v6013
      %v6041 = vunpack.c.l.b16 %v6014
      %v6042 = vunpack.c.l.b16 %v6015
      %v6043 = vunpack.c.l.b16 %v6016
      %v6044 = vunpack.c.l.b16 %v6017
      %v6045 = vpack.c.b16 %v6038, %v6037
      %v6046 = vpack.c.b16 %v6040, %v6039
      %v6047 = vpack.c.b16 %v6042, %v6041
      %v6048 = vpack.c.b16 %v6044, %v6043
      %v6054 = vsel %vm907, %v6018, 0
      %v6057 = vsel %vm907, %v6019, 0
      %v6060 = vsel %vm907, %v6020, 0
      %v6063 = vsel %vm907, %v6021, 0
      %6065 = vmatprep.subr.bf16.mxu0 0
      %6066 = vmatpush1.bf16.msra.mxu0 0
      %6067 = vmatprep.subr.bf16.mxu0 0
      %6068 = vmatpush1.bf16.msra.mxu0 0
      %6069 = vmatprep.subr.bf16.mxu0 0
      %6070 = vmatpush1.bf16.msra.mxu0 0
      %6071 = vmatprep.subr.bf16.mxu0 0
      %6072 = vmatpush1.bf16.msra.mxu0 0
      %6073 = vmatprep.subr.bf16.mxu0 0
      %6074 = vmatpush1.bf16.msra.mxu0 %v6048
      %6075 = vmatprep.subr.bf16.mxu0 0
      %6076 = vmatpush1.bf16.msra.mxu0 %v6047
      %6077 = vmatprep.subr.bf16.mxu0 0
      %6078 = vmatpush1.bf16.msra.mxu0 %v6046
      %6079 = vmatprep.subr.bf16.mxu0 0
      %6080 = vmatpush1.bf16.msra.mxu0 %v6045
      %6081 = vmatprep.subr.bf16.mxu0 0
      %6082 = vmatpush2.bf16.msra.mxu0 0
      %6083 = vmatprep.subr.bf16.mxu0 0
      %6084 = vmatpush2.bf16.msra.mxu0 0
      %6085 = vmatprep.subr.bf16.mxu0 0
      %6086 = vmatpush2.bf16.msra.mxu0 0
      %6087 = vmatprep.subr.bf16.mxu0 0
      %6088 = vmatpush2.bf16.msra.mxu0 0
      %6089 = vmatprep.subr.bf16.mxu0 0
      %6090 = vmatpush2.bf16.msra.mxu0 0
      %6091 = vmatprep.subr.bf16.mxu0 0
      %6092 = vmatpush2.bf16.msra.mxu0 0
      %6093 = vmatprep.subr.bf16.mxu0 0
      %6094 = vmatpush2.bf16.msra.mxu0 0
      %6095 = vmatprep.subr.bf16.mxu0 0
      %6096 = vmatpush2.bf16.msra.mxu0 0
      %6097 = vmatprep.mubr.bf16.mxu0 0
      %6098 = vmatmul.mubr.bf16.gmra.mxu0 %v6054
      %v6099 = vpop.f32.mrf.mxu0
      %v6100 = vadd.f32 %v6027, %v6099
      %v6101 = vpop.f32.mrf.mxu0
      %v6102 = vpop.f32.mrf.mxu0
      %v6103 = vadd.f32 %v6027, %v6102
      %v6104 = vpop.f32.mrf.mxu0
      %6105 = vmatprep.mubr.bf16.mxu0 0
      %6106 = vmatmul.mubr.bf16.gmra.mxu0 %v6057
      %v6107 = vpop.f32.mrf.mxu0
      %v6108 = vadd.f32 %v6027, %v6107
      %v6109 = vpop.f32.mrf.mxu0
      %v6110 = vpop.f32.mrf.mxu0
      %v6111 = vadd.f32 %v6027, %v6110
      %v6112 = vpop.f32.mrf.mxu0
      %6113 = vmatprep.mubr.bf16.mxu0 0
      %6114 = vmatmul.mubr.bf16.gmra.mxu0 %v6060
      %v6115 = vpop.f32.mrf.mxu0
      %v6116 = vadd.f32 %v6027, %v6115
      %v6117 = vpop.f32.mrf.mxu0
      %v6118 = vpop.f32.mrf.mxu0
      %v6119 = vadd.f32 %v6027, %v6118
      %v6120 = vpop.f32.mrf.mxu0
      %6121 = vmatprep.mubr.bf16.mxu0 0
      %6122 = vmatmul.mubr.bf16.gmra.mxu0 %v6063
      %v6123 = vpop.f32.mrf.mxu0
      %v6124 = vadd.f32 %v6027, %v6123
      %v6125 = vpop.f32.mrf.mxu0
      %v6126 = vpop.f32.mrf.mxu0
      %v6127 = vadd.f32 %v6027, %v6126
      %v6128 = vpop.f32.mrf.mxu0
      %6129 = vdwg.mxu0
      %6132 = vrot.lane.b32.xlu0 %v6108, 32
      %v6133 = vpop.permute.xlu0 %6132
      %6134 = vrot.lane.b32.xlu0 %v6111, 32
      %v6135 = vpop.permute.xlu0 %6134
      %6140 = vrot.lane.b32.xlu0 %v6116, 64
      %v6141 = vpop.permute.xlu0 %6140
      %6142 = vrot.lane.b32.xlu0 %v6119, 64
      %v6143 = vpop.permute.xlu0 %6142
      %6148 = vrot.lane.b32.xlu0 %v6124, 96
      %v6149 = vpop.permute.xlu0 %6148
      %6150 = vrot.lane.b32.xlu0 %v6127, 96
      %v6151 = vpop.permute.xlu0 %6150
      %v6154 = vsel %vm2601, %v6100, %v6133
      %v6155 = vsel %vm2601, %v6103, %v6135
      %v6156 = vsel %vm907, %v6154, %v6141
      %v6157 = vsel %vm907, %v6155, %v6143
      %vm6158 = vcmask 785408
      %v6159 = vsel %vm6158, %v6156, %v6149
      %v6160 = vsel %vm6158, %v6157, %v6151
      %6161 = vst [vmem:[%s562] sm:$0xff] %v6159
      %6162 = vst [vmem:[%s562 + $0x8] sm:$0xff] %v6160
      %p6163 = scmp.lt.s32.totalorder %s28, 1
      %s6164 = scalar_select %p6163, %s28, 1
      %s6165 = smul.addr %s6164, 2
      %s6166 = smul.addr %s6165, 8
      %s6167 = scalar_lea.vmem %s17, %s6166
      // Predicated region
      $region89: #{dit_forward.1} parent=87 // pred_check
        %p6168 = pneg %p413
      $region90: #{dit_forward.1} parent=87 // pred_check_branch
        %6170 = sbr.rel (%p6168) target = $region92
      $region91: #{dit_forward.1} parent=87 // pred_region
        _
      $region92: #{dit_forward.1} parent=87 // pred_fallthru
        _
    $region88: #{dit_forward.1} parent=5 // pred_fallthru
      _
    %p6171 = scmp.le.s32.totalorder 2, %s23
    // Predicated region
    $region93: #{dit_forward.1} parent=5 // pred_check
      %p6172 = pneg %p6171
    $region94: #{dit_forward.1} parent=5 // pred_check_branch
      %6174 = sbr.rel (%p6172) target = $region96
    $region95: #{dit_forward.1} parent=5 // pred_region
      %s6175 = ssub.s32 %s23, 2
      // Predicated region
      $region97: #{dit_forward.1} parent=95 // pred_check
        %p6176 = pneg %p419
      $region98: #{dit_forward.1} parent=95 // pred_check_branch
        %6178 = sbr.rel (%p6176) target = $region100
      $region99: #{dit_forward.1} parent=95 // pred_region
        %p6179 = scmp.lt.s32.totalorder %s29, 1
        %s6180 = scalar_select %p6179, %s29, 1
        %s6181 = smul.addr %s6180, 2
        %s6182 = smul.addr %s6181, 8
        %s6183 = scalar_lea.vmem %s17, %s6182
      $region100: #{dit_forward.1} parent=95 // pred_fallthru
        _
    $region96: #{dit_forward.1} parent=5 // pred_fallthru
      _
  $region6: #{dit_forward.1} parent=0 // loop_footer
    %s27 = sadd.s32 1, %s23
  $region7: #{dit_forward.1} parent=0 // loop_footer_branch
    %22 = sbr.rel target = $region3
  $region8: #{dit_forward.1} parent=0 // loop_exit
    _

</llo_original>
